<compile_context>
chip_gen: v5e
topology: v5e:2x2
jax: 0.10.0
libtpu: 0.0.40
codegen_flags: <defaults>
</compile_context>

<pallas_src>
import numpy as np
import jax
import jax.numpy as jnp
from jax.experimental import pallas as pl
from jax.experimental.pallas import tpu as pltpu

IN_FEATS = 4
HIDDEN = 64                # args.hidden_channels (logical width)
HIDDEN_PAD = 128           # zero-padded width used on the MXU
NUM_CLASSES = 3
CLASSES_PAD = 128          # lane-dense padded output width

NODES_PAD = 32                                   # every graph padded to this many nodes
BLOCK = 128                                      # MXU-native diagonal block size
GRAPHS_PER_BLOCK = BLOCK // NODES_PAD            # 4 graphs per 128x128 block
GRAPHS_PER_TILE = 32                             # graphs packed per grid step
NUM_BLOCKS = GRAPHS_PER_TILE // GRAPHS_PER_BLOCK # 8 diagonal blocks per tile
TILE_NODES = GRAPHS_PER_TILE * NODES_PAD         # 1024 node rows per tile


# ------------------------------- Pallas kernel -------------------------------

def _gcn_tile_kernel(adj_ref, x_ref, pool_ref,
                     w1_ref, b1_ref, w2_ref, b2_ref, w3_ref, b3_ref,
                     wl_ref, bl_ref, out_ref):
    f32 = jnp.float32
    bf16 = jnp.bfloat16

    adj = adj_ref[...]                 # (NUM_BLOCKS, 128, 128) bf16, reused by all 3 convs

    def spmm(z_f32):
        """Block-diagonal A_hat @ Z, Z: (TILE_NODES, HIDDEN_PAD) f32 -> f32."""
        zb = z_f32.astype(bf16).reshape(NUM_BLOCKS, BLOCK, HIDDEN_PAD)
        yb = jnp.einsum("bij,bjh->bih", adj, zb, preferred_element_type=f32)
        return yb.reshape(TILE_NODES, HIDDEN_PAD)

    # conv1: X @ W1 as 4 f32 VPU outer-product FMAs (K=4 would waste the MXU).
    x = x_ref[...]                     # (TILE_NODES, IN_FEATS) f32
    w1 = w1_ref[...]                   # (IN_FEATS, HIDDEN_PAD) f32
    xw = x[:, 0:1] * w1[0:1, :]
    for f in range(1, IN_FEATS):
        xw = xw + x[:, f:f + 1] * w1[f:f + 1, :]
    h = jnp.maximum(spmm(xw) + b1_ref[...], 0.0)

    # conv2: relu(A_hat @ (H @ W2) + b2)
    z = jnp.dot(h.astype(bf16), w2_ref[...], preferred_element_type=f32)
    h = jnp.maximum(spmm(z) + b2_ref[...], 0.0)

    # conv3: A_hat @ (H @ W3) + b3        (no relu, matches reference)
    z = jnp.dot(h.astype(bf16), w3_ref[...], preferred_element_type=f32)
    h = spmm(z) + b3_ref[...]

    # global_mean_pool: (G_tile, N_tile) @ (N_tile, H_pad)
    pooled = jnp.dot(pool_ref[...], h.astype(bf16), preferred_element_type=f32)

    # TODO(synk): F.dropout(p=0.3, training=self.training) is identity in eval mode.

    # lin: (G_tile, H_pad) @ (H_pad, C_pad) + b   (padded class columns stay zero)
    out_ref[...] = (jnp.dot(pooled.astype(bf16), wl_ref[...],
                            preferred_element_type=f32) + bl_ref[...])


# --------------------------------- wrapper -----------------------------------

def _pad2(a, rows, cols):
    return jnp.pad(a, ((0, rows - a.shape[0]), (0, cols - a.shape[1])))


def gcn_forward(adj_blocks, pool_tiles, x_tiles, params, num_graphs):
    """adj_blocks: (T, NUM_BLOCKS, 128, 128) f32 block-diag normalized adjacency.
       pool_tiles: (T, GRAPHS_PER_TILE, TILE_NODES) f32 mean-pool matrix.
       x_tiles:    (T, TILE_NODES, IN_FEATS) f32 node features.
       Returns (num_graphs, NUM_CLASSES) f32 logits."""
    num_tiles = adj_blocks.shape[0]
    bf16, f32 = jnp.bfloat16, jnp.float32

    # Pad weights/biases to lane-dense widths; padded channels stay exactly zero.
    w1 = _pad2(params["w1"], IN_FEATS, HIDDEN_PAD)                 # f32 (VPU path)
    w2 = _pad2(params["w2"], HIDDEN_PAD, HIDDEN_PAD).astype(bf16)
    w3 = _pad2(params["w3"], HIDDEN_PAD, HIDDEN_PAD).astype(bf16)
    wl = _pad2(params["wl"], HIDDEN_PAD, CLASSES_PAD).astype(bf16)
    b1 = _pad2(params["b1"], 1, HIDDEN_PAD)
    b2 = _pad2(params["b2"], 1, HIDDEN_PAD)
    b3 = _pad2(params["b3"], 1, HIDDEN_PAD)
    bl = _pad2(params["bl"], 1, CLASSES_PAD)

    adj_bf = adj_blocks.astype(bf16)
    pool_bf = pool_tiles.astype(bf16)

    full = lambda a: pl.BlockSpec(a.shape, lambda t: (0,) * a.ndim)

    out = pl.pallas_call(
        _gcn_tile_kernel,
        out_shape=jax.ShapeDtypeStruct((num_tiles, GRAPHS_PER_TILE, CLASSES_PAD), f32),
        grid_spec=pltpu.PrefetchScalarGridSpec(
            num_scalar_prefetch=0,
            grid=(num_tiles,),
            in_specs=[
                pl.BlockSpec((None, NUM_BLOCKS, BLOCK, BLOCK), lambda t: (t, 0, 0, 0)),
                pl.BlockSpec((None, TILE_NODES, IN_FEATS), lambda t: (t, 0, 0)),
                pl.BlockSpec((None, GRAPHS_PER_TILE, TILE_NODES), lambda t: (t, 0, 0)),
                full(w1), full(b1), full(w2), full(b2), full(w3), full(b3),
                full(wl), full(bl),
            ],
            out_specs=pl.BlockSpec((None, GRAPHS_PER_TILE, CLASSES_PAD),
                                   lambda t: (t, 0, 0)),
        ),
        compiler_params=pltpu.CompilerParams(
            dimension_semantics=("parallel",),        # megacore-shard tiles on v7x
            vmem_limit_bytes=32 * 1024 * 1024,        # safe on v5e/v6e/v7x
        ),
    )(adj_bf, x_tiles, pool_bf, w1, b1, w2, b2, w3, b3, wl, bl)

    return out.reshape(num_tiles * GRAPHS_PER_TILE, CLASSES_PAD)[:num_graphs,
                                                                 :NUM_CLASSES]


# ----------------------------- setup (host-side) ------------------------------

def build_ring_adj_np(n_real, n_pad):
    """Dense D^-1/2 (A + I) D^-1/2 of an undirected ring on n_real nodes, zero-padded."""
    a = np.zeros((n_real, n_real), np.float32)
    idx = np.arange(n_real)
    a[idx, (idx + 1) % n_real] = 1.0
    a[(idx + 1) % n_real, idx] = 1.0
    a = a + np.eye(n_real, dtype=np.float32)
    deg = a.sum(axis=1)
    d_inv_sqrt = np.where(deg > 0, 1.0 / np.sqrt(deg), 0.0)
    a = d_inv_sqrt[:, None] * a * d_inv_sqrt[None, :]
    out = np.zeros((n_pad, n_pad), np.float32)
    out[:n_real, :n_real] = a
    return out


def assemble_tiles_np(per_graph_adj, counts):
    """Pack graphs into 128x128 block-diagonal adjacency tiles + mean-pool matrices.
       The last tile is zero-padded if num_graphs % GRAPHS_PER_TILE != 0."""
    num_graphs = len(per_graph_adj)
    num_tiles = -(-num_graphs // GRAPHS_PER_TILE)          # ceil: no graphs dropped
    adj = np.zeros((num_tiles, NUM_BLOCKS, BLOCK, BLOCK), np.float32)
    pool = np.zeros((num_tiles, GRAPHS_PER_TILE, TILE_NODES), np.float32)
    for gi in range(num_graphs):
        t, g = divmod(gi, GRAPHS_PER_TILE)
        blk, slot = divmod(g, GRAPHS_PER_BLOCK)
        o = slot * NODES_PAD
        adj[t, blk, o:o + NODES_PAD, o:o + NODES_PAD] = per_graph_adj[gi]
        n = counts[gi]
        if n > 0:                                          # guard empty graphs
            node_off = g * NODES_PAD
            pool[t, g, node_off:node_off + n] = 1.0 / n
    return adj, pool


def glorot(key, shape):
    fan_in, fan_out = shape
    limit = jnp.sqrt(6.0 / (fan_in + fan_out))
    return jax.random.uniform(key, shape, jnp.float32, -limit, limit)


def init_params(key):
    k1, k2, k3, k4, k5 = jax.random.split(key, 5)
    return {
        "w1": glorot(k1, (IN_FEATS, HIDDEN)), "b1": jnp.zeros((1, HIDDEN), jnp.float32),
        "w2": glorot(k2, (HIDDEN, HIDDEN)),   "b2": jnp.zeros((1, HIDDEN), jnp.float32),
        "w3": glorot(k3, (HIDDEN, HIDDEN)),   "b3": jnp.zeros((1, HIDDEN), jnp.float32),
        "wl": glorot(k4, (HIDDEN, NUM_CLASSES)),
        "bl": 0.01 * jax.random.normal(k5, (1, NUM_CLASSES), jnp.float32),
    }


def gcn_reference(adj_blocks, pool_tiles, x_tiles, params, num_graphs):
    """Pure-JAX f32 reference (unpadded weights, f32 adjacency) for correctness."""
    hp = jax.lax.Precision.HIGHEST
    T = adj_blocks.shape[0]

    def spmm(h):
        hb = h.reshape(T, NUM_BLOCKS, BLOCK, h.shape[-1])
        y = jnp.einsum("tbij,tbjh->tbih", adj_blocks, hb, precision=hp)
        return y.reshape(T, TILE_NODES, h.shape[-1])

    h = jnp.einsum("tnf,fh->tnh", x_tiles, params["w1"], precision=hp)
    h = jnp.maximum(spmm(h) + params["b1"], 0.0)
    h = jnp.einsum("tnh,hk->tnk", h, params["w2"], precision=hp)
    h = jnp.maximum(spmm(h) + params["b2"], 0.0)
    h = jnp.einsum("tnh,hk->tnk", h, params["w3"], precision=hp)
    h = spmm(h) + params["b3"]
    pooled = jnp.einsum("tgn,tnh->tgh", pool_tiles, h, precision=hp)
    out = jnp.einsum("tgh,hc->tgc", pooled, params["wl"], precision=hp) + params["bl"]
    return out.reshape(-1, NUM_CLASSES)[:num_graphs]


if __name__ == "__main__":
    key = jax.random.PRNGKey(0)
    key, pkey, fkey = jax.random.split(key, 3)

    # 100 graphs -> 4 tiles of 32 (last tile padded): exercises remainder handling.
    num_graphs = 100
    sizes = ([20, 24, 28, 32] * 25)[:num_graphs]           # real node counts (<= NODES_PAD)

    per_graph_adj = [build_ring_adj_np(n, NODES_PAD) for n in sizes]
    adj_np, pool_np = assemble_tiles_np(per_graph_adj, sizes)
    adj_blocks = jnp.asarray(adj_np)                        # (T, 8, 128, 128)
    pool_tiles = jnp.asarray(pool_np)                       # (T, 32, 1024)
    num_tiles = adj_blocks.shape[0]

    # Node features; padded node rows are zeroed (they never reach a real output).
    x_tiles = jax.random.normal(fkey, (num_tiles, TILE_NODES, IN_FEATS), jnp.float32)
    node_mask = (pool_tiles.sum(axis=1) > 0).astype(jnp.float32)   # (T, TILE_NODES)
    x_tiles = x_tiles * node_mask[:, :, None]

    params = init_params(pkey)

    out = gcn_forward(adj_blocks, pool_tiles, x_tiles, params, num_graphs)
    jax.block_until_ready(out)
    assert out.shape == (num_graphs, NUM_CLASSES)

    ref = gcn_reference(adj_blocks, pool_tiles, x_tiles, params, num_graphs)
    assert jnp.allclose(out, ref, atol=5e-2, rtol=5e-2), \
        float(jnp.max(jnp.abs(out - ref)))
    print("KERNEL_OK")
</pallas_src>

<mosaic_0001>
module attributes {stable_mosaic.version = 11 : i64} {
  func.func @_gcn_tile_kernel(%arg0: i32, %arg1: memref<1x8x128x128xbf16, #tpu.memory_space<vmem>>, %arg2: memref<1x1024x4xf32, #tpu.memory_space<vmem>>, %arg3: memref<1x32x1024xbf16, #tpu.memory_space<vmem>>, %arg4: memref<4x128xf32, #tpu.memory_space<vmem>>, %arg5: memref<1x128xf32, #tpu.memory_space<vmem>>, %arg6: memref<128x128xbf16, #tpu.memory_space<vmem>>, %arg7: memref<1x128xf32, #tpu.memory_space<vmem>>, %arg8: memref<128x128xbf16, #tpu.memory_space<vmem>>, %arg9: memref<1x128xf32, #tpu.memory_space<vmem>>, %arg10: memref<128x128xbf16, #tpu.memory_space<vmem>>, %arg11: memref<1x128xf32, #tpu.memory_space<vmem>>, %arg12: memref<1x32x128xf32, #tpu.memory_space<vmem>>) attributes {dimension_semantics = [#tpu.dimension_semantics<parallel>], iteration_bounds = array<i64: 4>, scalar_prefetch = 0 : i64, scratch_operands = 0 : i64, tpu.core_type = #tpu.core_type<tc>, window_params = [{transform_indices = @transform_0, window_bounds = array<i64: 1, 8, 128, 128>}, {transform_indices = @transform_1, window_bounds = array<i64: 1, 1024, 4>}, {transform_indices = @transform_2, window_bounds = array<i64: 1, 32, 1024>}, {pipeline_mode = #tpu.pipeline_mode<synchronous>, transform_indices = @transform_3, window_bounds = array<i64: 4, 128>}, {pipeline_mode = #tpu.pipeline_mode<synchronous>, transform_indices = @transform_4, window_bounds = array<i64: 1, 128>}, {pipeline_mode = #tpu.pipeline_mode<synchronous>, transform_indices = @transform_5, window_bounds = array<i64: 128, 128>}, {pipeline_mode = #tpu.pipeline_mode<synchronous>, transform_indices = @transform_6, window_bounds = array<i64: 1, 128>}, {pipeline_mode = #tpu.pipeline_mode<synchronous>, transform_indices = @transform_7, window_bounds = array<i64: 128, 128>}, {pipeline_mode = #tpu.pipeline_mode<synchronous>, transform_indices = @transform_8, window_bounds = array<i64: 1, 128>}, {pipeline_mode = #tpu.pipeline_mode<synchronous>, transform_indices = @transform_9, window_bounds = array<i64: 128, 128>}, {pipeline_mode = #tpu.pipeline_mode<synchronous>, transform_indices = @transform_10, window_bounds = array<i64: 1, 128>}, {transform_indices = @transform_11, window_bounds = array<i64: 1, 32, 128>}]} {
    %c0 = arith.constant 0 : index
    %c0_0 = arith.constant 0 : index
    %c0_1 = arith.constant 0 : index
    %c0_2 = arith.constant 0 : index
    %0 = vector.load %arg1[%c0, %c0_0, %c0_1, %c0_2] : memref<1x8x128x128xbf16, #tpu.memory_space<vmem>>, vector<1x8x128x128xbf16>
    %1 = vector.shape_cast %0 : vector<1x8x128x128xbf16> to vector<8x128x128xbf16>
    %c0_3 = arith.constant 0 : index
    %c0_4 = arith.constant 0 : index
    %c0_5 = arith.constant 0 : index
    %2 = vector.load %arg2[%c0_3, %c0_4, %c0_5] : memref<1x1024x4xf32, #tpu.memory_space<vmem>>, vector<1x1024x4xf32>
    %3 = vector.shape_cast %2 : vector<1x1024x4xf32> to vector<1024x4xf32>
    %c0_6 = arith.constant 0 : index
    %c0_7 = arith.constant 0 : index
    %4 = vector.load %arg4[%c0_6, %c0_7] : memref<4x128xf32, #tpu.memory_space<vmem>>, vector<4x128xf32>
    %5 = vector.extract_strided_slice %3 {offsets = [0, 0], sizes = [1024, 1], strides = [1, 1]} : vector<1024x4xf32> to vector<1024x1xf32>
    %6 = vector.extract_strided_slice %4 {offsets = [0, 0], sizes = [1, 128], strides = [1, 1]} : vector<4x128xf32> to vector<1x128xf32>
    %7 = vector.broadcast %5 : vector<1024x1xf32> to vector<1024x128xf32>
    %8 = vector.broadcast %6 : vector<1x128xf32> to vector<1024x128xf32>
    %9 = arith.mulf %7, %8 : vector<1024x128xf32>
    %10 = vector.extract_strided_slice %3 {offsets = [0, 1], sizes = [1024, 1], strides = [1, 1]} : vector<1024x4xf32> to vector<1024x1xf32>
    %11 = vector.extract_strided_slice %4 {offsets = [1, 0], sizes = [1, 128], strides = [1, 1]} : vector<4x128xf32> to vector<1x128xf32>
    %12 = vector.broadcast %10 : vector<1024x1xf32> to vector<1024x128xf32>
    %13 = vector.broadcast %11 : vector<1x128xf32> to vector<1024x128xf32>
    %14 = arith.mulf %12, %13 : vector<1024x128xf32>
    %15 = arith.addf %9, %14 : vector<1024x128xf32>
    %16 = vector.extract_strided_slice %3 {offsets = [0, 2], sizes = [1024, 1], strides = [1, 1]} : vector<1024x4xf32> to vector<1024x1xf32>
    %17 = vector.extract_strided_slice %4 {offsets = [2, 0], sizes = [1, 128], strides = [1, 1]} : vector<4x128xf32> to vector<1x128xf32>
    %18 = vector.broadcast %16 : vector<1024x1xf32> to vector<1024x128xf32>
    %19 = vector.broadcast %17 : vector<1x128xf32> to vector<1024x128xf32>
    %20 = arith.mulf %18, %19 : vector<1024x128xf32>
    %21 = arith.addf %15, %20 : vector<1024x128xf32>
    %22 = vector.extract_strided_slice %3 {offsets = [0, 3], sizes = [1024, 1], strides = [1, 1]} : vector<1024x4xf32> to vector<1024x1xf32>
    %23 = vector.extract_strided_slice %4 {offsets = [3, 0], sizes = [1, 128], strides = [1, 1]} : vector<4x128xf32> to vector<1x128xf32>
    %24 = vector.broadcast %22 : vector<1024x1xf32> to vector<1024x128xf32>
    %25 = vector.broadcast %23 : vector<1x128xf32> to vector<1024x128xf32>
    %26 = arith.mulf %24, %25 : vector<1024x128xf32>
    %27 = arith.addf %21, %26 : vector<1024x128xf32>
    %28 = arith.truncf %27 : vector<1024x128xf32> to vector<1024x128xbf16>
    %29 = vector.shape_cast %28 : vector<1024x128xbf16> to vector<8x128x128xbf16>
    "tpu.trace_start"() <{level = 10 : i32, message = "bij,bjh->bih"}> : () -> ()
    %cst = arith.constant dense<0.000000e+00> : vector<8x128x128xf32>
    %30 = tpu.matmul %1, %29, %cst {dimension_numbers = #tpu.dot_dimension_numbers<[2], [1], [1], [2], [0, 0, 0, 1, 1, 2], [0], [0]>} : vector<8x128x128xbf16>, vector<8x128x128xbf16>, vector<8x128x128xf32> -> vector<8x128x128xf32>
    "tpu.trace_stop"() : () -> ()
    %31 = vector.shape_cast %30 : vector<8x128x128xf32> to vector<1024x128xf32>
    %c0_8 = arith.constant 0 : index
    %c0_9 = arith.constant 0 : index
    %32 = vector.load %arg5[%c0_8, %c0_9] : memref<1x128xf32, #tpu.memory_space<vmem>>, vector<1x128xf32>
    %33 = vector.broadcast %32 : vector<1x128xf32> to vector<1024x128xf32>
    %34 = arith.addf %31, %33 : vector<1024x128xf32>
    %cst_10 = arith.constant 0.000000e+00 : f32
    %35 = vector.broadcast %cst_10 : f32 to vector<1024x128xf32>
    %36 = arith.maximumf %34, %35 : vector<1024x128xf32>
    %37 = arith.truncf %36 : vector<1024x128xf32> to vector<1024x128xbf16>
    %c0_11 = arith.constant 0 : index
    %c0_12 = arith.constant 0 : index
    %38 = vector.load %arg6[%c0_11, %c0_12] : memref<128x128xbf16, #tpu.memory_space<vmem>>, vector<128x128xbf16>
    %cst_13 = arith.constant dense<0.000000e+00> : vector<1024x128xf32>
    %39 = tpu.matmul %37, %38, %cst_13 {dimension_numbers = #tpu.dot_dimension_numbers<[1], [0], [0], [1], [0, 0, 1, 1], [], []>} : vector<1024x128xbf16>, vector<128x128xbf16>, vector<1024x128xf32> -> vector<1024x128xf32>
    %40 = arith.truncf %39 : vector<1024x128xf32> to vector<1024x128xbf16>
    %41 = vector.shape_cast %40 : vector<1024x128xbf16> to vector<8x128x128xbf16>
    "tpu.trace_start"() <{level = 10 : i32, message = "bij,bjh->bih"}> : () -> ()
    %cst_14 = arith.constant dense<0.000000e+00> : vector<8x128x128xf32>
    %42 = tpu.matmul %1, %41, %cst_14 {dimension_numbers = #tpu.dot_dimension_numbers<[2], [1], [1], [2], [0, 0, 0, 1, 1, 2], [0], [0]>} : vector<8x128x128xbf16>, vector<8x128x128xbf16>, vector<8x128x128xf32> -> vector<8x128x128xf32>
    "tpu.trace_stop"() : () -> ()
    %43 = vector.shape_cast %42 : vector<8x128x128xf32> to vector<1024x128xf32>
    %c0_15 = arith.constant 0 : index
    %c0_16 = arith.constant 0 : index
    %44 = vector.load %arg7[%c0_15, %c0_16] : memref<1x128xf32, #tpu.memory_space<vmem>>, vector<1x128xf32>
    %45 = vector.broadcast %44 : vector<1x128xf32> to vector<1024x128xf32>
    %46 = arith.addf %43, %45 : vector<1024x128xf32>
    %cst_17 = arith.constant 0.000000e+00 : f32
    %47 = vector.broadcast %cst_17 : f32 to vector<1024x128xf32>
    %48 = arith.maximumf %46, %47 : vector<1024x128xf32>
    %49 = arith.truncf %48 : vector<1024x128xf32> to vector<1024x128xbf16>
    %c0_18 = arith.constant 0 : index
    %c0_19 = arith.constant 0 : index
    %50 = vector.load %arg8[%c0_18, %c0_19] : memref<128x128xbf16, #tpu.memory_space<vmem>>, vector<128x128xbf16>
    %cst_20 = arith.constant dense<0.000000e+00> : vector<1024x128xf32>
    %51 = tpu.matmul %49, %50, %cst_20 {dimension_numbers = #tpu.dot_dimension_numbers<[1], [0], [0], [1], [0, 0, 1, 1], [], []>} : vector<1024x128xbf16>, vector<128x128xbf16>, vector<1024x128xf32> -> vector<1024x128xf32>
    %52 = arith.truncf %51 : vector<1024x128xf32> to vector<1024x128xbf16>
    %53 = vector.shape_cast %52 : vector<1024x128xbf16> to vector<8x128x128xbf16>
    "tpu.trace_start"() <{level = 10 : i32, message = "bij,bjh->bih"}> : () -> ()
    %cst_21 = arith.constant dense<0.000000e+00> : vector<8x128x128xf32>
    %54 = tpu.matmul %1, %53, %cst_21 {dimension_numbers = #tpu.dot_dimension_numbers<[2], [1], [1], [2], [0, 0, 0, 1, 1, 2], [0], [0]>} : vector<8x128x128xbf16>, vector<8x128x128xbf16>, vector<8x128x128xf32> -> vector<8x128x128xf32>
    "tpu.trace_stop"() : () -> ()
    %55 = vector.shape_cast %54 : vector<8x128x128xf32> to vector<1024x128xf32>
    %c0_22 = arith.constant 0 : index
    %c0_23 = arith.constant 0 : index
    %56 = vector.load %arg9[%c0_22, %c0_23] : memref<1x128xf32, #tpu.memory_space<vmem>>, vector<1x128xf32>
    %57 = vector.broadcast %56 : vector<1x128xf32> to vector<1024x128xf32>
    %58 = arith.addf %55, %57 : vector<1024x128xf32>
    %c0_24 = arith.constant 0 : index
    %c0_25 = arith.constant 0 : index
    %c0_26 = arith.constant 0 : index
    %59 = vector.load %arg3[%c0_24, %c0_25, %c0_26] : memref<1x32x1024xbf16, #tpu.memory_space<vmem>>, vector<1x32x1024xbf16>
    %60 = vector.shape_cast %59 : vector<1x32x1024xbf16> to vector<32x1024xbf16>
    %61 = arith.truncf %58 : vector<1024x128xf32> to vector<1024x128xbf16>
    %cst_27 = arith.constant dense<0.000000e+00> : vector<32x128xf32>
    %62 = tpu.matmul %60, %61, %cst_27 {dimension_numbers = #tpu.dot_dimension_numbers<[1], [0], [0], [1], [0, 0, 1, 1], [], []>} : vector<32x1024xbf16>, vector<1024x128xbf16>, vector<32x128xf32> -> vector<32x128xf32>
    %63 = arith.truncf %62 : vector<32x128xf32> to vector<32x128xbf16>
    %c0_28 = arith.constant 0 : index
    %c0_29 = arith.constant 0 : index
    %64 = vector.load %arg10[%c0_28, %c0_29] : memref<128x128xbf16, #tpu.memory_space<vmem>>, vector<128x128xbf16>
    %cst_30 = arith.constant dense<0.000000e+00> : vector<32x128xf32>
    %65 = tpu.matmul %63, %64, %cst_30 {dimension_numbers = #tpu.dot_dimension_numbers<[1], [0], [0], [1], [0, 0, 1, 1], [], []>} : vector<32x128xbf16>, vector<128x128xbf16>, vector<32x128xf32> -> vector<32x128xf32>
    %c0_31 = arith.constant 0 : index
    %c0_32 = arith.constant 0 : index
    %66 = vector.load %arg11[%c0_31, %c0_32] : memref<1x128xf32, #tpu.memory_space<vmem>>, vector<1x128xf32>
    %67 = vector.broadcast %66 : vector<1x128xf32> to vector<32x128xf32>
    %68 = arith.addf %65, %67 : vector<32x128xf32>
    %c0_33 = arith.constant 0 : index
    %c0_34 = arith.constant 0 : index
    %c0_35 = arith.constant 0 : index
    %69 = vector.load %arg12[%c0_33, %c0_34, %c0_35] : memref<1x32x128xf32, #tpu.memory_space<vmem>>, vector<1x32x128xf32>
    %70 = vector.shape_cast %69 : vector<1x32x128xf32> to vector<32x128xf32>
    %71 = vector.shape_cast %68 : vector<32x128xf32> to vector<1x32x128xf32>
    tpu.vector_store %arg12[%c0_33, %c0_34, %c0_35], %71 {strides = array<i32>} : memref<1x32x128xf32, #tpu.memory_space<vmem>>, vector<1x32x128xf32>,
    return
  }
  func.func @transform_0(%arg0: i32) -> (i32, i32, i32, i32) {
    %c0_i32 = arith.constant 0 : i32
    %c0_i32_0 = arith.constant 0 : i32
    %c0_i32_1 = arith.constant 0 : i32
    %c0_i32_2 = arith.constant 0 : i32
    return %arg0, %c0_i32, %c0_i32_0, %c0_i32_1 : i32, i32, i32, i32
  }
  func.func @transform_1(%arg0: i32) -> (i32, i32, i32) {
    %c0_i32 = arith.constant 0 : i32
    %c0_i32_0 = arith.constant 0 : i32
    %c0_i32_1 = arith.constant 0 : i32
    return %arg0, %c0_i32, %c0_i32_0 : i32, i32, i32
  }
  func.func @transform_2(%arg0: i32) -> (i32, i32, i32) {
    %c0_i32 = arith.constant 0 : i32
    %c0_i32_0 = arith.constant 0 : i32
    %c0_i32_1 = arith.constant 0 : i32
    return %arg0, %c0_i32, %c0_i32_0 : i32, i32, i32
  }
  func.func @transform_3(%arg0: i32) -> (i32, i32) {
    %c0_i32 = arith.constant 0 : i32
    %c0_i32_0 = arith.constant 0 : i32
    %c0_i32_1 = arith.constant 0 : i32
    return %c0_i32, %c0_i32_0 : i32, i32
  }
  func.func @transform_4(%arg0: i32) -> (i32, i32) {
    %c0_i32 = arith.constant 0 : i32
    %c0_i32_0 = arith.constant 0 : i32
    %c0_i32_1 = arith.constant 0 : i32
    return %c0_i32, %c0_i32_0 : i32, i32
  }
  func.func @transform_5(%arg0: i32) -> (i32, i32) {
    %c0_i32 = arith.constant 0 : i32
    %c0_i32_0 = arith.constant 0 : i32
    %c0_i32_1 = arith.constant 0 : i32
    return %c0_i32, %c0_i32_0 : i32, i32
  }
  func.func @transform_6(%arg0: i32) -> (i32, i32) {
    %c0_i32 = arith.constant 0 : i32
    %c0_i32_0 = arith.constant 0 : i32
    %c0_i32_1 = arith.constant 0 : i32
    return %c0_i32, %c0_i32_0 : i32, i32
  }
  func.func @transform_7(%arg0: i32) -> (i32, i32) {
    %c0_i32 = arith.constant 0 : i32
    %c0_i32_0 = arith.constant 0 : i32
    %c0_i32_1 = arith.constant 0 : i32
    return %c0_i32, %c0_i32_0 : i32, i32
  }
  func.func @transform_8(%arg0: i32) -> (i32, i32) {
    %c0_i32 = arith.constant 0 : i32
    %c0_i32_0 = arith.constant 0 : i32
    %c0_i32_1 = arith.constant 0 : i32
    return %c0_i32, %c0_i32_0 : i32, i32
  }
  func.func @transform_9(%arg0: i32) -> (i32, i32) {
    %c0_i32 = arith.constant 0 : i32
    %c0_i32_0 = arith.constant 0 : i32
    %c0_i32_1 = arith.constant 0 : i32
    return %c0_i32, %c0_i32_0 : i32, i32
  }
  func.func @transform_10(%arg0: i32) -> (i32, i32) {
    %c0_i32 = arith.constant 0 : i32
    %c0_i32_0 = arith.constant 0 : i32
    %c0_i32_1 = arith.constant 0 : i32
    return %c0_i32, %c0_i32_0 : i32, i32
  }
  func.func @transform_11(%arg0: i32) -> (i32, i32, i32) {
    %c0_i32 = arith.constant 0 : i32
    %c0_i32_0 = arith.constant 0 : i32
    %c0_i32_1 = arith.constant 0 : i32
    return %arg0, %c0_i32, %c0_i32_0 : i32, i32, i32
  }
}

</mosaic_0001>

<llo_original>
// kernel: tpu_custom_call.1
$region0: #{tpu_custom_call.1}
  #allocation0 [shape = 'u32[]', space=smem, size = 0x4, offset = 0x4, fixed_abs, tag = 'smem constant byte address 0x4 - core index']
  #allocation1 [shape = 'u32[72,128]{1,0:T(1,128)}', space=vmem, size = 0x9000, scoped, tag = 'internal scratch']
  %s0 = inlined_call_operand.vmem [shape: bf16[4,8,128,128], index: 0, kind: input, shape index: {}]
  %s1 = inlined_call_operand.vmem [shape: f32[4,1024,4], index: 1, kind: input, shape index: {}]
  %s2 = inlined_call_operand.vmem [shape: bf16[4,32,1024], index: 2, kind: input, shape index: {}]
  %s3 = inlined_call_operand.vmem [shape: f32[4,128], index: 3, kind: input, shape index: {}]
  %s4 = inlined_call_operand.vmem [shape: f32[1,128], index: 4, kind: input, shape index: {}]
  %s5 = inlined_call_operand.vmem [shape: bf16[128,128], index: 5, kind: input, shape index: {}]
  %s6 = inlined_call_operand.vmem [shape: f32[1,128], index: 6, kind: input, shape index: {}]
  %s7 = inlined_call_operand.vmem [shape: bf16[128,128], index: 7, kind: input, shape index: {}]
  %s8 = inlined_call_operand.vmem [shape: f32[1,128], index: 8, kind: input, shape index: {}]
  %s9 = inlined_call_operand.vmem [shape: bf16[128,128], index: 9, kind: input, shape index: {}]
  %s10 = inlined_call_operand.vmem [shape: f32[1,128], index: 10, kind: input, shape index: {}]
  %s11 = inlined_call_operand.hbm [shape: f32[4,32,128], index: 11, kind: output, shape index: {}]
  %s12 = sld [smem:[#allocation0]]
  $region77: #{tpu_custom_call.1} parent=0
    _
  %s14 = ssub.s32 1, %s12
  %s15 = scalar_select 0, %s14, %s12
  $region1: #{tpu_custom_call.1} parent=0
    #allocation2 [shape = 'u8[32768]{0}', space=vmem, size = 0x8000, scoped, tag = 'output window, operand 0']
    #allocation3 [shape = 's32[2]{0}', space=sflag, size = 0x8, scoped, tag = 'scoped memory for tpu_custom_call.1']
    %16 = vsyncpa [#allocation3], 0
    %s17 = scalar_lea.sflag [#allocation3], 1
    %18 = vsyncpa %s17, 0
    loop: start=0, step=1, limit=6
    $region2: #{tpu_custom_call.1} parent=1 // loop_pre_header
      _
    $region3: #{tpu_custom_call.1} parent=1 // loop_header
      %s20 = sphi 0, %s24
      %p21 = scmp.ge.s32.totalorder %s20, 6
      %s30 = sphi 0, %s32
      %s33 = sphi 0, %s30
      %s34 = sphi 0, %s33
      %s50 = sphi 0, %s34
      %s56 = sphi 0, %s58
      %s59 = sphi 0, %s56
      %s60 = sphi 0, %s59
      %s76 = sphi 0, %s60
      %s82 = sphi 0, %s84
      %s85 = sphi 0, %s82
      %s86 = sphi 0, %s85
      %s102 = sphi 0, %s86
      %s106 = sphi 0, %s106
      %s108 = sphi 0, %s106
      %s109 = sphi 0, %s108
      %s123 = sphi 0, %s109
      %s127 = sphi 0, %s127
      %s129 = sphi 0, %s127
      %s130 = sphi 0, %s129
      %s144 = sphi 0, %s130
      %s148 = sphi 0, %s148
      %s150 = sphi 0, %s148
      %s151 = sphi 0, %s150
      %s165 = sphi 0, %s151
      %s169 = sphi 0, %s169
      %s171 = sphi 0, %s169
      %s172 = sphi 0, %s171
      %s186 = sphi 0, %s172
      %s190 = sphi 0, %s190
      %s192 = sphi 0, %s190
      %s193 = sphi 0, %s192
      %s207 = sphi 0, %s193
      %s211 = sphi 0, %s211
      %s213 = sphi 0, %s211
      %s214 = sphi 0, %s213
      %s228 = sphi 0, %s214
      %s232 = sphi 0, %s232
      %s234 = sphi 0, %s232
      %s235 = sphi 0, %s234
      %s249 = sphi 0, %s235
      %s253 = sphi 0, %s253
      %s255 = sphi 0, %s253
      %s256 = sphi 0, %s255
      %s270 = sphi 0, %s256
      %s276 = sphi 0, %s278
      %s279 = sphi 0, %s276
      %s280 = sphi 0, %s279
      %s296 = sphi 0, %s280
    $region4: #{tpu_custom_call.1} parent=1 // loop_header_branch
      %23 = sbr.rel (%p21) target = $region8
    $region5: #{tpu_custom_call.1} parent=1 // loop_body
      %s25 = ssub.s32 %s20, 1
      %s26 = ssub.s32 %s20, 2
      %s27 = sadd.s32 %s20, 1
      %s28 = ssub.s32 %s20, %s27
      %p29 = scmp.eq.s32.totalorder %s28, 0
      %s31 = sadd.s32 %s30, 1
      %s32 = scalar_select %p29, %s30, %s31
      %p35 = pneg %p29
      %p36 = scmp.eq.s32.totalorder %s20, 3
      %p37 = por %p35, %p36
      %p38 = scmp.ne.s32.totalorder %s30, %s33
      %p39 = scmp.eq.s32.totalorder %s20, 0
      %p40 = por %p38, %p39
      %p41 = scmp.ne.s32.totalorder %s30, %s33
      %p42 = scmp.eq.s32.totalorder %s25, 3
      %p43 = por %p41, %p42
      %p44 = scmp.ne.s32.totalorder %s33, %s34
      %p45 = scmp.eq.s32.totalorder %s25, 0
      %p46 = por %p44, %p45
      %p47 = scmp.ne.s32.totalorder %s33, %s34
      %p48 = scmp.eq.s32.totalorder %s26, 3
      %p49 = por %p47, %p48
      %p51 = scmp.ne.s32.totalorder %s34, %s50
      %p52 = scmp.eq.s32.totalorder %s26, 0
      %p53 = por %p51, %p52
      %s54 = ssub.s32 %s20, %s27
      %p55 = scmp.eq.s32.totalorder %s54, 0
      %s57 = sadd.s32 %s56, 1
      %s58 = scalar_select %p55, %s56, %s57
      %p61 = pneg %p55
      %p62 = scmp.eq.s32.totalorder %s20, 3
      %p63 = por %p61, %p62
      %p64 = scmp.ne.s32.totalorder %s56, %s59
      %p65 = scmp.eq.s32.totalorder %s20, 0
      %p66 = por %p64, %p65
      %p67 = scmp.ne.s32.totalorder %s56, %s59
      %p68 = scmp.eq.s32.totalorder %s25, 3
      %p69 = por %p67, %p68
      %p70 = scmp.ne.s32.totalorder %s59, %s60
      %p71 = scmp.eq.s32.totalorder %s25, 0
      %p72 = por %p70, %p71
      %p73 = scmp.ne.s32.totalorder %s59, %s60
      %p74 = scmp.eq.s32.totalorder %s26, 3
      %p75 = por %p73, %p74
      %p77 = scmp.ne.s32.totalorder %s60, %s76
      %p78 = scmp.eq.s32.totalorder %s26, 0
      %p79 = por %p77, %p78
      %s80 = ssub.s32 %s20, %s27
      %p81 = scmp.eq.s32.totalorder %s80, 0
      %s83 = sadd.s32 %s82, 1
      %s84 = scalar_select %p81, %s82, %s83
      %p87 = pneg %p81
      %p88 = scmp.eq.s32.totalorder %s20, 3
      %p89 = por %p87, %p88
      %p90 = scmp.ne.s32.totalorder %s82, %s85
      %p91 = scmp.eq.s32.totalorder %s20, 0
      %p92 = por %p90, %p91
      %p93 = scmp.ne.s32.totalorder %s82, %s85
      %p94 = scmp.eq.s32.totalorder %s25, 3
      %p95 = por %p93, %p94
      %p96 = scmp.ne.s32.totalorder %s85, %s86
      %p97 = scmp.eq.s32.totalorder %s25, 0
      %p98 = por %p96, %p97
      %p99 = scmp.ne.s32.totalorder %s85, %s86
      %p100 = scmp.eq.s32.totalorder %s26, 3
      %p101 = por %p99, %p100
      %p103 = scmp.ne.s32.totalorder %s86, %s102
      %p104 = scmp.eq.s32.totalorder %s26, 0
      %p105 = por %p103, %p104
      %s107 = sadd.s32 %s106, 1
      %p110 = scmp.eq.s32.totalorder %s20, 3
      %p111 = scmp.ne.s32.totalorder %s106, %s108
      %p112 = scmp.eq.s32.totalorder %s20, 0
      %p113 = por %p111, %p112
      %p114 = scmp.ne.s32.totalorder %s106, %s108
      %p115 = scmp.eq.s32.totalorder %s25, 3
      %p116 = por %p114, %p115
      %p117 = scmp.ne.s32.totalorder %s108, %s109
      %p118 = scmp.eq.s32.totalorder %s25, 0
      %p119 = por %p117, %p118
      %p120 = scmp.ne.s32.totalorder %s108, %s109
      %p121 = scmp.eq.s32.totalorder %s26, 3
      %p122 = por %p120, %p121
      %p124 = scmp.ne.s32.totalorder %s109, %s123
      %p125 = scmp.eq.s32.totalorder %s26, 0
      %p126 = por %p124, %p125
      %s128 = sadd.s32 %s127, 1
      %p131 = scmp.eq.s32.totalorder %s20, 3
      %p132 = scmp.ne.s32.totalorder %s127, %s129
      %p133 = scmp.eq.s32.totalorder %s20, 0
      %p134 = por %p132, %p133
      %p135 = scmp.ne.s32.totalorder %s127, %s129
      %p136 = scmp.eq.s32.totalorder %s25, 3
      %p137 = por %p135, %p136
      %p138 = scmp.ne.s32.totalorder %s129, %s130
      %p139 = scmp.eq.s32.totalorder %s25, 0
      %p140 = por %p138, %p139
      %p141 = scmp.ne.s32.totalorder %s129, %s130
      %p142 = scmp.eq.s32.totalorder %s26, 3
      %p143 = por %p141, %p142
      %p145 = scmp.ne.s32.totalorder %s130, %s144
      %p146 = scmp.eq.s32.totalorder %s26, 0
      %p147 = por %p145, %p146
      %s149 = sadd.s32 %s148, 1
      %p152 = scmp.eq.s32.totalorder %s20, 3
      %p153 = scmp.ne.s32.totalorder %s148, %s150
      %p154 = scmp.eq.s32.totalorder %s20, 0
      %p155 = por %p153, %p154
      %p156 = scmp.ne.s32.totalorder %s148, %s150
      %p157 = scmp.eq.s32.totalorder %s25, 3
      %p158 = por %p156, %p157
      %p159 = scmp.ne.s32.totalorder %s150, %s151
      %p160 = scmp.eq.s32.totalorder %s25, 0
      %p161 = por %p159, %p160
      %p162 = scmp.ne.s32.totalorder %s150, %s151
      %p163 = scmp.eq.s32.totalorder %s26, 3
      %p164 = por %p162, %p163
      %p166 = scmp.ne.s32.totalorder %s151, %s165
      %p167 = scmp.eq.s32.totalorder %s26, 0
      %p168 = por %p166, %p167
      %s170 = sadd.s32 %s169, 1
      %p173 = scmp.eq.s32.totalorder %s20, 3
      %p174 = scmp.ne.s32.totalorder %s169, %s171
      %p175 = scmp.eq.s32.totalorder %s20, 0
      %p176 = por %p174, %p175
      %p177 = scmp.ne.s32.totalorder %s169, %s171
      %p178 = scmp.eq.s32.totalorder %s25, 3
      %p179 = por %p177, %p178
      %p180 = scmp.ne.s32.totalorder %s171, %s172
      %p181 = scmp.eq.s32.totalorder %s25, 0
      %p182 = por %p180, %p181
      %p183 = scmp.ne.s32.totalorder %s171, %s172
      %p184 = scmp.eq.s32.totalorder %s26, 3
      %p185 = por %p183, %p184
      %p187 = scmp.ne.s32.totalorder %s172, %s186
      %p188 = scmp.eq.s32.totalorder %s26, 0
      %p189 = por %p187, %p188
      %s191 = sadd.s32 %s190, 1
      %p194 = scmp.eq.s32.totalorder %s20, 3
      %p195 = scmp.ne.s32.totalorder %s190, %s192
      %p196 = scmp.eq.s32.totalorder %s20, 0
      %p197 = por %p195, %p196
      %p198 = scmp.ne.s32.totalorder %s190, %s192
      %p199 = scmp.eq.s32.totalorder %s25, 3
      %p200 = por %p198, %p199
      %p201 = scmp.ne.s32.totalorder %s192, %s193
      %p202 = scmp.eq.s32.totalorder %s25, 0
      %p203 = por %p201, %p202
      %p204 = scmp.ne.s32.totalorder %s192, %s193
      %p205 = scmp.eq.s32.totalorder %s26, 3
      %p206 = por %p204, %p205
      %p208 = scmp.ne.s32.totalorder %s193, %s207
      %p209 = scmp.eq.s32.totalorder %s26, 0
      %p210 = por %p208, %p209
      %s212 = sadd.s32 %s211, 1
      %p215 = scmp.eq.s32.totalorder %s20, 3
      %p216 = scmp.ne.s32.totalorder %s211, %s213
      %p217 = scmp.eq.s32.totalorder %s20, 0
      %p218 = por %p216, %p217
      %p219 = scmp.ne.s32.totalorder %s211, %s213
      %p220 = scmp.eq.s32.totalorder %s25, 3
      %p221 = por %p219, %p220
      %p222 = scmp.ne.s32.totalorder %s213, %s214
      %p223 = scmp.eq.s32.totalorder %s25, 0
      %p224 = por %p222, %p223
      %p225 = scmp.ne.s32.totalorder %s213, %s214
      %p226 = scmp.eq.s32.totalorder %s26, 3
      %p227 = por %p225, %p226
      %p229 = scmp.ne.s32.totalorder %s214, %s228
      %p230 = scmp.eq.s32.totalorder %s26, 0
      %p231 = por %p229, %p230
      %s233 = sadd.s32 %s232, 1
      %p236 = scmp.eq.s32.totalorder %s20, 3
      %p237 = scmp.ne.s32.totalorder %s232, %s234
      %p238 = scmp.eq.s32.totalorder %s20, 0
      %p239 = por %p237, %p238
      %p240 = scmp.ne.s32.totalorder %s232, %s234
      %p241 = scmp.eq.s32.totalorder %s25, 3
      %p242 = por %p240, %p241
      %p243 = scmp.ne.s32.totalorder %s234, %s235
      %p244 = scmp.eq.s32.totalorder %s25, 0
      %p245 = por %p243, %p244
      %p246 = scmp.ne.s32.totalorder %s234, %s235
      %p247 = scmp.eq.s32.totalorder %s26, 3
      %p248 = por %p246, %p247
      %p250 = scmp.ne.s32.totalorder %s235, %s249
      %p251 = scmp.eq.s32.totalorder %s26, 0
      %p252 = por %p250, %p251
      %s254 = sadd.s32 %s253, 1
      %p257 = scmp.eq.s32.totalorder %s20, 3
      %p258 = scmp.ne.s32.totalorder %s253, %s255
      %p259 = scmp.eq.s32.totalorder %s20, 0
      %p260 = por %p258, %p259
      %p261 = scmp.ne.s32.totalorder %s253, %s255
      %p262 = scmp.eq.s32.totalorder %s25, 3
      %p263 = por %p261, %p262
      %p264 = scmp.ne.s32.totalorder %s255, %s256
      %p265 = scmp.eq.s32.totalorder %s25, 0
      %p266 = por %p264, %p265
      %p267 = scmp.ne.s32.totalorder %s255, %s256
      %p268 = scmp.eq.s32.totalorder %s26, 3
      %p269 = por %p267, %p268
      %p271 = scmp.ne.s32.totalorder %s256, %s270
      %p272 = scmp.eq.s32.totalorder %s26, 0
      %p273 = por %p271, %p272
      %s274 = ssub.s32 %s20, %s27
      %p275 = scmp.eq.s32.totalorder %s274, 0
      %s277 = sadd.s32 %s276, 1
      %s278 = scalar_select %p275, %s276, %s277
      %p281 = pneg %p275
      %p282 = scmp.eq.s32.totalorder %s20, 3
      %p283 = por %p281, %p282
      %p284 = scmp.ne.s32.totalorder %s276, %s279
      %p285 = scmp.eq.s32.totalorder %s20, 0
      %p286 = por %p284, %p285
      %p287 = scmp.ne.s32.totalorder %s276, %s279
      %p288 = scmp.eq.s32.totalorder %s25, 3
      %p289 = por %p287, %p288
      %p290 = scmp.ne.s32.totalorder %s279, %s280
      %p291 = scmp.eq.s32.totalorder %s25, 0
      %p292 = por %p290, %p291
      %p293 = scmp.ne.s32.totalorder %s279, %s280
      %p294 = scmp.eq.s32.totalorder %s26, 3
      %p295 = por %p293, %p294
      %p297 = scmp.ne.s32.totalorder %s280, %s296
      %p298 = scmp.eq.s32.totalorder %s26, 0
      %p299 = por %p297, %p298
      %p300 = scmp.le.s32.totalorder 1, %s20
      %p301 = scmp.lt.s32.totalorder %s20, 5
      %p302 = pnand %p300, %p301
      %p303 = pneg %p302
      // Predicated region
      $region9: #{tpu_custom_call.1} parent=5 // pred_check
        _
      $region10: #{tpu_custom_call.1} parent=5 // pred_check_branch
        %305 = sbr.rel (%p302) target = $region12
      $region11: #{tpu_custom_call.1} parent=5 // pred_region
        %s306 = ssub.s32 %s20, 1
        // Predicated region
        $region13: #{tpu_custom_call.1} parent=11 // pred_check
          %p307 = pneg %p119
        $region14: #{tpu_custom_call.1} parent=11 // pred_check_branch
          %309 = sbr.rel (%p307) target = $region16
        $region15: #{tpu_custom_call.1} parent=11 // pred_region
          _
        $region16: #{tpu_custom_call.1} parent=11 // pred_fallthru
          _
        // Predicated region
        $region17: #{tpu_custom_call.1} parent=11 // pred_check
          %p310 = pneg %p140
        $region18: #{tpu_custom_call.1} parent=11 // pred_check_branch
          %312 = sbr.rel (%p310) target = $region20
        $region19: #{tpu_custom_call.1} parent=11 // pred_region
          _
        $region20: #{tpu_custom_call.1} parent=11 // pred_fallthru
          _
        // Predicated region
        $region21: #{tpu_custom_call.1} parent=11 // pred_check
          %p313 = pneg %p161
        $region22: #{tpu_custom_call.1} parent=11 // pred_check_branch
          %315 = sbr.rel (%p313) target = $region24
        $region23: #{tpu_custom_call.1} parent=11 // pred_region
          _
        $region24: #{tpu_custom_call.1} parent=11 // pred_fallthru
          _
        // Predicated region
        $region25: #{tpu_custom_call.1} parent=11 // pred_check
          %p316 = pneg %p182
        $region26: #{tpu_custom_call.1} parent=11 // pred_check_branch
          %318 = sbr.rel (%p316) target = $region28
        $region27: #{tpu_custom_call.1} parent=11 // pred_region
          _
        $region28: #{tpu_custom_call.1} parent=11 // pred_fallthru
          _
        // Predicated region
        $region29: #{tpu_custom_call.1} parent=11 // pred_check
          %p319 = pneg %p203
        $region30: #{tpu_custom_call.1} parent=11 // pred_check_branch
          %321 = sbr.rel (%p319) target = $region32
        $region31: #{tpu_custom_call.1} parent=11 // pred_region
          _
        $region32: #{tpu_custom_call.1} parent=11 // pred_fallthru
          _
        // Predicated region
        $region33: #{tpu_custom_call.1} parent=11 // pred_check
          %p322 = pneg %p224
        $region34: #{tpu_custom_call.1} parent=11 // pred_check_branch
          %324 = sbr.rel (%p322) target = $region36
        $region35: #{tpu_custom_call.1} parent=11 // pred_region
          _
        $region36: #{tpu_custom_call.1} parent=11 // pred_fallthru
          _
        // Predicated region
        $region37: #{tpu_custom_call.1} parent=11 // pred_check
          %p325 = pneg %p245
        $region38: #{tpu_custom_call.1} parent=11 // pred_check_branch
          %327 = sbr.rel (%p325) target = $region40
        $region39: #{tpu_custom_call.1} parent=11 // pred_region
          _
        $region40: #{tpu_custom_call.1} parent=11 // pred_fallthru
          _
        // Predicated region
        $region41: #{tpu_custom_call.1} parent=11 // pred_check
          %p328 = pneg %p266
        $region42: #{tpu_custom_call.1} parent=11 // pred_check_branch
          %330 = sbr.rel (%p328) target = $region44
        $region43: #{tpu_custom_call.1} parent=11 // pred_region
          _
        $region44: #{tpu_custom_call.1} parent=11 // pred_fallthru
          _
      $region12: #{tpu_custom_call.1} parent=5 // pred_fallthru
        _
      %p331 = scmp.lt.s32.totalorder %s20, 4
      // Predicated region
      $region45: #{tpu_custom_call.1} parent=5 // pred_check
        %p332 = pneg %p331
      $region46: #{tpu_custom_call.1} parent=5 // pred_check_branch
        %334 = sbr.rel (%p332) target = $region48
      $region47: #{tpu_custom_call.1} parent=5 // pred_region
        // Predicated region
        $region49: #{tpu_custom_call.1} parent=47 // pred_check
          %p335 = pneg %p40
        $region50: #{tpu_custom_call.1} parent=47 // pred_check_branch
          %337 = sbr.rel (%p335) target = $region52
        $region51: #{tpu_custom_call.1} parent=47 // pred_region
          %p338 = scmp.lt.s32.totalorder %s20, 3
          %s339 = scalar_select %p338, %s20, 3
          %s340 = smul.addr %s339, 128
          %s341 = smul.addr %s340, 4
          %s342 = scalar_lea.vmem %s0, %s341
        $region52: #{tpu_custom_call.1} parent=47 // pred_fallthru
          _
        // Predicated region
        $region53: #{tpu_custom_call.1} parent=47 // pred_check
          %p343 = pneg %p66
        $region54: #{tpu_custom_call.1} parent=47 // pred_check_branch
          %345 = sbr.rel (%p343) target = $region56
        $region55: #{tpu_custom_call.1} parent=47 // pred_region
          %p346 = scmp.lt.s32.totalorder %s20, 3
          %s347 = scalar_select %p346, %s20, 3
          %s348 = smul.addr %s347, 128
          %s349 = smul.addr %s348, 8
          %s350 = scalar_lea.vmem %s1, %s349
        $region56: #{tpu_custom_call.1} parent=47 // pred_fallthru
          _
        // Predicated region
        $region57: #{tpu_custom_call.1} parent=47 // pred_check
          %p351 = pneg %p92
        $region58: #{tpu_custom_call.1} parent=47 // pred_check_branch
          %353 = sbr.rel (%p351) target = $region60
        $region59: #{tpu_custom_call.1} parent=47 // pred_region
          %p354 = scmp.lt.s32.totalorder %s20, 3
          %s355 = scalar_select %p354, %s20, 3
          %s356 = smul.addr %s355, 32
          %s357 = smul.addr %s356, 4
          %s358 = scalar_lea.vmem %s2, %s357
        $region60: #{tpu_custom_call.1} parent=47 // pred_fallthru
          _
      $region48: #{tpu_custom_call.1} parent=5 // pred_fallthru
        _
      %p359 = scmp.le.s32.totalorder 1, %s20
      %p360 = scmp.lt.s32.totalorder %s20, 5
      %p361 = pnand %p359, %p360
      %p362 = pneg %p361
      // Predicated region
      $region61: #{tpu_custom_call.1} parent=5 // pred_check
        _
      $region62: #{tpu_custom_call.1} parent=5 // pred_check_branch
        %364 = sbr.rel (%p361) target = $region64
      $region63: #{tpu_custom_call.1} parent=5 // pred_region
        %s365 = ssub.s32 %s20, 1
        %p366 = scmp.lt.s32.totalorder %s25, 3
        %s367 = scalar_select %p366, %s25, 3
        %s368 = smul.addr %s367, 128
        %s369 = smul.addr %s368, 4
        %s370 = scalar_lea.vmem %s0, %s369
        %p371 = pneg %p46
        %p372 = pneg %p43
        %p373 = scmp.lt.s32.totalorder %s25, 3
        %s374 = scalar_select %p373, %s25, 3
        %s375 = smul.addr %s374, 128
        %s376 = smul.addr %s375, 8
        %s377 = scalar_lea.vmem %s1, %s376
        %p378 = pneg %p72
        %p379 = pneg %p69
        %p380 = scmp.lt.s32.totalorder %s25, 3
        %s381 = scalar_select %p380, %s25, 3
        %s382 = smul.addr %s381, 32
        %s383 = smul.addr %s382, 4
        %s384 = scalar_lea.vmem %s2, %s383
        %p385 = pneg %p98
        %p386 = pneg %p95
        %p387 = pneg %p119
        %p388 = pneg %p116
        %p389 = pneg %p140
        %p390 = pneg %p137
        %p391 = pneg %p161
        %p392 = pneg %p158
        %p393 = pneg %p182
        %p394 = pneg %p179
        %p395 = pneg %p203
        %p396 = pneg %p200
        %p397 = pneg %p224
        %p398 = pneg %p221
        %p399 = pneg %p245
        %p400 = pneg %p242
        %p401 = pneg %p266
        %p402 = pneg %p263
        %p403 = pneg %p292
        %p404 = pneg %p289
        %s405 = sand.u32 %s279, 1
        %s406 = scalar_lea.sflag [#allocation3], %s405
        %s407 = sand.u32 %s279, 1
        %s408 = smul.addr %s407, 32
        %s409 = scalar_lea.vmem [#allocation2], %s408
        %p410 = scmp.lt.s32.totalorder %s25, 3
        %s411 = scalar_select %p410, %s25, 3
        %s412 = smul.addr %s411, 128
        %s413 = smul.addr %s412, 4
        %s414 = scalar_lea.vmem %s0, %s413
        %p415 = scmp.lt.s32.totalorder %s25, 3
        %s416 = scalar_select %p415, %s25, 3
        %s417 = smul.addr %s416, 128
        %s418 = smul.addr %s417, 8
        %s419 = scalar_lea.vmem %s1, %s418
        %p420 = scmp.lt.s32.totalorder %s25, 3
        %s421 = scalar_select %p420, %s25, 3
        %s422 = smul.addr %s421, 32
        %s423 = smul.addr %s422, 4
        %s424 = scalar_lea.vmem %s2, %s423
        %v425 = vld [vmem:[%s414] sm:$0xf]
        %v426 = vld [vmem:[%s414 + $0x4] sm:$0xf]
        %v427 = vld [vmem:[%s414 + $0x8] sm:$0xf]
        %v428 = vld [vmem:[%s414 + $0xc] sm:$0xf]
        %v429 = vld [vmem:[%s414 + $0x10] sm:$0xf]
        %v430 = vld [vmem:[%s414 + $0x14] sm:$0xf]
        %v431 = vld [vmem:[%s414 + $0x18] sm:$0xf]
        %v432 = vld [vmem:[%s414 + $0x1c] sm:$0xf]
        %v433 = vld [vmem:[%s414 + $0x20] sm:$0xf]
        %v434 = vld [vmem:[%s414 + $0x24] sm:$0xf]
        %v435 = vld [vmem:[%s414 + $0x28] sm:$0xf]
        %v436 = vld [vmem:[%s414 + $0x2c] sm:$0xf]
        %v437 = vld [vmem:[%s414 + $0x30] sm:$0xf]
        %v438 = vld [vmem:[%s414 + $0x34] sm:$0xf]
        %v439 = vld [vmem:[%s414 + $0x38] sm:$0xf]
        %v440 = vld [vmem:[%s414 + $0x3c] sm:$0xf]
        %v441 = vld [vmem:[%s414 + $0x40] sm:$0xf]
        %v442 = vld [vmem:[%s414 + $0x44] sm:$0xf]
        %v443 = vld [vmem:[%s414 + $0x48] sm:$0xf]
        %v444 = vld [vmem:[%s414 + $0x4c] sm:$0xf]
        %v445 = vld [vmem:[%s414 + $0x50] sm:$0xf]
        %v446 = vld [vmem:[%s414 + $0x54] sm:$0xf]
        %v447 = vld [vmem:[%s414 + $0x58] sm:$0xf]
        %v448 = vld [vmem:[%s414 + $0x5c] sm:$0xf]
        %v449 = vld [vmem:[%s414 + $0x60] sm:$0xf]
        %v450 = vld [vmem:[%s414 + $0x64] sm:$0xf]
        %v451 = vld [vmem:[%s414 + $0x68] sm:$0xf]
        %v452 = vld [vmem:[%s414 + $0x6c] sm:$0xf]
        %v453 = vld [vmem:[%s414 + $0x70] sm:$0xf]
        %v454 = vld [vmem:[%s414 + $0x74] sm:$0xf]
        %v455 = vld [vmem:[%s414 + $0x78] sm:$0xf]
        %v456 = vld [vmem:[%s414 + $0x7c] sm:$0xf]
        %v457 = vld [vmem:[%s414 + $0x80] sm:$0xf]
        %v458 = vld [vmem:[%s414 + $0x84] sm:$0xf]
        %v459 = vld [vmem:[%s414 + $0x88] sm:$0xf]
        %v460 = vld [vmem:[%s414 + $0x8c] sm:$0xf]
        %v461 = vld [vmem:[%s414 + $0x90] sm:$0xf]
        %v462 = vld [vmem:[%s414 + $0x94] sm:$0xf]
        %v463 = vld [vmem:[%s414 + $0x98] sm:$0xf]
        %v464 = vld [vmem:[%s414 + $0x9c] sm:$0xf]
        %v465 = vld [vmem:[%s414 + $0xa0] sm:$0xf]
        %v466 = vld [vmem:[%s414 + $0xa4] sm:$0xf]
        %v467 = vld [vmem:[%s414 + $0xa8] sm:$0xf]
        %v468 = vld [vmem:[%s414 + $0xac] sm:$0xf]
        %v469 = vld [vmem:[%s414 + $0xb0] sm:$0xf]
        %v470 = vld [vmem:[%s414 + $0xb4] sm:$0xf]
        %v471 = vld [vmem:[%s414 + $0xb8] sm:$0xf]
        %v472 = vld [vmem:[%s414 + $0xbc] sm:$0xf]
        %v473 = vld [vmem:[%s414 + $0xc0] sm:$0xf]
        %v474 = vld [vmem:[%s414 + $0xc4] sm:$0xf]
        %v475 = vld [vmem:[%s414 + $0xc8] sm:$0xf]
        %v476 = vld [vmem:[%s414 + $0xcc] sm:$0xf]
        %v477 = vld [vmem:[%s414 + $0xd0] sm:$0xf]
        %v478 = vld [vmem:[%s414 + $0xd4] sm:$0xf]
        %v479 = vld [vmem:[%s414 + $0xd8] sm:$0xf]
        %v480 = vld [vmem:[%s414 + $0xdc] sm:$0xf]
        %v481 = vld [vmem:[%s414 + $0xe0] sm:$0xf]
        %v482 = vld [vmem:[%s414 + $0xe4] sm:$0xf]
        %v483 = vld [vmem:[%s414 + $0xe8] sm:$0xf]
        %v484 = vld [vmem:[%s414 + $0xec] sm:$0xf]
        %v485 = vld [vmem:[%s414 + $0xf0] sm:$0xf]
        %v486 = vld [vmem:[%s414 + $0xf4] sm:$0xf]
        %v487 = vld [vmem:[%s414 + $0xf8] sm:$0xf]
        %v488 = vld [vmem:[%s414 + $0xfc] sm:$0xf]
        %v489 = vld [vmem:[%s414 + $0x100] sm:$0xf]
        %v490 = vld [vmem:[%s414 + $0x104] sm:$0xf]
        %v491 = vld [vmem:[%s414 + $0x108] sm:$0xf]
        %v492 = vld [vmem:[%s414 + $0x10c] sm:$0xf]
        %v493 = vld [vmem:[%s414 + $0x110] sm:$0xf]
        %v494 = vld [vmem:[%s414 + $0x114] sm:$0xf]
        %v495 = vld [vmem:[%s414 + $0x118] sm:$0xf]
        %v496 = vld [vmem:[%s414 + $0x11c] sm:$0xf]
        %v497 = vld [vmem:[%s414 + $0x120] sm:$0xf]
        %v498 = vld [vmem:[%s414 + $0x124] sm:$0xf]
        %v499 = vld [vmem:[%s414 + $0x128] sm:$0xf]
        %v500 = vld [vmem:[%s414 + $0x12c] sm:$0xf]
        %v501 = vld [vmem:[%s414 + $0x130] sm:$0xf]
        %v502 = vld [vmem:[%s414 + $0x134] sm:$0xf]
        %v503 = vld [vmem:[%s414 + $0x138] sm:$0xf]
        %v504 = vld [vmem:[%s414 + $0x13c] sm:$0xf]
        %v505 = vld [vmem:[%s414 + $0x140] sm:$0xf]
        %v506 = vld [vmem:[%s414 + $0x144] sm:$0xf]
        %v507 = vld [vmem:[%s414 + $0x148] sm:$0xf]
        %v508 = vld [vmem:[%s414 + $0x14c] sm:$0xf]
        %v509 = vld [vmem:[%s414 + $0x150] sm:$0xf]
        %v510 = vld [vmem:[%s414 + $0x154] sm:$0xf]
        %v511 = vld [vmem:[%s414 + $0x158] sm:$0xf]
        %v512 = vld [vmem:[%s414 + $0x15c] sm:$0xf]
        %v513 = vld [vmem:[%s414 + $0x160] sm:$0xf]
        %v514 = vld [vmem:[%s414 + $0x164] sm:$0xf]
        %v515 = vld [vmem:[%s414 + $0x168] sm:$0xf]
        %v516 = vld [vmem:[%s414 + $0x16c] sm:$0xf]
        %v517 = vld [vmem:[%s414 + $0x170] sm:$0xf]
        %v518 = vld [vmem:[%s414 + $0x174] sm:$0xf]
        %v519 = vld [vmem:[%s414 + $0x178] sm:$0xf]
        %v520 = vld [vmem:[%s414 + $0x17c] sm:$0xf]
        %v521 = vld [vmem:[%s414 + $0x180] sm:$0xf]
        %v522 = vld [vmem:[%s414 + $0x184] sm:$0xf]
        %v523 = vld [vmem:[%s414 + $0x188] sm:$0xf]
        %v524 = vld [vmem:[%s414 + $0x18c] sm:$0xf]
        %v525 = vld [vmem:[%s414 + $0x190] sm:$0xf]
        %v526 = vld [vmem:[%s414 + $0x194] sm:$0xf]
        %v527 = vld [vmem:[%s414 + $0x198] sm:$0xf]
        %v528 = vld [vmem:[%s414 + $0x19c] sm:$0xf]
        %v529 = vld [vmem:[%s414 + $0x1a0] sm:$0xf]
        %v530 = vld [vmem:[%s414 + $0x1a4] sm:$0xf]
        %v531 = vld [vmem:[%s414 + $0x1a8] sm:$0xf]
        %v532 = vld [vmem:[%s414 + $0x1ac] sm:$0xf]
        %v533 = vld [vmem:[%s414 + $0x1b0] sm:$0xf]
        %v534 = vld [vmem:[%s414 + $0x1b4] sm:$0xf]
        %v535 = vld [vmem:[%s414 + $0x1b8] sm:$0xf]
        %v536 = vld [vmem:[%s414 + $0x1bc] sm:$0xf]
        %v537 = vld [vmem:[%s414 + $0x1c0] sm:$0xf]
        %v538 = vld [vmem:[%s414 + $0x1c4] sm:$0xf]
        %v539 = vld [vmem:[%s414 + $0x1c8] sm:$0xf]
        %v540 = vld [vmem:[%s414 + $0x1cc] sm:$0xf]
        %v541 = vld [vmem:[%s414 + $0x1d0] sm:$0xf]
        %v542 = vld [vmem:[%s414 + $0x1d4] sm:$0xf]
        %v543 = vld [vmem:[%s414 + $0x1d8] sm:$0xf]
        %v544 = vld [vmem:[%s414 + $0x1dc] sm:$0xf]
        %v545 = vld [vmem:[%s414 + $0x1e0] sm:$0xf]
        %v546 = vld [vmem:[%s414 + $0x1e4] sm:$0xf]
        %v547 = vld [vmem:[%s414 + $0x1e8] sm:$0xf]
        %v548 = vld [vmem:[%s414 + $0x1ec] sm:$0xf]
        %v549 = vld [vmem:[%s414 + $0x1f0] sm:$0xf]
        %v550 = vld [vmem:[%s414 + $0x1f4] sm:$0xf]
        %v551 = vld [vmem:[%s414 + $0x1f8] sm:$0xf]
        %v552 = vld [vmem:[%s414 + $0x1fc] sm:$0xf]
        %v553 = vld [vmem:[%s419] sm:$0xff]
        %v554 = vld [vmem:[%s419 + $0x8] sm:$0xff]
        %v555 = vld [vmem:[%s419 + $0x10] sm:$0xff]
        %v556 = vld [vmem:[%s419 + $0x18] sm:$0xff]
        %v557 = vld [vmem:[%s419 + $0x20] sm:$0xff]
        %v558 = vld [vmem:[%s419 + $0x28] sm:$0xff]
        %v559 = vld [vmem:[%s419 + $0x30] sm:$0xff]
        %v560 = vld [vmem:[%s419 + $0x38] sm:$0xff]
        %v561 = vld [vmem:[%s419 + $0x40] sm:$0xff]
        %v562 = vld [vmem:[%s419 + $0x48] sm:$0xff]
        %v563 = vld [vmem:[%s419 + $0x50] sm:$0xff]
        %v564 = vld [vmem:[%s419 + $0x58] sm:$0xff]
        %v565 = vld [vmem:[%s419 + $0x60] sm:$0xff]
        %v566 = vld [vmem:[%s419 + $0x68] sm:$0xff]
        %v567 = vld [vmem:[%s419 + $0x70] sm:$0xff]
        %v568 = vld [vmem:[%s419 + $0x78] sm:$0xff]
        %v569 = vld [vmem:[%s419 + $0x80] sm:$0xff]
        %v570 = vld [vmem:[%s419 + $0x88] sm:$0xff]
        %v571 = vld [vmem:[%s419 + $0x90] sm:$0xff]
        %v572 = vld [vmem:[%s419 + $0x98] sm:$0xff]
        %v573 = vld [vmem:[%s419 + $0xa0] sm:$0xff]
        %v574 = vld [vmem:[%s419 + $0xa8] sm:$0xff]
        %v575 = vld [vmem:[%s419 + $0xb0] sm:$0xff]
        %v576 = vld [vmem:[%s419 + $0xb8] sm:$0xff]
        %v577 = vld [vmem:[%s419 + $0xc0] sm:$0xff]
        %v578 = vld [vmem:[%s419 + $0xc8] sm:$0xff]
        %v579 = vld [vmem:[%s419 + $0xd0] sm:$0xff]
        %v580 = vld [vmem:[%s419 + $0xd8] sm:$0xff]
        %v581 = vld [vmem:[%s419 + $0xe0] sm:$0xff]
        %v582 = vld [vmem:[%s419 + $0xe8] sm:$0xff]
        %v583 = vld [vmem:[%s419 + $0xf0] sm:$0xff]
        %v584 = vld [vmem:[%s419 + $0xf8] sm:$0xff]
        %v585 = vld [vmem:[%s419 + $0x100] sm:$0xff]
        %v586 = vld [vmem:[%s419 + $0x108] sm:$0xff]
        %v587 = vld [vmem:[%s419 + $0x110] sm:$0xff]
        %v588 = vld [vmem:[%s419 + $0x118] sm:$0xff]
        %v589 = vld [vmem:[%s419 + $0x120] sm:$0xff]
        %v590 = vld [vmem:[%s419 + $0x128] sm:$0xff]
        %v591 = vld [vmem:[%s419 + $0x130] sm:$0xff]
        %v592 = vld [vmem:[%s419 + $0x138] sm:$0xff]
        %v593 = vld [vmem:[%s419 + $0x140] sm:$0xff]
        %v594 = vld [vmem:[%s419 + $0x148] sm:$0xff]
        %v595 = vld [vmem:[%s419 + $0x150] sm:$0xff]
        %v596 = vld [vmem:[%s419 + $0x158] sm:$0xff]
        %v597 = vld [vmem:[%s419 + $0x160] sm:$0xff]
        %v598 = vld [vmem:[%s419 + $0x168] sm:$0xff]
        %v599 = vld [vmem:[%s419 + $0x170] sm:$0xff]
        %v600 = vld [vmem:[%s419 + $0x178] sm:$0xff]
        %v601 = vld [vmem:[%s419 + $0x180] sm:$0xff]
        %v602 = vld [vmem:[%s419 + $0x188] sm:$0xff]
        %v603 = vld [vmem:[%s419 + $0x190] sm:$0xff]
        %v604 = vld [vmem:[%s419 + $0x198] sm:$0xff]
        %v605 = vld [vmem:[%s419 + $0x1a0] sm:$0xff]
        %v606 = vld [vmem:[%s419 + $0x1a8] sm:$0xff]
        %v607 = vld [vmem:[%s419 + $0x1b0] sm:$0xff]
        %v608 = vld [vmem:[%s419 + $0x1b8] sm:$0xff]
        %v609 = vld [vmem:[%s419 + $0x1c0] sm:$0xff]
        %v610 = vld [vmem:[%s419 + $0x1c8] sm:$0xff]
        %v611 = vld [vmem:[%s419 + $0x1d0] sm:$0xff]
        %v612 = vld [vmem:[%s419 + $0x1d8] sm:$0xff]
        %v613 = vld [vmem:[%s419 + $0x1e0] sm:$0xff]
        %v614 = vld [vmem:[%s419 + $0x1e8] sm:$0xff]
        %v615 = vld [vmem:[%s419 + $0x1f0] sm:$0xff]
        %v616 = vld [vmem:[%s419 + $0x1f8] sm:$0xff]
        %v617 = vld [vmem:[%s419 + $0x200] sm:$0xff]
        %v618 = vld [vmem:[%s419 + $0x208] sm:$0xff]
        %v619 = vld [vmem:[%s419 + $0x210] sm:$0xff]
        %v620 = vld [vmem:[%s419 + $0x218] sm:$0xff]
        %v621 = vld [vmem:[%s419 + $0x220] sm:$0xff]
        %v622 = vld [vmem:[%s419 + $0x228] sm:$0xff]
        %v623 = vld [vmem:[%s419 + $0x230] sm:$0xff]
        %v624 = vld [vmem:[%s419 + $0x238] sm:$0xff]
        %v625 = vld [vmem:[%s419 + $0x240] sm:$0xff]
        %v626 = vld [vmem:[%s419 + $0x248] sm:$0xff]
        %v627 = vld [vmem:[%s419 + $0x250] sm:$0xff]
        %v628 = vld [vmem:[%s419 + $0x258] sm:$0xff]
        %v629 = vld [vmem:[%s419 + $0x260] sm:$0xff]
        %v630 = vld [vmem:[%s419 + $0x268] sm:$0xff]
        %v631 = vld [vmem:[%s419 + $0x270] sm:$0xff]
        %v632 = vld [vmem:[%s419 + $0x278] sm:$0xff]
        %v633 = vld [vmem:[%s419 + $0x280] sm:$0xff]
        %v634 = vld [vmem:[%s419 + $0x288] sm:$0xff]
        %v635 = vld [vmem:[%s419 + $0x290] sm:$0xff]
        %v636 = vld [vmem:[%s419 + $0x298] sm:$0xff]
        %v637 = vld [vmem:[%s419 + $0x2a0] sm:$0xff]
        %v638 = vld [vmem:[%s419 + $0x2a8] sm:$0xff]
        %v639 = vld [vmem:[%s419 + $0x2b0] sm:$0xff]
        %v640 = vld [vmem:[%s419 + $0x2b8] sm:$0xff]
        %v641 = vld [vmem:[%s419 + $0x2c0] sm:$0xff]
        %v642 = vld [vmem:[%s419 + $0x2c8] sm:$0xff]
        %v643 = vld [vmem:[%s419 + $0x2d0] sm:$0xff]
        %v644 = vld [vmem:[%s419 + $0x2d8] sm:$0xff]
        %v645 = vld [vmem:[%s419 + $0x2e0] sm:$0xff]
        %v646 = vld [vmem:[%s419 + $0x2e8] sm:$0xff]
        %v647 = vld [vmem:[%s419 + $0x2f0] sm:$0xff]
        %v648 = vld [vmem:[%s419 + $0x2f8] sm:$0xff]
        %v649 = vld [vmem:[%s419 + $0x300] sm:$0xff]
        %v650 = vld [vmem:[%s419 + $0x308] sm:$0xff]
        %v651 = vld [vmem:[%s419 + $0x310] sm:$0xff]
        %v652 = vld [vmem:[%s419 + $0x318] sm:$0xff]
        %v653 = vld [vmem:[%s419 + $0x320] sm:$0xff]
        %v654 = vld [vmem:[%s419 + $0x328] sm:$0xff]
        %v655 = vld [vmem:[%s419 + $0x330] sm:$0xff]
        %v656 = vld [vmem:[%s419 + $0x338] sm:$0xff]
        %v657 = vld [vmem:[%s419 + $0x340] sm:$0xff]
        %v658 = vld [vmem:[%s419 + $0x348] sm:$0xff]
        %v659 = vld [vmem:[%s419 + $0x350] sm:$0xff]
        %v660 = vld [vmem:[%s419 + $0x358] sm:$0xff]
        %v661 = vld [vmem:[%s419 + $0x360] sm:$0xff]
        %v662 = vld [vmem:[%s419 + $0x368] sm:$0xff]
        %v663 = vld [vmem:[%s419 + $0x370] sm:$0xff]
        %v664 = vld [vmem:[%s419 + $0x378] sm:$0xff]
        %v665 = vld [vmem:[%s419 + $0x380] sm:$0xff]
        %v666 = vld [vmem:[%s419 + $0x388] sm:$0xff]
        %v667 = vld [vmem:[%s419 + $0x390] sm:$0xff]
        %v668 = vld [vmem:[%s419 + $0x398] sm:$0xff]
        %v669 = vld [vmem:[%s419 + $0x3a0] sm:$0xff]
        %v670 = vld [vmem:[%s419 + $0x3a8] sm:$0xff]
        %v671 = vld [vmem:[%s419 + $0x3b0] sm:$0xff]
        %v672 = vld [vmem:[%s419 + $0x3b8] sm:$0xff]
        %v673 = vld [vmem:[%s419 + $0x3c0] sm:$0xff]
        %v674 = vld [vmem:[%s419 + $0x3c8] sm:$0xff]
        %v675 = vld [vmem:[%s419 + $0x3d0] sm:$0xff]
        %v676 = vld [vmem:[%s419 + $0x3d8] sm:$0xff]
        %v677 = vld [vmem:[%s419 + $0x3e0] sm:$0xff]
        %v678 = vld [vmem:[%s419 + $0x3e8] sm:$0xff]
        %v679 = vld [vmem:[%s419 + $0x3f0] sm:$0xff]
        %v680 = vld [vmem:[%s419 + $0x3f8] sm:$0xff]
        %v681 = vld [vmem:[%s3] sm:$0xf]
        %683 = vset.pattern.permute.xlu0 0
        %684 = vperm.xlu0 %683, %v553
        %v685 = vpop.permute.xlu0 %684
        %688 = vset.pattern.permute.xlu0 0
        %689 = vperm.xlu0 %688, %v554
        %v690 = vpop.permute.xlu0 %689
        %693 = vset.pattern.permute.xlu0 0
        %694 = vperm.xlu0 %693, %v555
        %v695 = vpop.permute.xlu0 %694
        %698 = vset.pattern.permute.xlu0 0
        %699 = vperm.xlu0 %698, %v556
        %v700 = vpop.permute.xlu0 %699
        %703 = vset.pattern.permute.xlu0 0
        %704 = vperm.xlu0 %703, %v557
        %v705 = vpop.permute.xlu0 %704
        %708 = vset.pattern.permute.xlu0 0
        %709 = vperm.xlu0 %708, %v558
        %v710 = vpop.permute.xlu0 %709
        %713 = vset.pattern.permute.xlu0 0
        %714 = vperm.xlu0 %713, %v559
        %v715 = vpop.permute.xlu0 %714
        %718 = vset.pattern.permute.xlu0 0
        %719 = vperm.xlu0 %718, %v560
        %v720 = vpop.permute.xlu0 %719
        %723 = vset.pattern.permute.xlu0 0
        %724 = vperm.xlu0 %723, %v561
        %v725 = vpop.permute.xlu0 %724
        %728 = vset.pattern.permute.xlu0 0
        %729 = vperm.xlu0 %728, %v562
        %v730 = vpop.permute.xlu0 %729
        %733 = vset.pattern.permute.xlu0 0
        %734 = vperm.xlu0 %733, %v563
        %v735 = vpop.permute.xlu0 %734
        %738 = vset.pattern.permute.xlu0 0
        %739 = vperm.xlu0 %738, %v564
        %v740 = vpop.permute.xlu0 %739
        %743 = vset.pattern.permute.xlu0 0
        %744 = vperm.xlu0 %743, %v565
        %v745 = vpop.permute.xlu0 %744
        %748 = vset.pattern.permute.xlu0 0
        %749 = vperm.xlu0 %748, %v566
        %v750 = vpop.permute.xlu0 %749
        %753 = vset.pattern.permute.xlu0 0
        %754 = vperm.xlu0 %753, %v567
        %v755 = vpop.permute.xlu0 %754
        %758 = vset.pattern.permute.xlu0 0
        %759 = vperm.xlu0 %758, %v568
        %v760 = vpop.permute.xlu0 %759
        %763 = vset.pattern.permute.xlu0 0
        %764 = vperm.xlu0 %763, %v569
        %v765 = vpop.permute.xlu0 %764
        %768 = vset.pattern.permute.xlu0 0
        %769 = vperm.xlu0 %768, %v570
        %v770 = vpop.permute.xlu0 %769
        %773 = vset.pattern.permute.xlu0 0
        %774 = vperm.xlu0 %773, %v571
        %v775 = vpop.permute.xlu0 %774
        %778 = vset.pattern.permute.xlu0 0
        %779 = vperm.xlu0 %778, %v572
        %v780 = vpop.permute.xlu0 %779
        %783 = vset.pattern.permute.xlu0 0
        %784 = vperm.xlu0 %783, %v573
        %v785 = vpop.permute.xlu0 %784
        %788 = vset.pattern.permute.xlu0 0
        %789 = vperm.xlu0 %788, %v574
        %v790 = vpop.permute.xlu0 %789
        %793 = vset.pattern.permute.xlu0 0
        %794 = vperm.xlu0 %793, %v575
        %v795 = vpop.permute.xlu0 %794
        %798 = vset.pattern.permute.xlu0 0
        %799 = vperm.xlu0 %798, %v576
        %v800 = vpop.permute.xlu0 %799
        %803 = vset.pattern.permute.xlu0 0
        %804 = vperm.xlu0 %803, %v577
        %v805 = vpop.permute.xlu0 %804
        %808 = vset.pattern.permute.xlu0 0
        %809 = vperm.xlu0 %808, %v578
        %v810 = vpop.permute.xlu0 %809
        %813 = vset.pattern.permute.xlu0 0
        %814 = vperm.xlu0 %813, %v579
        %v815 = vpop.permute.xlu0 %814
        %818 = vset.pattern.permute.xlu0 0
        %819 = vperm.xlu0 %818, %v580
        %v820 = vpop.permute.xlu0 %819
        %823 = vset.pattern.permute.xlu0 0
        %824 = vperm.xlu0 %823, %v581
        %v825 = vpop.permute.xlu0 %824
        %828 = vset.pattern.permute.xlu0 0
        %829 = vperm.xlu0 %828, %v582
        %v830 = vpop.permute.xlu0 %829
        %833 = vset.pattern.permute.xlu0 0
        %834 = vperm.xlu0 %833, %v583
        %v835 = vpop.permute.xlu0 %834
        %838 = vset.pattern.permute.xlu0 0
        %839 = vperm.xlu0 %838, %v584
        %v840 = vpop.permute.xlu0 %839
        %843 = vset.pattern.permute.xlu0 0
        %844 = vperm.xlu0 %843, %v585
        %v845 = vpop.permute.xlu0 %844
        %848 = vset.pattern.permute.xlu0 0
        %849 = vperm.xlu0 %848, %v586
        %v850 = vpop.permute.xlu0 %849
        %853 = vset.pattern.permute.xlu0 0
        %854 = vperm.xlu0 %853, %v587
        %v855 = vpop.permute.xlu0 %854
        %858 = vset.pattern.permute.xlu0 0
        %859 = vperm.xlu0 %858, %v588
        %v860 = vpop.permute.xlu0 %859
        %863 = vset.pattern.permute.xlu0 0
        %864 = vperm.xlu0 %863, %v589
        %v865 = vpop.permute.xlu0 %864
        %868 = vset.pattern.permute.xlu0 0
        %869 = vperm.xlu0 %868, %v590
        %v870 = vpop.permute.xlu0 %869
        %873 = vset.pattern.permute.xlu0 0
        %874 = vperm.xlu0 %873, %v591
        %v875 = vpop.permute.xlu0 %874
        %878 = vset.pattern.permute.xlu0 0
        %879 = vperm.xlu0 %878, %v592
        %v880 = vpop.permute.xlu0 %879
        %883 = vset.pattern.permute.xlu0 0
        %884 = vperm.xlu0 %883, %v593
        %v885 = vpop.permute.xlu0 %884
        %888 = vset.pattern.permute.xlu0 0
        %889 = vperm.xlu0 %888, %v594
        %v890 = vpop.permute.xlu0 %889
        %893 = vset.pattern.permute.xlu0 0
        %894 = vperm.xlu0 %893, %v595
        %v895 = vpop.permute.xlu0 %894
        %898 = vset.pattern.permute.xlu0 0
        %899 = vperm.xlu0 %898, %v596
        %v900 = vpop.permute.xlu0 %899
        %903 = vset.pattern.permute.xlu0 0
        %904 = vperm.xlu0 %903, %v597
        %v905 = vpop.permute.xlu0 %904
        %908 = vset.pattern.permute.xlu0 0
        %909 = vperm.xlu0 %908, %v598
        %v910 = vpop.permute.xlu0 %909
        %913 = vset.pattern.permute.xlu0 0
        %914 = vperm.xlu0 %913, %v599
        %v915 = vpop.permute.xlu0 %914
        %918 = vset.pattern.permute.xlu0 0
        %919 = vperm.xlu0 %918, %v600
        %v920 = vpop.permute.xlu0 %919
        %923 = vset.pattern.permute.xlu0 0
        %924 = vperm.xlu0 %923, %v601
        %v925 = vpop.permute.xlu0 %924
        %928 = vset.pattern.permute.xlu0 0
        %929 = vperm.xlu0 %928, %v602
        %v930 = vpop.permute.xlu0 %929
        %933 = vset.pattern.permute.xlu0 0
        %934 = vperm.xlu0 %933, %v603
        %v935 = vpop.permute.xlu0 %934
        %938 = vset.pattern.permute.xlu0 0
        %939 = vperm.xlu0 %938, %v604
        %v940 = vpop.permute.xlu0 %939
        %943 = vset.pattern.permute.xlu0 0
        %944 = vperm.xlu0 %943, %v605
        %v945 = vpop.permute.xlu0 %944
        %948 = vset.pattern.permute.xlu0 0
        %949 = vperm.xlu0 %948, %v606
        %v950 = vpop.permute.xlu0 %949
        %953 = vset.pattern.permute.xlu0 0
        %954 = vperm.xlu0 %953, %v607
        %v955 = vpop.permute.xlu0 %954
        %958 = vset.pattern.permute.xlu0 0
        %959 = vperm.xlu0 %958, %v608
        %v960 = vpop.permute.xlu0 %959
        %963 = vset.pattern.permute.xlu0 0
        %964 = vperm.xlu0 %963, %v609
        %v965 = vpop.permute.xlu0 %964
        %968 = vset.pattern.permute.xlu0 0
        %969 = vperm.xlu0 %968, %v610
        %v970 = vpop.permute.xlu0 %969
        %973 = vset.pattern.permute.xlu0 0
        %974 = vperm.xlu0 %973, %v611
        %v975 = vpop.permute.xlu0 %974
        %978 = vset.pattern.permute.xlu0 0
        %979 = vperm.xlu0 %978, %v612
        %v980 = vpop.permute.xlu0 %979
        %983 = vset.pattern.permute.xlu0 0
        %984 = vperm.xlu0 %983, %v613
        %v985 = vpop.permute.xlu0 %984
        %988 = vset.pattern.permute.xlu0 0
        %989 = vperm.xlu0 %988, %v614
        %v990 = vpop.permute.xlu0 %989
        %993 = vset.pattern.permute.xlu0 0
        %994 = vperm.xlu0 %993, %v615
        %v995 = vpop.permute.xlu0 %994
        %998 = vset.pattern.permute.xlu0 0
        %999 = vperm.xlu0 %998, %v616
        %v1000 = vpop.permute.xlu0 %999
        %1003 = vset.pattern.permute.xlu0 0
        %1004 = vperm.xlu0 %1003, %v617
        %v1005 = vpop.permute.xlu0 %1004
        %1008 = vset.pattern.permute.xlu0 0
        %1009 = vperm.xlu0 %1008, %v618
        %v1010 = vpop.permute.xlu0 %1009
        %1013 = vset.pattern.permute.xlu0 0
        %1014 = vperm.xlu0 %1013, %v619
        %v1015 = vpop.permute.xlu0 %1014
        %1018 = vset.pattern.permute.xlu0 0
        %1019 = vperm.xlu0 %1018, %v620
        %v1020 = vpop.permute.xlu0 %1019
        %1023 = vset.pattern.permute.xlu0 0
        %1024 = vperm.xlu0 %1023, %v621
        %v1025 = vpop.permute.xlu0 %1024
        %1028 = vset.pattern.permute.xlu0 0
        %1029 = vperm.xlu0 %1028, %v622
        %v1030 = vpop.permute.xlu0 %1029
        %1033 = vset.pattern.permute.xlu0 0
        %1034 = vperm.xlu0 %1033, %v623
        %v1035 = vpop.permute.xlu0 %1034
        %1038 = vset.pattern.permute.xlu0 0
        %1039 = vperm.xlu0 %1038, %v624
        %v1040 = vpop.permute.xlu0 %1039
        %1043 = vset.pattern.permute.xlu0 0
        %1044 = vperm.xlu0 %1043, %v625
        %v1045 = vpop.permute.xlu0 %1044
        %1048 = vset.pattern.permute.xlu0 0
        %1049 = vperm.xlu0 %1048, %v626
        %v1050 = vpop.permute.xlu0 %1049
        %1053 = vset.pattern.permute.xlu0 0
        %1054 = vperm.xlu0 %1053, %v627
        %v1055 = vpop.permute.xlu0 %1054
        %1058 = vset.pattern.permute.xlu0 0
        %1059 = vperm.xlu0 %1058, %v628
        %v1060 = vpop.permute.xlu0 %1059
        %1063 = vset.pattern.permute.xlu0 0
        %1064 = vperm.xlu0 %1063, %v629
        %v1065 = vpop.permute.xlu0 %1064
        %1068 = vset.pattern.permute.xlu0 0
        %1069 = vperm.xlu0 %1068, %v630
        %v1070 = vpop.permute.xlu0 %1069
        %1073 = vset.pattern.permute.xlu0 0
        %1074 = vperm.xlu0 %1073, %v631
        %v1075 = vpop.permute.xlu0 %1074
        %1078 = vset.pattern.permute.xlu0 0
        %1079 = vperm.xlu0 %1078, %v632
        %v1080 = vpop.permute.xlu0 %1079
        %1083 = vset.pattern.permute.xlu0 0
        %1084 = vperm.xlu0 %1083, %v633
        %v1085 = vpop.permute.xlu0 %1084
        %1088 = vset.pattern.permute.xlu0 0
        %1089 = vperm.xlu0 %1088, %v634
        %v1090 = vpop.permute.xlu0 %1089
        %1093 = vset.pattern.permute.xlu0 0
        %1094 = vperm.xlu0 %1093, %v635
        %v1095 = vpop.permute.xlu0 %1094
        %1098 = vset.pattern.permute.xlu0 0
        %1099 = vperm.xlu0 %1098, %v636
        %v1100 = vpop.permute.xlu0 %1099
        %1103 = vset.pattern.permute.xlu0 0
        %1104 = vperm.xlu0 %1103, %v637
        %v1105 = vpop.permute.xlu0 %1104
        %1108 = vset.pattern.permute.xlu0 0
        %1109 = vperm.xlu0 %1108, %v638
        %v1110 = vpop.permute.xlu0 %1109
        %1113 = vset.pattern.permute.xlu0 0
        %1114 = vperm.xlu0 %1113, %v639
        %v1115 = vpop.permute.xlu0 %1114
        %1118 = vset.pattern.permute.xlu0 0
        %1119 = vperm.xlu0 %1118, %v640
        %v1120 = vpop.permute.xlu0 %1119
        %1123 = vset.pattern.permute.xlu0 0
        %1124 = vperm.xlu0 %1123, %v641
        %v1125 = vpop.permute.xlu0 %1124
        %1128 = vset.pattern.permute.xlu0 0
        %1129 = vperm.xlu0 %1128, %v642
        %v1130 = vpop.permute.xlu0 %1129
        %1133 = vset.pattern.permute.xlu0 0
        %1134 = vperm.xlu0 %1133, %v643
        %v1135 = vpop.permute.xlu0 %1134
        %1138 = vset.pattern.permute.xlu0 0
        %1139 = vperm.xlu0 %1138, %v644
        %v1140 = vpop.permute.xlu0 %1139
        %1143 = vset.pattern.permute.xlu0 0
        %1144 = vperm.xlu0 %1143, %v645
        %v1145 = vpop.permute.xlu0 %1144
        %1148 = vset.pattern.permute.xlu0 0
        %1149 = vperm.xlu0 %1148, %v646
        %v1150 = vpop.permute.xlu0 %1149
        %1153 = vset.pattern.permute.xlu0 0
        %1154 = vperm.xlu0 %1153, %v647
        %v1155 = vpop.permute.xlu0 %1154
        %1158 = vset.pattern.permute.xlu0 0
        %1159 = vperm.xlu0 %1158, %v648
        %v1160 = vpop.permute.xlu0 %1159
        %1163 = vset.pattern.permute.xlu0 0
        %1164 = vperm.xlu0 %1163, %v649
        %v1165 = vpop.permute.xlu0 %1164
        %1168 = vset.pattern.permute.xlu0 0
        %1169 = vperm.xlu0 %1168, %v650
        %v1170 = vpop.permute.xlu0 %1169
        %1173 = vset.pattern.permute.xlu0 0
        %1174 = vperm.xlu0 %1173, %v651
        %v1175 = vpop.permute.xlu0 %1174
        %1178 = vset.pattern.permute.xlu0 0
        %1179 = vperm.xlu0 %1178, %v652
        %v1180 = vpop.permute.xlu0 %1179
        %1183 = vset.pattern.permute.xlu0 0
        %1184 = vperm.xlu0 %1183, %v653
        %v1185 = vpop.permute.xlu0 %1184
        %1188 = vset.pattern.permute.xlu0 0
        %1189 = vperm.xlu0 %1188, %v654
        %v1190 = vpop.permute.xlu0 %1189
        %1193 = vset.pattern.permute.xlu0 0
        %1194 = vperm.xlu0 %1193, %v655
        %v1195 = vpop.permute.xlu0 %1194
        %1198 = vset.pattern.permute.xlu0 0
        %1199 = vperm.xlu0 %1198, %v656
        %v1200 = vpop.permute.xlu0 %1199
        %1203 = vset.pattern.permute.xlu0 0
        %1204 = vperm.xlu0 %1203, %v657
        %v1205 = vpop.permute.xlu0 %1204
        %1208 = vset.pattern.permute.xlu0 0
        %1209 = vperm.xlu0 %1208, %v658
        %v1210 = vpop.permute.xlu0 %1209
        %1213 = vset.pattern.permute.xlu0 0
        %1214 = vperm.xlu0 %1213, %v659
        %v1215 = vpop.permute.xlu0 %1214
        %1218 = vset.pattern.permute.xlu0 0
        %1219 = vperm.xlu0 %1218, %v660
        %v1220 = vpop.permute.xlu0 %1219
        %1223 = vset.pattern.permute.xlu0 0
        %1224 = vperm.xlu0 %1223, %v661
        %v1225 = vpop.permute.xlu0 %1224
        %1228 = vset.pattern.permute.xlu0 0
        %1229 = vperm.xlu0 %1228, %v662
        %v1230 = vpop.permute.xlu0 %1229
        %1233 = vset.pattern.permute.xlu0 0
        %1234 = vperm.xlu0 %1233, %v663
        %v1235 = vpop.permute.xlu0 %1234
        %1238 = vset.pattern.permute.xlu0 0
        %1239 = vperm.xlu0 %1238, %v664
        %v1240 = vpop.permute.xlu0 %1239
        %1243 = vset.pattern.permute.xlu0 0
        %1244 = vperm.xlu0 %1243, %v665
        %v1245 = vpop.permute.xlu0 %1244
        %1248 = vset.pattern.permute.xlu0 0
        %1249 = vperm.xlu0 %1248, %v666
        %v1250 = vpop.permute.xlu0 %1249
        %1253 = vset.pattern.permute.xlu0 0
        %1254 = vperm.xlu0 %1253, %v667
        %v1255 = vpop.permute.xlu0 %1254
        %1258 = vset.pattern.permute.xlu0 0
        %1259 = vperm.xlu0 %1258, %v668
        %v1260 = vpop.permute.xlu0 %1259
        %1263 = vset.pattern.permute.xlu0 0
        %1264 = vperm.xlu0 %1263, %v669
        %v1265 = vpop.permute.xlu0 %1264
        %1268 = vset.pattern.permute.xlu0 0
        %1269 = vperm.xlu0 %1268, %v670
        %v1270 = vpop.permute.xlu0 %1269
        %1273 = vset.pattern.permute.xlu0 0
        %1274 = vperm.xlu0 %1273, %v671
        %v1275 = vpop.permute.xlu0 %1274
        %1278 = vset.pattern.permute.xlu0 0
        %1279 = vperm.xlu0 %1278, %v672
        %v1280 = vpop.permute.xlu0 %1279
        %1283 = vset.pattern.permute.xlu0 0
        %1284 = vperm.xlu0 %1283, %v673
        %v1285 = vpop.permute.xlu0 %1284
        %1288 = vset.pattern.permute.xlu0 0
        %1289 = vperm.xlu0 %1288, %v674
        %v1290 = vpop.permute.xlu0 %1289
        %1293 = vset.pattern.permute.xlu0 0
        %1294 = vperm.xlu0 %1293, %v675
        %v1295 = vpop.permute.xlu0 %1294
        %1298 = vset.pattern.permute.xlu0 0
        %1299 = vperm.xlu0 %1298, %v676
        %v1300 = vpop.permute.xlu0 %1299
        %1303 = vset.pattern.permute.xlu0 0
        %1304 = vperm.xlu0 %1303, %v677
        %v1305 = vpop.permute.xlu0 %1304
        %1308 = vset.pattern.permute.xlu0 0
        %1309 = vperm.xlu0 %1308, %v678
        %v1310 = vpop.permute.xlu0 %1309
        %1313 = vset.pattern.permute.xlu0 0
        %1314 = vperm.xlu0 %1313, %v679
        %v1315 = vpop.permute.xlu0 %1314
        %1318 = vset.pattern.permute.xlu0 0
        %1319 = vperm.xlu0 %1318, %v680
        %v1320 = vpop.permute.xlu0 %1319
        %v1322 = vperm.slane %v681, 0
        %v1323 = vmul.f32 %v685, %v1322
        %v1324 = vmul.f32 %v690, %v1322
        %v1325 = vmul.f32 %v695, %v1322
        %v1326 = vmul.f32 %v700, %v1322
        %v1327 = vmul.f32 %v705, %v1322
        %v1328 = vmul.f32 %v710, %v1322
        %v1329 = vmul.f32 %v715, %v1322
        %v1330 = vmul.f32 %v720, %v1322
        %v1331 = vmul.f32 %v725, %v1322
        %v1332 = vmul.f32 %v730, %v1322
        %v1333 = vmul.f32 %v735, %v1322
        %v1334 = vmul.f32 %v740, %v1322
        %v1335 = vmul.f32 %v745, %v1322
        %v1336 = vmul.f32 %v750, %v1322
        %v1337 = vmul.f32 %v755, %v1322
        %v1338 = vmul.f32 %v760, %v1322
        %v1339 = vmul.f32 %v765, %v1322
        %v1340 = vmul.f32 %v770, %v1322
        %v1341 = vmul.f32 %v775, %v1322
        %v1342 = vmul.f32 %v780, %v1322
        %v1343 = vmul.f32 %v785, %v1322
        %v1344 = vmul.f32 %v790, %v1322
        %v1345 = vmul.f32 %v795, %v1322
        %v1346 = vmul.f32 %v800, %v1322
        %v1347 = vmul.f32 %v805, %v1322
        %v1348 = vmul.f32 %v810, %v1322
        %v1349 = vmul.f32 %v815, %v1322
        %v1350 = vmul.f32 %v820, %v1322
        %v1351 = vmul.f32 %v825, %v1322
        %v1352 = vmul.f32 %v830, %v1322
        %v1353 = vmul.f32 %v835, %v1322
        %v1354 = vmul.f32 %v840, %v1322
        %v1355 = vmul.f32 %v845, %v1322
        %v1356 = vmul.f32 %v850, %v1322
        %v1357 = vmul.f32 %v855, %v1322
        %v1358 = vmul.f32 %v860, %v1322
        %v1359 = vmul.f32 %v865, %v1322
        %v1360 = vmul.f32 %v870, %v1322
        %v1361 = vmul.f32 %v875, %v1322
        %v1362 = vmul.f32 %v880, %v1322
        %v1363 = vmul.f32 %v885, %v1322
        %v1364 = vmul.f32 %v890, %v1322
        %v1365 = vmul.f32 %v895, %v1322
        %v1366 = vmul.f32 %v900, %v1322
        %v1367 = vmul.f32 %v905, %v1322
        %v1368 = vmul.f32 %v910, %v1322
        %v1369 = vmul.f32 %v915, %v1322
        %v1370 = vmul.f32 %v920, %v1322
        %v1371 = vmul.f32 %v925, %v1322
        %v1372 = vmul.f32 %v930, %v1322
        %v1373 = vmul.f32 %v935, %v1322
        %v1374 = vmul.f32 %v940, %v1322
        %v1375 = vmul.f32 %v945, %v1322
        %v1376 = vmul.f32 %v950, %v1322
        %v1377 = vmul.f32 %v955, %v1322
        %v1378 = vmul.f32 %v960, %v1322
        %v1379 = vmul.f32 %v965, %v1322
        %v1380 = vmul.f32 %v970, %v1322
        %v1381 = vmul.f32 %v975, %v1322
        %v1382 = vmul.f32 %v980, %v1322
        %v1383 = vmul.f32 %v985, %v1322
        %v1384 = vmul.f32 %v990, %v1322
        %v1385 = vmul.f32 %v995, %v1322
        %v1386 = vmul.f32 %v1000, %v1322
        %v1387 = vmul.f32 %v1005, %v1322
        %v1388 = vmul.f32 %v1010, %v1322
        %v1389 = vmul.f32 %v1015, %v1322
        %v1390 = vmul.f32 %v1020, %v1322
        %v1391 = vmul.f32 %v1025, %v1322
        %v1392 = vmul.f32 %v1030, %v1322
        %v1393 = vmul.f32 %v1035, %v1322
        %v1394 = vmul.f32 %v1040, %v1322
        %v1395 = vmul.f32 %v1045, %v1322
        %v1396 = vmul.f32 %v1050, %v1322
        %v1397 = vmul.f32 %v1055, %v1322
        %v1398 = vmul.f32 %v1060, %v1322
        %v1399 = vmul.f32 %v1065, %v1322
        %v1400 = vmul.f32 %v1070, %v1322
        %v1401 = vmul.f32 %v1075, %v1322
        %v1402 = vmul.f32 %v1080, %v1322
        %v1403 = vmul.f32 %v1085, %v1322
        %v1404 = vmul.f32 %v1090, %v1322
        %v1405 = vmul.f32 %v1095, %v1322
        %v1406 = vmul.f32 %v1100, %v1322
        %v1407 = vmul.f32 %v1105, %v1322
        %v1408 = vmul.f32 %v1110, %v1322
        %v1409 = vmul.f32 %v1115, %v1322
        %v1410 = vmul.f32 %v1120, %v1322
        %v1411 = vmul.f32 %v1125, %v1322
        %v1412 = vmul.f32 %v1130, %v1322
        %v1413 = vmul.f32 %v1135, %v1322
        %v1414 = vmul.f32 %v1140, %v1322
        %v1415 = vmul.f32 %v1145, %v1322
        %v1416 = vmul.f32 %v1150, %v1322
        %v1417 = vmul.f32 %v1155, %v1322
        %v1418 = vmul.f32 %v1160, %v1322
        %v1419 = vmul.f32 %v1165, %v1322
        %v1420 = vmul.f32 %v1170, %v1322
        %v1421 = vmul.f32 %v1175, %v1322
        %v1422 = vmul.f32 %v1180, %v1322
        %v1423 = vmul.f32 %v1185, %v1322
        %v1424 = vmul.f32 %v1190, %v1322
        %v1425 = vmul.f32 %v1195, %v1322
        %v1426 = vmul.f32 %v1200, %v1322
        %v1427 = vmul.f32 %v1205, %v1322
        %v1428 = vmul.f32 %v1210, %v1322
        %v1429 = vmul.f32 %v1215, %v1322
        %v1430 = vmul.f32 %v1220, %v1322
        %v1431 = vmul.f32 %v1225, %v1322
        %v1432 = vmul.f32 %v1230, %v1322
        %v1433 = vmul.f32 %v1235, %v1322
        %v1434 = vmul.f32 %v1240, %v1322
        %v1435 = vmul.f32 %v1245, %v1322
        %v1436 = vmul.f32 %v1250, %v1322
        %v1437 = vmul.f32 %v1255, %v1322
        %v1438 = vmul.f32 %v1260, %v1322
        %v1439 = vmul.f32 %v1265, %v1322
        %v1440 = vmul.f32 %v1270, %v1322
        %v1441 = vmul.f32 %v1275, %v1322
        %v1442 = vmul.f32 %v1280, %v1322
        %v1443 = vmul.f32 %v1285, %v1322
        %v1444 = vmul.f32 %v1290, %v1322
        %v1445 = vmul.f32 %v1295, %v1322
        %v1446 = vmul.f32 %v1300, %v1322
        %v1447 = vmul.f32 %v1305, %v1322
        %v1448 = vmul.f32 %v1310, %v1322
        %v1449 = vmul.f32 %v1315, %v1322
        %v1450 = vmul.f32 %v1320, %v1322
        %1451 = vset.pattern.permute.xlu0 1
        %1452 = vperm.xlu0 %1451, %v553
        %v1453 = vpop.permute.xlu0 %1452
        %1455 = vset.pattern.permute.xlu0 1
        %1456 = vperm.xlu0 %1455, %v554
        %v1457 = vpop.permute.xlu0 %1456
        %1459 = vset.pattern.permute.xlu0 1
        %1460 = vperm.xlu0 %1459, %v555
        %v1461 = vpop.permute.xlu0 %1460
        %1463 = vset.pattern.permute.xlu0 1
        %1464 = vperm.xlu0 %1463, %v556
        %v1465 = vpop.permute.xlu0 %1464
        %1467 = vset.pattern.permute.xlu0 1
        %1468 = vperm.xlu0 %1467, %v557
        %v1469 = vpop.permute.xlu0 %1468
        %1471 = vset.pattern.permute.xlu0 1
        %1472 = vperm.xlu0 %1471, %v558
        %v1473 = vpop.permute.xlu0 %1472
        %1475 = vset.pattern.permute.xlu0 1
        %1476 = vperm.xlu0 %1475, %v559
        %v1477 = vpop.permute.xlu0 %1476
        %1479 = vset.pattern.permute.xlu0 1
        %1480 = vperm.xlu0 %1479, %v560
        %v1481 = vpop.permute.xlu0 %1480
        %1483 = vset.pattern.permute.xlu0 1
        %1484 = vperm.xlu0 %1483, %v561
        %v1485 = vpop.permute.xlu0 %1484
        %1487 = vset.pattern.permute.xlu0 1
        %1488 = vperm.xlu0 %1487, %v562
        %v1489 = vpop.permute.xlu0 %1488
        %1491 = vset.pattern.permute.xlu0 1
        %1492 = vperm.xlu0 %1491, %v563
        %v1493 = vpop.permute.xlu0 %1492
        %1495 = vset.pattern.permute.xlu0 1
        %1496 = vperm.xlu0 %1495, %v564
        %v1497 = vpop.permute.xlu0 %1496
        %1499 = vset.pattern.permute.xlu0 1
        %1500 = vperm.xlu0 %1499, %v565
        %v1501 = vpop.permute.xlu0 %1500
        %1503 = vset.pattern.permute.xlu0 1
        %1504 = vperm.xlu0 %1503, %v566
        %v1505 = vpop.permute.xlu0 %1504
        %1507 = vset.pattern.permute.xlu0 1
        %1508 = vperm.xlu0 %1507, %v567
        %v1509 = vpop.permute.xlu0 %1508
        %1511 = vset.pattern.permute.xlu0 1
        %1512 = vperm.xlu0 %1511, %v568
        %v1513 = vpop.permute.xlu0 %1512
        %1515 = vset.pattern.permute.xlu0 1
        %1516 = vperm.xlu0 %1515, %v569
        %v1517 = vpop.permute.xlu0 %1516
        %1519 = vset.pattern.permute.xlu0 1
        %1520 = vperm.xlu0 %1519, %v570
        %v1521 = vpop.permute.xlu0 %1520
        %1523 = vset.pattern.permute.xlu0 1
        %1524 = vperm.xlu0 %1523, %v571
        %v1525 = vpop.permute.xlu0 %1524
        %1527 = vset.pattern.permute.xlu0 1
        %1528 = vperm.xlu0 %1527, %v572
        %v1529 = vpop.permute.xlu0 %1528
        %1531 = vset.pattern.permute.xlu0 1
        %1532 = vperm.xlu0 %1531, %v573
        %v1533 = vpop.permute.xlu0 %1532
        %1535 = vset.pattern.permute.xlu0 1
        %1536 = vperm.xlu0 %1535, %v574
        %v1537 = vpop.permute.xlu0 %1536
        %1539 = vset.pattern.permute.xlu0 1
        %1540 = vperm.xlu0 %1539, %v575
        %v1541 = vpop.permute.xlu0 %1540
        %1543 = vset.pattern.permute.xlu0 1
        %1544 = vperm.xlu0 %1543, %v576
        %v1545 = vpop.permute.xlu0 %1544
        %1547 = vset.pattern.permute.xlu0 1
        %1548 = vperm.xlu0 %1547, %v577
        %v1549 = vpop.permute.xlu0 %1548
        %1551 = vset.pattern.permute.xlu0 1
        %1552 = vperm.xlu0 %1551, %v578
        %v1553 = vpop.permute.xlu0 %1552
        %1555 = vset.pattern.permute.xlu0 1
        %1556 = vperm.xlu0 %1555, %v579
        %v1557 = vpop.permute.xlu0 %1556
        %1559 = vset.pattern.permute.xlu0 1
        %1560 = vperm.xlu0 %1559, %v580
        %v1561 = vpop.permute.xlu0 %1560
        %1563 = vset.pattern.permute.xlu0 1
        %1564 = vperm.xlu0 %1563, %v581
        %v1565 = vpop.permute.xlu0 %1564
        %1567 = vset.pattern.permute.xlu0 1
        %1568 = vperm.xlu0 %1567, %v582
        %v1569 = vpop.permute.xlu0 %1568
        %1571 = vset.pattern.permute.xlu0 1
        %1572 = vperm.xlu0 %1571, %v583
        %v1573 = vpop.permute.xlu0 %1572
        %1575 = vset.pattern.permute.xlu0 1
        %1576 = vperm.xlu0 %1575, %v584
        %v1577 = vpop.permute.xlu0 %1576
        %1579 = vset.pattern.permute.xlu0 1
        %1580 = vperm.xlu0 %1579, %v585
        %v1581 = vpop.permute.xlu0 %1580
        %1583 = vset.pattern.permute.xlu0 1
        %1584 = vperm.xlu0 %1583, %v586
        %v1585 = vpop.permute.xlu0 %1584
        %1587 = vset.pattern.permute.xlu0 1
        %1588 = vperm.xlu0 %1587, %v587
        %v1589 = vpop.permute.xlu0 %1588
        %1591 = vset.pattern.permute.xlu0 1
        %1592 = vperm.xlu0 %1591, %v588
        %v1593 = vpop.permute.xlu0 %1592
        %1595 = vset.pattern.permute.xlu0 1
        %1596 = vperm.xlu0 %1595, %v589
        %v1597 = vpop.permute.xlu0 %1596
        %1599 = vset.pattern.permute.xlu0 1
        %1600 = vperm.xlu0 %1599, %v590
        %v1601 = vpop.permute.xlu0 %1600
        %1603 = vset.pattern.permute.xlu0 1
        %1604 = vperm.xlu0 %1603, %v591
        %v1605 = vpop.permute.xlu0 %1604
        %1607 = vset.pattern.permute.xlu0 1
        %1608 = vperm.xlu0 %1607, %v592
        %v1609 = vpop.permute.xlu0 %1608
        %1611 = vset.pattern.permute.xlu0 1
        %1612 = vperm.xlu0 %1611, %v593
        %v1613 = vpop.permute.xlu0 %1612
        %1615 = vset.pattern.permute.xlu0 1
        %1616 = vperm.xlu0 %1615, %v594
        %v1617 = vpop.permute.xlu0 %1616
        %1619 = vset.pattern.permute.xlu0 1
        %1620 = vperm.xlu0 %1619, %v595
        %v1621 = vpop.permute.xlu0 %1620
        %1623 = vset.pattern.permute.xlu0 1
        %1624 = vperm.xlu0 %1623, %v596
        %v1625 = vpop.permute.xlu0 %1624
        %1627 = vset.pattern.permute.xlu0 1
        %1628 = vperm.xlu0 %1627, %v597
        %v1629 = vpop.permute.xlu0 %1628
        %1631 = vset.pattern.permute.xlu0 1
        %1632 = vperm.xlu0 %1631, %v598
        %v1633 = vpop.permute.xlu0 %1632
        %1635 = vset.pattern.permute.xlu0 1
        %1636 = vperm.xlu0 %1635, %v599
        %v1637 = vpop.permute.xlu0 %1636
        %1639 = vset.pattern.permute.xlu0 1
        %1640 = vperm.xlu0 %1639, %v600
        %v1641 = vpop.permute.xlu0 %1640
        %1643 = vset.pattern.permute.xlu0 1
        %1644 = vperm.xlu0 %1643, %v601
        %v1645 = vpop.permute.xlu0 %1644
        %1647 = vset.pattern.permute.xlu0 1
        %1648 = vperm.xlu0 %1647, %v602
        %v1649 = vpop.permute.xlu0 %1648
        %1651 = vset.pattern.permute.xlu0 1
        %1652 = vperm.xlu0 %1651, %v603
        %v1653 = vpop.permute.xlu0 %1652
        %1655 = vset.pattern.permute.xlu0 1
        %1656 = vperm.xlu0 %1655, %v604
        %v1657 = vpop.permute.xlu0 %1656
        %1659 = vset.pattern.permute.xlu0 1
        %1660 = vperm.xlu0 %1659, %v605
        %v1661 = vpop.permute.xlu0 %1660
        %1663 = vset.pattern.permute.xlu0 1
        %1664 = vperm.xlu0 %1663, %v606
        %v1665 = vpop.permute.xlu0 %1664
        %1667 = vset.pattern.permute.xlu0 1
        %1668 = vperm.xlu0 %1667, %v607
        %v1669 = vpop.permute.xlu0 %1668
        %1671 = vset.pattern.permute.xlu0 1
        %1672 = vperm.xlu0 %1671, %v608
        %v1673 = vpop.permute.xlu0 %1672
        %1675 = vset.pattern.permute.xlu0 1
        %1676 = vperm.xlu0 %1675, %v609
        %v1677 = vpop.permute.xlu0 %1676
        %1679 = vset.pattern.permute.xlu0 1
        %1680 = vperm.xlu0 %1679, %v610
        %v1681 = vpop.permute.xlu0 %1680
        %1683 = vset.pattern.permute.xlu0 1
        %1684 = vperm.xlu0 %1683, %v611
        %v1685 = vpop.permute.xlu0 %1684
        %1687 = vset.pattern.permute.xlu0 1
        %1688 = vperm.xlu0 %1687, %v612
        %v1689 = vpop.permute.xlu0 %1688
        %1691 = vset.pattern.permute.xlu0 1
        %1692 = vperm.xlu0 %1691, %v613
        %v1693 = vpop.permute.xlu0 %1692
        %1695 = vset.pattern.permute.xlu0 1
        %1696 = vperm.xlu0 %1695, %v614
        %v1697 = vpop.permute.xlu0 %1696
        %1699 = vset.pattern.permute.xlu0 1
        %1700 = vperm.xlu0 %1699, %v615
        %v1701 = vpop.permute.xlu0 %1700
        %1703 = vset.pattern.permute.xlu0 1
        %1704 = vperm.xlu0 %1703, %v616
        %v1705 = vpop.permute.xlu0 %1704
        %1707 = vset.pattern.permute.xlu0 1
        %1708 = vperm.xlu0 %1707, %v617
        %v1709 = vpop.permute.xlu0 %1708
        %1711 = vset.pattern.permute.xlu0 1
        %1712 = vperm.xlu0 %1711, %v618
        %v1713 = vpop.permute.xlu0 %1712
        %1715 = vset.pattern.permute.xlu0 1
        %1716 = vperm.xlu0 %1715, %v619
        %v1717 = vpop.permute.xlu0 %1716
        %1719 = vset.pattern.permute.xlu0 1
        %1720 = vperm.xlu0 %1719, %v620
        %v1721 = vpop.permute.xlu0 %1720
        %1723 = vset.pattern.permute.xlu0 1
        %1724 = vperm.xlu0 %1723, %v621
        %v1725 = vpop.permute.xlu0 %1724
        %1727 = vset.pattern.permute.xlu0 1
        %1728 = vperm.xlu0 %1727, %v622
        %v1729 = vpop.permute.xlu0 %1728
        %1731 = vset.pattern.permute.xlu0 1
        %1732 = vperm.xlu0 %1731, %v623
        %v1733 = vpop.permute.xlu0 %1732
        %1735 = vset.pattern.permute.xlu0 1
        %1736 = vperm.xlu0 %1735, %v624
        %v1737 = vpop.permute.xlu0 %1736
        %1739 = vset.pattern.permute.xlu0 1
        %1740 = vperm.xlu0 %1739, %v625
        %v1741 = vpop.permute.xlu0 %1740
        %1743 = vset.pattern.permute.xlu0 1
        %1744 = vperm.xlu0 %1743, %v626
        %v1745 = vpop.permute.xlu0 %1744
        %1747 = vset.pattern.permute.xlu0 1
        %1748 = vperm.xlu0 %1747, %v627
        %v1749 = vpop.permute.xlu0 %1748
        %1751 = vset.pattern.permute.xlu0 1
        %1752 = vperm.xlu0 %1751, %v628
        %v1753 = vpop.permute.xlu0 %1752
        %1755 = vset.pattern.permute.xlu0 1
        %1756 = vperm.xlu0 %1755, %v629
        %v1757 = vpop.permute.xlu0 %1756
        %1759 = vset.pattern.permute.xlu0 1
        %1760 = vperm.xlu0 %1759, %v630
        %v1761 = vpop.permute.xlu0 %1760
        %1763 = vset.pattern.permute.xlu0 1
        %1764 = vperm.xlu0 %1763, %v631
        %v1765 = vpop.permute.xlu0 %1764
        %1767 = vset.pattern.permute.xlu0 1
        %1768 = vperm.xlu0 %1767, %v632
        %v1769 = vpop.permute.xlu0 %1768
        %1771 = vset.pattern.permute.xlu0 1
        %1772 = vperm.xlu0 %1771, %v633
        %v1773 = vpop.permute.xlu0 %1772
        %1775 = vset.pattern.permute.xlu0 1
        %1776 = vperm.xlu0 %1775, %v634
        %v1777 = vpop.permute.xlu0 %1776
        %1779 = vset.pattern.permute.xlu0 1
        %1780 = vperm.xlu0 %1779, %v635
        %v1781 = vpop.permute.xlu0 %1780
        %1783 = vset.pattern.permute.xlu0 1
        %1784 = vperm.xlu0 %1783, %v636
        %v1785 = vpop.permute.xlu0 %1784
        %1787 = vset.pattern.permute.xlu0 1
        %1788 = vperm.xlu0 %1787, %v637
        %v1789 = vpop.permute.xlu0 %1788
        %1791 = vset.pattern.permute.xlu0 1
        %1792 = vperm.xlu0 %1791, %v638
        %v1793 = vpop.permute.xlu0 %1792
        %1795 = vset.pattern.permute.xlu0 1
        %1796 = vperm.xlu0 %1795, %v639
        %v1797 = vpop.permute.xlu0 %1796
        %1799 = vset.pattern.permute.xlu0 1
        %1800 = vperm.xlu0 %1799, %v640
        %v1801 = vpop.permute.xlu0 %1800
        %1803 = vset.pattern.permute.xlu0 1
        %1804 = vperm.xlu0 %1803, %v641
        %v1805 = vpop.permute.xlu0 %1804
        %1807 = vset.pattern.permute.xlu0 1
        %1808 = vperm.xlu0 %1807, %v642
        %v1809 = vpop.permute.xlu0 %1808
        %1811 = vset.pattern.permute.xlu0 1
        %1812 = vperm.xlu0 %1811, %v643
        %v1813 = vpop.permute.xlu0 %1812
        %1815 = vset.pattern.permute.xlu0 1
        %1816 = vperm.xlu0 %1815, %v644
        %v1817 = vpop.permute.xlu0 %1816
        %1819 = vset.pattern.permute.xlu0 1
        %1820 = vperm.xlu0 %1819, %v645
        %v1821 = vpop.permute.xlu0 %1820
        %1823 = vset.pattern.permute.xlu0 1
        %1824 = vperm.xlu0 %1823, %v646
        %v1825 = vpop.permute.xlu0 %1824
        %1827 = vset.pattern.permute.xlu0 1
        %1828 = vperm.xlu0 %1827, %v647
        %v1829 = vpop.permute.xlu0 %1828
        %1831 = vset.pattern.permute.xlu0 1
        %1832 = vperm.xlu0 %1831, %v648
        %v1833 = vpop.permute.xlu0 %1832
        %1835 = vset.pattern.permute.xlu0 1
        %1836 = vperm.xlu0 %1835, %v649
        %v1837 = vpop.permute.xlu0 %1836
        %1839 = vset.pattern.permute.xlu0 1
        %1840 = vperm.xlu0 %1839, %v650
        %v1841 = vpop.permute.xlu0 %1840
        %1843 = vset.pattern.permute.xlu0 1
        %1844 = vperm.xlu0 %1843, %v651
        %v1845 = vpop.permute.xlu0 %1844
        %1847 = vset.pattern.permute.xlu0 1
        %1848 = vperm.xlu0 %1847, %v652
        %v1849 = vpop.permute.xlu0 %1848
        %1851 = vset.pattern.permute.xlu0 1
        %1852 = vperm.xlu0 %1851, %v653
        %v1853 = vpop.permute.xlu0 %1852
        %1855 = vset.pattern.permute.xlu0 1
        %1856 = vperm.xlu0 %1855, %v654
        %v1857 = vpop.permute.xlu0 %1856
        %1859 = vset.pattern.permute.xlu0 1
        %1860 = vperm.xlu0 %1859, %v655
        %v1861 = vpop.permute.xlu0 %1860
        %1863 = vset.pattern.permute.xlu0 1
        %1864 = vperm.xlu0 %1863, %v656
        %v1865 = vpop.permute.xlu0 %1864
        %1867 = vset.pattern.permute.xlu0 1
        %1868 = vperm.xlu0 %1867, %v657
        %v1869 = vpop.permute.xlu0 %1868
        %1871 = vset.pattern.permute.xlu0 1
        %1872 = vperm.xlu0 %1871, %v658
        %v1873 = vpop.permute.xlu0 %1872
        %1875 = vset.pattern.permute.xlu0 1
        %1876 = vperm.xlu0 %1875, %v659
        %v1877 = vpop.permute.xlu0 %1876
        %1879 = vset.pattern.permute.xlu0 1
        %1880 = vperm.xlu0 %1879, %v660
        %v1881 = vpop.permute.xlu0 %1880
        %1883 = vset.pattern.permute.xlu0 1
        %1884 = vperm.xlu0 %1883, %v661
        %v1885 = vpop.permute.xlu0 %1884
        %1887 = vset.pattern.permute.xlu0 1
        %1888 = vperm.xlu0 %1887, %v662
        %v1889 = vpop.permute.xlu0 %1888
        %1891 = vset.pattern.permute.xlu0 1
        %1892 = vperm.xlu0 %1891, %v663
        %v1893 = vpop.permute.xlu0 %1892
        %1895 = vset.pattern.permute.xlu0 1
        %1896 = vperm.xlu0 %1895, %v664
        %v1897 = vpop.permute.xlu0 %1896
        %1899 = vset.pattern.permute.xlu0 1
        %1900 = vperm.xlu0 %1899, %v665
        %v1901 = vpop.permute.xlu0 %1900
        %1903 = vset.pattern.permute.xlu0 1
        %1904 = vperm.xlu0 %1903, %v666
        %v1905 = vpop.permute.xlu0 %1904
        %1907 = vset.pattern.permute.xlu0 1
        %1908 = vperm.xlu0 %1907, %v667
        %v1909 = vpop.permute.xlu0 %1908
        %1911 = vset.pattern.permute.xlu0 1
        %1912 = vperm.xlu0 %1911, %v668
        %v1913 = vpop.permute.xlu0 %1912
        %1915 = vset.pattern.permute.xlu0 1
        %1916 = vperm.xlu0 %1915, %v669
        %v1917 = vpop.permute.xlu0 %1916
        %1919 = vset.pattern.permute.xlu0 1
        %1920 = vperm.xlu0 %1919, %v670
        %v1921 = vpop.permute.xlu0 %1920
        %1923 = vset.pattern.permute.xlu0 1
        %1924 = vperm.xlu0 %1923, %v671
        %v1925 = vpop.permute.xlu0 %1924
        %1927 = vset.pattern.permute.xlu0 1
        %1928 = vperm.xlu0 %1927, %v672
        %v1929 = vpop.permute.xlu0 %1928
        %1931 = vset.pattern.permute.xlu0 1
        %1932 = vperm.xlu0 %1931, %v673
        %v1933 = vpop.permute.xlu0 %1932
        %1935 = vset.pattern.permute.xlu0 1
        %1936 = vperm.xlu0 %1935, %v674
        %v1937 = vpop.permute.xlu0 %1936
        %1939 = vset.pattern.permute.xlu0 1
        %1940 = vperm.xlu0 %1939, %v675
        %v1941 = vpop.permute.xlu0 %1940
        %1943 = vset.pattern.permute.xlu0 1
        %1944 = vperm.xlu0 %1943, %v676
        %v1945 = vpop.permute.xlu0 %1944
        %1947 = vset.pattern.permute.xlu0 1
        %1948 = vperm.xlu0 %1947, %v677
        %v1949 = vpop.permute.xlu0 %1948
        %1951 = vset.pattern.permute.xlu0 1
        %1952 = vperm.xlu0 %1951, %v678
        %v1953 = vpop.permute.xlu0 %1952
        %1955 = vset.pattern.permute.xlu0 1
        %1956 = vperm.xlu0 %1955, %v679
        %v1957 = vpop.permute.xlu0 %1956
        %1959 = vset.pattern.permute.xlu0 1
        %1960 = vperm.xlu0 %1959, %v680
        %v1961 = vpop.permute.xlu0 %1960
        %v1963 = vperm.slane %v681, 1
        %v1964 = vmul.f32 %v1453, %v1963
        %v1965 = vmul.f32 %v1457, %v1963
        %v1966 = vmul.f32 %v1461, %v1963
        %v1967 = vmul.f32 %v1465, %v1963
        %v1968 = vmul.f32 %v1469, %v1963
        %v1969 = vmul.f32 %v1473, %v1963
        %v1970 = vmul.f32 %v1477, %v1963
        %v1971 = vmul.f32 %v1481, %v1963
        %v1972 = vmul.f32 %v1485, %v1963
        %v1973 = vmul.f32 %v1489, %v1963
        %v1974 = vmul.f32 %v1493, %v1963
        %v1975 = vmul.f32 %v1497, %v1963
        %v1976 = vmul.f32 %v1501, %v1963
        %v1977 = vmul.f32 %v1505, %v1963
        %v1978 = vmul.f32 %v1509, %v1963
        %v1979 = vmul.f32 %v1513, %v1963
        %v1980 = vmul.f32 %v1517, %v1963
        %v1981 = vmul.f32 %v1521, %v1963
        %v1982 = vmul.f32 %v1525, %v1963
        %v1983 = vmul.f32 %v1529, %v1963
        %v1984 = vmul.f32 %v1533, %v1963
        %v1985 = vmul.f32 %v1537, %v1963
        %v1986 = vmul.f32 %v1541, %v1963
        %v1987 = vmul.f32 %v1545, %v1963
        %v1988 = vmul.f32 %v1549, %v1963
        %v1989 = vmul.f32 %v1553, %v1963
        %v1990 = vmul.f32 %v1557, %v1963
        %v1991 = vmul.f32 %v1561, %v1963
        %v1992 = vmul.f32 %v1565, %v1963
        %v1993 = vmul.f32 %v1569, %v1963
        %v1994 = vmul.f32 %v1573, %v1963
        %v1995 = vmul.f32 %v1577, %v1963
        %v1996 = vmul.f32 %v1581, %v1963
        %v1997 = vmul.f32 %v1585, %v1963
        %v1998 = vmul.f32 %v1589, %v1963
        %v1999 = vmul.f32 %v1593, %v1963
        %v2000 = vmul.f32 %v1597, %v1963
        %v2001 = vmul.f32 %v1601, %v1963
        %v2002 = vmul.f32 %v1605, %v1963
        %v2003 = vmul.f32 %v1609, %v1963
        %v2004 = vmul.f32 %v1613, %v1963
        %v2005 = vmul.f32 %v1617, %v1963
        %v2006 = vmul.f32 %v1621, %v1963
        %v2007 = vmul.f32 %v1625, %v1963
        %v2008 = vmul.f32 %v1629, %v1963
        %v2009 = vmul.f32 %v1633, %v1963
        %v2010 = vmul.f32 %v1637, %v1963
        %v2011 = vmul.f32 %v1641, %v1963
        %v2012 = vmul.f32 %v1645, %v1963
        %v2013 = vmul.f32 %v1649, %v1963
        %v2014 = vmul.f32 %v1653, %v1963
        %v2015 = vmul.f32 %v1657, %v1963
        %v2016 = vmul.f32 %v1661, %v1963
        %v2017 = vmul.f32 %v1665, %v1963
        %v2018 = vmul.f32 %v1669, %v1963
        %v2019 = vmul.f32 %v1673, %v1963
        %v2020 = vmul.f32 %v1677, %v1963
        %v2021 = vmul.f32 %v1681, %v1963
        %v2022 = vmul.f32 %v1685, %v1963
        %v2023 = vmul.f32 %v1689, %v1963
        %v2024 = vmul.f32 %v1693, %v1963
        %v2025 = vmul.f32 %v1697, %v1963
        %v2026 = vmul.f32 %v1701, %v1963
        %v2027 = vmul.f32 %v1705, %v1963
        %v2028 = vmul.f32 %v1709, %v1963
        %v2029 = vmul.f32 %v1713, %v1963
        %v2030 = vmul.f32 %v1717, %v1963
        %v2031 = vmul.f32 %v1721, %v1963
        %v2032 = vmul.f32 %v1725, %v1963
        %v2033 = vmul.f32 %v1729, %v1963
        %v2034 = vmul.f32 %v1733, %v1963
        %v2035 = vmul.f32 %v1737, %v1963
        %v2036 = vmul.f32 %v1741, %v1963
        %v2037 = vmul.f32 %v1745, %v1963
        %v2038 = vmul.f32 %v1749, %v1963
        %v2039 = vmul.f32 %v1753, %v1963
        %v2040 = vmul.f32 %v1757, %v1963
        %v2041 = vmul.f32 %v1761, %v1963
        %v2042 = vmul.f32 %v1765, %v1963
        %v2043 = vmul.f32 %v1769, %v1963
        %v2044 = vmul.f32 %v1773, %v1963
        %v2045 = vmul.f32 %v1777, %v1963
        %v2046 = vmul.f32 %v1781, %v1963
        %v2047 = vmul.f32 %v1785, %v1963
        %v2048 = vmul.f32 %v1789, %v1963
        %v2049 = vmul.f32 %v1793, %v1963
        %v2050 = vmul.f32 %v1797, %v1963
        %v2051 = vmul.f32 %v1801, %v1963
        %v2052 = vmul.f32 %v1805, %v1963
        %v2053 = vmul.f32 %v1809, %v1963
        %v2054 = vmul.f32 %v1813, %v1963
        %v2055 = vmul.f32 %v1817, %v1963
        %v2056 = vmul.f32 %v1821, %v1963
        %v2057 = vmul.f32 %v1825, %v1963
        %v2058 = vmul.f32 %v1829, %v1963
        %v2059 = vmul.f32 %v1833, %v1963
        %v2060 = vmul.f32 %v1837, %v1963
        %v2061 = vmul.f32 %v1841, %v1963
        %v2062 = vmul.f32 %v1845, %v1963
        %v2063 = vmul.f32 %v1849, %v1963
        %v2064 = vmul.f32 %v1853, %v1963
        %v2065 = vmul.f32 %v1857, %v1963
        %v2066 = vmul.f32 %v1861, %v1963
        %v2067 = vmul.f32 %v1865, %v1963
        %v2068 = vmul.f32 %v1869, %v1963
        %v2069 = vmul.f32 %v1873, %v1963
        %v2070 = vmul.f32 %v1877, %v1963
        %v2071 = vmul.f32 %v1881, %v1963
        %v2072 = vmul.f32 %v1885, %v1963
        %v2073 = vmul.f32 %v1889, %v1963
        %v2074 = vmul.f32 %v1893, %v1963
        %v2075 = vmul.f32 %v1897, %v1963
        %v2076 = vmul.f32 %v1901, %v1963
        %v2077 = vmul.f32 %v1905, %v1963
        %v2078 = vmul.f32 %v1909, %v1963
        %v2079 = vmul.f32 %v1913, %v1963
        %v2080 = vmul.f32 %v1917, %v1963
        %v2081 = vmul.f32 %v1921, %v1963
        %v2082 = vmul.f32 %v1925, %v1963
        %v2083 = vmul.f32 %v1929, %v1963
        %v2084 = vmul.f32 %v1933, %v1963
        %v2085 = vmul.f32 %v1937, %v1963
        %v2086 = vmul.f32 %v1941, %v1963
        %v2087 = vmul.f32 %v1945, %v1963
        %v2088 = vmul.f32 %v1949, %v1963
        %v2089 = vmul.f32 %v1953, %v1963
        %v2090 = vmul.f32 %v1957, %v1963
        %v2091 = vmul.f32 %v1961, %v1963
        %v2092 = vadd.f32 %v1323, %v1964
        %v2093 = vadd.f32 %v1324, %v1965
        %v2094 = vadd.f32 %v1325, %v1966
        %v2095 = vadd.f32 %v1326, %v1967
        %v2096 = vadd.f32 %v1327, %v1968
        %v2097 = vadd.f32 %v1328, %v1969
        %v2098 = vadd.f32 %v1329, %v1970
        %v2099 = vadd.f32 %v1330, %v1971
        %v2100 = vadd.f32 %v1331, %v1972
        %v2101 = vadd.f32 %v1332, %v1973
        %v2102 = vadd.f32 %v1333, %v1974
        %v2103 = vadd.f32 %v1334, %v1975
        %v2104 = vadd.f32 %v1335, %v1976
        %v2105 = vadd.f32 %v1336, %v1977
        %v2106 = vadd.f32 %v1337, %v1978
        %v2107 = vadd.f32 %v1338, %v1979
        %v2108 = vadd.f32 %v1339, %v1980
        %v2109 = vadd.f32 %v1340, %v1981
        %v2110 = vadd.f32 %v1341, %v1982
        %v2111 = vadd.f32 %v1342, %v1983
        %v2112 = vadd.f32 %v1343, %v1984
        %v2113 = vadd.f32 %v1344, %v1985
        %v2114 = vadd.f32 %v1345, %v1986
        %v2115 = vadd.f32 %v1346, %v1987
        %v2116 = vadd.f32 %v1347, %v1988
        %v2117 = vadd.f32 %v1348, %v1989
        %v2118 = vadd.f32 %v1349, %v1990
        %v2119 = vadd.f32 %v1350, %v1991
        %v2120 = vadd.f32 %v1351, %v1992
        %v2121 = vadd.f32 %v1352, %v1993
        %v2122 = vadd.f32 %v1353, %v1994
        %v2123 = vadd.f32 %v1354, %v1995
        %v2124 = vadd.f32 %v1355, %v1996
        %v2125 = vadd.f32 %v1356, %v1997
        %v2126 = vadd.f32 %v1357, %v1998
        %v2127 = vadd.f32 %v1358, %v1999
        %v2128 = vadd.f32 %v1359, %v2000
        %v2129 = vadd.f32 %v1360, %v2001
        %v2130 = vadd.f32 %v1361, %v2002
        %v2131 = vadd.f32 %v1362, %v2003
        %v2132 = vadd.f32 %v1363, %v2004
        %v2133 = vadd.f32 %v1364, %v2005
        %v2134 = vadd.f32 %v1365, %v2006
        %v2135 = vadd.f32 %v1366, %v2007
        %v2136 = vadd.f32 %v1367, %v2008
        %v2137 = vadd.f32 %v1368, %v2009
        %v2138 = vadd.f32 %v1369, %v2010
        %v2139 = vadd.f32 %v1370, %v2011
        %v2140 = vadd.f32 %v1371, %v2012
        %v2141 = vadd.f32 %v1372, %v2013
        %v2142 = vadd.f32 %v1373, %v2014
        %v2143 = vadd.f32 %v1374, %v2015
        %v2144 = vadd.f32 %v1375, %v2016
        %v2145 = vadd.f32 %v1376, %v2017
        %v2146 = vadd.f32 %v1377, %v2018
        %v2147 = vadd.f32 %v1378, %v2019
        %v2148 = vadd.f32 %v1379, %v2020
        %v2149 = vadd.f32 %v1380, %v2021
        %v2150 = vadd.f32 %v1381, %v2022
        %v2151 = vadd.f32 %v1382, %v2023
        %v2152 = vadd.f32 %v1383, %v2024
        %v2153 = vadd.f32 %v1384, %v2025
        %v2154 = vadd.f32 %v1385, %v2026
        %v2155 = vadd.f32 %v1386, %v2027
        %v2156 = vadd.f32 %v1387, %v2028
        %v2157 = vadd.f32 %v1388, %v2029
        %v2158 = vadd.f32 %v1389, %v2030
        %v2159 = vadd.f32 %v1390, %v2031
        %v2160 = vadd.f32 %v1391, %v2032
        %v2161 = vadd.f32 %v1392, %v2033
        %v2162 = vadd.f32 %v1393, %v2034
        %v2163 = vadd.f32 %v1394, %v2035
        %v2164 = vadd.f32 %v1395, %v2036
        %v2165 = vadd.f32 %v1396, %v2037
        %v2166 = vadd.f32 %v1397, %v2038
        %v2167 = vadd.f32 %v1398, %v2039
        %v2168 = vadd.f32 %v1399, %v2040
        %v2169 = vadd.f32 %v1400, %v2041
        %v2170 = vadd.f32 %v1401, %v2042
        %v2171 = vadd.f32 %v1402, %v2043
        %v2172 = vadd.f32 %v1403, %v2044
        %v2173 = vadd.f32 %v1404, %v2045
        %v2174 = vadd.f32 %v1405, %v2046
        %v2175 = vadd.f32 %v1406, %v2047
        %v2176 = vadd.f32 %v1407, %v2048
        %v2177 = vadd.f32 %v1408, %v2049
        %v2178 = vadd.f32 %v1409, %v2050
        %v2179 = vadd.f32 %v1410, %v2051
        %v2180 = vadd.f32 %v1411, %v2052
        %v2181 = vadd.f32 %v1412, %v2053
        %v2182 = vadd.f32 %v1413, %v2054
        %v2183 = vadd.f32 %v1414, %v2055
        %v2184 = vadd.f32 %v1415, %v2056
        %v2185 = vadd.f32 %v1416, %v2057
        %v2186 = vadd.f32 %v1417, %v2058
        %v2187 = vadd.f32 %v1418, %v2059
        %v2188 = vadd.f32 %v1419, %v2060
        %v2189 = vadd.f32 %v1420, %v2061
        %v2190 = vadd.f32 %v1421, %v2062
        %v2191 = vadd.f32 %v1422, %v2063
        %v2192 = vadd.f32 %v1423, %v2064
        %v2193 = vadd.f32 %v1424, %v2065
        %v2194 = vadd.f32 %v1425, %v2066
        %v2195 = vadd.f32 %v1426, %v2067
        %v2196 = vadd.f32 %v1427, %v2068
        %v2197 = vadd.f32 %v1428, %v2069
        %v2198 = vadd.f32 %v1429, %v2070
        %v2199 = vadd.f32 %v1430, %v2071
        %v2200 = vadd.f32 %v1431, %v2072
        %v2201 = vadd.f32 %v1432, %v2073
        %v2202 = vadd.f32 %v1433, %v2074
        %v2203 = vadd.f32 %v1434, %v2075
        %v2204 = vadd.f32 %v1435, %v2076
        %v2205 = vadd.f32 %v1436, %v2077
        %v2206 = vadd.f32 %v1437, %v2078
        %v2207 = vadd.f32 %v1438, %v2079
        %v2208 = vadd.f32 %v1439, %v2080
        %v2209 = vadd.f32 %v1440, %v2081
        %v2210 = vadd.f32 %v1441, %v2082
        %v2211 = vadd.f32 %v1442, %v2083
        %v2212 = vadd.f32 %v1443, %v2084
        %v2213 = vadd.f32 %v1444, %v2085
        %v2214 = vadd.f32 %v1445, %v2086
        %v2215 = vadd.f32 %v1446, %v2087
        %v2216 = vadd.f32 %v1447, %v2088
        %v2217 = vadd.f32 %v1448, %v2089
        %v2218 = vadd.f32 %v1449, %v2090
        %v2219 = vadd.f32 %v1450, %v2091
        %2220 = vset.pattern.permute.xlu0 2
        %2221 = vperm.xlu0 %2220, %v553
        %v2222 = vpop.permute.xlu0 %2221
        %2224 = vset.pattern.permute.xlu0 2
        %2225 = vperm.xlu0 %2224, %v554
        %v2226 = vpop.permute.xlu0 %2225
        %2228 = vset.pattern.permute.xlu0 2
        %2229 = vperm.xlu0 %2228, %v555
        %v2230 = vpop.permute.xlu0 %2229
        %2232 = vset.pattern.permute.xlu0 2
        %2233 = vperm.xlu0 %2232, %v556
        %v2234 = vpop.permute.xlu0 %2233
        %2236 = vset.pattern.permute.xlu0 2
        %2237 = vperm.xlu0 %2236, %v557
        %v2238 = vpop.permute.xlu0 %2237
        %2240 = vset.pattern.permute.xlu0 2
        %2241 = vperm.xlu0 %2240, %v558
        %v2242 = vpop.permute.xlu0 %2241
        %2244 = vset.pattern.permute.xlu0 2
        %2245 = vperm.xlu0 %2244, %v559
        %v2246 = vpop.permute.xlu0 %2245
        %2248 = vset.pattern.permute.xlu0 2
        %2249 = vperm.xlu0 %2248, %v560
        %v2250 = vpop.permute.xlu0 %2249
        %2252 = vset.pattern.permute.xlu0 2
        %2253 = vperm.xlu0 %2252, %v561
        %v2254 = vpop.permute.xlu0 %2253
        %2256 = vset.pattern.permute.xlu0 2
        %2257 = vperm.xlu0 %2256, %v562
        %v2258 = vpop.permute.xlu0 %2257
        %2260 = vset.pattern.permute.xlu0 2
        %2261 = vperm.xlu0 %2260, %v563
        %v2262 = vpop.permute.xlu0 %2261
        %2264 = vset.pattern.permute.xlu0 2
        %2265 = vperm.xlu0 %2264, %v564
        %v2266 = vpop.permute.xlu0 %2265
        %2268 = vset.pattern.permute.xlu0 2
        %2269 = vperm.xlu0 %2268, %v565
        %v2270 = vpop.permute.xlu0 %2269
        %2272 = vset.pattern.permute.xlu0 2
        %2273 = vperm.xlu0 %2272, %v566
        %v2274 = vpop.permute.xlu0 %2273
        %2276 = vset.pattern.permute.xlu0 2
        %2277 = vperm.xlu0 %2276, %v567
        %v2278 = vpop.permute.xlu0 %2277
        %2280 = vset.pattern.permute.xlu0 2
        %2281 = vperm.xlu0 %2280, %v568
        %v2282 = vpop.permute.xlu0 %2281
        %2284 = vset.pattern.permute.xlu0 2
        %2285 = vperm.xlu0 %2284, %v569
        %v2286 = vpop.permute.xlu0 %2285
        %2288 = vset.pattern.permute.xlu0 2
        %2289 = vperm.xlu0 %2288, %v570
        %v2290 = vpop.permute.xlu0 %2289
        %2292 = vset.pattern.permute.xlu0 2
        %2293 = vperm.xlu0 %2292, %v571
        %v2294 = vpop.permute.xlu0 %2293
        %2296 = vset.pattern.permute.xlu0 2
        %2297 = vperm.xlu0 %2296, %v572
        %v2298 = vpop.permute.xlu0 %2297
        %2300 = vset.pattern.permute.xlu0 2
        %2301 = vperm.xlu0 %2300, %v573
        %v2302 = vpop.permute.xlu0 %2301
        %2304 = vset.pattern.permute.xlu0 2
        %2305 = vperm.xlu0 %2304, %v574
        %v2306 = vpop.permute.xlu0 %2305
        %2308 = vset.pattern.permute.xlu0 2
        %2309 = vperm.xlu0 %2308, %v575
        %v2310 = vpop.permute.xlu0 %2309
        %2312 = vset.pattern.permute.xlu0 2
        %2313 = vperm.xlu0 %2312, %v576
        %v2314 = vpop.permute.xlu0 %2313
        %2316 = vset.pattern.permute.xlu0 2
        %2317 = vperm.xlu0 %2316, %v577
        %v2318 = vpop.permute.xlu0 %2317
        %2320 = vset.pattern.permute.xlu0 2
        %2321 = vperm.xlu0 %2320, %v578
        %v2322 = vpop.permute.xlu0 %2321
        %2324 = vset.pattern.permute.xlu0 2
        %2325 = vperm.xlu0 %2324, %v579
        %v2326 = vpop.permute.xlu0 %2325
        %2328 = vset.pattern.permute.xlu0 2
        %2329 = vperm.xlu0 %2328, %v580
        %v2330 = vpop.permute.xlu0 %2329
        %2332 = vset.pattern.permute.xlu0 2
        %2333 = vperm.xlu0 %2332, %v581
        %v2334 = vpop.permute.xlu0 %2333
        %2336 = vset.pattern.permute.xlu0 2
        %2337 = vperm.xlu0 %2336, %v582
        %v2338 = vpop.permute.xlu0 %2337
        %2340 = vset.pattern.permute.xlu0 2
        %2341 = vperm.xlu0 %2340, %v583
        %v2342 = vpop.permute.xlu0 %2341
        %2344 = vset.pattern.permute.xlu0 2
        %2345 = vperm.xlu0 %2344, %v584
        %v2346 = vpop.permute.xlu0 %2345
        %2348 = vset.pattern.permute.xlu0 2
        %2349 = vperm.xlu0 %2348, %v585
        %v2350 = vpop.permute.xlu0 %2349
        %2352 = vset.pattern.permute.xlu0 2
        %2353 = vperm.xlu0 %2352, %v586
        %v2354 = vpop.permute.xlu0 %2353
        %2356 = vset.pattern.permute.xlu0 2
        %2357 = vperm.xlu0 %2356, %v587
        %v2358 = vpop.permute.xlu0 %2357
        %2360 = vset.pattern.permute.xlu0 2
        %2361 = vperm.xlu0 %2360, %v588
        %v2362 = vpop.permute.xlu0 %2361
        %2364 = vset.pattern.permute.xlu0 2
        %2365 = vperm.xlu0 %2364, %v589
        %v2366 = vpop.permute.xlu0 %2365
        %2368 = vset.pattern.permute.xlu0 2
        %2369 = vperm.xlu0 %2368, %v590
        %v2370 = vpop.permute.xlu0 %2369
        %2372 = vset.pattern.permute.xlu0 2
        %2373 = vperm.xlu0 %2372, %v591
        %v2374 = vpop.permute.xlu0 %2373
        %2376 = vset.pattern.permute.xlu0 2
        %2377 = vperm.xlu0 %2376, %v592
        %v2378 = vpop.permute.xlu0 %2377
        %2380 = vset.pattern.permute.xlu0 2
        %2381 = vperm.xlu0 %2380, %v593
        %v2382 = vpop.permute.xlu0 %2381
        %2384 = vset.pattern.permute.xlu0 2
        %2385 = vperm.xlu0 %2384, %v594
        %v2386 = vpop.permute.xlu0 %2385
        %2388 = vset.pattern.permute.xlu0 2
        %2389 = vperm.xlu0 %2388, %v595
        %v2390 = vpop.permute.xlu0 %2389
        %2392 = vset.pattern.permute.xlu0 2
        %2393 = vperm.xlu0 %2392, %v596
        %v2394 = vpop.permute.xlu0 %2393
        %2396 = vset.pattern.permute.xlu0 2
        %2397 = vperm.xlu0 %2396, %v597
        %v2398 = vpop.permute.xlu0 %2397
        %2400 = vset.pattern.permute.xlu0 2
        %2401 = vperm.xlu0 %2400, %v598
        %v2402 = vpop.permute.xlu0 %2401
        %2404 = vset.pattern.permute.xlu0 2
        %2405 = vperm.xlu0 %2404, %v599
        %v2406 = vpop.permute.xlu0 %2405
        %2408 = vset.pattern.permute.xlu0 2
        %2409 = vperm.xlu0 %2408, %v600
        %v2410 = vpop.permute.xlu0 %2409
        %2412 = vset.pattern.permute.xlu0 2
        %2413 = vperm.xlu0 %2412, %v601
        %v2414 = vpop.permute.xlu0 %2413
        %2416 = vset.pattern.permute.xlu0 2
        %2417 = vperm.xlu0 %2416, %v602
        %v2418 = vpop.permute.xlu0 %2417
        %2420 = vset.pattern.permute.xlu0 2
        %2421 = vperm.xlu0 %2420, %v603
        %v2422 = vpop.permute.xlu0 %2421
        %2424 = vset.pattern.permute.xlu0 2
        %2425 = vperm.xlu0 %2424, %v604
        %v2426 = vpop.permute.xlu0 %2425
        %2428 = vset.pattern.permute.xlu0 2
        %2429 = vperm.xlu0 %2428, %v605
        %v2430 = vpop.permute.xlu0 %2429
        %2432 = vset.pattern.permute.xlu0 2
        %2433 = vperm.xlu0 %2432, %v606
        %v2434 = vpop.permute.xlu0 %2433
        %2436 = vset.pattern.permute.xlu0 2
        %2437 = vperm.xlu0 %2436, %v607
        %v2438 = vpop.permute.xlu0 %2437
        %2440 = vset.pattern.permute.xlu0 2
        %2441 = vperm.xlu0 %2440, %v608
        %v2442 = vpop.permute.xlu0 %2441
        %2444 = vset.pattern.permute.xlu0 2
        %2445 = vperm.xlu0 %2444, %v609
        %v2446 = vpop.permute.xlu0 %2445
        %2448 = vset.pattern.permute.xlu0 2
        %2449 = vperm.xlu0 %2448, %v610
        %v2450 = vpop.permute.xlu0 %2449
        %2452 = vset.pattern.permute.xlu0 2
        %2453 = vperm.xlu0 %2452, %v611
        %v2454 = vpop.permute.xlu0 %2453
        %2456 = vset.pattern.permute.xlu0 2
        %2457 = vperm.xlu0 %2456, %v612
        %v2458 = vpop.permute.xlu0 %2457
        %2460 = vset.pattern.permute.xlu0 2
        %2461 = vperm.xlu0 %2460, %v613
        %v2462 = vpop.permute.xlu0 %2461
        %2464 = vset.pattern.permute.xlu0 2
        %2465 = vperm.xlu0 %2464, %v614
        %v2466 = vpop.permute.xlu0 %2465
        %2468 = vset.pattern.permute.xlu0 2
        %2469 = vperm.xlu0 %2468, %v615
        %v2470 = vpop.permute.xlu0 %2469
        %2472 = vset.pattern.permute.xlu0 2
        %2473 = vperm.xlu0 %2472, %v616
        %v2474 = vpop.permute.xlu0 %2473
        %2476 = vset.pattern.permute.xlu0 2
        %2477 = vperm.xlu0 %2476, %v617
        %v2478 = vpop.permute.xlu0 %2477
        %2480 = vset.pattern.permute.xlu0 2
        %2481 = vperm.xlu0 %2480, %v618
        %v2482 = vpop.permute.xlu0 %2481
        %2484 = vset.pattern.permute.xlu0 2
        %2485 = vperm.xlu0 %2484, %v619
        %v2486 = vpop.permute.xlu0 %2485
        %2488 = vset.pattern.permute.xlu0 2
        %2489 = vperm.xlu0 %2488, %v620
        %v2490 = vpop.permute.xlu0 %2489
        %2492 = vset.pattern.permute.xlu0 2
        %2493 = vperm.xlu0 %2492, %v621
        %v2494 = vpop.permute.xlu0 %2493
        %2496 = vset.pattern.permute.xlu0 2
        %2497 = vperm.xlu0 %2496, %v622
        %v2498 = vpop.permute.xlu0 %2497
        %2500 = vset.pattern.permute.xlu0 2
        %2501 = vperm.xlu0 %2500, %v623
        %v2502 = vpop.permute.xlu0 %2501
        %2504 = vset.pattern.permute.xlu0 2
        %2505 = vperm.xlu0 %2504, %v624
        %v2506 = vpop.permute.xlu0 %2505
        %2508 = vset.pattern.permute.xlu0 2
        %2509 = vperm.xlu0 %2508, %v625
        %v2510 = vpop.permute.xlu0 %2509
        %2512 = vset.pattern.permute.xlu0 2
        %2513 = vperm.xlu0 %2512, %v626
        %v2514 = vpop.permute.xlu0 %2513
        %2516 = vset.pattern.permute.xlu0 2
        %2517 = vperm.xlu0 %2516, %v627
        %v2518 = vpop.permute.xlu0 %2517
        %2520 = vset.pattern.permute.xlu0 2
        %2521 = vperm.xlu0 %2520, %v628
        %v2522 = vpop.permute.xlu0 %2521
        %2524 = vset.pattern.permute.xlu0 2
        %2525 = vperm.xlu0 %2524, %v629
        %v2526 = vpop.permute.xlu0 %2525
        %2528 = vset.pattern.permute.xlu0 2
        %2529 = vperm.xlu0 %2528, %v630
        %v2530 = vpop.permute.xlu0 %2529
        %2532 = vset.pattern.permute.xlu0 2
        %2533 = vperm.xlu0 %2532, %v631
        %v2534 = vpop.permute.xlu0 %2533
        %2536 = vset.pattern.permute.xlu0 2
        %2537 = vperm.xlu0 %2536, %v632
        %v2538 = vpop.permute.xlu0 %2537
        %2540 = vset.pattern.permute.xlu0 2
        %2541 = vperm.xlu0 %2540, %v633
        %v2542 = vpop.permute.xlu0 %2541
        %2544 = vset.pattern.permute.xlu0 2
        %2545 = vperm.xlu0 %2544, %v634
        %v2546 = vpop.permute.xlu0 %2545
        %2548 = vset.pattern.permute.xlu0 2
        %2549 = vperm.xlu0 %2548, %v635
        %v2550 = vpop.permute.xlu0 %2549
        %2552 = vset.pattern.permute.xlu0 2
        %2553 = vperm.xlu0 %2552, %v636
        %v2554 = vpop.permute.xlu0 %2553
        %2556 = vset.pattern.permute.xlu0 2
        %2557 = vperm.xlu0 %2556, %v637
        %v2558 = vpop.permute.xlu0 %2557
        %2560 = vset.pattern.permute.xlu0 2
        %2561 = vperm.xlu0 %2560, %v638
        %v2562 = vpop.permute.xlu0 %2561
        %2564 = vset.pattern.permute.xlu0 2
        %2565 = vperm.xlu0 %2564, %v639
        %v2566 = vpop.permute.xlu0 %2565
        %2568 = vset.pattern.permute.xlu0 2
        %2569 = vperm.xlu0 %2568, %v640
        %v2570 = vpop.permute.xlu0 %2569
        %2572 = vset.pattern.permute.xlu0 2
        %2573 = vperm.xlu0 %2572, %v641
        %v2574 = vpop.permute.xlu0 %2573
        %2576 = vset.pattern.permute.xlu0 2
        %2577 = vperm.xlu0 %2576, %v642
        %v2578 = vpop.permute.xlu0 %2577
        %2580 = vset.pattern.permute.xlu0 2
        %2581 = vperm.xlu0 %2580, %v643
        %v2582 = vpop.permute.xlu0 %2581
        %2584 = vset.pattern.permute.xlu0 2
        %2585 = vperm.xlu0 %2584, %v644
        %v2586 = vpop.permute.xlu0 %2585
        %2588 = vset.pattern.permute.xlu0 2
        %2589 = vperm.xlu0 %2588, %v645
        %v2590 = vpop.permute.xlu0 %2589
        %2592 = vset.pattern.permute.xlu0 2
        %2593 = vperm.xlu0 %2592, %v646
        %v2594 = vpop.permute.xlu0 %2593
        %2596 = vset.pattern.permute.xlu0 2
        %2597 = vperm.xlu0 %2596, %v647
        %v2598 = vpop.permute.xlu0 %2597
        %2600 = vset.pattern.permute.xlu0 2
        %2601 = vperm.xlu0 %2600, %v648
        %v2602 = vpop.permute.xlu0 %2601
        %2604 = vset.pattern.permute.xlu0 2
        %2605 = vperm.xlu0 %2604, %v649
        %v2606 = vpop.permute.xlu0 %2605
        %2608 = vset.pattern.permute.xlu0 2
        %2609 = vperm.xlu0 %2608, %v650
        %v2610 = vpop.permute.xlu0 %2609
        %2612 = vset.pattern.permute.xlu0 2
        %2613 = vperm.xlu0 %2612, %v651
        %v2614 = vpop.permute.xlu0 %2613
        %2616 = vset.pattern.permute.xlu0 2
        %2617 = vperm.xlu0 %2616, %v652
        %v2618 = vpop.permute.xlu0 %2617
        %2620 = vset.pattern.permute.xlu0 2
        %2621 = vperm.xlu0 %2620, %v653
        %v2622 = vpop.permute.xlu0 %2621
        %2624 = vset.pattern.permute.xlu0 2
        %2625 = vperm.xlu0 %2624, %v654
        %v2626 = vpop.permute.xlu0 %2625
        %2628 = vset.pattern.permute.xlu0 2
        %2629 = vperm.xlu0 %2628, %v655
        %v2630 = vpop.permute.xlu0 %2629
        %2632 = vset.pattern.permute.xlu0 2
        %2633 = vperm.xlu0 %2632, %v656
        %v2634 = vpop.permute.xlu0 %2633
        %2636 = vset.pattern.permute.xlu0 2
        %2637 = vperm.xlu0 %2636, %v657
        %v2638 = vpop.permute.xlu0 %2637
        %2640 = vset.pattern.permute.xlu0 2
        %2641 = vperm.xlu0 %2640, %v658
        %v2642 = vpop.permute.xlu0 %2641
        %2644 = vset.pattern.permute.xlu0 2
        %2645 = vperm.xlu0 %2644, %v659
        %v2646 = vpop.permute.xlu0 %2645
        %2648 = vset.pattern.permute.xlu0 2
        %2649 = vperm.xlu0 %2648, %v660
        %v2650 = vpop.permute.xlu0 %2649
        %2652 = vset.pattern.permute.xlu0 2
        %2653 = vperm.xlu0 %2652, %v661
        %v2654 = vpop.permute.xlu0 %2653
        %2656 = vset.pattern.permute.xlu0 2
        %2657 = vperm.xlu0 %2656, %v662
        %v2658 = vpop.permute.xlu0 %2657
        %2660 = vset.pattern.permute.xlu0 2
        %2661 = vperm.xlu0 %2660, %v663
        %v2662 = vpop.permute.xlu0 %2661
        %2664 = vset.pattern.permute.xlu0 2
        %2665 = vperm.xlu0 %2664, %v664
        %v2666 = vpop.permute.xlu0 %2665
        %2668 = vset.pattern.permute.xlu0 2
        %2669 = vperm.xlu0 %2668, %v665
        %v2670 = vpop.permute.xlu0 %2669
        %2672 = vset.pattern.permute.xlu0 2
        %2673 = vperm.xlu0 %2672, %v666
        %v2674 = vpop.permute.xlu0 %2673
        %2676 = vset.pattern.permute.xlu0 2
        %2677 = vperm.xlu0 %2676, %v667
        %v2678 = vpop.permute.xlu0 %2677
        %2680 = vset.pattern.permute.xlu0 2
        %2681 = vperm.xlu0 %2680, %v668
        %v2682 = vpop.permute.xlu0 %2681
        %2684 = vset.pattern.permute.xlu0 2
        %2685 = vperm.xlu0 %2684, %v669
        %v2686 = vpop.permute.xlu0 %2685
        %2688 = vset.pattern.permute.xlu0 2
        %2689 = vperm.xlu0 %2688, %v670
        %v2690 = vpop.permute.xlu0 %2689
        %2692 = vset.pattern.permute.xlu0 2
        %2693 = vperm.xlu0 %2692, %v671
        %v2694 = vpop.permute.xlu0 %2693
        %2696 = vset.pattern.permute.xlu0 2
        %2697 = vperm.xlu0 %2696, %v672
        %v2698 = vpop.permute.xlu0 %2697
        %2700 = vset.pattern.permute.xlu0 2
        %2701 = vperm.xlu0 %2700, %v673
        %v2702 = vpop.permute.xlu0 %2701
        %2704 = vset.pattern.permute.xlu0 2
        %2705 = vperm.xlu0 %2704, %v674
        %v2706 = vpop.permute.xlu0 %2705
        %2708 = vset.pattern.permute.xlu0 2
        %2709 = vperm.xlu0 %2708, %v675
        %v2710 = vpop.permute.xlu0 %2709
        %2712 = vset.pattern.permute.xlu0 2
        %2713 = vperm.xlu0 %2712, %v676
        %v2714 = vpop.permute.xlu0 %2713
        %2716 = vset.pattern.permute.xlu0 2
        %2717 = vperm.xlu0 %2716, %v677
        %v2718 = vpop.permute.xlu0 %2717
        %2720 = vset.pattern.permute.xlu0 2
        %2721 = vperm.xlu0 %2720, %v678
        %v2722 = vpop.permute.xlu0 %2721
        %2724 = vset.pattern.permute.xlu0 2
        %2725 = vperm.xlu0 %2724, %v679
        %v2726 = vpop.permute.xlu0 %2725
        %2728 = vset.pattern.permute.xlu0 2
        %2729 = vperm.xlu0 %2728, %v680
        %v2730 = vpop.permute.xlu0 %2729
        %v2732 = vperm.slane %v681, 2
        %v2733 = vmul.f32 %v2222, %v2732
        %v2734 = vmul.f32 %v2226, %v2732
        %v2735 = vmul.f32 %v2230, %v2732
        %v2736 = vmul.f32 %v2234, %v2732
        %v2737 = vmul.f32 %v2238, %v2732
        %v2738 = vmul.f32 %v2242, %v2732
        %v2739 = vmul.f32 %v2246, %v2732
        %v2740 = vmul.f32 %v2250, %v2732
        %v2741 = vmul.f32 %v2254, %v2732
        %v2742 = vmul.f32 %v2258, %v2732
        %v2743 = vmul.f32 %v2262, %v2732
        %v2744 = vmul.f32 %v2266, %v2732
        %v2745 = vmul.f32 %v2270, %v2732
        %v2746 = vmul.f32 %v2274, %v2732
        %v2747 = vmul.f32 %v2278, %v2732
        %v2748 = vmul.f32 %v2282, %v2732
        %v2749 = vmul.f32 %v2286, %v2732
        %v2750 = vmul.f32 %v2290, %v2732
        %v2751 = vmul.f32 %v2294, %v2732
        %v2752 = vmul.f32 %v2298, %v2732
        %v2753 = vmul.f32 %v2302, %v2732
        %v2754 = vmul.f32 %v2306, %v2732
        %v2755 = vmul.f32 %v2310, %v2732
        %v2756 = vmul.f32 %v2314, %v2732
        %v2757 = vmul.f32 %v2318, %v2732
        %v2758 = vmul.f32 %v2322, %v2732
        %v2759 = vmul.f32 %v2326, %v2732
        %v2760 = vmul.f32 %v2330, %v2732
        %v2761 = vmul.f32 %v2334, %v2732
        %v2762 = vmul.f32 %v2338, %v2732
        %v2763 = vmul.f32 %v2342, %v2732
        %v2764 = vmul.f32 %v2346, %v2732
        %v2765 = vmul.f32 %v2350, %v2732
        %v2766 = vmul.f32 %v2354, %v2732
        %v2767 = vmul.f32 %v2358, %v2732
        %v2768 = vmul.f32 %v2362, %v2732
        %v2769 = vmul.f32 %v2366, %v2732
        %v2770 = vmul.f32 %v2370, %v2732
        %v2771 = vmul.f32 %v2374, %v2732
        %v2772 = vmul.f32 %v2378, %v2732
        %v2773 = vmul.f32 %v2382, %v2732
        %v2774 = vmul.f32 %v2386, %v2732
        %v2775 = vmul.f32 %v2390, %v2732
        %v2776 = vmul.f32 %v2394, %v2732
        %v2777 = vmul.f32 %v2398, %v2732
        %v2778 = vmul.f32 %v2402, %v2732
        %v2779 = vmul.f32 %v2406, %v2732
        %v2780 = vmul.f32 %v2410, %v2732
        %v2781 = vmul.f32 %v2414, %v2732
        %v2782 = vmul.f32 %v2418, %v2732
        %v2783 = vmul.f32 %v2422, %v2732
        %v2784 = vmul.f32 %v2426, %v2732
        %v2785 = vmul.f32 %v2430, %v2732
        %v2786 = vmul.f32 %v2434, %v2732
        %v2787 = vmul.f32 %v2438, %v2732
        %v2788 = vmul.f32 %v2442, %v2732
        %v2789 = vmul.f32 %v2446, %v2732
        %v2790 = vmul.f32 %v2450, %v2732
        %v2791 = vmul.f32 %v2454, %v2732
        %v2792 = vmul.f32 %v2458, %v2732
        %v2793 = vmul.f32 %v2462, %v2732
        %v2794 = vmul.f32 %v2466, %v2732
        %v2795 = vmul.f32 %v2470, %v2732
        %v2796 = vmul.f32 %v2474, %v2732
        %v2797 = vmul.f32 %v2478, %v2732
        %v2798 = vmul.f32 %v2482, %v2732
        %v2799 = vmul.f32 %v2486, %v2732
        %v2800 = vmul.f32 %v2490, %v2732
        %v2801 = vmul.f32 %v2494, %v2732
        %v2802 = vmul.f32 %v2498, %v2732
        %v2803 = vmul.f32 %v2502, %v2732
        %v2804 = vmul.f32 %v2506, %v2732
        %v2805 = vmul.f32 %v2510, %v2732
        %v2806 = vmul.f32 %v2514, %v2732
        %v2807 = vmul.f32 %v2518, %v2732
        %v2808 = vmul.f32 %v2522, %v2732
        %v2809 = vmul.f32 %v2526, %v2732
        %v2810 = vmul.f32 %v2530, %v2732
        %v2811 = vmul.f32 %v2534, %v2732
        %v2812 = vmul.f32 %v2538, %v2732
        %v2813 = vmul.f32 %v2542, %v2732
        %v2814 = vmul.f32 %v2546, %v2732
        %v2815 = vmul.f32 %v2550, %v2732
        %v2816 = vmul.f32 %v2554, %v2732
        %v2817 = vmul.f32 %v2558, %v2732
        %v2818 = vmul.f32 %v2562, %v2732
        %v2819 = vmul.f32 %v2566, %v2732
        %v2820 = vmul.f32 %v2570, %v2732
        %v2821 = vmul.f32 %v2574, %v2732
        %v2822 = vmul.f32 %v2578, %v2732
        %v2823 = vmul.f32 %v2582, %v2732
        %v2824 = vmul.f32 %v2586, %v2732
        %v2825 = vmul.f32 %v2590, %v2732
        %v2826 = vmul.f32 %v2594, %v2732
        %v2827 = vmul.f32 %v2598, %v2732
        %v2828 = vmul.f32 %v2602, %v2732
        %v2829 = vmul.f32 %v2606, %v2732
        %v2830 = vmul.f32 %v2610, %v2732
        %v2831 = vmul.f32 %v2614, %v2732
        %v2832 = vmul.f32 %v2618, %v2732
        %v2833 = vmul.f32 %v2622, %v2732
        %v2834 = vmul.f32 %v2626, %v2732
        %v2835 = vmul.f32 %v2630, %v2732
        %v2836 = vmul.f32 %v2634, %v2732
        %v2837 = vmul.f32 %v2638, %v2732
        %v2838 = vmul.f32 %v2642, %v2732
        %v2839 = vmul.f32 %v2646, %v2732
        %v2840 = vmul.f32 %v2650, %v2732
        %v2841 = vmul.f32 %v2654, %v2732
        %v2842 = vmul.f32 %v2658, %v2732
        %v2843 = vmul.f32 %v2662, %v2732
        %v2844 = vmul.f32 %v2666, %v2732
        %v2845 = vmul.f32 %v2670, %v2732
        %v2846 = vmul.f32 %v2674, %v2732
        %v2847 = vmul.f32 %v2678, %v2732
        %v2848 = vmul.f32 %v2682, %v2732
        %v2849 = vmul.f32 %v2686, %v2732
        %v2850 = vmul.f32 %v2690, %v2732
        %v2851 = vmul.f32 %v2694, %v2732
        %v2852 = vmul.f32 %v2698, %v2732
        %v2853 = vmul.f32 %v2702, %v2732
        %v2854 = vmul.f32 %v2706, %v2732
        %v2855 = vmul.f32 %v2710, %v2732
        %v2856 = vmul.f32 %v2714, %v2732
        %v2857 = vmul.f32 %v2718, %v2732
        %v2858 = vmul.f32 %v2722, %v2732
        %v2859 = vmul.f32 %v2726, %v2732
        %v2860 = vmul.f32 %v2730, %v2732
        %v2861 = vadd.f32 %v2092, %v2733
        %v2862 = vadd.f32 %v2093, %v2734
        %v2863 = vadd.f32 %v2094, %v2735
        %v2864 = vadd.f32 %v2095, %v2736
        %v2865 = vadd.f32 %v2096, %v2737
        %v2866 = vadd.f32 %v2097, %v2738
        %v2867 = vadd.f32 %v2098, %v2739
        %v2868 = vadd.f32 %v2099, %v2740
        %v2869 = vadd.f32 %v2100, %v2741
        %v2870 = vadd.f32 %v2101, %v2742
        %v2871 = vadd.f32 %v2102, %v2743
        %v2872 = vadd.f32 %v2103, %v2744
        %v2873 = vadd.f32 %v2104, %v2745
        %v2874 = vadd.f32 %v2105, %v2746
        %v2875 = vadd.f32 %v2106, %v2747
        %v2876 = vadd.f32 %v2107, %v2748
        %v2877 = vadd.f32 %v2108, %v2749
        %v2878 = vadd.f32 %v2109, %v2750
        %v2879 = vadd.f32 %v2110, %v2751
        %v2880 = vadd.f32 %v2111, %v2752
        %v2881 = vadd.f32 %v2112, %v2753
        %v2882 = vadd.f32 %v2113, %v2754
        %v2883 = vadd.f32 %v2114, %v2755
        %v2884 = vadd.f32 %v2115, %v2756
        %v2885 = vadd.f32 %v2116, %v2757
        %v2886 = vadd.f32 %v2117, %v2758
        %v2887 = vadd.f32 %v2118, %v2759
        %v2888 = vadd.f32 %v2119, %v2760
        %v2889 = vadd.f32 %v2120, %v2761
        %v2890 = vadd.f32 %v2121, %v2762
        %v2891 = vadd.f32 %v2122, %v2763
        %v2892 = vadd.f32 %v2123, %v2764
        %v2893 = vadd.f32 %v2124, %v2765
        %v2894 = vadd.f32 %v2125, %v2766
        %v2895 = vadd.f32 %v2126, %v2767
        %v2896 = vadd.f32 %v2127, %v2768
        %v2897 = vadd.f32 %v2128, %v2769
        %v2898 = vadd.f32 %v2129, %v2770
        %v2899 = vadd.f32 %v2130, %v2771
        %v2900 = vadd.f32 %v2131, %v2772
        %v2901 = vadd.f32 %v2132, %v2773
        %v2902 = vadd.f32 %v2133, %v2774
        %v2903 = vadd.f32 %v2134, %v2775
        %v2904 = vadd.f32 %v2135, %v2776
        %v2905 = vadd.f32 %v2136, %v2777
        %v2906 = vadd.f32 %v2137, %v2778
        %v2907 = vadd.f32 %v2138, %v2779
        %v2908 = vadd.f32 %v2139, %v2780
        %v2909 = vadd.f32 %v2140, %v2781
        %v2910 = vadd.f32 %v2141, %v2782
        %v2911 = vadd.f32 %v2142, %v2783
        %v2912 = vadd.f32 %v2143, %v2784
        %v2913 = vadd.f32 %v2144, %v2785
        %v2914 = vadd.f32 %v2145, %v2786
        %v2915 = vadd.f32 %v2146, %v2787
        %v2916 = vadd.f32 %v2147, %v2788
        %v2917 = vadd.f32 %v2148, %v2789
        %v2918 = vadd.f32 %v2149, %v2790
        %v2919 = vadd.f32 %v2150, %v2791
        %v2920 = vadd.f32 %v2151, %v2792
        %v2921 = vadd.f32 %v2152, %v2793
        %v2922 = vadd.f32 %v2153, %v2794
        %v2923 = vadd.f32 %v2154, %v2795
        %v2924 = vadd.f32 %v2155, %v2796
        %v2925 = vadd.f32 %v2156, %v2797
        %v2926 = vadd.f32 %v2157, %v2798
        %v2927 = vadd.f32 %v2158, %v2799
        %v2928 = vadd.f32 %v2159, %v2800
        %v2929 = vadd.f32 %v2160, %v2801
        %v2930 = vadd.f32 %v2161, %v2802
        %v2931 = vadd.f32 %v2162, %v2803
        %v2932 = vadd.f32 %v2163, %v2804
        %v2933 = vadd.f32 %v2164, %v2805
        %v2934 = vadd.f32 %v2165, %v2806
        %v2935 = vadd.f32 %v2166, %v2807
        %v2936 = vadd.f32 %v2167, %v2808
        %v2937 = vadd.f32 %v2168, %v2809
        %v2938 = vadd.f32 %v2169, %v2810
        %v2939 = vadd.f32 %v2170, %v2811
        %v2940 = vadd.f32 %v2171, %v2812
        %v2941 = vadd.f32 %v2172, %v2813
        %v2942 = vadd.f32 %v2173, %v2814
        %v2943 = vadd.f32 %v2174, %v2815
        %v2944 = vadd.f32 %v2175, %v2816
        %v2945 = vadd.f32 %v2176, %v2817
        %v2946 = vadd.f32 %v2177, %v2818
        %v2947 = vadd.f32 %v2178, %v2819
        %v2948 = vadd.f32 %v2179, %v2820
        %v2949 = vadd.f32 %v2180, %v2821
        %v2950 = vadd.f32 %v2181, %v2822
        %v2951 = vadd.f32 %v2182, %v2823
        %v2952 = vadd.f32 %v2183, %v2824
        %v2953 = vadd.f32 %v2184, %v2825
        %v2954 = vadd.f32 %v2185, %v2826
        %v2955 = vadd.f32 %v2186, %v2827
        %v2956 = vadd.f32 %v2187, %v2828
        %v2957 = vadd.f32 %v2188, %v2829
        %v2958 = vadd.f32 %v2189, %v2830
        %v2959 = vadd.f32 %v2190, %v2831
        %v2960 = vadd.f32 %v2191, %v2832
        %v2961 = vadd.f32 %v2192, %v2833
        %v2962 = vadd.f32 %v2193, %v2834
        %v2963 = vadd.f32 %v2194, %v2835
        %v2964 = vadd.f32 %v2195, %v2836
        %v2965 = vadd.f32 %v2196, %v2837
        %v2966 = vadd.f32 %v2197, %v2838
        %v2967 = vadd.f32 %v2198, %v2839
        %v2968 = vadd.f32 %v2199, %v2840
        %v2969 = vadd.f32 %v2200, %v2841
        %v2970 = vadd.f32 %v2201, %v2842
        %v2971 = vadd.f32 %v2202, %v2843
        %v2972 = vadd.f32 %v2203, %v2844
        %v2973 = vadd.f32 %v2204, %v2845
        %v2974 = vadd.f32 %v2205, %v2846
        %v2975 = vadd.f32 %v2206, %v2847
        %v2976 = vadd.f32 %v2207, %v2848
        %v2977 = vadd.f32 %v2208, %v2849
        %v2978 = vadd.f32 %v2209, %v2850
        %v2979 = vadd.f32 %v2210, %v2851
        %v2980 = vadd.f32 %v2211, %v2852
        %v2981 = vadd.f32 %v2212, %v2853
        %v2982 = vadd.f32 %v2213, %v2854
        %v2983 = vadd.f32 %v2214, %v2855
        %v2984 = vadd.f32 %v2215, %v2856
        %v2985 = vadd.f32 %v2216, %v2857
        %v2986 = vadd.f32 %v2217, %v2858
        %v2987 = vadd.f32 %v2218, %v2859
        %v2988 = vadd.f32 %v2219, %v2860
        %2989 = vset.pattern.permute.xlu0 3
        %2990 = vperm.xlu0 %2989, %v553
        %v2991 = vpop.permute.xlu0 %2990
        %2993 = vset.pattern.permute.xlu0 3
        %2994 = vperm.xlu0 %2993, %v554
        %v2995 = vpop.permute.xlu0 %2994
        %2997 = vset.pattern.permute.xlu0 3
        %2998 = vperm.xlu0 %2997, %v555
        %v2999 = vpop.permute.xlu0 %2998
        %3001 = vset.pattern.permute.xlu0 3
        %3002 = vperm.xlu0 %3001, %v556
        %v3003 = vpop.permute.xlu0 %3002
        %3005 = vset.pattern.permute.xlu0 3
        %3006 = vperm.xlu0 %3005, %v557
        %v3007 = vpop.permute.xlu0 %3006
        %3009 = vset.pattern.permute.xlu0 3
        %3010 = vperm.xlu0 %3009, %v558
        %v3011 = vpop.permute.xlu0 %3010
        %3013 = vset.pattern.permute.xlu0 3
        %3014 = vperm.xlu0 %3013, %v559
        %v3015 = vpop.permute.xlu0 %3014
        %3017 = vset.pattern.permute.xlu0 3
        %3018 = vperm.xlu0 %3017, %v560
        %v3019 = vpop.permute.xlu0 %3018
        %3021 = vset.pattern.permute.xlu0 3
        %3022 = vperm.xlu0 %3021, %v561
        %v3023 = vpop.permute.xlu0 %3022
        %3025 = vset.pattern.permute.xlu0 3
        %3026 = vperm.xlu0 %3025, %v562
        %v3027 = vpop.permute.xlu0 %3026
        %3029 = vset.pattern.permute.xlu0 3
        %3030 = vperm.xlu0 %3029, %v563
        %v3031 = vpop.permute.xlu0 %3030
        %3033 = vset.pattern.permute.xlu0 3
        %3034 = vperm.xlu0 %3033, %v564
        %v3035 = vpop.permute.xlu0 %3034
        %3037 = vset.pattern.permute.xlu0 3
        %3038 = vperm.xlu0 %3037, %v565
        %v3039 = vpop.permute.xlu0 %3038
        %3041 = vset.pattern.permute.xlu0 3
        %3042 = vperm.xlu0 %3041, %v566
        %v3043 = vpop.permute.xlu0 %3042
        %3045 = vset.pattern.permute.xlu0 3
        %3046 = vperm.xlu0 %3045, %v567
        %v3047 = vpop.permute.xlu0 %3046
        %3049 = vset.pattern.permute.xlu0 3
        %3050 = vperm.xlu0 %3049, %v568
        %v3051 = vpop.permute.xlu0 %3050
        %3053 = vset.pattern.permute.xlu0 3
        %3054 = vperm.xlu0 %3053, %v569
        %v3055 = vpop.permute.xlu0 %3054
        %3057 = vset.pattern.permute.xlu0 3
        %3058 = vperm.xlu0 %3057, %v570
        %v3059 = vpop.permute.xlu0 %3058
        %3061 = vset.pattern.permute.xlu0 3
        %3062 = vperm.xlu0 %3061, %v571
        %v3063 = vpop.permute.xlu0 %3062
        %3065 = vset.pattern.permute.xlu0 3
        %3066 = vperm.xlu0 %3065, %v572
        %v3067 = vpop.permute.xlu0 %3066
        %3069 = vset.pattern.permute.xlu0 3
        %3070 = vperm.xlu0 %3069, %v573
        %v3071 = vpop.permute.xlu0 %3070
        %3073 = vset.pattern.permute.xlu0 3
        %3074 = vperm.xlu0 %3073, %v574
        %v3075 = vpop.permute.xlu0 %3074
        %3077 = vset.pattern.permute.xlu0 3
        %3078 = vperm.xlu0 %3077, %v575
        %v3079 = vpop.permute.xlu0 %3078
        %3081 = vset.pattern.permute.xlu0 3
        %3082 = vperm.xlu0 %3081, %v576
        %v3083 = vpop.permute.xlu0 %3082
        %3085 = vset.pattern.permute.xlu0 3
        %3086 = vperm.xlu0 %3085, %v577
        %v3087 = vpop.permute.xlu0 %3086
        %3089 = vset.pattern.permute.xlu0 3
        %3090 = vperm.xlu0 %3089, %v578
        %v3091 = vpop.permute.xlu0 %3090
        %3093 = vset.pattern.permute.xlu0 3
        %3094 = vperm.xlu0 %3093, %v579
        %v3095 = vpop.permute.xlu0 %3094
        %3097 = vset.pattern.permute.xlu0 3
        %3098 = vperm.xlu0 %3097, %v580
        %v3099 = vpop.permute.xlu0 %3098
        %3101 = vset.pattern.permute.xlu0 3
        %3102 = vperm.xlu0 %3101, %v581
        %v3103 = vpop.permute.xlu0 %3102
        %3105 = vset.pattern.permute.xlu0 3
        %3106 = vperm.xlu0 %3105, %v582
        %v3107 = vpop.permute.xlu0 %3106
        %3109 = vset.pattern.permute.xlu0 3
        %3110 = vperm.xlu0 %3109, %v583
        %v3111 = vpop.permute.xlu0 %3110
        %3113 = vset.pattern.permute.xlu0 3
        %3114 = vperm.xlu0 %3113, %v584
        %v3115 = vpop.permute.xlu0 %3114
        %3117 = vset.pattern.permute.xlu0 3
        %3118 = vperm.xlu0 %3117, %v585
        %v3119 = vpop.permute.xlu0 %3118
        %3121 = vset.pattern.permute.xlu0 3
        %3122 = vperm.xlu0 %3121, %v586
        %v3123 = vpop.permute.xlu0 %3122
        %3125 = vset.pattern.permute.xlu0 3
        %3126 = vperm.xlu0 %3125, %v587
        %v3127 = vpop.permute.xlu0 %3126
        %3129 = vset.pattern.permute.xlu0 3
        %3130 = vperm.xlu0 %3129, %v588
        %v3131 = vpop.permute.xlu0 %3130
        %3133 = vset.pattern.permute.xlu0 3
        %3134 = vperm.xlu0 %3133, %v589
        %v3135 = vpop.permute.xlu0 %3134
        %3137 = vset.pattern.permute.xlu0 3
        %3138 = vperm.xlu0 %3137, %v590
        %v3139 = vpop.permute.xlu0 %3138
        %3141 = vset.pattern.permute.xlu0 3
        %3142 = vperm.xlu0 %3141, %v591
        %v3143 = vpop.permute.xlu0 %3142
        %3145 = vset.pattern.permute.xlu0 3
        %3146 = vperm.xlu0 %3145, %v592
        %v3147 = vpop.permute.xlu0 %3146
        %3149 = vset.pattern.permute.xlu0 3
        %3150 = vperm.xlu0 %3149, %v593
        %v3151 = vpop.permute.xlu0 %3150
        %3153 = vset.pattern.permute.xlu0 3
        %3154 = vperm.xlu0 %3153, %v594
        %v3155 = vpop.permute.xlu0 %3154
        %3157 = vset.pattern.permute.xlu0 3
        %3158 = vperm.xlu0 %3157, %v595
        %v3159 = vpop.permute.xlu0 %3158
        %3161 = vset.pattern.permute.xlu0 3
        %3162 = vperm.xlu0 %3161, %v596
        %v3163 = vpop.permute.xlu0 %3162
        %3165 = vset.pattern.permute.xlu0 3
        %3166 = vperm.xlu0 %3165, %v597
        %v3167 = vpop.permute.xlu0 %3166
        %3169 = vset.pattern.permute.xlu0 3
        %3170 = vperm.xlu0 %3169, %v598
        %v3171 = vpop.permute.xlu0 %3170
        %3173 = vset.pattern.permute.xlu0 3
        %3174 = vperm.xlu0 %3173, %v599
        %v3175 = vpop.permute.xlu0 %3174
        %3177 = vset.pattern.permute.xlu0 3
        %3178 = vperm.xlu0 %3177, %v600
        %v3179 = vpop.permute.xlu0 %3178
        %3181 = vset.pattern.permute.xlu0 3
        %3182 = vperm.xlu0 %3181, %v601
        %v3183 = vpop.permute.xlu0 %3182
        %3185 = vset.pattern.permute.xlu0 3
        %3186 = vperm.xlu0 %3185, %v602
        %v3187 = vpop.permute.xlu0 %3186
        %3189 = vset.pattern.permute.xlu0 3
        %3190 = vperm.xlu0 %3189, %v603
        %v3191 = vpop.permute.xlu0 %3190
        %3193 = vset.pattern.permute.xlu0 3
        %3194 = vperm.xlu0 %3193, %v604
        %v3195 = vpop.permute.xlu0 %3194
        %3197 = vset.pattern.permute.xlu0 3
        %3198 = vperm.xlu0 %3197, %v605
        %v3199 = vpop.permute.xlu0 %3198
        %3201 = vset.pattern.permute.xlu0 3
        %3202 = vperm.xlu0 %3201, %v606
        %v3203 = vpop.permute.xlu0 %3202
        %3205 = vset.pattern.permute.xlu0 3
        %3206 = vperm.xlu0 %3205, %v607
        %v3207 = vpop.permute.xlu0 %3206
        %3209 = vset.pattern.permute.xlu0 3
        %3210 = vperm.xlu0 %3209, %v608
        %v3211 = vpop.permute.xlu0 %3210
        %3213 = vset.pattern.permute.xlu0 3
        %3214 = vperm.xlu0 %3213, %v609
        %v3215 = vpop.permute.xlu0 %3214
        %3217 = vset.pattern.permute.xlu0 3
        %3218 = vperm.xlu0 %3217, %v610
        %v3219 = vpop.permute.xlu0 %3218
        %3221 = vset.pattern.permute.xlu0 3
        %3222 = vperm.xlu0 %3221, %v611
        %v3223 = vpop.permute.xlu0 %3222
        %3225 = vset.pattern.permute.xlu0 3
        %3226 = vperm.xlu0 %3225, %v612
        %v3227 = vpop.permute.xlu0 %3226
        %3229 = vset.pattern.permute.xlu0 3
        %3230 = vperm.xlu0 %3229, %v613
        %v3231 = vpop.permute.xlu0 %3230
        %3233 = vset.pattern.permute.xlu0 3
        %3234 = vperm.xlu0 %3233, %v614
        %v3235 = vpop.permute.xlu0 %3234
        %3237 = vset.pattern.permute.xlu0 3
        %3238 = vperm.xlu0 %3237, %v615
        %v3239 = vpop.permute.xlu0 %3238
        %3241 = vset.pattern.permute.xlu0 3
        %3242 = vperm.xlu0 %3241, %v616
        %v3243 = vpop.permute.xlu0 %3242
        %3245 = vset.pattern.permute.xlu0 3
        %3246 = vperm.xlu0 %3245, %v617
        %v3247 = vpop.permute.xlu0 %3246
        %3249 = vset.pattern.permute.xlu0 3
        %3250 = vperm.xlu0 %3249, %v618
        %v3251 = vpop.permute.xlu0 %3250
        %3253 = vset.pattern.permute.xlu0 3
        %3254 = vperm.xlu0 %3253, %v619
        %v3255 = vpop.permute.xlu0 %3254
        %3257 = vset.pattern.permute.xlu0 3
        %3258 = vperm.xlu0 %3257, %v620
        %v3259 = vpop.permute.xlu0 %3258
        %3261 = vset.pattern.permute.xlu0 3
        %3262 = vperm.xlu0 %3261, %v621
        %v3263 = vpop.permute.xlu0 %3262
        %3265 = vset.pattern.permute.xlu0 3
        %3266 = vperm.xlu0 %3265, %v622
        %v3267 = vpop.permute.xlu0 %3266
        %3269 = vset.pattern.permute.xlu0 3
        %3270 = vperm.xlu0 %3269, %v623
        %v3271 = vpop.permute.xlu0 %3270
        %3273 = vset.pattern.permute.xlu0 3
        %3274 = vperm.xlu0 %3273, %v624
        %v3275 = vpop.permute.xlu0 %3274
        %3277 = vset.pattern.permute.xlu0 3
        %3278 = vperm.xlu0 %3277, %v625
        %v3279 = vpop.permute.xlu0 %3278
        %3281 = vset.pattern.permute.xlu0 3
        %3282 = vperm.xlu0 %3281, %v626
        %v3283 = vpop.permute.xlu0 %3282
        %3285 = vset.pattern.permute.xlu0 3
        %3286 = vperm.xlu0 %3285, %v627
        %v3287 = vpop.permute.xlu0 %3286
        %3289 = vset.pattern.permute.xlu0 3
        %3290 = vperm.xlu0 %3289, %v628
        %v3291 = vpop.permute.xlu0 %3290
        %3293 = vset.pattern.permute.xlu0 3
        %3294 = vperm.xlu0 %3293, %v629
        %v3295 = vpop.permute.xlu0 %3294
        %3297 = vset.pattern.permute.xlu0 3
        %3298 = vperm.xlu0 %3297, %v630
        %v3299 = vpop.permute.xlu0 %3298
        %3301 = vset.pattern.permute.xlu0 3
        %3302 = vperm.xlu0 %3301, %v631
        %v3303 = vpop.permute.xlu0 %3302
        %3305 = vset.pattern.permute.xlu0 3
        %3306 = vperm.xlu0 %3305, %v632
        %v3307 = vpop.permute.xlu0 %3306
        %3309 = vset.pattern.permute.xlu0 3
        %3310 = vperm.xlu0 %3309, %v633
        %v3311 = vpop.permute.xlu0 %3310
        %3313 = vset.pattern.permute.xlu0 3
        %3314 = vperm.xlu0 %3313, %v634
        %v3315 = vpop.permute.xlu0 %3314
        %3317 = vset.pattern.permute.xlu0 3
        %3318 = vperm.xlu0 %3317, %v635
        %v3319 = vpop.permute.xlu0 %3318
        %3321 = vset.pattern.permute.xlu0 3
        %3322 = vperm.xlu0 %3321, %v636
        %v3323 = vpop.permute.xlu0 %3322
        %3325 = vset.pattern.permute.xlu0 3
        %3326 = vperm.xlu0 %3325, %v637
        %v3327 = vpop.permute.xlu0 %3326
        %3329 = vset.pattern.permute.xlu0 3
        %3330 = vperm.xlu0 %3329, %v638
        %v3331 = vpop.permute.xlu0 %3330
        %3333 = vset.pattern.permute.xlu0 3
        %3334 = vperm.xlu0 %3333, %v639
        %v3335 = vpop.permute.xlu0 %3334
        %3337 = vset.pattern.permute.xlu0 3
        %3338 = vperm.xlu0 %3337, %v640
        %v3339 = vpop.permute.xlu0 %3338
        %3341 = vset.pattern.permute.xlu0 3
        %3342 = vperm.xlu0 %3341, %v641
        %v3343 = vpop.permute.xlu0 %3342
        %3345 = vset.pattern.permute.xlu0 3
        %3346 = vperm.xlu0 %3345, %v642
        %v3347 = vpop.permute.xlu0 %3346
        %3349 = vset.pattern.permute.xlu0 3
        %3350 = vperm.xlu0 %3349, %v643
        %v3351 = vpop.permute.xlu0 %3350
        %3353 = vset.pattern.permute.xlu0 3
        %3354 = vperm.xlu0 %3353, %v644
        %v3355 = vpop.permute.xlu0 %3354
        %3357 = vset.pattern.permute.xlu0 3
        %3358 = vperm.xlu0 %3357, %v645
        %v3359 = vpop.permute.xlu0 %3358
        %3361 = vset.pattern.permute.xlu0 3
        %3362 = vperm.xlu0 %3361, %v646
        %v3363 = vpop.permute.xlu0 %3362
        %3365 = vset.pattern.permute.xlu0 3
        %3366 = vperm.xlu0 %3365, %v647
        %v3367 = vpop.permute.xlu0 %3366
        %3369 = vset.pattern.permute.xlu0 3
        %3370 = vperm.xlu0 %3369, %v648
        %v3371 = vpop.permute.xlu0 %3370
        %3373 = vset.pattern.permute.xlu0 3
        %3374 = vperm.xlu0 %3373, %v649
        %v3375 = vpop.permute.xlu0 %3374
        %3377 = vset.pattern.permute.xlu0 3
        %3378 = vperm.xlu0 %3377, %v650
        %v3379 = vpop.permute.xlu0 %3378
        %3381 = vset.pattern.permute.xlu0 3
        %3382 = vperm.xlu0 %3381, %v651
        %v3383 = vpop.permute.xlu0 %3382
        %3385 = vset.pattern.permute.xlu0 3
        %3386 = vperm.xlu0 %3385, %v652
        %v3387 = vpop.permute.xlu0 %3386
        %3389 = vset.pattern.permute.xlu0 3
        %3390 = vperm.xlu0 %3389, %v653
        %v3391 = vpop.permute.xlu0 %3390
        %3393 = vset.pattern.permute.xlu0 3
        %3394 = vperm.xlu0 %3393, %v654
        %v3395 = vpop.permute.xlu0 %3394
        %3397 = vset.pattern.permute.xlu0 3
        %3398 = vperm.xlu0 %3397, %v655
        %v3399 = vpop.permute.xlu0 %3398
        %3401 = vset.pattern.permute.xlu0 3
        %3402 = vperm.xlu0 %3401, %v656
        %v3403 = vpop.permute.xlu0 %3402
        %3405 = vset.pattern.permute.xlu0 3
        %3406 = vperm.xlu0 %3405, %v657
        %v3407 = vpop.permute.xlu0 %3406
        %3409 = vset.pattern.permute.xlu0 3
        %3410 = vperm.xlu0 %3409, %v658
        %v3411 = vpop.permute.xlu0 %3410
        %3413 = vset.pattern.permute.xlu0 3
        %3414 = vperm.xlu0 %3413, %v659
        %v3415 = vpop.permute.xlu0 %3414
        %3417 = vset.pattern.permute.xlu0 3
        %3418 = vperm.xlu0 %3417, %v660
        %v3419 = vpop.permute.xlu0 %3418
        %3421 = vset.pattern.permute.xlu0 3
        %3422 = vperm.xlu0 %3421, %v661
        %v3423 = vpop.permute.xlu0 %3422
        %3425 = vset.pattern.permute.xlu0 3
        %3426 = vperm.xlu0 %3425, %v662
        %v3427 = vpop.permute.xlu0 %3426
        %3429 = vset.pattern.permute.xlu0 3
        %3430 = vperm.xlu0 %3429, %v663
        %v3431 = vpop.permute.xlu0 %3430
        %3433 = vset.pattern.permute.xlu0 3
        %3434 = vperm.xlu0 %3433, %v664
        %v3435 = vpop.permute.xlu0 %3434
        %3437 = vset.pattern.permute.xlu0 3
        %3438 = vperm.xlu0 %3437, %v665
        %v3439 = vpop.permute.xlu0 %3438
        %3441 = vset.pattern.permute.xlu0 3
        %3442 = vperm.xlu0 %3441, %v666
        %v3443 = vpop.permute.xlu0 %3442
        %3445 = vset.pattern.permute.xlu0 3
        %3446 = vperm.xlu0 %3445, %v667
        %v3447 = vpop.permute.xlu0 %3446
        %3449 = vset.pattern.permute.xlu0 3
        %3450 = vperm.xlu0 %3449, %v668
        %v3451 = vpop.permute.xlu0 %3450
        %3453 = vset.pattern.permute.xlu0 3
        %3454 = vperm.xlu0 %3453, %v669
        %v3455 = vpop.permute.xlu0 %3454
        %3457 = vset.pattern.permute.xlu0 3
        %3458 = vperm.xlu0 %3457, %v670
        %v3459 = vpop.permute.xlu0 %3458
        %3461 = vset.pattern.permute.xlu0 3
        %3462 = vperm.xlu0 %3461, %v671
        %v3463 = vpop.permute.xlu0 %3462
        %3465 = vset.pattern.permute.xlu0 3
        %3466 = vperm.xlu0 %3465, %v672
        %v3467 = vpop.permute.xlu0 %3466
        %3469 = vset.pattern.permute.xlu0 3
        %3470 = vperm.xlu0 %3469, %v673
        %v3471 = vpop.permute.xlu0 %3470
        %3473 = vset.pattern.permute.xlu0 3
        %3474 = vperm.xlu0 %3473, %v674
        %v3475 = vpop.permute.xlu0 %3474
        %3477 = vset.pattern.permute.xlu0 3
        %3478 = vperm.xlu0 %3477, %v675
        %v3479 = vpop.permute.xlu0 %3478
        %3481 = vset.pattern.permute.xlu0 3
        %3482 = vperm.xlu0 %3481, %v676
        %v3483 = vpop.permute.xlu0 %3482
        %3485 = vset.pattern.permute.xlu0 3
        %3486 = vperm.xlu0 %3485, %v677
        %v3487 = vpop.permute.xlu0 %3486
        %3489 = vset.pattern.permute.xlu0 3
        %3490 = vperm.xlu0 %3489, %v678
        %v3491 = vpop.permute.xlu0 %3490
        %3493 = vset.pattern.permute.xlu0 3
        %3494 = vperm.xlu0 %3493, %v679
        %v3495 = vpop.permute.xlu0 %3494
        %3497 = vset.pattern.permute.xlu0 3
        %3498 = vperm.xlu0 %3497, %v680
        %v3499 = vpop.permute.xlu0 %3498
        %v3501 = vperm.slane %v681, 3
        %v3502 = vmul.f32 %v2991, %v3501
        %v3503 = vmul.f32 %v2995, %v3501
        %v3504 = vmul.f32 %v2999, %v3501
        %v3505 = vmul.f32 %v3003, %v3501
        %v3506 = vmul.f32 %v3007, %v3501
        %v3507 = vmul.f32 %v3011, %v3501
        %v3508 = vmul.f32 %v3015, %v3501
        %v3509 = vmul.f32 %v3019, %v3501
        %v3510 = vmul.f32 %v3023, %v3501
        %v3511 = vmul.f32 %v3027, %v3501
        %v3512 = vmul.f32 %v3031, %v3501
        %v3513 = vmul.f32 %v3035, %v3501
        %v3514 = vmul.f32 %v3039, %v3501
        %v3515 = vmul.f32 %v3043, %v3501
        %v3516 = vmul.f32 %v3047, %v3501
        %v3517 = vmul.f32 %v3051, %v3501
        %v3518 = vmul.f32 %v3055, %v3501
        %v3519 = vmul.f32 %v3059, %v3501
        %v3520 = vmul.f32 %v3063, %v3501
        %v3521 = vmul.f32 %v3067, %v3501
        %v3522 = vmul.f32 %v3071, %v3501
        %v3523 = vmul.f32 %v3075, %v3501
        %v3524 = vmul.f32 %v3079, %v3501
        %v3525 = vmul.f32 %v3083, %v3501
        %v3526 = vmul.f32 %v3087, %v3501
        %v3527 = vmul.f32 %v3091, %v3501
        %v3528 = vmul.f32 %v3095, %v3501
        %v3529 = vmul.f32 %v3099, %v3501
        %v3530 = vmul.f32 %v3103, %v3501
        %v3531 = vmul.f32 %v3107, %v3501
        %v3532 = vmul.f32 %v3111, %v3501
        %v3533 = vmul.f32 %v3115, %v3501
        %v3534 = vmul.f32 %v3119, %v3501
        %v3535 = vmul.f32 %v3123, %v3501
        %v3536 = vmul.f32 %v3127, %v3501
        %v3537 = vmul.f32 %v3131, %v3501
        %v3538 = vmul.f32 %v3135, %v3501
        %v3539 = vmul.f32 %v3139, %v3501
        %v3540 = vmul.f32 %v3143, %v3501
        %v3541 = vmul.f32 %v3147, %v3501
        %v3542 = vmul.f32 %v3151, %v3501
        %v3543 = vmul.f32 %v3155, %v3501
        %v3544 = vmul.f32 %v3159, %v3501
        %v3545 = vmul.f32 %v3163, %v3501
        %v3546 = vmul.f32 %v3167, %v3501
        %v3547 = vmul.f32 %v3171, %v3501
        %v3548 = vmul.f32 %v3175, %v3501
        %v3549 = vmul.f32 %v3179, %v3501
        %v3550 = vmul.f32 %v3183, %v3501
        %v3551 = vmul.f32 %v3187, %v3501
        %v3552 = vmul.f32 %v3191, %v3501
        %v3553 = vmul.f32 %v3195, %v3501
        %v3554 = vmul.f32 %v3199, %v3501
        %v3555 = vmul.f32 %v3203, %v3501
        %v3556 = vmul.f32 %v3207, %v3501
        %v3557 = vmul.f32 %v3211, %v3501
        %v3558 = vmul.f32 %v3215, %v3501
        %v3559 = vmul.f32 %v3219, %v3501
        %v3560 = vmul.f32 %v3223, %v3501
        %v3561 = vmul.f32 %v3227, %v3501
        %v3562 = vmul.f32 %v3231, %v3501
        %v3563 = vmul.f32 %v3235, %v3501
        %v3564 = vmul.f32 %v3239, %v3501
        %v3565 = vmul.f32 %v3243, %v3501
        %v3566 = vmul.f32 %v3247, %v3501
        %v3567 = vmul.f32 %v3251, %v3501
        %v3568 = vmul.f32 %v3255, %v3501
        %v3569 = vmul.f32 %v3259, %v3501
        %v3570 = vmul.f32 %v3263, %v3501
        %v3571 = vmul.f32 %v3267, %v3501
        %v3572 = vmul.f32 %v3271, %v3501
        %v3573 = vmul.f32 %v3275, %v3501
        %v3574 = vmul.f32 %v3279, %v3501
        %v3575 = vmul.f32 %v3283, %v3501
        %v3576 = vmul.f32 %v3287, %v3501
        %v3577 = vmul.f32 %v3291, %v3501
        %v3578 = vmul.f32 %v3295, %v3501
        %v3579 = vmul.f32 %v3299, %v3501
        %v3580 = vmul.f32 %v3303, %v3501
        %v3581 = vmul.f32 %v3307, %v3501
        %v3582 = vmul.f32 %v3311, %v3501
        %v3583 = vmul.f32 %v3315, %v3501
        %v3584 = vmul.f32 %v3319, %v3501
        %v3585 = vmul.f32 %v3323, %v3501
        %v3586 = vmul.f32 %v3327, %v3501
        %v3587 = vmul.f32 %v3331, %v3501
        %v3588 = vmul.f32 %v3335, %v3501
        %v3589 = vmul.f32 %v3339, %v3501
        %v3590 = vmul.f32 %v3343, %v3501
        %v3591 = vmul.f32 %v3347, %v3501
        %v3592 = vmul.f32 %v3351, %v3501
        %v3593 = vmul.f32 %v3355, %v3501
        %v3594 = vmul.f32 %v3359, %v3501
        %v3595 = vmul.f32 %v3363, %v3501
        %v3596 = vmul.f32 %v3367, %v3501
        %v3597 = vmul.f32 %v3371, %v3501
        %v3598 = vmul.f32 %v3375, %v3501
        %v3599 = vmul.f32 %v3379, %v3501
        %v3600 = vmul.f32 %v3383, %v3501
        %v3601 = vmul.f32 %v3387, %v3501
        %v3602 = vmul.f32 %v3391, %v3501
        %v3603 = vmul.f32 %v3395, %v3501
        %v3604 = vmul.f32 %v3399, %v3501
        %v3605 = vmul.f32 %v3403, %v3501
        %v3606 = vmul.f32 %v3407, %v3501
        %v3607 = vmul.f32 %v3411, %v3501
        %v3608 = vmul.f32 %v3415, %v3501
        %v3609 = vmul.f32 %v3419, %v3501
        %v3610 = vmul.f32 %v3423, %v3501
        %v3611 = vmul.f32 %v3427, %v3501
        %v3612 = vmul.f32 %v3431, %v3501
        %v3613 = vmul.f32 %v3435, %v3501
        %v3614 = vmul.f32 %v3439, %v3501
        %v3615 = vmul.f32 %v3443, %v3501
        %v3616 = vmul.f32 %v3447, %v3501
        %v3617 = vmul.f32 %v3451, %v3501
        %v3618 = vmul.f32 %v3455, %v3501
        %v3619 = vmul.f32 %v3459, %v3501
        %v3620 = vmul.f32 %v3463, %v3501
        %v3621 = vmul.f32 %v3467, %v3501
        %v3622 = vmul.f32 %v3471, %v3501
        %v3623 = vmul.f32 %v3475, %v3501
        %v3624 = vmul.f32 %v3479, %v3501
        %v3625 = vmul.f32 %v3483, %v3501
        %v3626 = vmul.f32 %v3487, %v3501
        %v3627 = vmul.f32 %v3491, %v3501
        %v3628 = vmul.f32 %v3495, %v3501
        %v3629 = vmul.f32 %v3499, %v3501
        %v3630 = vadd.f32 %v2861, %v3502
        %v3631 = vadd.f32 %v2862, %v3503
        %v3632 = vadd.f32 %v2863, %v3504
        %v3633 = vadd.f32 %v2864, %v3505
        %v3634 = vadd.f32 %v2865, %v3506
        %v3635 = vadd.f32 %v2866, %v3507
        %v3636 = vadd.f32 %v2867, %v3508
        %v3637 = vadd.f32 %v2868, %v3509
        %v3638 = vadd.f32 %v2869, %v3510
        %v3639 = vadd.f32 %v2870, %v3511
        %v3640 = vadd.f32 %v2871, %v3512
        %v3641 = vadd.f32 %v2872, %v3513
        %v3642 = vadd.f32 %v2873, %v3514
        %v3643 = vadd.f32 %v2874, %v3515
        %v3644 = vadd.f32 %v2875, %v3516
        %v3645 = vadd.f32 %v2876, %v3517
        %v3646 = vadd.f32 %v2877, %v3518
        %v3647 = vadd.f32 %v2878, %v3519
        %v3648 = vadd.f32 %v2879, %v3520
        %v3649 = vadd.f32 %v2880, %v3521
        %v3650 = vadd.f32 %v2881, %v3522
        %v3651 = vadd.f32 %v2882, %v3523
        %v3652 = vadd.f32 %v2883, %v3524
        %v3653 = vadd.f32 %v2884, %v3525
        %v3654 = vadd.f32 %v2885, %v3526
        %v3655 = vadd.f32 %v2886, %v3527
        %v3656 = vadd.f32 %v2887, %v3528
        %v3657 = vadd.f32 %v2888, %v3529
        %v3658 = vadd.f32 %v2889, %v3530
        %v3659 = vadd.f32 %v2890, %v3531
        %v3660 = vadd.f32 %v2891, %v3532
        %v3661 = vadd.f32 %v2892, %v3533
        %v3662 = vadd.f32 %v2893, %v3534
        %v3663 = vadd.f32 %v2894, %v3535
        %v3664 = vadd.f32 %v2895, %v3536
        %v3665 = vadd.f32 %v2896, %v3537
        %v3666 = vadd.f32 %v2897, %v3538
        %v3667 = vadd.f32 %v2898, %v3539
        %v3668 = vadd.f32 %v2899, %v3540
        %v3669 = vadd.f32 %v2900, %v3541
        %v3670 = vadd.f32 %v2901, %v3542
        %v3671 = vadd.f32 %v2902, %v3543
        %v3672 = vadd.f32 %v2903, %v3544
        %v3673 = vadd.f32 %v2904, %v3545
        %v3674 = vadd.f32 %v2905, %v3546
        %v3675 = vadd.f32 %v2906, %v3547
        %v3676 = vadd.f32 %v2907, %v3548
        %v3677 = vadd.f32 %v2908, %v3549
        %v3678 = vadd.f32 %v2909, %v3550
        %v3679 = vadd.f32 %v2910, %v3551
        %v3680 = vadd.f32 %v2911, %v3552
        %v3681 = vadd.f32 %v2912, %v3553
        %v3682 = vadd.f32 %v2913, %v3554
        %v3683 = vadd.f32 %v2914, %v3555
        %v3684 = vadd.f32 %v2915, %v3556
        %v3685 = vadd.f32 %v2916, %v3557
        %v3686 = vadd.f32 %v2917, %v3558
        %v3687 = vadd.f32 %v2918, %v3559
        %v3688 = vadd.f32 %v2919, %v3560
        %v3689 = vadd.f32 %v2920, %v3561
        %v3690 = vadd.f32 %v2921, %v3562
        %v3691 = vadd.f32 %v2922, %v3563
        %v3692 = vadd.f32 %v2923, %v3564
        %v3693 = vadd.f32 %v2924, %v3565
        %v3694 = vadd.f32 %v2925, %v3566
        %v3695 = vadd.f32 %v2926, %v3567
        %v3696 = vadd.f32 %v2927, %v3568
        %v3697 = vadd.f32 %v2928, %v3569
        %v3698 = vadd.f32 %v2929, %v3570
        %v3699 = vadd.f32 %v2930, %v3571
        %v3700 = vadd.f32 %v2931, %v3572
        %v3701 = vadd.f32 %v2932, %v3573
        %v3702 = vadd.f32 %v2933, %v3574
        %v3703 = vadd.f32 %v2934, %v3575
        %v3704 = vadd.f32 %v2935, %v3576
        %v3705 = vadd.f32 %v2936, %v3577
        %v3706 = vadd.f32 %v2937, %v3578
        %v3707 = vadd.f32 %v2938, %v3579
        %v3708 = vadd.f32 %v2939, %v3580
        %v3709 = vadd.f32 %v2940, %v3581
        %v3710 = vadd.f32 %v2941, %v3582
        %v3711 = vadd.f32 %v2942, %v3583
        %v3712 = vadd.f32 %v2943, %v3584
        %v3713 = vadd.f32 %v2944, %v3585
        %v3714 = vadd.f32 %v2945, %v3586
        %v3715 = vadd.f32 %v2946, %v3587
        %v3716 = vadd.f32 %v2947, %v3588
        %v3717 = vadd.f32 %v2948, %v3589
        %v3718 = vadd.f32 %v2949, %v3590
        %v3719 = vadd.f32 %v2950, %v3591
        %v3720 = vadd.f32 %v2951, %v3592
        %v3721 = vadd.f32 %v2952, %v3593
        %v3722 = vadd.f32 %v2953, %v3594
        %v3723 = vadd.f32 %v2954, %v3595
        %v3724 = vadd.f32 %v2955, %v3596
        %v3725 = vadd.f32 %v2956, %v3597
        %v3726 = vadd.f32 %v2957, %v3598
        %v3727 = vadd.f32 %v2958, %v3599
        %v3728 = vadd.f32 %v2959, %v3600
        %v3729 = vadd.f32 %v2960, %v3601
        %v3730 = vadd.f32 %v2961, %v3602
        %v3731 = vadd.f32 %v2962, %v3603
        %v3732 = vadd.f32 %v2963, %v3604
        %v3733 = vadd.f32 %v2964, %v3605
        %v3734 = vadd.f32 %v2965, %v3606
        %v3735 = vadd.f32 %v2966, %v3607
        %v3736 = vadd.f32 %v2967, %v3608
        %v3737 = vadd.f32 %v2968, %v3609
        %v3738 = vadd.f32 %v2969, %v3610
        %v3739 = vadd.f32 %v2970, %v3611
        %v3740 = vadd.f32 %v2971, %v3612
        %v3741 = vadd.f32 %v2972, %v3613
        %v3742 = vadd.f32 %v2973, %v3614
        %v3743 = vadd.f32 %v2974, %v3615
        %v3744 = vadd.f32 %v2975, %v3616
        %v3745 = vadd.f32 %v2976, %v3617
        %v3746 = vadd.f32 %v2977, %v3618
        %v3747 = vadd.f32 %v2978, %v3619
        %v3748 = vadd.f32 %v2979, %v3620
        %v3749 = vadd.f32 %v2980, %v3621
        %v3750 = vadd.f32 %v2981, %v3622
        %v3751 = vadd.f32 %v2982, %v3623
        %v3752 = vadd.f32 %v2983, %v3624
        %v3753 = vadd.f32 %v2984, %v3625
        %v3754 = vadd.f32 %v2985, %v3626
        %v3755 = vadd.f32 %v2986, %v3627
        %v3756 = vadd.f32 %v2987, %v3628
        %v3757 = vadd.f32 %v2988, %v3629
        %v3758 = vpack.c.bf16 %v3630, %v3630
        %v3759 = vpack.c.bf16 %v3631, %v3631
        %v3760 = vpack.c.bf16 %v3632, %v3632
        %v3761 = vpack.c.bf16 %v3633, %v3633
        %v3762 = vpack.c.bf16 %v3634, %v3634
        %v3763 = vpack.c.bf16 %v3635, %v3635
        %v3764 = vpack.c.bf16 %v3636, %v3636
        %v3765 = vpack.c.bf16 %v3637, %v3637
        %v3766 = vpack.c.bf16 %v3638, %v3638
        %v3767 = vpack.c.bf16 %v3639, %v3639
        %v3768 = vpack.c.bf16 %v3640, %v3640
        %v3769 = vpack.c.bf16 %v3641, %v3641
        %v3770 = vpack.c.bf16 %v3642, %v3642
        %v3771 = vpack.c.bf16 %v3643, %v3643
        %v3772 = vpack.c.bf16 %v3644, %v3644
        %v3773 = vpack.c.bf16 %v3645, %v3645
        %v3774 = vpack.c.bf16 %v3646, %v3646
        %v3775 = vpack.c.bf16 %v3647, %v3647
        %v3776 = vpack.c.bf16 %v3648, %v3648
        %v3777 = vpack.c.bf16 %v3649, %v3649
        %v3778 = vpack.c.bf16 %v3650, %v3650
        %v3779 = vpack.c.bf16 %v3651, %v3651
        %v3780 = vpack.c.bf16 %v3652, %v3652
        %v3781 = vpack.c.bf16 %v3653, %v3653
        %v3782 = vpack.c.bf16 %v3654, %v3654
        %v3783 = vpack.c.bf16 %v3655, %v3655
        %v3784 = vpack.c.bf16 %v3656, %v3656
        %v3785 = vpack.c.bf16 %v3657, %v3657
        %v3786 = vpack.c.bf16 %v3658, %v3658
        %v3787 = vpack.c.bf16 %v3659, %v3659
        %v3788 = vpack.c.bf16 %v3660, %v3660
        %v3789 = vpack.c.bf16 %v3661, %v3661
        %v3790 = vpack.c.bf16 %v3662, %v3662
        %v3791 = vpack.c.bf16 %v3663, %v3663
        %v3792 = vpack.c.bf16 %v3664, %v3664
        %v3793 = vpack.c.bf16 %v3665, %v3665
        %v3794 = vpack.c.bf16 %v3666, %v3666
        %v3795 = vpack.c.bf16 %v3667, %v3667
        %v3796 = vpack.c.bf16 %v3668, %v3668
        %v3797 = vpack.c.bf16 %v3669, %v3669
        %v3798 = vpack.c.bf16 %v3670, %v3670
        %v3799 = vpack.c.bf16 %v3671, %v3671
        %v3800 = vpack.c.bf16 %v3672, %v3672
        %v3801 = vpack.c.bf16 %v3673, %v3673
        %v3802 = vpack.c.bf16 %v3674, %v3674
        %v3803 = vpack.c.bf16 %v3675, %v3675
        %v3804 = vpack.c.bf16 %v3676, %v3676
        %v3805 = vpack.c.bf16 %v3677, %v3677
        %v3806 = vpack.c.bf16 %v3678, %v3678
        %v3807 = vpack.c.bf16 %v3679, %v3679
        %v3808 = vpack.c.bf16 %v3680, %v3680
        %v3809 = vpack.c.bf16 %v3681, %v3681
        %v3810 = vpack.c.bf16 %v3682, %v3682
        %v3811 = vpack.c.bf16 %v3683, %v3683
        %v3812 = vpack.c.bf16 %v3684, %v3684
        %v3813 = vpack.c.bf16 %v3685, %v3685
        %v3814 = vpack.c.bf16 %v3686, %v3686
        %v3815 = vpack.c.bf16 %v3687, %v3687
        %v3816 = vpack.c.bf16 %v3688, %v3688
        %v3817 = vpack.c.bf16 %v3689, %v3689
        %v3818 = vpack.c.bf16 %v3690, %v3690
        %v3819 = vpack.c.bf16 %v3691, %v3691
        %v3820 = vpack.c.bf16 %v3692, %v3692
        %v3821 = vpack.c.bf16 %v3693, %v3693
        %v3822 = vpack.c.bf16 %v3694, %v3694
        %v3823 = vpack.c.bf16 %v3695, %v3695
        %v3824 = vpack.c.bf16 %v3696, %v3696
        %v3825 = vpack.c.bf16 %v3697, %v3697
        %v3826 = vpack.c.bf16 %v3698, %v3698
        %v3827 = vpack.c.bf16 %v3699, %v3699
        %v3828 = vpack.c.bf16 %v3700, %v3700
        %v3829 = vpack.c.bf16 %v3701, %v3701
        %v3830 = vpack.c.bf16 %v3702, %v3702
        %v3831 = vpack.c.bf16 %v3703, %v3703
        %v3832 = vpack.c.bf16 %v3704, %v3704
        %v3833 = vpack.c.bf16 %v3705, %v3705
        %v3834 = vpack.c.bf16 %v3706, %v3706
        %v3835 = vpack.c.bf16 %v3707, %v3707
        %v3836 = vpack.c.bf16 %v3708, %v3708
        %v3837 = vpack.c.bf16 %v3709, %v3709
        %v3838 = vpack.c.bf16 %v3710, %v3710
        %v3839 = vpack.c.bf16 %v3711, %v3711
        %v3840 = vpack.c.bf16 %v3712, %v3712
        %v3841 = vpack.c.bf16 %v3713, %v3713
        %v3842 = vpack.c.bf16 %v3714, %v3714
        %v3843 = vpack.c.bf16 %v3715, %v3715
        %v3844 = vpack.c.bf16 %v3716, %v3716
        %v3845 = vpack.c.bf16 %v3717, %v3717
        %v3846 = vpack.c.bf16 %v3718, %v3718
        %v3847 = vpack.c.bf16 %v3719, %v3719
        %v3848 = vpack.c.bf16 %v3720, %v3720
        %v3849 = vpack.c.bf16 %v3721, %v3721
        %v3850 = vpack.c.bf16 %v3722, %v3722
        %v3851 = vpack.c.bf16 %v3723, %v3723
        %v3852 = vpack.c.bf16 %v3724, %v3724
        %v3853 = vpack.c.bf16 %v3725, %v3725
        %v3854 = vpack.c.bf16 %v3726, %v3726
        %v3855 = vpack.c.bf16 %v3727, %v3727
        %v3856 = vpack.c.bf16 %v3728, %v3728
        %v3857 = vpack.c.bf16 %v3729, %v3729
        %v3858 = vpack.c.bf16 %v3730, %v3730
        %v3859 = vpack.c.bf16 %v3731, %v3731
        %v3860 = vpack.c.bf16 %v3732, %v3732
        %v3861 = vpack.c.bf16 %v3733, %v3733
        %v3862 = vpack.c.bf16 %v3734, %v3734
        %v3863 = vpack.c.bf16 %v3735, %v3735
        %v3864 = vpack.c.bf16 %v3736, %v3736
        %v3865 = vpack.c.bf16 %v3737, %v3737
        %v3866 = vpack.c.bf16 %v3738, %v3738
        %v3867 = vpack.c.bf16 %v3739, %v3739
        %v3868 = vpack.c.bf16 %v3740, %v3740
        %v3869 = vpack.c.bf16 %v3741, %v3741
        %v3870 = vpack.c.bf16 %v3742, %v3742
        %v3871 = vpack.c.bf16 %v3743, %v3743
        %v3872 = vpack.c.bf16 %v3744, %v3744
        %v3873 = vpack.c.bf16 %v3745, %v3745
        %v3874 = vpack.c.bf16 %v3746, %v3746
        %v3875 = vpack.c.bf16 %v3747, %v3747
        %v3876 = vpack.c.bf16 %v3748, %v3748
        %v3877 = vpack.c.bf16 %v3749, %v3749
        %v3878 = vpack.c.bf16 %v3750, %v3750
        %v3879 = vpack.c.bf16 %v3751, %v3751
        %v3880 = vpack.c.bf16 %v3752, %v3752
        %v3881 = vpack.c.bf16 %v3753, %v3753
        %v3882 = vpack.c.bf16 %v3754, %v3754
        %v3883 = vpack.c.bf16 %v3755, %v3755
        %v3884 = vpack.c.bf16 %v3756, %v3756
        %v3885 = vpack.c.bf16 %v3757, %v3757
        %v3902 = vunpack.c.l.b16 %v425
        %v3903 = vunpack.c.l.b16 %v426
        %v3904 = vunpack.c.l.b16 %v427
        %v3905 = vunpack.c.l.b16 %v428
        %v3906 = vunpack.c.l.b16 %v429
        %v3907 = vunpack.c.l.b16 %v430
        %v3908 = vunpack.c.l.b16 %v431
        %v3909 = vunpack.c.l.b16 %v432
        %v3910 = vunpack.c.l.b16 %v433
        %v3911 = vunpack.c.l.b16 %v434
        %v3912 = vunpack.c.l.b16 %v435
        %v3913 = vunpack.c.l.b16 %v436
        %v3914 = vunpack.c.l.b16 %v437
        %v3915 = vunpack.c.l.b16 %v438
        %v3916 = vunpack.c.l.b16 %v439
        %v3917 = vunpack.c.l.b16 %v440
        %v3918 = vpack.c.b16 %v3903, %v3902
        %v3919 = vpack.c.b16 %v3905, %v3904
        %v3920 = vpack.c.b16 %v3907, %v3906
        %v3921 = vpack.c.b16 %v3909, %v3908
        %v3922 = vpack.c.b16 %v3911, %v3910
        %v3923 = vpack.c.b16 %v3913, %v3912
        %v3924 = vpack.c.b16 %v3915, %v3914
        %v3925 = vpack.c.b16 %v3917, %v3916
        %v3950 = vunpack.c.l.b16 %v3758
        %v3951 = vunpack.c.l.b16 %v3759
        %v3952 = vunpack.c.l.b16 %v3760
        %v3953 = vunpack.c.l.b16 %v3761
        %v3954 = vunpack.c.l.b16 %v3762
        %v3955 = vunpack.c.l.b16 %v3763
        %v3956 = vunpack.c.l.b16 %v3764
        %v3957 = vunpack.c.l.b16 %v3765
        %v3958 = vunpack.c.l.b16 %v3766
        %v3959 = vunpack.c.l.b16 %v3767
        %v3960 = vunpack.c.l.b16 %v3768
        %v3961 = vunpack.c.l.b16 %v3769
        %v3962 = vunpack.c.l.b16 %v3770
        %v3963 = vunpack.c.l.b16 %v3771
        %v3964 = vunpack.c.l.b16 %v3772
        %v3965 = vunpack.c.l.b16 %v3773
        %v3966 = vpack.c.b16 %v3951, %v3950
        %v3967 = vpack.c.b16 %v3953, %v3952
        %v3968 = vpack.c.b16 %v3955, %v3954
        %v3969 = vpack.c.b16 %v3957, %v3956
        %v3970 = vpack.c.b16 %v3959, %v3958
        %v3971 = vpack.c.b16 %v3961, %v3960
        %v3972 = vpack.c.b16 %v3963, %v3962
        %v3973 = vpack.c.b16 %v3965, %v3964
        %3982 = vmatpush.bf16.msra.mxu0 %v3973
        %3983 = vmatpush.bf16.msra.mxu0 %v3972
        %3984 = vmatpush.bf16.msra.mxu0 %v3971
        %3985 = vmatpush.bf16.msra.mxu0 %v3970
        %3986 = vmatpush.bf16.msra.mxu0 %v3969
        %3987 = vmatpush.bf16.msra.mxu0 %v3968
        %3988 = vmatpush.bf16.msra.mxu0 %v3967
        %3989 = vmatpush.bf16.msra.mxu0 %v3966
        %3990 = vmatmul.bf16.gmra.mxu0 %v3918
        %v3991 = vpop.f32.mrf.mxu0
        %v3992 = vadd.f32 0.0, %v3991
        %v3993 = vpop.f32.mrf.mxu0
        %v3994 = vadd.f32 0.0, %v3993
        %3995 = vmatmul.bf16.gmra.mxu0 %v3919
        %v3996 = vpop.f32.mrf.mxu0
        %v3997 = vadd.f32 0.0, %v3996
        %v3998 = vpop.f32.mrf.mxu0
        %v3999 = vadd.f32 0.0, %v3998
        %4000 = vmatmul.bf16.gmra.mxu0 %v3920
        %v4001 = vpop.f32.mrf.mxu0
        %v4002 = vadd.f32 0.0, %v4001
        %v4003 = vpop.f32.mrf.mxu0
        %v4004 = vadd.f32 0.0, %v4003
        %4005 = vmatmul.bf16.gmra.mxu0 %v3921
        %v4006 = vpop.f32.mrf.mxu0
        %v4007 = vadd.f32 0.0, %v4006
        %v4008 = vpop.f32.mrf.mxu0
        %v4009 = vadd.f32 0.0, %v4008
        %4010 = vmatmul.bf16.gmra.mxu0 %v3922
        %v4011 = vpop.f32.mrf.mxu0
        %v4012 = vadd.f32 0.0, %v4011
        %v4013 = vpop.f32.mrf.mxu0
        %v4014 = vadd.f32 0.0, %v4013
        %4015 = vmatmul.bf16.gmra.mxu0 %v3923
        %v4016 = vpop.f32.mrf.mxu0
        %v4017 = vadd.f32 0.0, %v4016
        %v4018 = vpop.f32.mrf.mxu0
        %v4019 = vadd.f32 0.0, %v4018
        %4020 = vmatmul.bf16.gmra.mxu0 %v3924
        %v4021 = vpop.f32.mrf.mxu0
        %v4022 = vadd.f32 0.0, %v4021
        %v4023 = vpop.f32.mrf.mxu0
        %v4024 = vadd.f32 0.0, %v4023
        %4025 = vmatmul.bf16.gmra.mxu0 %v3925
        %v4026 = vpop.f32.mrf.mxu0
        %v4027 = vadd.f32 0.0, %v4026
        %v4028 = vpop.f32.mrf.mxu0
        %v4029 = vadd.f32 0.0, %v4028
        %4030 = vdwg.mxu0
        %v4047 = vunpack.c.l.b16 %v441
        %v4048 = vunpack.c.l.b16 %v442
        %v4049 = vunpack.c.l.b16 %v443
        %v4050 = vunpack.c.l.b16 %v444
        %v4051 = vunpack.c.l.b16 %v445
        %v4052 = vunpack.c.l.b16 %v446
        %v4053 = vunpack.c.l.b16 %v447
        %v4054 = vunpack.c.l.b16 %v448
        %v4055 = vunpack.c.l.b16 %v449
        %v4056 = vunpack.c.l.b16 %v450
        %v4057 = vunpack.c.l.b16 %v451
        %v4058 = vunpack.c.l.b16 %v452
        %v4059 = vunpack.c.l.b16 %v453
        %v4060 = vunpack.c.l.b16 %v454
        %v4061 = vunpack.c.l.b16 %v455
        %v4062 = vunpack.c.l.b16 %v456
        %v4063 = vpack.c.b16 %v4048, %v4047
        %v4064 = vpack.c.b16 %v4050, %v4049
        %v4065 = vpack.c.b16 %v4052, %v4051
        %v4066 = vpack.c.b16 %v4054, %v4053
        %v4067 = vpack.c.b16 %v4056, %v4055
        %v4068 = vpack.c.b16 %v4058, %v4057
        %v4069 = vpack.c.b16 %v4060, %v4059
        %v4070 = vpack.c.b16 %v4062, %v4061
        %v4095 = vunpack.c.l.b16 %v3774
        %v4096 = vunpack.c.l.b16 %v3775
        %v4097 = vunpack.c.l.b16 %v3776
        %v4098 = vunpack.c.l.b16 %v3777
        %v4099 = vunpack.c.l.b16 %v3778
        %v4100 = vunpack.c.l.b16 %v3779
        %v4101 = vunpack.c.l.b16 %v3780
        %v4102 = vunpack.c.l.b16 %v3781
        %v4103 = vunpack.c.l.b16 %v3782
        %v4104 = vunpack.c.l.b16 %v3783
        %v4105 = vunpack.c.l.b16 %v3784
        %v4106 = vunpack.c.l.b16 %v3785
        %v4107 = vunpack.c.l.b16 %v3786
        %v4108 = vunpack.c.l.b16 %v3787
        %v4109 = vunpack.c.l.b16 %v3788
        %v4110 = vunpack.c.l.b16 %v3789
        %v4111 = vpack.c.b16 %v4096, %v4095
        %v4112 = vpack.c.b16 %v4098, %v4097
        %v4113 = vpack.c.b16 %v4100, %v4099
        %v4114 = vpack.c.b16 %v4102, %v4101
        %v4115 = vpack.c.b16 %v4104, %v4103
        %v4116 = vpack.c.b16 %v4106, %v4105
        %v4117 = vpack.c.b16 %v4108, %v4107
        %v4118 = vpack.c.b16 %v4110, %v4109
        %4127 = vmatpush.bf16.msra.mxu0 %v4118
        %4128 = vmatpush.bf16.msra.mxu0 %v4117
        %4129 = vmatpush.bf16.msra.mxu0 %v4116
        %4130 = vmatpush.bf16.msra.mxu0 %v4115
        %4131 = vmatpush.bf16.msra.mxu0 %v4114
        %4132 = vmatpush.bf16.msra.mxu0 %v4113
        %4133 = vmatpush.bf16.msra.mxu0 %v4112
        %4134 = vmatpush.bf16.msra.mxu0 %v4111
        %4135 = vmatmul.bf16.gmra.mxu0 %v4063
        %v4136 = vpop.f32.mrf.mxu0
        %v4137 = vadd.f32 0.0, %v4136
        %v4138 = vpop.f32.mrf.mxu0
        %v4139 = vadd.f32 0.0, %v4138
        %4140 = vmatmul.bf16.gmra.mxu0 %v4064
        %v4141 = vpop.f32.mrf.mxu0
        %v4142 = vadd.f32 0.0, %v4141
        %v4143 = vpop.f32.mrf.mxu0
        %v4144 = vadd.f32 0.0, %v4143
        %4145 = vmatmul.bf16.gmra.mxu0 %v4065
        %v4146 = vpop.f32.mrf.mxu0
        %v4147 = vadd.f32 0.0, %v4146
        %v4148 = vpop.f32.mrf.mxu0
        %v4149 = vadd.f32 0.0, %v4148
        %4150 = vmatmul.bf16.gmra.mxu0 %v4066
        %v4151 = vpop.f32.mrf.mxu0
        %v4152 = vadd.f32 0.0, %v4151
        %v4153 = vpop.f32.mrf.mxu0
        %v4154 = vadd.f32 0.0, %v4153
        %4155 = vmatmul.bf16.gmra.mxu0 %v4067
        %v4156 = vpop.f32.mrf.mxu0
        %v4157 = vadd.f32 0.0, %v4156
        %v4158 = vpop.f32.mrf.mxu0
        %v4159 = vadd.f32 0.0, %v4158
        %4160 = vmatmul.bf16.gmra.mxu0 %v4068
        %v4161 = vpop.f32.mrf.mxu0
        %v4162 = vadd.f32 0.0, %v4161
        %v4163 = vpop.f32.mrf.mxu0
        %v4164 = vadd.f32 0.0, %v4163
        %4165 = vmatmul.bf16.gmra.mxu0 %v4069
        %v4166 = vpop.f32.mrf.mxu0
        %v4167 = vadd.f32 0.0, %v4166
        %v4168 = vpop.f32.mrf.mxu0
        %v4169 = vadd.f32 0.0, %v4168
        %4170 = vmatmul.bf16.gmra.mxu0 %v4070
        %v4171 = vpop.f32.mrf.mxu0
        %v4172 = vadd.f32 0.0, %v4171
        %v4173 = vpop.f32.mrf.mxu0
        %v4174 = vadd.f32 0.0, %v4173
        %4175 = vdwg.mxu0
        %v4192 = vunpack.c.l.b16 %v457
        %v4193 = vunpack.c.l.b16 %v458
        %v4194 = vunpack.c.l.b16 %v459
        %v4195 = vunpack.c.l.b16 %v460
        %v4196 = vunpack.c.l.b16 %v461
        %v4197 = vunpack.c.l.b16 %v462
        %v4198 = vunpack.c.l.b16 %v463
        %v4199 = vunpack.c.l.b16 %v464
        %v4200 = vunpack.c.l.b16 %v465
        %v4201 = vunpack.c.l.b16 %v466
        %v4202 = vunpack.c.l.b16 %v467
        %v4203 = vunpack.c.l.b16 %v468
        %v4204 = vunpack.c.l.b16 %v469
        %v4205 = vunpack.c.l.b16 %v470
        %v4206 = vunpack.c.l.b16 %v471
        %v4207 = vunpack.c.l.b16 %v472
        %v4208 = vpack.c.b16 %v4193, %v4192
        %v4209 = vpack.c.b16 %v4195, %v4194
        %v4210 = vpack.c.b16 %v4197, %v4196
        %v4211 = vpack.c.b16 %v4199, %v4198
        %v4212 = vpack.c.b16 %v4201, %v4200
        %v4213 = vpack.c.b16 %v4203, %v4202
        %v4214 = vpack.c.b16 %v4205, %v4204
        %v4215 = vpack.c.b16 %v4207, %v4206
        %v4240 = vunpack.c.l.b16 %v3790
        %v4241 = vunpack.c.l.b16 %v3791
        %v4242 = vunpack.c.l.b16 %v3792
        %v4243 = vunpack.c.l.b16 %v3793
        %v4244 = vunpack.c.l.b16 %v3794
        %v4245 = vunpack.c.l.b16 %v3795
        %v4246 = vunpack.c.l.b16 %v3796
        %v4247 = vunpack.c.l.b16 %v3797
        %v4248 = vunpack.c.l.b16 %v3798
        %v4249 = vunpack.c.l.b16 %v3799
        %v4250 = vunpack.c.l.b16 %v3800
        %v4251 = vunpack.c.l.b16 %v3801
        %v4252 = vunpack.c.l.b16 %v3802
        %v4253 = vunpack.c.l.b16 %v3803
        %v4254 = vunpack.c.l.b16 %v3804
        %v4255 = vunpack.c.l.b16 %v3805
        %v4256 = vpack.c.b16 %v4241, %v4240
        %v4257 = vpack.c.b16 %v4243, %v4242
        %v4258 = vpack.c.b16 %v4245, %v4244
        %v4259 = vpack.c.b16 %v4247, %v4246
        %v4260 = vpack.c.b16 %v4249, %v4248
        %v4261 = vpack.c.b16 %v4251, %v4250
        %v4262 = vpack.c.b16 %v4253, %v4252
        %v4263 = vpack.c.b16 %v4255, %v4254
        %4272 = vmatpush.bf16.msra.mxu0 %v4263
        %4273 = vmatpush.bf16.msra.mxu0 %v4262
        %4274 = vmatpush.bf16.msra.mxu0 %v4261
        %4275 = vmatpush.bf16.msra.mxu0 %v4260
        %4276 = vmatpush.bf16.msra.mxu0 %v4259
        %4277 = vmatpush.bf16.msra.mxu0 %v4258
        %4278 = vmatpush.bf16.msra.mxu0 %v4257
        %4279 = vmatpush.bf16.msra.mxu0 %v4256
        %4280 = vmatmul.bf16.gmra.mxu0 %v4208
        %v4281 = vpop.f32.mrf.mxu0
        %v4282 = vadd.f32 0.0, %v4281
        %v4283 = vpop.f32.mrf.mxu0
        %v4284 = vadd.f32 0.0, %v4283
        %4285 = vmatmul.bf16.gmra.mxu0 %v4209
        %v4286 = vpop.f32.mrf.mxu0
        %v4287 = vadd.f32 0.0, %v4286
        %v4288 = vpop.f32.mrf.mxu0
        %v4289 = vadd.f32 0.0, %v4288
        %4290 = vmatmul.bf16.gmra.mxu0 %v4210
        %v4291 = vpop.f32.mrf.mxu0
        %v4292 = vadd.f32 0.0, %v4291
        %v4293 = vpop.f32.mrf.mxu0
        %v4294 = vadd.f32 0.0, %v4293
        %4295 = vmatmul.bf16.gmra.mxu0 %v4211
        %v4296 = vpop.f32.mrf.mxu0
        %v4297 = vadd.f32 0.0, %v4296
        %v4298 = vpop.f32.mrf.mxu0
        %v4299 = vadd.f32 0.0, %v4298
        %4300 = vmatmul.bf16.gmra.mxu0 %v4212
        %v4301 = vpop.f32.mrf.mxu0
        %v4302 = vadd.f32 0.0, %v4301
        %v4303 = vpop.f32.mrf.mxu0
        %v4304 = vadd.f32 0.0, %v4303
        %4305 = vmatmul.bf16.gmra.mxu0 %v4213
        %v4306 = vpop.f32.mrf.mxu0
        %v4307 = vadd.f32 0.0, %v4306
        %v4308 = vpop.f32.mrf.mxu0
        %v4309 = vadd.f32 0.0, %v4308
        %4310 = vmatmul.bf16.gmra.mxu0 %v4214
        %v4311 = vpop.f32.mrf.mxu0
        %v4312 = vadd.f32 0.0, %v4311
        %v4313 = vpop.f32.mrf.mxu0
        %v4314 = vadd.f32 0.0, %v4313
        %4315 = vmatmul.bf16.gmra.mxu0 %v4215
        %v4316 = vpop.f32.mrf.mxu0
        %v4317 = vadd.f32 0.0, %v4316
        %v4318 = vpop.f32.mrf.mxu0
        %v4319 = vadd.f32 0.0, %v4318
        %4320 = vdwg.mxu0
        %v4337 = vunpack.c.l.b16 %v473
        %v4338 = vunpack.c.l.b16 %v474
        %v4339 = vunpack.c.l.b16 %v475
        %v4340 = vunpack.c.l.b16 %v476
        %v4341 = vunpack.c.l.b16 %v477
        %v4342 = vunpack.c.l.b16 %v478
        %v4343 = vunpack.c.l.b16 %v479
        %v4344 = vunpack.c.l.b16 %v480
        %v4345 = vunpack.c.l.b16 %v481
        %v4346 = vunpack.c.l.b16 %v482
        %v4347 = vunpack.c.l.b16 %v483
        %v4348 = vunpack.c.l.b16 %v484
        %v4349 = vunpack.c.l.b16 %v485
        %v4350 = vunpack.c.l.b16 %v486
        %v4351 = vunpack.c.l.b16 %v487
        %v4352 = vunpack.c.l.b16 %v488
        %v4353 = vpack.c.b16 %v4338, %v4337
        %v4354 = vpack.c.b16 %v4340, %v4339
        %v4355 = vpack.c.b16 %v4342, %v4341
        %v4356 = vpack.c.b16 %v4344, %v4343
        %v4357 = vpack.c.b16 %v4346, %v4345
        %v4358 = vpack.c.b16 %v4348, %v4347
        %v4359 = vpack.c.b16 %v4350, %v4349
        %v4360 = vpack.c.b16 %v4352, %v4351
        %v4385 = vunpack.c.l.b16 %v3806
        %v4386 = vunpack.c.l.b16 %v3807
        %v4387 = vunpack.c.l.b16 %v3808
        %v4388 = vunpack.c.l.b16 %v3809
        %v4389 = vunpack.c.l.b16 %v3810
        %v4390 = vunpack.c.l.b16 %v3811
        %v4391 = vunpack.c.l.b16 %v3812
        %v4392 = vunpack.c.l.b16 %v3813
        %v4393 = vunpack.c.l.b16 %v3814
        %v4394 = vunpack.c.l.b16 %v3815
        %v4395 = vunpack.c.l.b16 %v3816
        %v4396 = vunpack.c.l.b16 %v3817
        %v4397 = vunpack.c.l.b16 %v3818
        %v4398 = vunpack.c.l.b16 %v3819
        %v4399 = vunpack.c.l.b16 %v3820
        %v4400 = vunpack.c.l.b16 %v3821
        %v4401 = vpack.c.b16 %v4386, %v4385
        %v4402 = vpack.c.b16 %v4388, %v4387
        %v4403 = vpack.c.b16 %v4390, %v4389
        %v4404 = vpack.c.b16 %v4392, %v4391
        %v4405 = vpack.c.b16 %v4394, %v4393
        %v4406 = vpack.c.b16 %v4396, %v4395
        %v4407 = vpack.c.b16 %v4398, %v4397
        %v4408 = vpack.c.b16 %v4400, %v4399
        %4417 = vmatpush.bf16.msra.mxu0 %v4408
        %4418 = vmatpush.bf16.msra.mxu0 %v4407
        %4419 = vmatpush.bf16.msra.mxu0 %v4406
        %4420 = vmatpush.bf16.msra.mxu0 %v4405
        %4421 = vmatpush.bf16.msra.mxu0 %v4404
        %4422 = vmatpush.bf16.msra.mxu0 %v4403
        %4423 = vmatpush.bf16.msra.mxu0 %v4402
        %4424 = vmatpush.bf16.msra.mxu0 %v4401
        %4425 = vmatmul.bf16.gmra.mxu0 %v4353
        %v4426 = vpop.f32.mrf.mxu0
        %v4427 = vadd.f32 0.0, %v4426
        %v4428 = vpop.f32.mrf.mxu0
        %v4429 = vadd.f32 0.0, %v4428
        %4430 = vmatmul.bf16.gmra.mxu0 %v4354
        %v4431 = vpop.f32.mrf.mxu0
        %v4432 = vadd.f32 0.0, %v4431
        %v4433 = vpop.f32.mrf.mxu0
        %v4434 = vadd.f32 0.0, %v4433
        %4435 = vmatmul.bf16.gmra.mxu0 %v4355
        %v4436 = vpop.f32.mrf.mxu0
        %v4437 = vadd.f32 0.0, %v4436
        %v4438 = vpop.f32.mrf.mxu0
        %v4439 = vadd.f32 0.0, %v4438
        %4440 = vmatmul.bf16.gmra.mxu0 %v4356
        %v4441 = vpop.f32.mrf.mxu0
        %v4442 = vadd.f32 0.0, %v4441
        %v4443 = vpop.f32.mrf.mxu0
        %v4444 = vadd.f32 0.0, %v4443
        %4445 = vmatmul.bf16.gmra.mxu0 %v4357
        %v4446 = vpop.f32.mrf.mxu0
        %v4447 = vadd.f32 0.0, %v4446
        %v4448 = vpop.f32.mrf.mxu0
        %v4449 = vadd.f32 0.0, %v4448
        %4450 = vmatmul.bf16.gmra.mxu0 %v4358
        %v4451 = vpop.f32.mrf.mxu0
        %v4452 = vadd.f32 0.0, %v4451
        %v4453 = vpop.f32.mrf.mxu0
        %v4454 = vadd.f32 0.0, %v4453
        %4455 = vmatmul.bf16.gmra.mxu0 %v4359
        %v4456 = vpop.f32.mrf.mxu0
        %v4457 = vadd.f32 0.0, %v4456
        %v4458 = vpop.f32.mrf.mxu0
        %v4459 = vadd.f32 0.0, %v4458
        %4460 = vmatmul.bf16.gmra.mxu0 %v4360
        %v4461 = vpop.f32.mrf.mxu0
        %v4462 = vadd.f32 0.0, %v4461
        %v4463 = vpop.f32.mrf.mxu0
        %v4464 = vadd.f32 0.0, %v4463
        %4465 = vdwg.mxu0
        %v4482 = vunpack.c.l.b16 %v489
        %v4483 = vunpack.c.l.b16 %v490
        %v4484 = vunpack.c.l.b16 %v491
        %v4485 = vunpack.c.l.b16 %v492
        %v4486 = vunpack.c.l.b16 %v493
        %v4487 = vunpack.c.l.b16 %v494
        %v4488 = vunpack.c.l.b16 %v495
        %v4489 = vunpack.c.l.b16 %v496
        %v4490 = vunpack.c.l.b16 %v497
        %v4491 = vunpack.c.l.b16 %v498
        %v4492 = vunpack.c.l.b16 %v499
        %v4493 = vunpack.c.l.b16 %v500
        %v4494 = vunpack.c.l.b16 %v501
        %v4495 = vunpack.c.l.b16 %v502
        %v4496 = vunpack.c.l.b16 %v503
        %v4497 = vunpack.c.l.b16 %v504
        %v4498 = vpack.c.b16 %v4483, %v4482
        %v4499 = vpack.c.b16 %v4485, %v4484
        %v4500 = vpack.c.b16 %v4487, %v4486
        %v4501 = vpack.c.b16 %v4489, %v4488
        %v4502 = vpack.c.b16 %v4491, %v4490
        %v4503 = vpack.c.b16 %v4493, %v4492
        %v4504 = vpack.c.b16 %v4495, %v4494
        %v4505 = vpack.c.b16 %v4497, %v4496
        %v4530 = vunpack.c.l.b16 %v3822
        %v4531 = vunpack.c.l.b16 %v3823
        %v4532 = vunpack.c.l.b16 %v3824
        %v4533 = vunpack.c.l.b16 %v3825
        %v4534 = vunpack.c.l.b16 %v3826
        %v4535 = vunpack.c.l.b16 %v3827
        %v4536 = vunpack.c.l.b16 %v3828
        %v4537 = vunpack.c.l.b16 %v3829
        %v4538 = vunpack.c.l.b16 %v3830
        %v4539 = vunpack.c.l.b16 %v3831
        %v4540 = vunpack.c.l.b16 %v3832
        %v4541 = vunpack.c.l.b16 %v3833
        %v4542 = vunpack.c.l.b16 %v3834
        %v4543 = vunpack.c.l.b16 %v3835
        %v4544 = vunpack.c.l.b16 %v3836
        %v4545 = vunpack.c.l.b16 %v3837
        %v4546 = vpack.c.b16 %v4531, %v4530
        %v4547 = vpack.c.b16 %v4533, %v4532
        %v4548 = vpack.c.b16 %v4535, %v4534
        %v4549 = vpack.c.b16 %v4537, %v4536
        %v4550 = vpack.c.b16 %v4539, %v4538
        %v4551 = vpack.c.b16 %v4541, %v4540
        %v4552 = vpack.c.b16 %v4543, %v4542
        %v4553 = vpack.c.b16 %v4545, %v4544
        %4562 = vmatpush.bf16.msra.mxu0 %v4553
        %4563 = vmatpush.bf16.msra.mxu0 %v4552
        %4564 = vmatpush.bf16.msra.mxu0 %v4551
        %4565 = vmatpush.bf16.msra.mxu0 %v4550
        %4566 = vmatpush.bf16.msra.mxu0 %v4549
        %4567 = vmatpush.bf16.msra.mxu0 %v4548
        %4568 = vmatpush.bf16.msra.mxu0 %v4547
        %4569 = vmatpush.bf16.msra.mxu0 %v4546
        %4570 = vmatmul.bf16.gmra.mxu0 %v4498
        %v4571 = vpop.f32.mrf.mxu0
        %v4572 = vadd.f32 0.0, %v4571
        %v4573 = vpop.f32.mrf.mxu0
        %v4574 = vadd.f32 0.0, %v4573
        %4575 = vmatmul.bf16.gmra.mxu0 %v4499
        %v4576 = vpop.f32.mrf.mxu0
        %v4577 = vadd.f32 0.0, %v4576
        %v4578 = vpop.f32.mrf.mxu0
        %v4579 = vadd.f32 0.0, %v4578
        %4580 = vmatmul.bf16.gmra.mxu0 %v4500
        %v4581 = vpop.f32.mrf.mxu0
        %v4582 = vadd.f32 0.0, %v4581
        %v4583 = vpop.f32.mrf.mxu0
        %v4584 = vadd.f32 0.0, %v4583
        %4585 = vmatmul.bf16.gmra.mxu0 %v4501
        %v4586 = vpop.f32.mrf.mxu0
        %v4587 = vadd.f32 0.0, %v4586
        %v4588 = vpop.f32.mrf.mxu0
        %v4589 = vadd.f32 0.0, %v4588
        %4590 = vmatmul.bf16.gmra.mxu0 %v4502
        %v4591 = vpop.f32.mrf.mxu0
        %v4592 = vadd.f32 0.0, %v4591
        %v4593 = vpop.f32.mrf.mxu0
        %v4594 = vadd.f32 0.0, %v4593
        %4595 = vmatmul.bf16.gmra.mxu0 %v4503
        %v4596 = vpop.f32.mrf.mxu0
        %v4597 = vadd.f32 0.0, %v4596
        %v4598 = vpop.f32.mrf.mxu0
        %v4599 = vadd.f32 0.0, %v4598
        %4600 = vmatmul.bf16.gmra.mxu0 %v4504
        %v4601 = vpop.f32.mrf.mxu0
        %v4602 = vadd.f32 0.0, %v4601
        %v4603 = vpop.f32.mrf.mxu0
        %v4604 = vadd.f32 0.0, %v4603
        %4605 = vmatmul.bf16.gmra.mxu0 %v4505
        %v4606 = vpop.f32.mrf.mxu0
        %v4607 = vadd.f32 0.0, %v4606
        %v4608 = vpop.f32.mrf.mxu0
        %v4609 = vadd.f32 0.0, %v4608
        %4610 = vdwg.mxu0
        %v4627 = vunpack.c.l.b16 %v505
        %v4628 = vunpack.c.l.b16 %v506
        %v4629 = vunpack.c.l.b16 %v507
        %v4630 = vunpack.c.l.b16 %v508
        %v4631 = vunpack.c.l.b16 %v509
        %v4632 = vunpack.c.l.b16 %v510
        %v4633 = vunpack.c.l.b16 %v511
        %v4634 = vunpack.c.l.b16 %v512
        %v4635 = vunpack.c.l.b16 %v513
        %v4636 = vunpack.c.l.b16 %v514
        %v4637 = vunpack.c.l.b16 %v515
        %v4638 = vunpack.c.l.b16 %v516
        %v4639 = vunpack.c.l.b16 %v517
        %v4640 = vunpack.c.l.b16 %v518
        %v4641 = vunpack.c.l.b16 %v519
        %v4642 = vunpack.c.l.b16 %v520
        %v4643 = vpack.c.b16 %v4628, %v4627
        %v4644 = vpack.c.b16 %v4630, %v4629
        %v4645 = vpack.c.b16 %v4632, %v4631
        %v4646 = vpack.c.b16 %v4634, %v4633
        %v4647 = vpack.c.b16 %v4636, %v4635
        %v4648 = vpack.c.b16 %v4638, %v4637
        %v4649 = vpack.c.b16 %v4640, %v4639
        %v4650 = vpack.c.b16 %v4642, %v4641
        %v4675 = vunpack.c.l.b16 %v3838
        %v4676 = vunpack.c.l.b16 %v3839
        %v4677 = vunpack.c.l.b16 %v3840
        %v4678 = vunpack.c.l.b16 %v3841
        %v4679 = vunpack.c.l.b16 %v3842
        %v4680 = vunpack.c.l.b16 %v3843
        %v4681 = vunpack.c.l.b16 %v3844
        %v4682 = vunpack.c.l.b16 %v3845
        %v4683 = vunpack.c.l.b16 %v3846
        %v4684 = vunpack.c.l.b16 %v3847
        %v4685 = vunpack.c.l.b16 %v3848
        %v4686 = vunpack.c.l.b16 %v3849
        %v4687 = vunpack.c.l.b16 %v3850
        %v4688 = vunpack.c.l.b16 %v3851
        %v4689 = vunpack.c.l.b16 %v3852
        %v4690 = vunpack.c.l.b16 %v3853
        %v4691 = vpack.c.b16 %v4676, %v4675
        %v4692 = vpack.c.b16 %v4678, %v4677
        %v4693 = vpack.c.b16 %v4680, %v4679
        %v4694 = vpack.c.b16 %v4682, %v4681
        %v4695 = vpack.c.b16 %v4684, %v4683
        %v4696 = vpack.c.b16 %v4686, %v4685
        %v4697 = vpack.c.b16 %v4688, %v4687
        %v4698 = vpack.c.b16 %v4690, %v4689
        %4707 = vmatpush.bf16.msra.mxu0 %v4698
        %4708 = vmatpush.bf16.msra.mxu0 %v4697
        %4709 = vmatpush.bf16.msra.mxu0 %v4696
        %4710 = vmatpush.bf16.msra.mxu0 %v4695
        %4711 = vmatpush.bf16.msra.mxu0 %v4694
        %4712 = vmatpush.bf16.msra.mxu0 %v4693
        %4713 = vmatpush.bf16.msra.mxu0 %v4692
        %4714 = vmatpush.bf16.msra.mxu0 %v4691
        %4715 = vmatmul.bf16.gmra.mxu0 %v4643
        %v4716 = vpop.f32.mrf.mxu0
        %v4717 = vadd.f32 0.0, %v4716
        %v4718 = vpop.f32.mrf.mxu0
        %v4719 = vadd.f32 0.0, %v4718
        %4720 = vmatmul.bf16.gmra.mxu0 %v4644
        %v4721 = vpop.f32.mrf.mxu0
        %v4722 = vadd.f32 0.0, %v4721
        %v4723 = vpop.f32.mrf.mxu0
        %v4724 = vadd.f32 0.0, %v4723
        %4725 = vmatmul.bf16.gmra.mxu0 %v4645
        %v4726 = vpop.f32.mrf.mxu0
        %v4727 = vadd.f32 0.0, %v4726
        %v4728 = vpop.f32.mrf.mxu0
        %v4729 = vadd.f32 0.0, %v4728
        %4730 = vmatmul.bf16.gmra.mxu0 %v4646
        %v4731 = vpop.f32.mrf.mxu0
        %v4732 = vadd.f32 0.0, %v4731
        %v4733 = vpop.f32.mrf.mxu0
        %v4734 = vadd.f32 0.0, %v4733
        %4735 = vmatmul.bf16.gmra.mxu0 %v4647
        %v4736 = vpop.f32.mrf.mxu0
        %v4737 = vadd.f32 0.0, %v4736
        %v4738 = vpop.f32.mrf.mxu0
        %v4739 = vadd.f32 0.0, %v4738
        %4740 = vmatmul.bf16.gmra.mxu0 %v4648
        %v4741 = vpop.f32.mrf.mxu0
        %v4742 = vadd.f32 0.0, %v4741
        %v4743 = vpop.f32.mrf.mxu0
        %v4744 = vadd.f32 0.0, %v4743
        %4745 = vmatmul.bf16.gmra.mxu0 %v4649
        %v4746 = vpop.f32.mrf.mxu0
        %v4747 = vadd.f32 0.0, %v4746
        %v4748 = vpop.f32.mrf.mxu0
        %v4749 = vadd.f32 0.0, %v4748
        %4750 = vmatmul.bf16.gmra.mxu0 %v4650
        %v4751 = vpop.f32.mrf.mxu0
        %v4752 = vadd.f32 0.0, %v4751
        %v4753 = vpop.f32.mrf.mxu0
        %v4754 = vadd.f32 0.0, %v4753
        %4755 = vdwg.mxu0
        %v4772 = vunpack.c.l.b16 %v521
        %v4773 = vunpack.c.l.b16 %v522
        %v4774 = vunpack.c.l.b16 %v523
        %v4775 = vunpack.c.l.b16 %v524
        %v4776 = vunpack.c.l.b16 %v525
        %v4777 = vunpack.c.l.b16 %v526
        %v4778 = vunpack.c.l.b16 %v527
        %v4779 = vunpack.c.l.b16 %v528
        %v4780 = vunpack.c.l.b16 %v529
        %v4781 = vunpack.c.l.b16 %v530
        %v4782 = vunpack.c.l.b16 %v531
        %v4783 = vunpack.c.l.b16 %v532
        %v4784 = vunpack.c.l.b16 %v533
        %v4785 = vunpack.c.l.b16 %v534
        %v4786 = vunpack.c.l.b16 %v535
        %v4787 = vunpack.c.l.b16 %v536
        %v4788 = vpack.c.b16 %v4773, %v4772
        %v4789 = vpack.c.b16 %v4775, %v4774
        %v4790 = vpack.c.b16 %v4777, %v4776
        %v4791 = vpack.c.b16 %v4779, %v4778
        %v4792 = vpack.c.b16 %v4781, %v4780
        %v4793 = vpack.c.b16 %v4783, %v4782
        %v4794 = vpack.c.b16 %v4785, %v4784
        %v4795 = vpack.c.b16 %v4787, %v4786
        %v4820 = vunpack.c.l.b16 %v3854
        %v4821 = vunpack.c.l.b16 %v3855
        %v4822 = vunpack.c.l.b16 %v3856
        %v4823 = vunpack.c.l.b16 %v3857
        %v4824 = vunpack.c.l.b16 %v3858
        %v4825 = vunpack.c.l.b16 %v3859
        %v4826 = vunpack.c.l.b16 %v3860
        %v4827 = vunpack.c.l.b16 %v3861
        %v4828 = vunpack.c.l.b16 %v3862
        %v4829 = vunpack.c.l.b16 %v3863
        %v4830 = vunpack.c.l.b16 %v3864
        %v4831 = vunpack.c.l.b16 %v3865
        %v4832 = vunpack.c.l.b16 %v3866
        %v4833 = vunpack.c.l.b16 %v3867
        %v4834 = vunpack.c.l.b16 %v3868
        %v4835 = vunpack.c.l.b16 %v3869
        %v4836 = vpack.c.b16 %v4821, %v4820
        %v4837 = vpack.c.b16 %v4823, %v4822
        %v4838 = vpack.c.b16 %v4825, %v4824
        %v4839 = vpack.c.b16 %v4827, %v4826
        %v4840 = vpack.c.b16 %v4829, %v4828
        %v4841 = vpack.c.b16 %v4831, %v4830
        %v4842 = vpack.c.b16 %v4833, %v4832
        %v4843 = vpack.c.b16 %v4835, %v4834
        %4852 = vmatpush.bf16.msra.mxu0 %v4843
        %4853 = vmatpush.bf16.msra.mxu0 %v4842
        %4854 = vmatpush.bf16.msra.mxu0 %v4841
        %4855 = vmatpush.bf16.msra.mxu0 %v4840
        %4856 = vmatpush.bf16.msra.mxu0 %v4839
        %4857 = vmatpush.bf16.msra.mxu0 %v4838
        %4858 = vmatpush.bf16.msra.mxu0 %v4837
        %4859 = vmatpush.bf16.msra.mxu0 %v4836
        %4860 = vmatmul.bf16.gmra.mxu0 %v4788
        %v4861 = vpop.f32.mrf.mxu0
        %v4862 = vadd.f32 0.0, %v4861
        %v4863 = vpop.f32.mrf.mxu0
        %v4864 = vadd.f32 0.0, %v4863
        %4865 = vmatmul.bf16.gmra.mxu0 %v4789
        %v4866 = vpop.f32.mrf.mxu0
        %v4867 = vadd.f32 0.0, %v4866
        %v4868 = vpop.f32.mrf.mxu0
        %v4869 = vadd.f32 0.0, %v4868
        %4870 = vmatmul.bf16.gmra.mxu0 %v4790
        %v4871 = vpop.f32.mrf.mxu0
        %v4872 = vadd.f32 0.0, %v4871
        %v4873 = vpop.f32.mrf.mxu0
        %v4874 = vadd.f32 0.0, %v4873
        %4875 = vmatmul.bf16.gmra.mxu0 %v4791
        %v4876 = vpop.f32.mrf.mxu0
        %v4877 = vadd.f32 0.0, %v4876
        %v4878 = vpop.f32.mrf.mxu0
        %v4879 = vadd.f32 0.0, %v4878
        %4880 = vmatmul.bf16.gmra.mxu0 %v4792
        %v4881 = vpop.f32.mrf.mxu0
        %v4882 = vadd.f32 0.0, %v4881
        %v4883 = vpop.f32.mrf.mxu0
        %v4884 = vadd.f32 0.0, %v4883
        %4885 = vmatmul.bf16.gmra.mxu0 %v4793
        %v4886 = vpop.f32.mrf.mxu0
        %v4887 = vadd.f32 0.0, %v4886
        %v4888 = vpop.f32.mrf.mxu0
        %v4889 = vadd.f32 0.0, %v4888
        %4890 = vmatmul.bf16.gmra.mxu0 %v4794
        %v4891 = vpop.f32.mrf.mxu0
        %v4892 = vadd.f32 0.0, %v4891
        %v4893 = vpop.f32.mrf.mxu0
        %v4894 = vadd.f32 0.0, %v4893
        %4895 = vmatmul.bf16.gmra.mxu0 %v4795
        %v4896 = vpop.f32.mrf.mxu0
        %v4897 = vadd.f32 0.0, %v4896
        %v4898 = vpop.f32.mrf.mxu0
        %v4899 = vadd.f32 0.0, %v4898
        %4900 = vdwg.mxu0
        %v4917 = vunpack.c.l.b16 %v537
        %v4918 = vunpack.c.l.b16 %v538
        %v4919 = vunpack.c.l.b16 %v539
        %v4920 = vunpack.c.l.b16 %v540
        %v4921 = vunpack.c.l.b16 %v541
        %v4922 = vunpack.c.l.b16 %v542
        %v4923 = vunpack.c.l.b16 %v543
        %v4924 = vunpack.c.l.b16 %v544
        %v4925 = vunpack.c.l.b16 %v545
        %v4926 = vunpack.c.l.b16 %v546
        %v4927 = vunpack.c.l.b16 %v547
        %v4928 = vunpack.c.l.b16 %v548
        %v4929 = vunpack.c.l.b16 %v549
        %v4930 = vunpack.c.l.b16 %v550
        %v4931 = vunpack.c.l.b16 %v551
        %v4932 = vunpack.c.l.b16 %v552
        %v4933 = vpack.c.b16 %v4918, %v4917
        %v4934 = vpack.c.b16 %v4920, %v4919
        %v4935 = vpack.c.b16 %v4922, %v4921
        %v4936 = vpack.c.b16 %v4924, %v4923
        %v4937 = vpack.c.b16 %v4926, %v4925
        %v4938 = vpack.c.b16 %v4928, %v4927
        %v4939 = vpack.c.b16 %v4930, %v4929
        %v4940 = vpack.c.b16 %v4932, %v4931
        %v4965 = vunpack.c.l.b16 %v3870
        %v4966 = vunpack.c.l.b16 %v3871
        %v4967 = vunpack.c.l.b16 %v3872
        %v4968 = vunpack.c.l.b16 %v3873
        %v4969 = vunpack.c.l.b16 %v3874
        %v4970 = vunpack.c.l.b16 %v3875
        %v4971 = vunpack.c.l.b16 %v3876
        %v4972 = vunpack.c.l.b16 %v3877
        %v4973 = vunpack.c.l.b16 %v3878
        %v4974 = vunpack.c.l.b16 %v3879
        %v4975 = vunpack.c.l.b16 %v3880
        %v4976 = vunpack.c.l.b16 %v3881
        %v4977 = vunpack.c.l.b16 %v3882
        %v4978 = vunpack.c.l.b16 %v3883
        %v4979 = vunpack.c.l.b16 %v3884
        %v4980 = vunpack.c.l.b16 %v3885
        %v4981 = vpack.c.b16 %v4966, %v4965
        %v4982 = vpack.c.b16 %v4968, %v4967
        %v4983 = vpack.c.b16 %v4970, %v4969
        %v4984 = vpack.c.b16 %v4972, %v4971
        %v4985 = vpack.c.b16 %v4974, %v4973
        %v4986 = vpack.c.b16 %v4976, %v4975
        %v4987 = vpack.c.b16 %v4978, %v4977
        %v4988 = vpack.c.b16 %v4980, %v4979
        %4997 = vmatpush.bf16.msra.mxu0 %v4988
        %4998 = vmatpush.bf16.msra.mxu0 %v4987
        %4999 = vmatpush.bf16.msra.mxu0 %v4986
        %5000 = vmatpush.bf16.msra.mxu0 %v4985
        %5001 = vmatpush.bf16.msra.mxu0 %v4984
        %5002 = vmatpush.bf16.msra.mxu0 %v4983
        %5003 = vmatpush.bf16.msra.mxu0 %v4982
        %5004 = vmatpush.bf16.msra.mxu0 %v4981
        %5005 = vmatmul.bf16.gmra.mxu0 %v4933
        %v5006 = vpop.f32.mrf.mxu0
        %v5007 = vadd.f32 0.0, %v5006
        %v5008 = vpop.f32.mrf.mxu0
        %v5009 = vadd.f32 0.0, %v5008
        %5010 = vmatmul.bf16.gmra.mxu0 %v4934
        %v5011 = vpop.f32.mrf.mxu0
        %v5012 = vadd.f32 0.0, %v5011
        %v5013 = vpop.f32.mrf.mxu0
        %v5014 = vadd.f32 0.0, %v5013
        %5015 = vmatmul.bf16.gmra.mxu0 %v4935
        %v5016 = vpop.f32.mrf.mxu0
        %v5017 = vadd.f32 0.0, %v5016
        %v5018 = vpop.f32.mrf.mxu0
        %v5019 = vadd.f32 0.0, %v5018
        %5020 = vmatmul.bf16.gmra.mxu0 %v4936
        %v5021 = vpop.f32.mrf.mxu0
        %v5022 = vadd.f32 0.0, %v5021
        %v5023 = vpop.f32.mrf.mxu0
        %v5024 = vadd.f32 0.0, %v5023
        %5025 = vmatmul.bf16.gmra.mxu0 %v4937
        %v5026 = vpop.f32.mrf.mxu0
        %v5027 = vadd.f32 0.0, %v5026
        %v5028 = vpop.f32.mrf.mxu0
        %v5029 = vadd.f32 0.0, %v5028
        %5030 = vmatmul.bf16.gmra.mxu0 %v4938
        %v5031 = vpop.f32.mrf.mxu0
        %v5032 = vadd.f32 0.0, %v5031
        %v5033 = vpop.f32.mrf.mxu0
        %v5034 = vadd.f32 0.0, %v5033
        %5035 = vmatmul.bf16.gmra.mxu0 %v4939
        %v5036 = vpop.f32.mrf.mxu0
        %v5037 = vadd.f32 0.0, %v5036
        %v5038 = vpop.f32.mrf.mxu0
        %v5039 = vadd.f32 0.0, %v5038
        %5040 = vmatmul.bf16.gmra.mxu0 %v4940
        %v5041 = vpop.f32.mrf.mxu0
        %v5042 = vadd.f32 0.0, %v5041
        %v5043 = vpop.f32.mrf.mxu0
        %v5044 = vadd.f32 0.0, %v5043
        %5045 = vdwg.mxu0
        %v5046 = vld [vmem:[%s4] sm:$0x1]
        %v5048 = vperm.slane %v5046, 0
        %v5050 = vadd.f32 %v3992, %v5048
        %v5051 = vadd.f32 %v3994, %v5048
        %v5052 = vadd.f32 %v3997, %v5048
        %v5053 = vadd.f32 %v3999, %v5048
        %v5054 = vadd.f32 %v4002, %v5048
        %v5055 = vadd.f32 %v4004, %v5048
        %v5056 = vadd.f32 %v4007, %v5048
        %v5057 = vadd.f32 %v4009, %v5048
        %v5058 = vadd.f32 %v4012, %v5048
        %v5059 = vadd.f32 %v4014, %v5048
        %v5060 = vadd.f32 %v4017, %v5048
        %v5061 = vadd.f32 %v4019, %v5048
        %v5062 = vadd.f32 %v4022, %v5048
        %v5063 = vadd.f32 %v4024, %v5048
        %v5064 = vadd.f32 %v4027, %v5048
        %v5065 = vadd.f32 %v4029, %v5048
        %v5066 = vadd.f32 %v4137, %v5048
        %v5067 = vadd.f32 %v4139, %v5048
        %v5068 = vadd.f32 %v4142, %v5048
        %v5069 = vadd.f32 %v4144, %v5048
        %v5070 = vadd.f32 %v4147, %v5048
        %v5071 = vadd.f32 %v4149, %v5048
        %v5072 = vadd.f32 %v4152, %v5048
        %v5073 = vadd.f32 %v4154, %v5048
        %v5074 = vadd.f32 %v4157, %v5048
        %v5075 = vadd.f32 %v4159, %v5048
        %v5076 = vadd.f32 %v4162, %v5048
        %v5077 = vadd.f32 %v4164, %v5048
        %v5078 = vadd.f32 %v4167, %v5048
        %v5079 = vadd.f32 %v4169, %v5048
        %v5080 = vadd.f32 %v4172, %v5048
        %v5081 = vadd.f32 %v4174, %v5048
        %v5082 = vadd.f32 %v4282, %v5048
        %v5083 = vadd.f32 %v4284, %v5048
        %v5084 = vadd.f32 %v4287, %v5048
        %v5085 = vadd.f32 %v4289, %v5048
        %v5086 = vadd.f32 %v4292, %v5048
        %v5087 = vadd.f32 %v4294, %v5048
        %v5088 = vadd.f32 %v4297, %v5048
        %v5089 = vadd.f32 %v4299, %v5048
        %v5090 = vadd.f32 %v4302, %v5048
        %v5091 = vadd.f32 %v4304, %v5048
        %v5092 = vadd.f32 %v4307, %v5048
        %v5093 = vadd.f32 %v4309, %v5048
        %v5094 = vadd.f32 %v4312, %v5048
        %v5095 = vadd.f32 %v4314, %v5048
        %v5096 = vadd.f32 %v4317, %v5048
        %v5097 = vadd.f32 %v4319, %v5048
        %v5098 = vadd.f32 %v4427, %v5048
        %v5099 = vadd.f32 %v4429, %v5048
        %v5100 = vadd.f32 %v4432, %v5048
        %v5101 = vadd.f32 %v4434, %v5048
        %v5102 = vadd.f32 %v4437, %v5048
        %v5103 = vadd.f32 %v4439, %v5048
        %v5104 = vadd.f32 %v4442, %v5048
        %v5105 = vadd.f32 %v4444, %v5048
        %v5106 = vadd.f32 %v4447, %v5048
        %v5107 = vadd.f32 %v4449, %v5048
        %v5108 = vadd.f32 %v4452, %v5048
        %v5109 = vadd.f32 %v4454, %v5048
        %v5110 = vadd.f32 %v4457, %v5048
        %v5111 = vadd.f32 %v4459, %v5048
        %v5112 = vadd.f32 %v4462, %v5048
        %v5113 = vadd.f32 %v4464, %v5048
        %v5114 = vadd.f32 %v4572, %v5048
        %v5115 = vadd.f32 %v4574, %v5048
        %v5116 = vadd.f32 %v4577, %v5048
        %v5117 = vadd.f32 %v4579, %v5048
        %v5118 = vadd.f32 %v4582, %v5048
        %v5119 = vadd.f32 %v4584, %v5048
        %v5120 = vadd.f32 %v4587, %v5048
        %v5121 = vadd.f32 %v4589, %v5048
        %v5122 = vadd.f32 %v4592, %v5048
        %v5123 = vadd.f32 %v4594, %v5048
        %v5124 = vadd.f32 %v4597, %v5048
        %v5125 = vadd.f32 %v4599, %v5048
        %v5126 = vadd.f32 %v4602, %v5048
        %v5127 = vadd.f32 %v4604, %v5048
        %v5128 = vadd.f32 %v4607, %v5048
        %v5129 = vadd.f32 %v4609, %v5048
        %v5130 = vadd.f32 %v4717, %v5048
        %v5131 = vadd.f32 %v4719, %v5048
        %v5132 = vadd.f32 %v4722, %v5048
        %v5133 = vadd.f32 %v4724, %v5048
        %v5134 = vadd.f32 %v4727, %v5048
        %v5135 = vadd.f32 %v4729, %v5048
        %v5136 = vadd.f32 %v4732, %v5048
        %v5137 = vadd.f32 %v4734, %v5048
        %v5138 = vadd.f32 %v4737, %v5048
        %v5139 = vadd.f32 %v4739, %v5048
        %v5140 = vadd.f32 %v4742, %v5048
        %v5141 = vadd.f32 %v4744, %v5048
        %v5142 = vadd.f32 %v4747, %v5048
        %v5143 = vadd.f32 %v4749, %v5048
        %v5144 = vadd.f32 %v4752, %v5048
        %v5145 = vadd.f32 %v4754, %v5048
        %v5146 = vadd.f32 %v4862, %v5048
        %v5147 = vadd.f32 %v4864, %v5048
        %v5148 = vadd.f32 %v4867, %v5048
        %v5149 = vadd.f32 %v4869, %v5048
        %v5150 = vadd.f32 %v4872, %v5048
        %v5151 = vadd.f32 %v4874, %v5048
        %v5152 = vadd.f32 %v4877, %v5048
        %v5153 = vadd.f32 %v4879, %v5048
        %v5154 = vadd.f32 %v4882, %v5048
        %v5155 = vadd.f32 %v4884, %v5048
        %v5156 = vadd.f32 %v4887, %v5048
        %v5157 = vadd.f32 %v4889, %v5048
        %v5158 = vadd.f32 %v4892, %v5048
        %v5159 = vadd.f32 %v4894, %v5048
        %v5160 = vadd.f32 %v4897, %v5048
        %v5161 = vadd.f32 %v4899, %v5048
        %v5162 = vadd.f32 %v5007, %v5048
        %v5163 = vadd.f32 %v5009, %v5048
        %v5164 = vadd.f32 %v5012, %v5048
        %v5165 = vadd.f32 %v5014, %v5048
        %v5166 = vadd.f32 %v5017, %v5048
        %v5167 = vadd.f32 %v5019, %v5048
        %v5168 = vadd.f32 %v5022, %v5048
        %v5169 = vadd.f32 %v5024, %v5048
        %v5170 = vadd.f32 %v5027, %v5048
        %v5171 = vadd.f32 %v5029, %v5048
        %v5172 = vadd.f32 %v5032, %v5048
        %v5173 = vadd.f32 %v5034, %v5048
        %v5174 = vadd.f32 %v5037, %v5048
        %v5175 = vadd.f32 %v5039, %v5048
        %v5176 = vadd.f32 %v5042, %v5048
        %v5177 = vadd.f32 %v5044, %v5048
        %v5178 = vmax.f32 %v5050, 0.0
        %v5179 = vmax.f32 %v5051, 0.0
        %v5180 = vmax.f32 %v5052, 0.0
        %v5181 = vmax.f32 %v5053, 0.0
        %v5182 = vmax.f32 %v5054, 0.0
        %v5183 = vmax.f32 %v5055, 0.0
        %v5184 = vmax.f32 %v5056, 0.0
        %v5185 = vmax.f32 %v5057, 0.0
        %v5186 = vmax.f32 %v5058, 0.0
        %v5187 = vmax.f32 %v5059, 0.0
        %v5188 = vmax.f32 %v5060, 0.0
        %v5189 = vmax.f32 %v5061, 0.0
        %v5190 = vmax.f32 %v5062, 0.0
        %v5191 = vmax.f32 %v5063, 0.0
        %v5192 = vmax.f32 %v5064, 0.0
        %v5193 = vmax.f32 %v5065, 0.0
        %v5194 = vmax.f32 %v5066, 0.0
        %v5195 = vmax.f32 %v5067, 0.0
        %v5196 = vmax.f32 %v5068, 0.0
        %v5197 = vmax.f32 %v5069, 0.0
        %v5198 = vmax.f32 %v5070, 0.0
        %v5199 = vmax.f32 %v5071, 0.0
        %v5200 = vmax.f32 %v5072, 0.0
        %v5201 = vmax.f32 %v5073, 0.0
        %v5202 = vmax.f32 %v5074, 0.0
        %v5203 = vmax.f32 %v5075, 0.0
        %v5204 = vmax.f32 %v5076, 0.0
        %v5205 = vmax.f32 %v5077, 0.0
        %v5206 = vmax.f32 %v5078, 0.0
        %v5207 = vmax.f32 %v5079, 0.0
        %v5208 = vmax.f32 %v5080, 0.0
        %v5209 = vmax.f32 %v5081, 0.0
        %v5210 = vmax.f32 %v5082, 0.0
        %v5211 = vmax.f32 %v5083, 0.0
        %v5212 = vmax.f32 %v5084, 0.0
        %v5213 = vmax.f32 %v5085, 0.0
        %v5214 = vmax.f32 %v5086, 0.0
        %v5215 = vmax.f32 %v5087, 0.0
        %v5216 = vmax.f32 %v5088, 0.0
        %v5217 = vmax.f32 %v5089, 0.0
        %v5218 = vmax.f32 %v5090, 0.0
        %v5219 = vmax.f32 %v5091, 0.0
        %v5220 = vmax.f32 %v5092, 0.0
        %v5221 = vmax.f32 %v5093, 0.0
        %v5222 = vmax.f32 %v5094, 0.0
        %v5223 = vmax.f32 %v5095, 0.0
        %v5224 = vmax.f32 %v5096, 0.0
        %v5225 = vmax.f32 %v5097, 0.0
        %v5226 = vmax.f32 %v5098, 0.0
        %v5227 = vmax.f32 %v5099, 0.0
        %v5228 = vmax.f32 %v5100, 0.0
        %v5229 = vmax.f32 %v5101, 0.0
        %v5230 = vmax.f32 %v5102, 0.0
        %v5231 = vmax.f32 %v5103, 0.0
        %v5232 = vmax.f32 %v5104, 0.0
        %v5233 = vmax.f32 %v5105, 0.0
        %v5234 = vmax.f32 %v5106, 0.0
        %v5235 = vmax.f32 %v5107, 0.0
        %v5236 = vmax.f32 %v5108, 0.0
        %v5237 = vmax.f32 %v5109, 0.0
        %v5238 = vmax.f32 %v5110, 0.0
        %v5239 = vmax.f32 %v5111, 0.0
        %v5240 = vmax.f32 %v5112, 0.0
        %v5241 = vmax.f32 %v5113, 0.0
        %v5242 = vmax.f32 %v5114, 0.0
        %v5243 = vmax.f32 %v5115, 0.0
        %v5244 = vmax.f32 %v5116, 0.0
        %v5245 = vmax.f32 %v5117, 0.0
        %v5246 = vmax.f32 %v5118, 0.0
        %v5247 = vmax.f32 %v5119, 0.0
        %v5248 = vmax.f32 %v5120, 0.0
        %v5249 = vmax.f32 %v5121, 0.0
        %v5250 = vmax.f32 %v5122, 0.0
        %v5251 = vmax.f32 %v5123, 0.0
        %v5252 = vmax.f32 %v5124, 0.0
        %v5253 = vmax.f32 %v5125, 0.0
        %v5254 = vmax.f32 %v5126, 0.0
        %v5255 = vmax.f32 %v5127, 0.0
        %v5256 = vmax.f32 %v5128, 0.0
        %v5257 = vmax.f32 %v5129, 0.0
        %v5258 = vmax.f32 %v5130, 0.0
        %v5259 = vmax.f32 %v5131, 0.0
        %v5260 = vmax.f32 %v5132, 0.0
        %v5261 = vmax.f32 %v5133, 0.0
        %v5262 = vmax.f32 %v5134, 0.0
        %v5263 = vmax.f32 %v5135, 0.0
        %v5264 = vmax.f32 %v5136, 0.0
        %v5265 = vmax.f32 %v5137, 0.0
        %v5266 = vmax.f32 %v5138, 0.0
        %v5267 = vmax.f32 %v5139, 0.0
        %v5268 = vmax.f32 %v5140, 0.0
        %v5269 = vmax.f32 %v5141, 0.0
        %v5270 = vmax.f32 %v5142, 0.0
        %v5271 = vmax.f32 %v5143, 0.0
        %v5272 = vmax.f32 %v5144, 0.0
        %v5273 = vmax.f32 %v5145, 0.0
        %v5274 = vmax.f32 %v5146, 0.0
        %v5275 = vmax.f32 %v5147, 0.0
        %v5276 = vmax.f32 %v5148, 0.0
        %v5277 = vmax.f32 %v5149, 0.0
        %v5278 = vmax.f32 %v5150, 0.0
        %v5279 = vmax.f32 %v5151, 0.0
        %v5280 = vmax.f32 %v5152, 0.0
        %v5281 = vmax.f32 %v5153, 0.0
        %v5282 = vmax.f32 %v5154, 0.0
        %v5283 = vmax.f32 %v5155, 0.0
        %v5284 = vmax.f32 %v5156, 0.0
        %v5285 = vmax.f32 %v5157, 0.0
        %v5286 = vmax.f32 %v5158, 0.0
        %v5287 = vmax.f32 %v5159, 0.0
        %v5288 = vmax.f32 %v5160, 0.0
        %v5289 = vmax.f32 %v5161, 0.0
        %v5290 = vmax.f32 %v5162, 0.0
        %v5291 = vmax.f32 %v5163, 0.0
        %v5292 = vmax.f32 %v5164, 0.0
        %v5293 = vmax.f32 %v5165, 0.0
        %v5294 = vmax.f32 %v5166, 0.0
        %v5295 = vmax.f32 %v5167, 0.0
        %v5296 = vmax.f32 %v5168, 0.0
        %v5297 = vmax.f32 %v5169, 0.0
        %v5298 = vmax.f32 %v5170, 0.0
        %v5299 = vmax.f32 %v5171, 0.0
        %v5300 = vmax.f32 %v5172, 0.0
        %v5301 = vmax.f32 %v5173, 0.0
        %v5302 = vmax.f32 %v5174, 0.0
        %v5303 = vmax.f32 %v5175, 0.0
        %v5304 = vmax.f32 %v5176, 0.0
        %v5305 = vmax.f32 %v5177, 0.0
        %v5306 = vpack.c.bf16 %v5179, %v5178
        %v5307 = vpack.c.bf16 %v5181, %v5180
        %v5308 = vpack.c.bf16 %v5183, %v5182
        %v5309 = vpack.c.bf16 %v5185, %v5184
        %v5310 = vpack.c.bf16 %v5187, %v5186
        %v5311 = vpack.c.bf16 %v5189, %v5188
        %v5312 = vpack.c.bf16 %v5191, %v5190
        %v5313 = vpack.c.bf16 %v5193, %v5192
        %v5314 = vpack.c.bf16 %v5195, %v5194
        %v5315 = vpack.c.bf16 %v5197, %v5196
        %v5316 = vpack.c.bf16 %v5199, %v5198
        %v5317 = vpack.c.bf16 %v5201, %v5200
        %v5318 = vpack.c.bf16 %v5203, %v5202
        %v5319 = vpack.c.bf16 %v5205, %v5204
        %v5320 = vpack.c.bf16 %v5207, %v5206
        %v5321 = vpack.c.bf16 %v5209, %v5208
        %v5322 = vpack.c.bf16 %v5211, %v5210
        %v5323 = vpack.c.bf16 %v5213, %v5212
        %v5324 = vpack.c.bf16 %v5215, %v5214
        %v5325 = vpack.c.bf16 %v5217, %v5216
        %v5326 = vpack.c.bf16 %v5219, %v5218
        %v5327 = vpack.c.bf16 %v5221, %v5220
        %v5328 = vpack.c.bf16 %v5223, %v5222
        %v5329 = vpack.c.bf16 %v5225, %v5224
        %v5330 = vpack.c.bf16 %v5227, %v5226
        %v5331 = vpack.c.bf16 %v5229, %v5228
        %v5332 = vpack.c.bf16 %v5231, %v5230
        %v5333 = vpack.c.bf16 %v5233, %v5232
        %v5334 = vpack.c.bf16 %v5235, %v5234
        %v5335 = vpack.c.bf16 %v5237, %v5236
        %v5336 = vpack.c.bf16 %v5239, %v5238
        %v5337 = vpack.c.bf16 %v5241, %v5240
        %v5338 = vpack.c.bf16 %v5243, %v5242
        %v5339 = vpack.c.bf16 %v5245, %v5244
        %v5340 = vpack.c.bf16 %v5247, %v5246
        %v5341 = vpack.c.bf16 %v5249, %v5248
        %v5342 = vpack.c.bf16 %v5251, %v5250
        %v5343 = vpack.c.bf16 %v5253, %v5252
        %v5344 = vpack.c.bf16 %v5255, %v5254
        %v5345 = vpack.c.bf16 %v5257, %v5256
        %v5346 = vpack.c.bf16 %v5259, %v5258
        %v5347 = vpack.c.bf16 %v5261, %v5260
        %v5348 = vpack.c.bf16 %v5263, %v5262
        %v5349 = vpack.c.bf16 %v5265, %v5264
        %v5350 = vpack.c.bf16 %v5267, %v5266
        %v5351 = vpack.c.bf16 %v5269, %v5268
        %v5352 = vpack.c.bf16 %v5271, %v5270
        %v5353 = vpack.c.bf16 %v5273, %v5272
        %v5354 = vpack.c.bf16 %v5275, %v5274
        %v5355 = vpack.c.bf16 %v5277, %v5276
        %v5356 = vpack.c.bf16 %v5279, %v5278
        %v5357 = vpack.c.bf16 %v5281, %v5280
        %v5358 = vpack.c.bf16 %v5283, %v5282
        %v5359 = vpack.c.bf16 %v5285, %v5284
        %v5360 = vpack.c.bf16 %v5287, %v5286
        %v5361 = vpack.c.bf16 %v5289, %v5288
        %v5362 = vpack.c.bf16 %v5291, %v5290
        %v5363 = vpack.c.bf16 %v5293, %v5292
        %v5364 = vpack.c.bf16 %v5295, %v5294
        %v5365 = vpack.c.bf16 %v5297, %v5296
        %v5366 = vpack.c.bf16 %v5299, %v5298
        %v5367 = vpack.c.bf16 %v5301, %v5300
        %v5368 = vpack.c.bf16 %v5303, %v5302
        %v5369 = vpack.c.bf16 %v5305, %v5304
        %v5370 = vld [vmem:[%s5] sm:$0xf]
        %v5371 = vld [vmem:[%s5 + $0x4] sm:$0xf]
        %v5372 = vld [vmem:[%s5 + $0x8] sm:$0xf]
        %v5373 = vld [vmem:[%s5 + $0xc] sm:$0xf]
        %v5374 = vld [vmem:[%s5 + $0x10] sm:$0xf]
        %v5375 = vld [vmem:[%s5 + $0x14] sm:$0xf]
        %v5376 = vld [vmem:[%s5 + $0x18] sm:$0xf]
        %v5377 = vld [vmem:[%s5 + $0x1c] sm:$0xf]
        %v5378 = vld [vmem:[%s5 + $0x20] sm:$0xf]
        %v5379 = vld [vmem:[%s5 + $0x24] sm:$0xf]
        %v5380 = vld [vmem:[%s5 + $0x28] sm:$0xf]
        %v5381 = vld [vmem:[%s5 + $0x2c] sm:$0xf]
        %v5382 = vld [vmem:[%s5 + $0x30] sm:$0xf]
        %v5383 = vld [vmem:[%s5 + $0x34] sm:$0xf]
        %v5384 = vld [vmem:[%s5 + $0x38] sm:$0xf]
        %v5385 = vld [vmem:[%s5 + $0x3c] sm:$0xf]
        %v5402 = vunpack.c.l.b16 %v5370
        %v5403 = vunpack.c.l.b16 %v5371
        %v5404 = vunpack.c.l.b16 %v5372
        %v5405 = vunpack.c.l.b16 %v5373
        %v5406 = vunpack.c.l.b16 %v5374
        %v5407 = vunpack.c.l.b16 %v5375
        %v5408 = vunpack.c.l.b16 %v5376
        %v5409 = vunpack.c.l.b16 %v5377
        %v5410 = vunpack.c.l.b16 %v5378
        %v5411 = vunpack.c.l.b16 %v5379
        %v5412 = vunpack.c.l.b16 %v5380
        %v5413 = vunpack.c.l.b16 %v5381
        %v5414 = vunpack.c.l.b16 %v5382
        %v5415 = vunpack.c.l.b16 %v5383
        %v5416 = vunpack.c.l.b16 %v5384
        %v5417 = vunpack.c.l.b16 %v5385
        %v5418 = vpack.c.b16 %v5403, %v5402
        %v5419 = vpack.c.b16 %v5405, %v5404
        %v5420 = vpack.c.b16 %v5407, %v5406
        %v5421 = vpack.c.b16 %v5409, %v5408
        %v5422 = vpack.c.b16 %v5411, %v5410
        %v5423 = vpack.c.b16 %v5413, %v5412
        %v5424 = vpack.c.b16 %v5415, %v5414
        %v5425 = vpack.c.b16 %v5417, %v5416
        %5434 = vmatpush.bf16.msra.mxu0 %v5425
        %5435 = vmatpush.bf16.msra.mxu0 %v5424
        %5436 = vmatpush.bf16.msra.mxu0 %v5423
        %5437 = vmatpush.bf16.msra.mxu0 %v5422
        %5438 = vmatpush.bf16.msra.mxu0 %v5421
        %5439 = vmatpush.bf16.msra.mxu0 %v5420
        %5440 = vmatpush.bf16.msra.mxu0 %v5419
        %5441 = vmatpush.bf16.msra.mxu0 %v5418
        %5442 = vmatmul.bf16.gmra.mxu0 %v5306
        %v5443 = vpop.f32.mrf.mxu0
        %v5444 = vadd.f32 0.0, %v5443
        %v5445 = vpop.f32.mrf.mxu0
        %v5446 = vadd.f32 0.0, %v5445
        %5447 = vmatmul.bf16.gmra.mxu0 %v5307
        %v5448 = vpop.f32.mrf.mxu0
        %v5449 = vadd.f32 0.0, %v5448
        %v5450 = vpop.f32.mrf.mxu0
        %v5451 = vadd.f32 0.0, %v5450
        %5452 = vmatmul.bf16.gmra.mxu0 %v5308
        %v5453 = vpop.f32.mrf.mxu0
        %v5454 = vadd.f32 0.0, %v5453
        %v5455 = vpop.f32.mrf.mxu0
        %v5456 = vadd.f32 0.0, %v5455
        %5457 = vmatmul.bf16.gmra.mxu0 %v5309
        %v5458 = vpop.f32.mrf.mxu0
        %v5459 = vadd.f32 0.0, %v5458
        %v5460 = vpop.f32.mrf.mxu0
        %v5461 = vadd.f32 0.0, %v5460
        %5462 = vmatmul.bf16.gmra.mxu0 %v5310
        %v5463 = vpop.f32.mrf.mxu0
        %v5464 = vadd.f32 0.0, %v5463
        %v5465 = vpop.f32.mrf.mxu0
        %v5466 = vadd.f32 0.0, %v5465
        %5467 = vmatmul.bf16.gmra.mxu0 %v5311
        %v5468 = vpop.f32.mrf.mxu0
        %v5469 = vadd.f32 0.0, %v5468
        %v5470 = vpop.f32.mrf.mxu0
        %v5471 = vadd.f32 0.0, %v5470
        %5472 = vmatmul.bf16.gmra.mxu0 %v5312
        %v5473 = vpop.f32.mrf.mxu0
        %v5474 = vadd.f32 0.0, %v5473
        %v5475 = vpop.f32.mrf.mxu0
        %v5476 = vadd.f32 0.0, %v5475
        %5477 = vmatmul.bf16.gmra.mxu0 %v5313
        %v5478 = vpop.f32.mrf.mxu0
        %v5479 = vadd.f32 0.0, %v5478
        %v5480 = vpop.f32.mrf.mxu0
        %v5481 = vadd.f32 0.0, %v5480
        %5482 = vmatmul.bf16.gmra.mxu0 %v5314
        %v5483 = vpop.f32.mrf.mxu0
        %v5484 = vadd.f32 0.0, %v5483
        %v5485 = vpop.f32.mrf.mxu0
        %v5486 = vadd.f32 0.0, %v5485
        %5487 = vmatmul.bf16.gmra.mxu0 %v5315
        %v5488 = vpop.f32.mrf.mxu0
        %v5489 = vadd.f32 0.0, %v5488
        %v5490 = vpop.f32.mrf.mxu0
        %v5491 = vadd.f32 0.0, %v5490
        %5492 = vmatmul.bf16.gmra.mxu0 %v5316
        %v5493 = vpop.f32.mrf.mxu0
        %v5494 = vadd.f32 0.0, %v5493
        %v5495 = vpop.f32.mrf.mxu0
        %v5496 = vadd.f32 0.0, %v5495
        %5497 = vmatmul.bf16.gmra.mxu0 %v5317
        %v5498 = vpop.f32.mrf.mxu0
        %v5499 = vadd.f32 0.0, %v5498
        %v5500 = vpop.f32.mrf.mxu0
        %v5501 = vadd.f32 0.0, %v5500
        %5502 = vmatmul.bf16.gmra.mxu0 %v5318
        %v5503 = vpop.f32.mrf.mxu0
        %v5504 = vadd.f32 0.0, %v5503
        %v5505 = vpop.f32.mrf.mxu0
        %v5506 = vadd.f32 0.0, %v5505
        %5507 = vmatmul.bf16.gmra.mxu0 %v5319
        %v5508 = vpop.f32.mrf.mxu0
        %v5509 = vadd.f32 0.0, %v5508
        %v5510 = vpop.f32.mrf.mxu0
        %v5511 = vadd.f32 0.0, %v5510
        %5512 = vmatmul.bf16.gmra.mxu0 %v5320
        %v5513 = vpop.f32.mrf.mxu0
        %v5514 = vadd.f32 0.0, %v5513
        %v5515 = vpop.f32.mrf.mxu0
        %v5516 = vadd.f32 0.0, %v5515
        %5517 = vmatmul.bf16.gmra.mxu0 %v5321
        %v5518 = vpop.f32.mrf.mxu0
        %v5519 = vadd.f32 0.0, %v5518
        %v5520 = vpop.f32.mrf.mxu0
        %v5521 = vadd.f32 0.0, %v5520
        %5522 = vmatmul.bf16.gmra.mxu0 %v5322
        %v5523 = vpop.f32.mrf.mxu0
        %v5524 = vadd.f32 0.0, %v5523
        %v5525 = vpop.f32.mrf.mxu0
        %v5526 = vadd.f32 0.0, %v5525
        %5527 = vmatmul.bf16.gmra.mxu0 %v5323
        %v5528 = vpop.f32.mrf.mxu0
        %v5529 = vadd.f32 0.0, %v5528
        %v5530 = vpop.f32.mrf.mxu0
        %v5531 = vadd.f32 0.0, %v5530
        %5532 = vmatmul.bf16.gmra.mxu0 %v5324
        %v5533 = vpop.f32.mrf.mxu0
        %v5534 = vadd.f32 0.0, %v5533
        %v5535 = vpop.f32.mrf.mxu0
        %v5536 = vadd.f32 0.0, %v5535
        %5537 = vmatmul.bf16.gmra.mxu0 %v5325
        %v5538 = vpop.f32.mrf.mxu0
        %v5539 = vadd.f32 0.0, %v5538
        %v5540 = vpop.f32.mrf.mxu0
        %v5541 = vadd.f32 0.0, %v5540
        %5542 = vmatmul.bf16.gmra.mxu0 %v5326
        %v5543 = vpop.f32.mrf.mxu0
        %v5544 = vadd.f32 0.0, %v5543
        %v5545 = vpop.f32.mrf.mxu0
        %v5546 = vadd.f32 0.0, %v5545
        %5547 = vmatmul.bf16.gmra.mxu0 %v5327
        %v5548 = vpop.f32.mrf.mxu0
        %v5549 = vadd.f32 0.0, %v5548
        %v5550 = vpop.f32.mrf.mxu0
        %v5551 = vadd.f32 0.0, %v5550
        %5552 = vmatmul.bf16.gmra.mxu0 %v5328
        %v5553 = vpop.f32.mrf.mxu0
        %v5554 = vadd.f32 0.0, %v5553
        %v5555 = vpop.f32.mrf.mxu0
        %v5556 = vadd.f32 0.0, %v5555
        %5557 = vmatmul.bf16.gmra.mxu0 %v5329
        %v5558 = vpop.f32.mrf.mxu0
        %v5559 = vadd.f32 0.0, %v5558
        %v5560 = vpop.f32.mrf.mxu0
        %v5561 = vadd.f32 0.0, %v5560
        %5562 = vmatmul.bf16.gmra.mxu0 %v5330
        %v5563 = vpop.f32.mrf.mxu0
        %v5564 = vadd.f32 0.0, %v5563
        %v5565 = vpop.f32.mrf.mxu0
        %v5566 = vadd.f32 0.0, %v5565
        %5567 = vmatmul.bf16.gmra.mxu0 %v5331
        %v5568 = vpop.f32.mrf.mxu0
        %v5569 = vadd.f32 0.0, %v5568
        %v5570 = vpop.f32.mrf.mxu0
        %v5571 = vadd.f32 0.0, %v5570
        %5572 = vmatmul.bf16.gmra.mxu0 %v5332
        %v5573 = vpop.f32.mrf.mxu0
        %v5574 = vadd.f32 0.0, %v5573
        %v5575 = vpop.f32.mrf.mxu0
        %v5576 = vadd.f32 0.0, %v5575
        %5577 = vmatmul.bf16.gmra.mxu0 %v5333
        %v5578 = vpop.f32.mrf.mxu0
        %v5579 = vadd.f32 0.0, %v5578
        %v5580 = vpop.f32.mrf.mxu0
        %v5581 = vadd.f32 0.0, %v5580
        %5582 = vmatmul.bf16.gmra.mxu0 %v5334
        %v5583 = vpop.f32.mrf.mxu0
        %v5584 = vadd.f32 0.0, %v5583
        %v5585 = vpop.f32.mrf.mxu0
        %v5586 = vadd.f32 0.0, %v5585
        %5587 = vmatmul.bf16.gmra.mxu0 %v5335
        %v5588 = vpop.f32.mrf.mxu0
        %v5589 = vadd.f32 0.0, %v5588
        %v5590 = vpop.f32.mrf.mxu0
        %v5591 = vadd.f32 0.0, %v5590
        %5592 = vmatmul.bf16.gmra.mxu0 %v5336
        %v5593 = vpop.f32.mrf.mxu0
        %v5594 = vadd.f32 0.0, %v5593
        %v5595 = vpop.f32.mrf.mxu0
        %v5596 = vadd.f32 0.0, %v5595
        %5597 = vmatmul.bf16.gmra.mxu0 %v5337
        %v5598 = vpop.f32.mrf.mxu0
        %v5599 = vadd.f32 0.0, %v5598
        %v5600 = vpop.f32.mrf.mxu0
        %v5601 = vadd.f32 0.0, %v5600
        %5602 = vmatmul.bf16.gmra.mxu0 %v5338
        %v5603 = vpop.f32.mrf.mxu0
        %v5604 = vadd.f32 0.0, %v5603
        %v5605 = vpop.f32.mrf.mxu0
        %v5606 = vadd.f32 0.0, %v5605
        %5607 = vmatmul.bf16.gmra.mxu0 %v5339
        %v5608 = vpop.f32.mrf.mxu0
        %v5609 = vadd.f32 0.0, %v5608
        %v5610 = vpop.f32.mrf.mxu0
        %v5611 = vadd.f32 0.0, %v5610
        %5612 = vmatmul.bf16.gmra.mxu0 %v5340
        %v5613 = vpop.f32.mrf.mxu0
        %v5614 = vadd.f32 0.0, %v5613
        %v5615 = vpop.f32.mrf.mxu0
        %v5616 = vadd.f32 0.0, %v5615
        %5617 = vmatmul.bf16.gmra.mxu0 %v5341
        %v5618 = vpop.f32.mrf.mxu0
        %v5619 = vadd.f32 0.0, %v5618
        %v5620 = vpop.f32.mrf.mxu0
        %v5621 = vadd.f32 0.0, %v5620
        %5622 = vmatmul.bf16.gmra.mxu0 %v5342
        %v5623 = vpop.f32.mrf.mxu0
        %v5624 = vadd.f32 0.0, %v5623
        %v5625 = vpop.f32.mrf.mxu0
        %v5626 = vadd.f32 0.0, %v5625
        %5627 = vmatmul.bf16.gmra.mxu0 %v5343
        %v5628 = vpop.f32.mrf.mxu0
        %v5629 = vadd.f32 0.0, %v5628
        %v5630 = vpop.f32.mrf.mxu0
        %v5631 = vadd.f32 0.0, %v5630
        %5632 = vmatmul.bf16.gmra.mxu0 %v5344
        %v5633 = vpop.f32.mrf.mxu0
        %v5634 = vadd.f32 0.0, %v5633
        %v5635 = vpop.f32.mrf.mxu0
        %v5636 = vadd.f32 0.0, %v5635
        %5637 = vmatmul.bf16.gmra.mxu0 %v5345
        %v5638 = vpop.f32.mrf.mxu0
        %v5639 = vadd.f32 0.0, %v5638
        %v5640 = vpop.f32.mrf.mxu0
        %v5641 = vadd.f32 0.0, %v5640
        %5642 = vmatmul.bf16.gmra.mxu0 %v5346
        %v5643 = vpop.f32.mrf.mxu0
        %v5644 = vadd.f32 0.0, %v5643
        %v5645 = vpop.f32.mrf.mxu0
        %v5646 = vadd.f32 0.0, %v5645
        %5647 = vmatmul.bf16.gmra.mxu0 %v5347
        %v5648 = vpop.f32.mrf.mxu0
        %v5649 = vadd.f32 0.0, %v5648
        %v5650 = vpop.f32.mrf.mxu0
        %v5651 = vadd.f32 0.0, %v5650
        %5652 = vmatmul.bf16.gmra.mxu0 %v5348
        %v5653 = vpop.f32.mrf.mxu0
        %v5654 = vadd.f32 0.0, %v5653
        %v5655 = vpop.f32.mrf.mxu0
        %v5656 = vadd.f32 0.0, %v5655
        %5657 = vmatmul.bf16.gmra.mxu0 %v5349
        %v5658 = vpop.f32.mrf.mxu0
        %v5659 = vadd.f32 0.0, %v5658
        %v5660 = vpop.f32.mrf.mxu0
        %v5661 = vadd.f32 0.0, %v5660
        %5662 = vmatmul.bf16.gmra.mxu0 %v5350
        %v5663 = vpop.f32.mrf.mxu0
        %v5664 = vadd.f32 0.0, %v5663
        %v5665 = vpop.f32.mrf.mxu0
        %v5666 = vadd.f32 0.0, %v5665
        %5667 = vmatmul.bf16.gmra.mxu0 %v5351
        %v5668 = vpop.f32.mrf.mxu0
        %v5669 = vadd.f32 0.0, %v5668
        %v5670 = vpop.f32.mrf.mxu0
        %v5671 = vadd.f32 0.0, %v5670
        %5672 = vmatmul.bf16.gmra.mxu0 %v5352
        %v5673 = vpop.f32.mrf.mxu0
        %v5674 = vadd.f32 0.0, %v5673
        %v5675 = vpop.f32.mrf.mxu0
        %v5676 = vadd.f32 0.0, %v5675
        %5677 = vmatmul.bf16.gmra.mxu0 %v5353
        %v5678 = vpop.f32.mrf.mxu0
        %v5679 = vadd.f32 0.0, %v5678
        %v5680 = vpop.f32.mrf.mxu0
        %v5681 = vadd.f32 0.0, %v5680
        %5682 = vmatmul.bf16.gmra.mxu0 %v5354
        %v5683 = vpop.f32.mrf.mxu0
        %v5684 = vadd.f32 0.0, %v5683
        %v5685 = vpop.f32.mrf.mxu0
        %v5686 = vadd.f32 0.0, %v5685
        %5687 = vmatmul.bf16.gmra.mxu0 %v5355
        %v5688 = vpop.f32.mrf.mxu0
        %v5689 = vadd.f32 0.0, %v5688
        %v5690 = vpop.f32.mrf.mxu0
        %v5691 = vadd.f32 0.0, %v5690
        %5692 = vmatmul.bf16.gmra.mxu0 %v5356
        %v5693 = vpop.f32.mrf.mxu0
        %v5694 = vadd.f32 0.0, %v5693
        %v5695 = vpop.f32.mrf.mxu0
        %v5696 = vadd.f32 0.0, %v5695
        %5697 = vmatmul.bf16.gmra.mxu0 %v5357
        %v5698 = vpop.f32.mrf.mxu0
        %v5699 = vadd.f32 0.0, %v5698
        %v5700 = vpop.f32.mrf.mxu0
        %v5701 = vadd.f32 0.0, %v5700
        %5702 = vmatmul.bf16.gmra.mxu0 %v5358
        %v5703 = vpop.f32.mrf.mxu0
        %v5704 = vadd.f32 0.0, %v5703
        %v5705 = vpop.f32.mrf.mxu0
        %v5706 = vadd.f32 0.0, %v5705
        %5707 = vmatmul.bf16.gmra.mxu0 %v5359
        %v5708 = vpop.f32.mrf.mxu0
        %v5709 = vadd.f32 0.0, %v5708
        %v5710 = vpop.f32.mrf.mxu0
        %v5711 = vadd.f32 0.0, %v5710
        %5712 = vmatmul.bf16.gmra.mxu0 %v5360
        %v5713 = vpop.f32.mrf.mxu0
        %v5714 = vadd.f32 0.0, %v5713
        %v5715 = vpop.f32.mrf.mxu0
        %v5716 = vadd.f32 0.0, %v5715
        %5717 = vmatmul.bf16.gmra.mxu0 %v5361
        %v5718 = vpop.f32.mrf.mxu0
        %v5719 = vadd.f32 0.0, %v5718
        %v5720 = vpop.f32.mrf.mxu0
        %v5721 = vadd.f32 0.0, %v5720
        %5722 = vmatmul.bf16.gmra.mxu0 %v5362
        %v5723 = vpop.f32.mrf.mxu0
        %v5724 = vadd.f32 0.0, %v5723
        %v5725 = vpop.f32.mrf.mxu0
        %v5726 = vadd.f32 0.0, %v5725
        %5727 = vmatmul.bf16.gmra.mxu0 %v5363
        %v5728 = vpop.f32.mrf.mxu0
        %v5729 = vadd.f32 0.0, %v5728
        %v5730 = vpop.f32.mrf.mxu0
        %v5731 = vadd.f32 0.0, %v5730
        %5732 = vmatmul.bf16.gmra.mxu0 %v5364
        %v5733 = vpop.f32.mrf.mxu0
        %v5734 = vadd.f32 0.0, %v5733
        %v5735 = vpop.f32.mrf.mxu0
        %v5736 = vadd.f32 0.0, %v5735
        %5737 = vmatmul.bf16.gmra.mxu0 %v5365
        %v5738 = vpop.f32.mrf.mxu0
        %v5739 = vadd.f32 0.0, %v5738
        %v5740 = vpop.f32.mrf.mxu0
        %v5741 = vadd.f32 0.0, %v5740
        %5742 = vmatmul.bf16.gmra.mxu0 %v5366
        %v5743 = vpop.f32.mrf.mxu0
        %v5744 = vadd.f32 0.0, %v5743
        %v5745 = vpop.f32.mrf.mxu0
        %v5746 = vadd.f32 0.0, %v5745
        %5747 = vmatmul.bf16.gmra.mxu0 %v5367
        %v5748 = vpop.f32.mrf.mxu0
        %v5749 = vadd.f32 0.0, %v5748
        %v5750 = vpop.f32.mrf.mxu0
        %v5751 = vadd.f32 0.0, %v5750
        %5752 = vmatmul.bf16.gmra.mxu0 %v5368
        %v5753 = vpop.f32.mrf.mxu0
        %v5754 = vadd.f32 0.0, %v5753
        %v5755 = vpop.f32.mrf.mxu0
        %v5756 = vadd.f32 0.0, %v5755
        %5757 = vmatmul.bf16.gmra.mxu0 %v5369
        %v5758 = vpop.f32.mrf.mxu0
        %v5759 = vadd.f32 0.0, %v5758
        %v5760 = vpop.f32.mrf.mxu0
        %v5761 = vadd.f32 0.0, %v5760
        %5762 = vdwg.mxu0
        %v5763 = vpack.c.bf16 %v5444, %v5444
        %v5764 = vpack.c.bf16 %v5446, %v5446
        %v5765 = vpack.c.bf16 %v5449, %v5449
        %v5766 = vpack.c.bf16 %v5451, %v5451
        %v5767 = vpack.c.bf16 %v5454, %v5454
        %v5768 = vpack.c.bf16 %v5456, %v5456
        %v5769 = vpack.c.bf16 %v5459, %v5459
        %v5770 = vpack.c.bf16 %v5461, %v5461
        %v5771 = vpack.c.bf16 %v5464, %v5464
        %v5772 = vpack.c.bf16 %v5466, %v5466
        %v5773 = vpack.c.bf16 %v5469, %v5469
        %v5774 = vpack.c.bf16 %v5471, %v5471
        %v5775 = vpack.c.bf16 %v5474, %v5474
        %v5776 = vpack.c.bf16 %v5476, %v5476
        %v5777 = vpack.c.bf16 %v5479, %v5479
        %v5778 = vpack.c.bf16 %v5481, %v5481
        %v5779 = vpack.c.bf16 %v5484, %v5484
        %v5780 = vpack.c.bf16 %v5486, %v5486
        %v5781 = vpack.c.bf16 %v5489, %v5489
        %v5782 = vpack.c.bf16 %v5491, %v5491
        %v5783 = vpack.c.bf16 %v5494, %v5494
        %v5784 = vpack.c.bf16 %v5496, %v5496
        %v5785 = vpack.c.bf16 %v5499, %v5499
        %v5786 = vpack.c.bf16 %v5501, %v5501
        %v5787 = vpack.c.bf16 %v5504, %v5504
        %v5788 = vpack.c.bf16 %v5506, %v5506
        %v5789 = vpack.c.bf16 %v5509, %v5509
        %v5790 = vpack.c.bf16 %v5511, %v5511
        %v5791 = vpack.c.bf16 %v5514, %v5514
        %v5792 = vpack.c.bf16 %v5516, %v5516
        %v5793 = vpack.c.bf16 %v5519, %v5519
        %v5794 = vpack.c.bf16 %v5521, %v5521
        %v5795 = vpack.c.bf16 %v5524, %v5524
        %v5796 = vpack.c.bf16 %v5526, %v5526
        %v5797 = vpack.c.bf16 %v5529, %v5529
        %v5798 = vpack.c.bf16 %v5531, %v5531
        %v5799 = vpack.c.bf16 %v5534, %v5534
        %v5800 = vpack.c.bf16 %v5536, %v5536
        %v5801 = vpack.c.bf16 %v5539, %v5539
        %v5802 = vpack.c.bf16 %v5541, %v5541
        %v5803 = vpack.c.bf16 %v5544, %v5544
        %v5804 = vpack.c.bf16 %v5546, %v5546
        %v5805 = vpack.c.bf16 %v5549, %v5549
        %v5806 = vpack.c.bf16 %v5551, %v5551
        %v5807 = vpack.c.bf16 %v5554, %v5554
        %v5808 = vpack.c.bf16 %v5556, %v5556
        %v5809 = vpack.c.bf16 %v5559, %v5559
        %v5810 = vpack.c.bf16 %v5561, %v5561
        %v5811 = vpack.c.bf16 %v5564, %v5564
        %v5812 = vpack.c.bf16 %v5566, %v5566
        %v5813 = vpack.c.bf16 %v5569, %v5569
        %v5814 = vpack.c.bf16 %v5571, %v5571
        %v5815 = vpack.c.bf16 %v5574, %v5574
        %v5816 = vpack.c.bf16 %v5576, %v5576
        %v5817 = vpack.c.bf16 %v5579, %v5579
        %v5818 = vpack.c.bf16 %v5581, %v5581
        %v5819 = vpack.c.bf16 %v5584, %v5584
        %v5820 = vpack.c.bf16 %v5586, %v5586
        %v5821 = vpack.c.bf16 %v5589, %v5589
        %v5822 = vpack.c.bf16 %v5591, %v5591
        %v5823 = vpack.c.bf16 %v5594, %v5594
        %v5824 = vpack.c.bf16 %v5596, %v5596
        %v5825 = vpack.c.bf16 %v5599, %v5599
        %v5826 = vpack.c.bf16 %v5601, %v5601
        %v5827 = vpack.c.bf16 %v5604, %v5604
        %v5828 = vpack.c.bf16 %v5606, %v5606
        %v5829 = vpack.c.bf16 %v5609, %v5609
        %v5830 = vpack.c.bf16 %v5611, %v5611
        %v5831 = vpack.c.bf16 %v5614, %v5614
        %v5832 = vpack.c.bf16 %v5616, %v5616
        %v5833 = vpack.c.bf16 %v5619, %v5619
        %v5834 = vpack.c.bf16 %v5621, %v5621
        %v5835 = vpack.c.bf16 %v5624, %v5624
        %v5836 = vpack.c.bf16 %v5626, %v5626
        %v5837 = vpack.c.bf16 %v5629, %v5629
        %v5838 = vpack.c.bf16 %v5631, %v5631
        %v5839 = vpack.c.bf16 %v5634, %v5634
        %v5840 = vpack.c.bf16 %v5636, %v5636
        %v5841 = vpack.c.bf16 %v5639, %v5639
        %v5842 = vpack.c.bf16 %v5641, %v5641
        %v5843 = vpack.c.bf16 %v5644, %v5644
        %v5844 = vpack.c.bf16 %v5646, %v5646
        %v5845 = vpack.c.bf16 %v5649, %v5649
        %v5846 = vpack.c.bf16 %v5651, %v5651
        %v5847 = vpack.c.bf16 %v5654, %v5654
        %v5848 = vpack.c.bf16 %v5656, %v5656
        %v5849 = vpack.c.bf16 %v5659, %v5659
        %v5850 = vpack.c.bf16 %v5661, %v5661
        %v5851 = vpack.c.bf16 %v5664, %v5664
        %v5852 = vpack.c.bf16 %v5666, %v5666
        %v5853 = vpack.c.bf16 %v5669, %v5669
        %v5854 = vpack.c.bf16 %v5671, %v5671
        %v5855 = vpack.c.bf16 %v5674, %v5674
        %v5856 = vpack.c.bf16 %v5676, %v5676
        %v5857 = vpack.c.bf16 %v5679, %v5679
        %v5858 = vpack.c.bf16 %v5681, %v5681
        %v5859 = vpack.c.bf16 %v5684, %v5684
        %v5860 = vpack.c.bf16 %v5686, %v5686
        %v5861 = vpack.c.bf16 %v5689, %v5689
        %v5862 = vpack.c.bf16 %v5691, %v5691
        %v5863 = vpack.c.bf16 %v5694, %v5694
        %v5864 = vpack.c.bf16 %v5696, %v5696
        %v5865 = vpack.c.bf16 %v5699, %v5699
        %v5866 = vpack.c.bf16 %v5701, %v5701
        %v5867 = vpack.c.bf16 %v5704, %v5704
        %v5868 = vpack.c.bf16 %v5706, %v5706
        %v5869 = vpack.c.bf16 %v5709, %v5709
        %v5870 = vpack.c.bf16 %v5711, %v5711
        %v5871 = vpack.c.bf16 %v5714, %v5714
        %v5872 = vpack.c.bf16 %v5716, %v5716
        %v5873 = vpack.c.bf16 %v5719, %v5719
        %v5874 = vpack.c.bf16 %v5721, %v5721
        %v5875 = vpack.c.bf16 %v5724, %v5724
        %v5876 = vpack.c.bf16 %v5726, %v5726
        %v5877 = vpack.c.bf16 %v5729, %v5729
        %v5878 = vpack.c.bf16 %v5731, %v5731
        %v5879 = vpack.c.bf16 %v5734, %v5734
        %v5880 = vpack.c.bf16 %v5736, %v5736
        %v5881 = vpack.c.bf16 %v5739, %v5739
        %v5882 = vpack.c.bf16 %v5741, %v5741
        %v5883 = vpack.c.bf16 %v5744, %v5744
        %v5884 = vpack.c.bf16 %v5746, %v5746
        %v5885 = vpack.c.bf16 %v5749, %v5749
        %v5886 = vpack.c.bf16 %v5751, %v5751
        %v5887 = vpack.c.bf16 %v5754, %v5754
        %v5888 = vpack.c.bf16 %v5756, %v5756
        %v5889 = vpack.c.bf16 %v5759, %v5759
        %v5890 = vpack.c.bf16 %v5761, %v5761
        %v5907 = vunpack.c.l.b16 %v5763
        %v5908 = vunpack.c.l.b16 %v5764
        %v5909 = vunpack.c.l.b16 %v5765
        %v5910 = vunpack.c.l.b16 %v5766
        %v5911 = vunpack.c.l.b16 %v5767
        %v5912 = vunpack.c.l.b16 %v5768
        %v5913 = vunpack.c.l.b16 %v5769
        %v5914 = vunpack.c.l.b16 %v5770
        %v5915 = vunpack.c.l.b16 %v5771
        %v5916 = vunpack.c.l.b16 %v5772
        %v5917 = vunpack.c.l.b16 %v5773
        %v5918 = vunpack.c.l.b16 %v5774
        %v5919 = vunpack.c.l.b16 %v5775
        %v5920 = vunpack.c.l.b16 %v5776
        %v5921 = vunpack.c.l.b16 %v5777
        %v5922 = vunpack.c.l.b16 %v5778
        %v5923 = vpack.c.b16 %v5908, %v5907
        %v5924 = vpack.c.b16 %v5910, %v5909
        %v5925 = vpack.c.b16 %v5912, %v5911
        %v5926 = vpack.c.b16 %v5914, %v5913
        %v5927 = vpack.c.b16 %v5916, %v5915
        %v5928 = vpack.c.b16 %v5918, %v5917
        %v5929 = vpack.c.b16 %v5920, %v5919
        %v5930 = vpack.c.b16 %v5922, %v5921
        %5939 = vmatpush.bf16.msra.mxu0 %v5930
        %5940 = vmatpush.bf16.msra.mxu0 %v5929
        %5941 = vmatpush.bf16.msra.mxu0 %v5928
        %5942 = vmatpush.bf16.msra.mxu0 %v5927
        %5943 = vmatpush.bf16.msra.mxu0 %v5926
        %5944 = vmatpush.bf16.msra.mxu0 %v5925
        %5945 = vmatpush.bf16.msra.mxu0 %v5924
        %5946 = vmatpush.bf16.msra.mxu0 %v5923
        %5947 = vmatmul.bf16.gmra.mxu0 %v3918
        %v5948 = vpop.f32.mrf.mxu0
        %v5949 = vadd.f32 0.0, %v5948
        %v5950 = vpop.f32.mrf.mxu0
        %v5951 = vadd.f32 0.0, %v5950
        %5952 = vmatmul.bf16.gmra.mxu0 %v3919
        %v5953 = vpop.f32.mrf.mxu0
        %v5954 = vadd.f32 0.0, %v5953
        %v5955 = vpop.f32.mrf.mxu0
        %v5956 = vadd.f32 0.0, %v5955
        %5957 = vmatmul.bf16.gmra.mxu0 %v3920
        %v5958 = vpop.f32.mrf.mxu0
        %v5959 = vadd.f32 0.0, %v5958
        %v5960 = vpop.f32.mrf.mxu0
        %v5961 = vadd.f32 0.0, %v5960
        %5962 = vmatmul.bf16.gmra.mxu0 %v3921
        %v5963 = vpop.f32.mrf.mxu0
        %v5964 = vadd.f32 0.0, %v5963
        %v5965 = vpop.f32.mrf.mxu0
        %v5966 = vadd.f32 0.0, %v5965
        %5967 = vmatmul.bf16.gmra.mxu0 %v3922
        %v5968 = vpop.f32.mrf.mxu0
        %v5969 = vadd.f32 0.0, %v5968
        %v5970 = vpop.f32.mrf.mxu0
        %v5971 = vadd.f32 0.0, %v5970
        %5972 = vmatmul.bf16.gmra.mxu0 %v3923
        %v5973 = vpop.f32.mrf.mxu0
        %v5974 = vadd.f32 0.0, %v5973
        %v5975 = vpop.f32.mrf.mxu0
        %v5976 = vadd.f32 0.0, %v5975
        %5977 = vmatmul.bf16.gmra.mxu0 %v3924
        %v5978 = vpop.f32.mrf.mxu0
        %v5979 = vadd.f32 0.0, %v5978
        %v5980 = vpop.f32.mrf.mxu0
        %v5981 = vadd.f32 0.0, %v5980
        %5982 = vmatmul.bf16.gmra.mxu0 %v3925
        %v5983 = vpop.f32.mrf.mxu0
        %v5984 = vadd.f32 0.0, %v5983
        %v5985 = vpop.f32.mrf.mxu0
        %v5986 = vadd.f32 0.0, %v5985
        %5987 = vdwg.mxu0
        %v6004 = vunpack.c.l.b16 %v5779
        %v6005 = vunpack.c.l.b16 %v5780
        %v6006 = vunpack.c.l.b16 %v5781
        %v6007 = vunpack.c.l.b16 %v5782
        %v6008 = vunpack.c.l.b16 %v5783
        %v6009 = vunpack.c.l.b16 %v5784
        %v6010 = vunpack.c.l.b16 %v5785
        %v6011 = vunpack.c.l.b16 %v5786
        %v6012 = vunpack.c.l.b16 %v5787
        %v6013 = vunpack.c.l.b16 %v5788
        %v6014 = vunpack.c.l.b16 %v5789
        %v6015 = vunpack.c.l.b16 %v5790
        %v6016 = vunpack.c.l.b16 %v5791
        %v6017 = vunpack.c.l.b16 %v5792
        %v6018 = vunpack.c.l.b16 %v5793
        %v6019 = vunpack.c.l.b16 %v5794
        %v6020 = vpack.c.b16 %v6005, %v6004
        %v6021 = vpack.c.b16 %v6007, %v6006
        %v6022 = vpack.c.b16 %v6009, %v6008
        %v6023 = vpack.c.b16 %v6011, %v6010
        %v6024 = vpack.c.b16 %v6013, %v6012
        %v6025 = vpack.c.b16 %v6015, %v6014
        %v6026 = vpack.c.b16 %v6017, %v6016
        %v6027 = vpack.c.b16 %v6019, %v6018
        %6036 = vmatpush.bf16.msra.mxu0 %v6027
        %6037 = vmatpush.bf16.msra.mxu0 %v6026
        %6038 = vmatpush.bf16.msra.mxu0 %v6025
        %6039 = vmatpush.bf16.msra.mxu0 %v6024
        %6040 = vmatpush.bf16.msra.mxu0 %v6023
        %6041 = vmatpush.bf16.msra.mxu0 %v6022
        %6042 = vmatpush.bf16.msra.mxu0 %v6021
        %6043 = vmatpush.bf16.msra.mxu0 %v6020
        %6044 = vmatmul.bf16.gmra.mxu0 %v4063
        %v6045 = vpop.f32.mrf.mxu0
        %v6046 = vadd.f32 0.0, %v6045
        %v6047 = vpop.f32.mrf.mxu0
        %v6048 = vadd.f32 0.0, %v6047
        %6049 = vmatmul.bf16.gmra.mxu0 %v4064
        %v6050 = vpop.f32.mrf.mxu0
        %v6051 = vadd.f32 0.0, %v6050
        %v6052 = vpop.f32.mrf.mxu0
        %v6053 = vadd.f32 0.0, %v6052
        %6054 = vmatmul.bf16.gmra.mxu0 %v4065
        %v6055 = vpop.f32.mrf.mxu0
        %v6056 = vadd.f32 0.0, %v6055
        %v6057 = vpop.f32.mrf.mxu0
        %v6058 = vadd.f32 0.0, %v6057
        %6059 = vmatmul.bf16.gmra.mxu0 %v4066
        %v6060 = vpop.f32.mrf.mxu0
        %v6061 = vadd.f32 0.0, %v6060
        %v6062 = vpop.f32.mrf.mxu0
        %v6063 = vadd.f32 0.0, %v6062
        %6064 = vmatmul.bf16.gmra.mxu0 %v4067
        %v6065 = vpop.f32.mrf.mxu0
        %v6066 = vadd.f32 0.0, %v6065
        %v6067 = vpop.f32.mrf.mxu0
        %v6068 = vadd.f32 0.0, %v6067
        %6069 = vmatmul.bf16.gmra.mxu0 %v4068
        %v6070 = vpop.f32.mrf.mxu0
        %v6071 = vadd.f32 0.0, %v6070
        %v6072 = vpop.f32.mrf.mxu0
        %v6073 = vadd.f32 0.0, %v6072
        %6074 = vmatmul.bf16.gmra.mxu0 %v4069
        %v6075 = vpop.f32.mrf.mxu0
        %v6076 = vadd.f32 0.0, %v6075
        %v6077 = vpop.f32.mrf.mxu0
        %v6078 = vadd.f32 0.0, %v6077
        %6079 = vmatmul.bf16.gmra.mxu0 %v4070
        %v6080 = vpop.f32.mrf.mxu0
        %v6081 = vadd.f32 0.0, %v6080
        %v6082 = vpop.f32.mrf.mxu0
        %v6083 = vadd.f32 0.0, %v6082
        %6084 = vdwg.mxu0
        %v6101 = vunpack.c.l.b16 %v5795
        %v6102 = vunpack.c.l.b16 %v5796
        %v6103 = vunpack.c.l.b16 %v5797
        %v6104 = vunpack.c.l.b16 %v5798
        %v6105 = vunpack.c.l.b16 %v5799
        %v6106 = vunpack.c.l.b16 %v5800
        %v6107 = vunpack.c.l.b16 %v5801
        %v6108 = vunpack.c.l.b16 %v5802
        %v6109 = vunpack.c.l.b16 %v5803
        %v6110 = vunpack.c.l.b16 %v5804
        %v6111 = vunpack.c.l.b16 %v5805
        %v6112 = vunpack.c.l.b16 %v5806
        %v6113 = vunpack.c.l.b16 %v5807
        %v6114 = vunpack.c.l.b16 %v5808
        %v6115 = vunpack.c.l.b16 %v5809
        %v6116 = vunpack.c.l.b16 %v5810
        %v6117 = vpack.c.b16 %v6102, %v6101
        %v6118 = vpack.c.b16 %v6104, %v6103
        %v6119 = vpack.c.b16 %v6106, %v6105
        %v6120 = vpack.c.b16 %v6108, %v6107
        %v6121 = vpack.c.b16 %v6110, %v6109
        %v6122 = vpack.c.b16 %v6112, %v6111
        %v6123 = vpack.c.b16 %v6114, %v6113
        %v6124 = vpack.c.b16 %v6116, %v6115
        %6133 = vmatpush.bf16.msra.mxu0 %v6124
        %6134 = vmatpush.bf16.msra.mxu0 %v6123
        %6135 = vmatpush.bf16.msra.mxu0 %v6122
        %6136 = vmatpush.bf16.msra.mxu0 %v6121
        %6137 = vmatpush.bf16.msra.mxu0 %v6120
        %6138 = vmatpush.bf16.msra.mxu0 %v6119
        %6139 = vmatpush.bf16.msra.mxu0 %v6118
        %6140 = vmatpush.bf16.msra.mxu0 %v6117
        %6141 = vmatmul.bf16.gmra.mxu0 %v4208
        %v6142 = vpop.f32.mrf.mxu0
        %v6143 = vadd.f32 0.0, %v6142
        %v6144 = vpop.f32.mrf.mxu0
        %v6145 = vadd.f32 0.0, %v6144
        %6146 = vmatmul.bf16.gmra.mxu0 %v4209
        %v6147 = vpop.f32.mrf.mxu0
        %v6148 = vadd.f32 0.0, %v6147
        %v6149 = vpop.f32.mrf.mxu0
        %v6150 = vadd.f32 0.0, %v6149
        %6151 = vmatmul.bf16.gmra.mxu0 %v4210
        %v6152 = vpop.f32.mrf.mxu0
        %v6153 = vadd.f32 0.0, %v6152
        %v6154 = vpop.f32.mrf.mxu0
        %v6155 = vadd.f32 0.0, %v6154
        %6156 = vmatmul.bf16.gmra.mxu0 %v4211
        %v6157 = vpop.f32.mrf.mxu0
        %v6158 = vadd.f32 0.0, %v6157
        %v6159 = vpop.f32.mrf.mxu0
        %v6160 = vadd.f32 0.0, %v6159
        %6161 = vmatmul.bf16.gmra.mxu0 %v4212
        %v6162 = vpop.f32.mrf.mxu0
        %v6163 = vadd.f32 0.0, %v6162
        %v6164 = vpop.f32.mrf.mxu0
        %v6165 = vadd.f32 0.0, %v6164
        %6166 = vmatmul.bf16.gmra.mxu0 %v4213
        %v6167 = vpop.f32.mrf.mxu0
        %v6168 = vadd.f32 0.0, %v6167
        %v6169 = vpop.f32.mrf.mxu0
        %v6170 = vadd.f32 0.0, %v6169
        %6171 = vmatmul.bf16.gmra.mxu0 %v4214
        %v6172 = vpop.f32.mrf.mxu0
        %v6173 = vadd.f32 0.0, %v6172
        %v6174 = vpop.f32.mrf.mxu0
        %v6175 = vadd.f32 0.0, %v6174
        %6176 = vmatmul.bf16.gmra.mxu0 %v4215
        %v6177 = vpop.f32.mrf.mxu0
        %v6178 = vadd.f32 0.0, %v6177
        %v6179 = vpop.f32.mrf.mxu0
        %v6180 = vadd.f32 0.0, %v6179
        %6181 = vdwg.mxu0
        %v6198 = vunpack.c.l.b16 %v5811
        %v6199 = vunpack.c.l.b16 %v5812
        %v6200 = vunpack.c.l.b16 %v5813
        %v6201 = vunpack.c.l.b16 %v5814
        %v6202 = vunpack.c.l.b16 %v5815
        %v6203 = vunpack.c.l.b16 %v5816
        %v6204 = vunpack.c.l.b16 %v5817
        %v6205 = vunpack.c.l.b16 %v5818
        %v6206 = vunpack.c.l.b16 %v5819
        %v6207 = vunpack.c.l.b16 %v5820
        %v6208 = vunpack.c.l.b16 %v5821
        %v6209 = vunpack.c.l.b16 %v5822
        %v6210 = vunpack.c.l.b16 %v5823
        %v6211 = vunpack.c.l.b16 %v5824
        %v6212 = vunpack.c.l.b16 %v5825
        %v6213 = vunpack.c.l.b16 %v5826
        %v6214 = vpack.c.b16 %v6199, %v6198
        %v6215 = vpack.c.b16 %v6201, %v6200
        %v6216 = vpack.c.b16 %v6203, %v6202
        %v6217 = vpack.c.b16 %v6205, %v6204
        %v6218 = vpack.c.b16 %v6207, %v6206
        %v6219 = vpack.c.b16 %v6209, %v6208
        %v6220 = vpack.c.b16 %v6211, %v6210
        %v6221 = vpack.c.b16 %v6213, %v6212
        %6230 = vmatpush.bf16.msra.mxu0 %v6221
        %6231 = vmatpush.bf16.msra.mxu0 %v6220
        %6232 = vmatpush.bf16.msra.mxu0 %v6219
        %6233 = vmatpush.bf16.msra.mxu0 %v6218
        %6234 = vmatpush.bf16.msra.mxu0 %v6217
        %6235 = vmatpush.bf16.msra.mxu0 %v6216
        %6236 = vmatpush.bf16.msra.mxu0 %v6215
        %6237 = vmatpush.bf16.msra.mxu0 %v6214
        %6238 = vmatmul.bf16.gmra.mxu0 %v4353
        %v6239 = vpop.f32.mrf.mxu0
        %v6240 = vadd.f32 0.0, %v6239
        %v6241 = vpop.f32.mrf.mxu0
        %v6242 = vadd.f32 0.0, %v6241
        %6243 = vmatmul.bf16.gmra.mxu0 %v4354
        %v6244 = vpop.f32.mrf.mxu0
        %v6245 = vadd.f32 0.0, %v6244
        %v6246 = vpop.f32.mrf.mxu0
        %v6247 = vadd.f32 0.0, %v6246
        %6248 = vmatmul.bf16.gmra.mxu0 %v4355
        %v6249 = vpop.f32.mrf.mxu0
        %v6250 = vadd.f32 0.0, %v6249
        %v6251 = vpop.f32.mrf.mxu0
        %v6252 = vadd.f32 0.0, %v6251
        %6253 = vmatmul.bf16.gmra.mxu0 %v4356
        %v6254 = vpop.f32.mrf.mxu0
        %v6255 = vadd.f32 0.0, %v6254
        %v6256 = vpop.f32.mrf.mxu0
        %v6257 = vadd.f32 0.0, %v6256
        %6258 = vmatmul.bf16.gmra.mxu0 %v4357
        %v6259 = vpop.f32.mrf.mxu0
        %v6260 = vadd.f32 0.0, %v6259
        %v6261 = vpop.f32.mrf.mxu0
        %v6262 = vadd.f32 0.0, %v6261
        %6263 = vmatmul.bf16.gmra.mxu0 %v4358
        %v6264 = vpop.f32.mrf.mxu0
        %v6265 = vadd.f32 0.0, %v6264
        %v6266 = vpop.f32.mrf.mxu0
        %v6267 = vadd.f32 0.0, %v6266
        %6268 = vmatmul.bf16.gmra.mxu0 %v4359
        %v6269 = vpop.f32.mrf.mxu0
        %v6270 = vadd.f32 0.0, %v6269
        %v6271 = vpop.f32.mrf.mxu0
        %v6272 = vadd.f32 0.0, %v6271
        %6273 = vmatmul.bf16.gmra.mxu0 %v4360
        %v6274 = vpop.f32.mrf.mxu0
        %v6275 = vadd.f32 0.0, %v6274
        %v6276 = vpop.f32.mrf.mxu0
        %v6277 = vadd.f32 0.0, %v6276
        %6278 = vdwg.mxu0
        %v6295 = vunpack.c.l.b16 %v5827
        %v6296 = vunpack.c.l.b16 %v5828
        %v6297 = vunpack.c.l.b16 %v5829
        %v6298 = vunpack.c.l.b16 %v5830
        %v6299 = vunpack.c.l.b16 %v5831
        %v6300 = vunpack.c.l.b16 %v5832
        %v6301 = vunpack.c.l.b16 %v5833
        %v6302 = vunpack.c.l.b16 %v5834
        %v6303 = vunpack.c.l.b16 %v5835
        %v6304 = vunpack.c.l.b16 %v5836
        %v6305 = vunpack.c.l.b16 %v5837
        %v6306 = vunpack.c.l.b16 %v5838
        %v6307 = vunpack.c.l.b16 %v5839
        %v6308 = vunpack.c.l.b16 %v5840
        %v6309 = vunpack.c.l.b16 %v5841
        %v6310 = vunpack.c.l.b16 %v5842
        %v6311 = vpack.c.b16 %v6296, %v6295
        %v6312 = vpack.c.b16 %v6298, %v6297
        %v6313 = vpack.c.b16 %v6300, %v6299
        %v6314 = vpack.c.b16 %v6302, %v6301
        %v6315 = vpack.c.b16 %v6304, %v6303
        %v6316 = vpack.c.b16 %v6306, %v6305
        %v6317 = vpack.c.b16 %v6308, %v6307
        %v6318 = vpack.c.b16 %v6310, %v6309
        %6327 = vmatpush.bf16.msra.mxu0 %v6318
        %6328 = vmatpush.bf16.msra.mxu0 %v6317
        %6329 = vmatpush.bf16.msra.mxu0 %v6316
        %6330 = vmatpush.bf16.msra.mxu0 %v6315
        %6331 = vmatpush.bf16.msra.mxu0 %v6314
        %6332 = vmatpush.bf16.msra.mxu0 %v6313
        %6333 = vmatpush.bf16.msra.mxu0 %v6312
        %6334 = vmatpush.bf16.msra.mxu0 %v6311
        %6335 = vmatmul.bf16.gmra.mxu0 %v4498
        %v6336 = vpop.f32.mrf.mxu0
        %v6337 = vadd.f32 0.0, %v6336
        %v6338 = vpop.f32.mrf.mxu0
        %v6339 = vadd.f32 0.0, %v6338
        %6340 = vmatmul.bf16.gmra.mxu0 %v4499
        %v6341 = vpop.f32.mrf.mxu0
        %v6342 = vadd.f32 0.0, %v6341
        %v6343 = vpop.f32.mrf.mxu0
        %v6344 = vadd.f32 0.0, %v6343
        %6345 = vmatmul.bf16.gmra.mxu0 %v4500
        %v6346 = vpop.f32.mrf.mxu0
        %v6347 = vadd.f32 0.0, %v6346
        %v6348 = vpop.f32.mrf.mxu0
        %v6349 = vadd.f32 0.0, %v6348
        %6350 = vmatmul.bf16.gmra.mxu0 %v4501
        %v6351 = vpop.f32.mrf.mxu0
        %v6352 = vadd.f32 0.0, %v6351
        %v6353 = vpop.f32.mrf.mxu0
        %v6354 = vadd.f32 0.0, %v6353
        %6355 = vmatmul.bf16.gmra.mxu0 %v4502
        %v6356 = vpop.f32.mrf.mxu0
        %v6357 = vadd.f32 0.0, %v6356
        %v6358 = vpop.f32.mrf.mxu0
        %v6359 = vadd.f32 0.0, %v6358
        %6360 = vmatmul.bf16.gmra.mxu0 %v4503
        %v6361 = vpop.f32.mrf.mxu0
        %v6362 = vadd.f32 0.0, %v6361
        %v6363 = vpop.f32.mrf.mxu0
        %v6364 = vadd.f32 0.0, %v6363
        %6365 = vmatmul.bf16.gmra.mxu0 %v4504
        %v6366 = vpop.f32.mrf.mxu0
        %v6367 = vadd.f32 0.0, %v6366
        %v6368 = vpop.f32.mrf.mxu0
        %v6369 = vadd.f32 0.0, %v6368
        %6370 = vmatmul.bf16.gmra.mxu0 %v4505
        %v6371 = vpop.f32.mrf.mxu0
        %v6372 = vadd.f32 0.0, %v6371
        %v6373 = vpop.f32.mrf.mxu0
        %v6374 = vadd.f32 0.0, %v6373
        %6375 = vdwg.mxu0
        %v6392 = vunpack.c.l.b16 %v5843
        %v6393 = vunpack.c.l.b16 %v5844
        %v6394 = vunpack.c.l.b16 %v5845
        %v6395 = vunpack.c.l.b16 %v5846
        %v6396 = vunpack.c.l.b16 %v5847
        %v6397 = vunpack.c.l.b16 %v5848
        %v6398 = vunpack.c.l.b16 %v5849
        %v6399 = vunpack.c.l.b16 %v5850
        %v6400 = vunpack.c.l.b16 %v5851
        %v6401 = vunpack.c.l.b16 %v5852
        %v6402 = vunpack.c.l.b16 %v5853
        %v6403 = vunpack.c.l.b16 %v5854
        %v6404 = vunpack.c.l.b16 %v5855
        %v6405 = vunpack.c.l.b16 %v5856
        %v6406 = vunpack.c.l.b16 %v5857
        %v6407 = vunpack.c.l.b16 %v5858
        %v6408 = vpack.c.b16 %v6393, %v6392
        %v6409 = vpack.c.b16 %v6395, %v6394
        %v6410 = vpack.c.b16 %v6397, %v6396
        %v6411 = vpack.c.b16 %v6399, %v6398
        %v6412 = vpack.c.b16 %v6401, %v6400
        %v6413 = vpack.c.b16 %v6403, %v6402
        %v6414 = vpack.c.b16 %v6405, %v6404
        %v6415 = vpack.c.b16 %v6407, %v6406
        %6424 = vmatpush.bf16.msra.mxu0 %v6415
        %6425 = vmatpush.bf16.msra.mxu0 %v6414
        %6426 = vmatpush.bf16.msra.mxu0 %v6413
        %6427 = vmatpush.bf16.msra.mxu0 %v6412
        %6428 = vmatpush.bf16.msra.mxu0 %v6411
        %6429 = vmatpush.bf16.msra.mxu0 %v6410
        %6430 = vmatpush.bf16.msra.mxu0 %v6409
        %6431 = vmatpush.bf16.msra.mxu0 %v6408
        %6432 = vmatmul.bf16.gmra.mxu0 %v4643
        %v6433 = vpop.f32.mrf.mxu0
        %v6434 = vadd.f32 0.0, %v6433
        %v6435 = vpop.f32.mrf.mxu0
        %v6436 = vadd.f32 0.0, %v6435
        %6437 = vmatmul.bf16.gmra.mxu0 %v4644
        %v6438 = vpop.f32.mrf.mxu0
        %v6439 = vadd.f32 0.0, %v6438
        %v6440 = vpop.f32.mrf.mxu0
        %v6441 = vadd.f32 0.0, %v6440
        %6442 = vmatmul.bf16.gmra.mxu0 %v4645
        %v6443 = vpop.f32.mrf.mxu0
        %v6444 = vadd.f32 0.0, %v6443
        %v6445 = vpop.f32.mrf.mxu0
        %v6446 = vadd.f32 0.0, %v6445
        %6447 = vmatmul.bf16.gmra.mxu0 %v4646
        %v6448 = vpop.f32.mrf.mxu0
        %v6449 = vadd.f32 0.0, %v6448
        %v6450 = vpop.f32.mrf.mxu0
        %v6451 = vadd.f32 0.0, %v6450
        %6452 = vmatmul.bf16.gmra.mxu0 %v4647
        %v6453 = vpop.f32.mrf.mxu0
        %v6454 = vadd.f32 0.0, %v6453
        %v6455 = vpop.f32.mrf.mxu0
        %v6456 = vadd.f32 0.0, %v6455
        %6457 = vmatmul.bf16.gmra.mxu0 %v4648
        %v6458 = vpop.f32.mrf.mxu0
        %v6459 = vadd.f32 0.0, %v6458
        %v6460 = vpop.f32.mrf.mxu0
        %v6461 = vadd.f32 0.0, %v6460
        %6462 = vmatmul.bf16.gmra.mxu0 %v4649
        %v6463 = vpop.f32.mrf.mxu0
        %v6464 = vadd.f32 0.0, %v6463
        %v6465 = vpop.f32.mrf.mxu0
        %v6466 = vadd.f32 0.0, %v6465
        %6467 = vmatmul.bf16.gmra.mxu0 %v4650
        %v6468 = vpop.f32.mrf.mxu0
        %v6469 = vadd.f32 0.0, %v6468
        %v6470 = vpop.f32.mrf.mxu0
        %v6471 = vadd.f32 0.0, %v6470
        %6472 = vdwg.mxu0
        %v6489 = vunpack.c.l.b16 %v5859
        %v6490 = vunpack.c.l.b16 %v5860
        %v6491 = vunpack.c.l.b16 %v5861
        %v6492 = vunpack.c.l.b16 %v5862
        %v6493 = vunpack.c.l.b16 %v5863
        %v6494 = vunpack.c.l.b16 %v5864
        %v6495 = vunpack.c.l.b16 %v5865
        %v6496 = vunpack.c.l.b16 %v5866
        %v6497 = vunpack.c.l.b16 %v5867
        %v6498 = vunpack.c.l.b16 %v5868
        %v6499 = vunpack.c.l.b16 %v5869
        %v6500 = vunpack.c.l.b16 %v5870
        %v6501 = vunpack.c.l.b16 %v5871
        %v6502 = vunpack.c.l.b16 %v5872
        %v6503 = vunpack.c.l.b16 %v5873
        %v6504 = vunpack.c.l.b16 %v5874
        %v6505 = vpack.c.b16 %v6490, %v6489
        %v6506 = vpack.c.b16 %v6492, %v6491
        %v6507 = vpack.c.b16 %v6494, %v6493
        %v6508 = vpack.c.b16 %v6496, %v6495
        %v6509 = vpack.c.b16 %v6498, %v6497
        %v6510 = vpack.c.b16 %v6500, %v6499
        %v6511 = vpack.c.b16 %v6502, %v6501
        %v6512 = vpack.c.b16 %v6504, %v6503
        %6521 = vmatpush.bf16.msra.mxu0 %v6512
        %6522 = vmatpush.bf16.msra.mxu0 %v6511
        %6523 = vmatpush.bf16.msra.mxu0 %v6510
        %6524 = vmatpush.bf16.msra.mxu0 %v6509
        %6525 = vmatpush.bf16.msra.mxu0 %v6508
        %6526 = vmatpush.bf16.msra.mxu0 %v6507
        %6527 = vmatpush.bf16.msra.mxu0 %v6506
        %6528 = vmatpush.bf16.msra.mxu0 %v6505
        %6529 = vmatmul.bf16.gmra.mxu0 %v4788
        %v6530 = vpop.f32.mrf.mxu0
        %v6531 = vadd.f32 0.0, %v6530
        %v6532 = vpop.f32.mrf.mxu0
        %v6533 = vadd.f32 0.0, %v6532
        %6534 = vmatmul.bf16.gmra.mxu0 %v4789
        %v6535 = vpop.f32.mrf.mxu0
        %v6536 = vadd.f32 0.0, %v6535
        %v6537 = vpop.f32.mrf.mxu0
        %v6538 = vadd.f32 0.0, %v6537
        %6539 = vmatmul.bf16.gmra.mxu0 %v4790
        %v6540 = vpop.f32.mrf.mxu0
        %v6541 = vadd.f32 0.0, %v6540
        %v6542 = vpop.f32.mrf.mxu0
        %v6543 = vadd.f32 0.0, %v6542
        %6544 = vmatmul.bf16.gmra.mxu0 %v4791
        %v6545 = vpop.f32.mrf.mxu0
        %v6546 = vadd.f32 0.0, %v6545
        %v6547 = vpop.f32.mrf.mxu0
        %v6548 = vadd.f32 0.0, %v6547
        %6549 = vmatmul.bf16.gmra.mxu0 %v4792
        %v6550 = vpop.f32.mrf.mxu0
        %v6551 = vadd.f32 0.0, %v6550
        %v6552 = vpop.f32.mrf.mxu0
        %v6553 = vadd.f32 0.0, %v6552
        %6554 = vmatmul.bf16.gmra.mxu0 %v4793
        %v6555 = vpop.f32.mrf.mxu0
        %v6556 = vadd.f32 0.0, %v6555
        %v6557 = vpop.f32.mrf.mxu0
        %v6558 = vadd.f32 0.0, %v6557
        %6559 = vmatmul.bf16.gmra.mxu0 %v4794
        %v6560 = vpop.f32.mrf.mxu0
        %v6561 = vadd.f32 0.0, %v6560
        %v6562 = vpop.f32.mrf.mxu0
        %v6563 = vadd.f32 0.0, %v6562
        %6564 = vmatmul.bf16.gmra.mxu0 %v4795
        %v6565 = vpop.f32.mrf.mxu0
        %v6566 = vadd.f32 0.0, %v6565
        %v6567 = vpop.f32.mrf.mxu0
        %v6568 = vadd.f32 0.0, %v6567
        %6569 = vdwg.mxu0
        %v6586 = vunpack.c.l.b16 %v5875
        %v6587 = vunpack.c.l.b16 %v5876
        %v6588 = vunpack.c.l.b16 %v5877
        %v6589 = vunpack.c.l.b16 %v5878
        %v6590 = vunpack.c.l.b16 %v5879
        %v6591 = vunpack.c.l.b16 %v5880
        %v6592 = vunpack.c.l.b16 %v5881
        %v6593 = vunpack.c.l.b16 %v5882
        %v6594 = vunpack.c.l.b16 %v5883
        %v6595 = vunpack.c.l.b16 %v5884
        %v6596 = vunpack.c.l.b16 %v5885
        %v6597 = vunpack.c.l.b16 %v5886
        %v6598 = vunpack.c.l.b16 %v5887
        %v6599 = vunpack.c.l.b16 %v5888
        %v6600 = vunpack.c.l.b16 %v5889
        %v6601 = vunpack.c.l.b16 %v5890
        %v6602 = vpack.c.b16 %v6587, %v6586
        %v6603 = vpack.c.b16 %v6589, %v6588
        %v6604 = vpack.c.b16 %v6591, %v6590
        %v6605 = vpack.c.b16 %v6593, %v6592
        %v6606 = vpack.c.b16 %v6595, %v6594
        %v6607 = vpack.c.b16 %v6597, %v6596
        %v6608 = vpack.c.b16 %v6599, %v6598
        %v6609 = vpack.c.b16 %v6601, %v6600
        %6618 = vmatpush.bf16.msra.mxu0 %v6609
        %6619 = vmatpush.bf16.msra.mxu0 %v6608
        %6620 = vmatpush.bf16.msra.mxu0 %v6607
        %6621 = vmatpush.bf16.msra.mxu0 %v6606
        %6622 = vmatpush.bf16.msra.mxu0 %v6605
        %6623 = vmatpush.bf16.msra.mxu0 %v6604
        %6624 = vmatpush.bf16.msra.mxu0 %v6603
        %6625 = vmatpush.bf16.msra.mxu0 %v6602
        %6626 = vmatmul.bf16.gmra.mxu0 %v4933
        %v6627 = vpop.f32.mrf.mxu0
        %v6628 = vadd.f32 0.0, %v6627
        %v6629 = vpop.f32.mrf.mxu0
        %v6630 = vadd.f32 0.0, %v6629
        %6631 = vmatmul.bf16.gmra.mxu0 %v4934
        %v6632 = vpop.f32.mrf.mxu0
        %v6633 = vadd.f32 0.0, %v6632
        %v6634 = vpop.f32.mrf.mxu0
        %v6635 = vadd.f32 0.0, %v6634
        %6636 = vmatmul.bf16.gmra.mxu0 %v4935
        %v6637 = vpop.f32.mrf.mxu0
        %v6638 = vadd.f32 0.0, %v6637
        %v6639 = vpop.f32.mrf.mxu0
        %v6640 = vadd.f32 0.0, %v6639
        %6641 = vmatmul.bf16.gmra.mxu0 %v4936
        %v6642 = vpop.f32.mrf.mxu0
        %v6643 = vadd.f32 0.0, %v6642
        %v6644 = vpop.f32.mrf.mxu0
        %v6645 = vadd.f32 0.0, %v6644
        %6646 = vmatmul.bf16.gmra.mxu0 %v4937
        %v6647 = vpop.f32.mrf.mxu0
        %v6648 = vadd.f32 0.0, %v6647
        %v6649 = vpop.f32.mrf.mxu0
        %v6650 = vadd.f32 0.0, %v6649
        %6651 = vmatmul.bf16.gmra.mxu0 %v4938
        %v6652 = vpop.f32.mrf.mxu0
        %v6653 = vadd.f32 0.0, %v6652
        %v6654 = vpop.f32.mrf.mxu0
        %v6655 = vadd.f32 0.0, %v6654
        %6656 = vmatmul.bf16.gmra.mxu0 %v4939
        %v6657 = vpop.f32.mrf.mxu0
        %v6658 = vadd.f32 0.0, %v6657
        %v6659 = vpop.f32.mrf.mxu0
        %v6660 = vadd.f32 0.0, %v6659
        %6661 = vmatmul.bf16.gmra.mxu0 %v4940
        %v6662 = vpop.f32.mrf.mxu0
        %v6663 = vadd.f32 0.0, %v6662
        %v6664 = vpop.f32.mrf.mxu0
        %v6665 = vadd.f32 0.0, %v6664
        %6666 = vdwg.mxu0
        %v6667 = vld [vmem:[%s6] sm:$0x1]
        %v6669 = vperm.slane %v6667, 0
        %v6671 = vadd.f32 %v5949, %v6669
        %v6672 = vadd.f32 %v5951, %v6669
        %v6673 = vadd.f32 %v5954, %v6669
        %v6674 = vadd.f32 %v5956, %v6669
        %v6675 = vadd.f32 %v5959, %v6669
        %v6676 = vadd.f32 %v5961, %v6669
        %v6677 = vadd.f32 %v5964, %v6669
        %v6678 = vadd.f32 %v5966, %v6669
        %v6679 = vadd.f32 %v5969, %v6669
        %v6680 = vadd.f32 %v5971, %v6669
        %v6681 = vadd.f32 %v5974, %v6669
        %v6682 = vadd.f32 %v5976, %v6669
        %v6683 = vadd.f32 %v5979, %v6669
        %v6684 = vadd.f32 %v5981, %v6669
        %v6685 = vadd.f32 %v5984, %v6669
        %v6686 = vadd.f32 %v5986, %v6669
        %v6687 = vadd.f32 %v6046, %v6669
        %v6688 = vadd.f32 %v6048, %v6669
        %v6689 = vadd.f32 %v6051, %v6669
        %v6690 = vadd.f32 %v6053, %v6669
        %v6691 = vadd.f32 %v6056, %v6669
        %v6692 = vadd.f32 %v6058, %v6669
        %v6693 = vadd.f32 %v6061, %v6669
        %v6694 = vadd.f32 %v6063, %v6669
        %v6695 = vadd.f32 %v6066, %v6669
        %v6696 = vadd.f32 %v6068, %v6669
        %v6697 = vadd.f32 %v6071, %v6669
        %v6698 = vadd.f32 %v6073, %v6669
        %v6699 = vadd.f32 %v6076, %v6669
        %v6700 = vadd.f32 %v6078, %v6669
        %v6701 = vadd.f32 %v6081, %v6669
        %v6702 = vadd.f32 %v6083, %v6669
        %v6703 = vadd.f32 %v6143, %v6669
        %v6704 = vadd.f32 %v6145, %v6669
        %v6705 = vadd.f32 %v6148, %v6669
        %v6706 = vadd.f32 %v6150, %v6669
        %v6707 = vadd.f32 %v6153, %v6669
        %v6708 = vadd.f32 %v6155, %v6669
        %v6709 = vadd.f32 %v6158, %v6669
        %v6710 = vadd.f32 %v6160, %v6669
        %v6711 = vadd.f32 %v6163, %v6669
        %v6712 = vadd.f32 %v6165, %v6669
        %v6713 = vadd.f32 %v6168, %v6669
        %v6714 = vadd.f32 %v6170, %v6669
        %v6715 = vadd.f32 %v6173, %v6669
        %v6716 = vadd.f32 %v6175, %v6669
        %v6717 = vadd.f32 %v6178, %v6669
        %v6718 = vadd.f32 %v6180, %v6669
        %v6719 = vadd.f32 %v6240, %v6669
        %v6720 = vadd.f32 %v6242, %v6669
        %v6721 = vadd.f32 %v6245, %v6669
        %v6722 = vadd.f32 %v6247, %v6669
        %v6723 = vadd.f32 %v6250, %v6669
        %v6724 = vadd.f32 %v6252, %v6669
        %v6725 = vadd.f32 %v6255, %v6669
        %v6726 = vadd.f32 %v6257, %v6669
        %v6727 = vadd.f32 %v6260, %v6669
        %v6728 = vadd.f32 %v6262, %v6669
        %v6729 = vadd.f32 %v6265, %v6669
        %v6730 = vadd.f32 %v6267, %v6669
        %v6731 = vadd.f32 %v6270, %v6669
        %v6732 = vadd.f32 %v6272, %v6669
        %v6733 = vadd.f32 %v6275, %v6669
        %v6734 = vadd.f32 %v6277, %v6669
        %v6735 = vadd.f32 %v6337, %v6669
        %v6736 = vadd.f32 %v6339, %v6669
        %v6737 = vadd.f32 %v6342, %v6669
        %v6738 = vadd.f32 %v6344, %v6669
        %v6739 = vadd.f32 %v6347, %v6669
        %v6740 = vadd.f32 %v6349, %v6669
        %v6741 = vadd.f32 %v6352, %v6669
        %v6742 = vadd.f32 %v6354, %v6669
        %v6743 = vadd.f32 %v6357, %v6669
        %v6744 = vadd.f32 %v6359, %v6669
        %v6745 = vadd.f32 %v6362, %v6669
        %v6746 = vadd.f32 %v6364, %v6669
        %v6747 = vadd.f32 %v6367, %v6669
        %v6748 = vadd.f32 %v6369, %v6669
        %v6749 = vadd.f32 %v6372, %v6669
        %v6750 = vadd.f32 %v6374, %v6669
        %v6751 = vadd.f32 %v6434, %v6669
        %v6752 = vadd.f32 %v6436, %v6669
        %v6753 = vadd.f32 %v6439, %v6669
        %v6754 = vadd.f32 %v6441, %v6669
        %v6755 = vadd.f32 %v6444, %v6669
        %v6756 = vadd.f32 %v6446, %v6669
        %v6757 = vadd.f32 %v6449, %v6669
        %v6758 = vadd.f32 %v6451, %v6669
        %v6759 = vadd.f32 %v6454, %v6669
        %v6760 = vadd.f32 %v6456, %v6669
        %v6761 = vadd.f32 %v6459, %v6669
        %v6762 = vadd.f32 %v6461, %v6669
        %v6763 = vadd.f32 %v6464, %v6669
        %v6764 = vadd.f32 %v6466, %v6669
        %v6765 = vadd.f32 %v6469, %v6669
        %v6766 = vadd.f32 %v6471, %v6669
        %v6767 = vadd.f32 %v6531, %v6669
        %v6768 = vadd.f32 %v6533, %v6669
        %v6769 = vadd.f32 %v6536, %v6669
        %v6770 = vadd.f32 %v6538, %v6669
        %v6771 = vadd.f32 %v6541, %v6669
        %v6772 = vadd.f32 %v6543, %v6669
        %v6773 = vadd.f32 %v6546, %v6669
        %v6774 = vadd.f32 %v6548, %v6669
        %v6775 = vadd.f32 %v6551, %v6669
        %v6776 = vadd.f32 %v6553, %v6669
        %v6777 = vadd.f32 %v6556, %v6669
        %v6778 = vadd.f32 %v6558, %v6669
        %v6779 = vadd.f32 %v6561, %v6669
        %v6780 = vadd.f32 %v6563, %v6669
        %v6781 = vadd.f32 %v6566, %v6669
        %v6782 = vadd.f32 %v6568, %v6669
        %v6783 = vadd.f32 %v6628, %v6669
        %v6784 = vadd.f32 %v6630, %v6669
        %v6785 = vadd.f32 %v6633, %v6669
        %v6786 = vadd.f32 %v6635, %v6669
        %v6787 = vadd.f32 %v6638, %v6669
        %v6788 = vadd.f32 %v6640, %v6669
        %v6789 = vadd.f32 %v6643, %v6669
        %v6790 = vadd.f32 %v6645, %v6669
        %v6791 = vadd.f32 %v6648, %v6669
        %v6792 = vadd.f32 %v6650, %v6669
        %v6793 = vadd.f32 %v6653, %v6669
        %v6794 = vadd.f32 %v6655, %v6669
        %v6795 = vadd.f32 %v6658, %v6669
        %v6796 = vadd.f32 %v6660, %v6669
        %v6797 = vadd.f32 %v6663, %v6669
        %v6798 = vadd.f32 %v6665, %v6669
        %v6799 = vmax.f32 %v6671, 0.0
        %v6800 = vmax.f32 %v6672, 0.0
        %v6801 = vmax.f32 %v6673, 0.0
        %v6802 = vmax.f32 %v6674, 0.0
        %v6803 = vmax.f32 %v6675, 0.0
        %v6804 = vmax.f32 %v6676, 0.0
        %v6805 = vmax.f32 %v6677, 0.0
        %v6806 = vmax.f32 %v6678, 0.0
        %v6807 = vmax.f32 %v6679, 0.0
        %v6808 = vmax.f32 %v6680, 0.0
        %v6809 = vmax.f32 %v6681, 0.0
        %v6810 = vmax.f32 %v6682, 0.0
        %v6811 = vmax.f32 %v6683, 0.0
        %v6812 = vmax.f32 %v6684, 0.0
        %v6813 = vmax.f32 %v6685, 0.0
        %v6814 = vmax.f32 %v6686, 0.0
        %v6815 = vmax.f32 %v6687, 0.0
        %v6816 = vmax.f32 %v6688, 0.0
        %v6817 = vmax.f32 %v6689, 0.0
        %v6818 = vmax.f32 %v6690, 0.0
        %v6819 = vmax.f32 %v6691, 0.0
        %v6820 = vmax.f32 %v6692, 0.0
        %v6821 = vmax.f32 %v6693, 0.0
        %v6822 = vmax.f32 %v6694, 0.0
        %v6823 = vmax.f32 %v6695, 0.0
        %v6824 = vmax.f32 %v6696, 0.0
        %v6825 = vmax.f32 %v6697, 0.0
        %v6826 = vmax.f32 %v6698, 0.0
        %v6827 = vmax.f32 %v6699, 0.0
        %v6828 = vmax.f32 %v6700, 0.0
        %v6829 = vmax.f32 %v6701, 0.0
        %v6830 = vmax.f32 %v6702, 0.0
        %v6831 = vmax.f32 %v6703, 0.0
        %v6832 = vmax.f32 %v6704, 0.0
        %v6833 = vmax.f32 %v6705, 0.0
        %v6834 = vmax.f32 %v6706, 0.0
        %v6835 = vmax.f32 %v6707, 0.0
        %v6836 = vmax.f32 %v6708, 0.0
        %v6837 = vmax.f32 %v6709, 0.0
        %v6838 = vmax.f32 %v6710, 0.0
        %v6839 = vmax.f32 %v6711, 0.0
        %v6840 = vmax.f32 %v6712, 0.0
        %v6841 = vmax.f32 %v6713, 0.0
        %v6842 = vmax.f32 %v6714, 0.0
        %v6843 = vmax.f32 %v6715, 0.0
        %v6844 = vmax.f32 %v6716, 0.0
        %v6845 = vmax.f32 %v6717, 0.0
        %v6846 = vmax.f32 %v6718, 0.0
        %v6847 = vmax.f32 %v6719, 0.0
        %v6848 = vmax.f32 %v6720, 0.0
        %v6849 = vmax.f32 %v6721, 0.0
        %v6850 = vmax.f32 %v6722, 0.0
        %v6851 = vmax.f32 %v6723, 0.0
        %v6852 = vmax.f32 %v6724, 0.0
        %v6853 = vmax.f32 %v6725, 0.0
        %v6854 = vmax.f32 %v6726, 0.0
        %v6855 = vmax.f32 %v6727, 0.0
        %v6856 = vmax.f32 %v6728, 0.0
        %v6857 = vmax.f32 %v6729, 0.0
        %v6858 = vmax.f32 %v6730, 0.0
        %v6859 = vmax.f32 %v6731, 0.0
        %v6860 = vmax.f32 %v6732, 0.0
        %v6861 = vmax.f32 %v6733, 0.0
        %v6862 = vmax.f32 %v6734, 0.0
        %v6863 = vmax.f32 %v6735, 0.0
        %v6864 = vmax.f32 %v6736, 0.0
        %v6865 = vmax.f32 %v6737, 0.0
        %v6866 = vmax.f32 %v6738, 0.0
        %v6867 = vmax.f32 %v6739, 0.0
        %v6868 = vmax.f32 %v6740, 0.0
        %v6869 = vmax.f32 %v6741, 0.0
        %v6870 = vmax.f32 %v6742, 0.0
        %v6871 = vmax.f32 %v6743, 0.0
        %v6872 = vmax.f32 %v6744, 0.0
        %v6873 = vmax.f32 %v6745, 0.0
        %v6874 = vmax.f32 %v6746, 0.0
        %v6875 = vmax.f32 %v6747, 0.0
        %v6876 = vmax.f32 %v6748, 0.0
        %v6877 = vmax.f32 %v6749, 0.0
        %v6878 = vmax.f32 %v6750, 0.0
        %v6879 = vmax.f32 %v6751, 0.0
        %v6880 = vmax.f32 %v6752, 0.0
        %v6881 = vmax.f32 %v6753, 0.0
        %v6882 = vmax.f32 %v6754, 0.0
        %v6883 = vmax.f32 %v6755, 0.0
        %v6884 = vmax.f32 %v6756, 0.0
        %v6885 = vmax.f32 %v6757, 0.0
        %v6886 = vmax.f32 %v6758, 0.0
        %v6887 = vmax.f32 %v6759, 0.0
        %v6888 = vmax.f32 %v6760, 0.0
        %v6889 = vmax.f32 %v6761, 0.0
        %v6890 = vmax.f32 %v6762, 0.0
        %v6891 = vmax.f32 %v6763, 0.0
        %v6892 = vmax.f32 %v6764, 0.0
        %v6893 = vmax.f32 %v6765, 0.0
        %v6894 = vmax.f32 %v6766, 0.0
        %v6895 = vmax.f32 %v6767, 0.0
        %v6896 = vmax.f32 %v6768, 0.0
        %v6897 = vmax.f32 %v6769, 0.0
        %v6898 = vmax.f32 %v6770, 0.0
        %v6899 = vmax.f32 %v6771, 0.0
        %v6900 = vmax.f32 %v6772, 0.0
        %v6901 = vmax.f32 %v6773, 0.0
        %v6902 = vmax.f32 %v6774, 0.0
        %v6903 = vmax.f32 %v6775, 0.0
        %v6904 = vmax.f32 %v6776, 0.0
        %v6905 = vmax.f32 %v6777, 0.0
        %v6906 = vmax.f32 %v6778, 0.0
        %v6907 = vmax.f32 %v6779, 0.0
        %v6908 = vmax.f32 %v6780, 0.0
        %v6909 = vmax.f32 %v6781, 0.0
        %v6910 = vmax.f32 %v6782, 0.0
        %v6911 = vmax.f32 %v6783, 0.0
        %v6912 = vmax.f32 %v6784, 0.0
        %v6913 = vmax.f32 %v6785, 0.0
        %v6914 = vmax.f32 %v6786, 0.0
        %v6915 = vmax.f32 %v6787, 0.0
        %v6916 = vmax.f32 %v6788, 0.0
        %v6917 = vmax.f32 %v6789, 0.0
        %v6918 = vmax.f32 %v6790, 0.0
        %v6919 = vmax.f32 %v6791, 0.0
        %v6920 = vmax.f32 %v6792, 0.0
        %v6921 = vmax.f32 %v6793, 0.0
        %v6922 = vmax.f32 %v6794, 0.0
        %v6923 = vmax.f32 %v6795, 0.0
        %v6924 = vmax.f32 %v6796, 0.0
        %v6925 = vmax.f32 %v6797, 0.0
        %v6926 = vmax.f32 %v6798, 0.0
        %v6927 = vpack.c.bf16 %v6800, %v6799
        %v6928 = vpack.c.bf16 %v6802, %v6801
        %v6929 = vpack.c.bf16 %v6804, %v6803
        %v6930 = vpack.c.bf16 %v6806, %v6805
        %v6931 = vpack.c.bf16 %v6808, %v6807
        %v6932 = vpack.c.bf16 %v6810, %v6809
        %v6933 = vpack.c.bf16 %v6812, %v6811
        %v6934 = vpack.c.bf16 %v6814, %v6813
        %v6935 = vpack.c.bf16 %v6816, %v6815
        %v6936 = vpack.c.bf16 %v6818, %v6817
        %v6937 = vpack.c.bf16 %v6820, %v6819
        %v6938 = vpack.c.bf16 %v6822, %v6821
        %v6939 = vpack.c.bf16 %v6824, %v6823
        %v6940 = vpack.c.bf16 %v6826, %v6825
        %v6941 = vpack.c.bf16 %v6828, %v6827
        %v6942 = vpack.c.bf16 %v6830, %v6829
        %v6943 = vpack.c.bf16 %v6832, %v6831
        %v6944 = vpack.c.bf16 %v6834, %v6833
        %v6945 = vpack.c.bf16 %v6836, %v6835
        %v6946 = vpack.c.bf16 %v6838, %v6837
        %v6947 = vpack.c.bf16 %v6840, %v6839
        %v6948 = vpack.c.bf16 %v6842, %v6841
        %v6949 = vpack.c.bf16 %v6844, %v6843
        %v6950 = vpack.c.bf16 %v6846, %v6845
        %v6951 = vpack.c.bf16 %v6848, %v6847
        %v6952 = vpack.c.bf16 %v6850, %v6849
        %v6953 = vpack.c.bf16 %v6852, %v6851
        %v6954 = vpack.c.bf16 %v6854, %v6853
        %v6955 = vpack.c.bf16 %v6856, %v6855
        %v6956 = vpack.c.bf16 %v6858, %v6857
        %v6957 = vpack.c.bf16 %v6860, %v6859
        %v6958 = vpack.c.bf16 %v6862, %v6861
        %v6959 = vpack.c.bf16 %v6864, %v6863
        %v6960 = vpack.c.bf16 %v6866, %v6865
        %v6961 = vpack.c.bf16 %v6868, %v6867
        %v6962 = vpack.c.bf16 %v6870, %v6869
        %v6963 = vpack.c.bf16 %v6872, %v6871
        %v6964 = vpack.c.bf16 %v6874, %v6873
        %v6965 = vpack.c.bf16 %v6876, %v6875
        %v6966 = vpack.c.bf16 %v6878, %v6877
        %v6967 = vpack.c.bf16 %v6880, %v6879
        %v6968 = vpack.c.bf16 %v6882, %v6881
        %v6969 = vpack.c.bf16 %v6884, %v6883
        %v6970 = vpack.c.bf16 %v6886, %v6885
        %v6971 = vpack.c.bf16 %v6888, %v6887
        %v6972 = vpack.c.bf16 %v6890, %v6889
        %v6973 = vpack.c.bf16 %v6892, %v6891
        %v6974 = vpack.c.bf16 %v6894, %v6893
        %v6975 = vpack.c.bf16 %v6896, %v6895
        %v6976 = vpack.c.bf16 %v6898, %v6897
        %v6977 = vpack.c.bf16 %v6900, %v6899
        %v6978 = vpack.c.bf16 %v6902, %v6901
        %v6979 = vpack.c.bf16 %v6904, %v6903
        %v6980 = vpack.c.bf16 %v6906, %v6905
        %v6981 = vpack.c.bf16 %v6908, %v6907
        %v6982 = vpack.c.bf16 %v6910, %v6909
        %v6983 = vpack.c.bf16 %v6912, %v6911
        %v6984 = vpack.c.bf16 %v6914, %v6913
        %v6985 = vpack.c.bf16 %v6916, %v6915
        %v6986 = vpack.c.bf16 %v6918, %v6917
        %v6987 = vpack.c.bf16 %v6920, %v6919
        %v6988 = vpack.c.bf16 %v6922, %v6921
        %v6989 = vpack.c.bf16 %v6924, %v6923
        %v6990 = vpack.c.bf16 %v6926, %v6925
        %v6991 = vld [vmem:[%s7] sm:$0xf]
        %v6992 = vld [vmem:[%s7 + $0x4] sm:$0xf]
        %v6993 = vld [vmem:[%s7 + $0x8] sm:$0xf]
        %v6994 = vld [vmem:[%s7 + $0xc] sm:$0xf]
        %v6995 = vld [vmem:[%s7 + $0x10] sm:$0xf]
        %v6996 = vld [vmem:[%s7 + $0x14] sm:$0xf]
        %v6997 = vld [vmem:[%s7 + $0x18] sm:$0xf]
        %v6998 = vld [vmem:[%s7 + $0x1c] sm:$0xf]
        %v6999 = vld [vmem:[%s7 + $0x20] sm:$0xf]
        %v7000 = vld [vmem:[%s7 + $0x24] sm:$0xf]
        %v7001 = vld [vmem:[%s7 + $0x28] sm:$0xf]
        %v7002 = vld [vmem:[%s7 + $0x2c] sm:$0xf]
        %v7003 = vld [vmem:[%s7 + $0x30] sm:$0xf]
        %v7004 = vld [vmem:[%s7 + $0x34] sm:$0xf]
        %v7005 = vld [vmem:[%s7 + $0x38] sm:$0xf]
        %v7006 = vld [vmem:[%s7 + $0x3c] sm:$0xf]
        %v7023 = vunpack.c.l.b16 %v6991
        %v7024 = vunpack.c.l.b16 %v6992
        %v7025 = vunpack.c.l.b16 %v6993
        %v7026 = vunpack.c.l.b16 %v6994
        %v7027 = vunpack.c.l.b16 %v6995
        %v7028 = vunpack.c.l.b16 %v6996
        %v7029 = vunpack.c.l.b16 %v6997
        %v7030 = vunpack.c.l.b16 %v6998
        %v7031 = vunpack.c.l.b16 %v6999
        %v7032 = vunpack.c.l.b16 %v7000
        %v7033 = vunpack.c.l.b16 %v7001
        %v7034 = vunpack.c.l.b16 %v7002
        %v7035 = vunpack.c.l.b16 %v7003
        %v7036 = vunpack.c.l.b16 %v7004
        %v7037 = vunpack.c.l.b16 %v7005
        %v7038 = vunpack.c.l.b16 %v7006
        %v7039 = vpack.c.b16 %v7024, %v7023
        %v7040 = vpack.c.b16 %v7026, %v7025
        %v7041 = vpack.c.b16 %v7028, %v7027
        %v7042 = vpack.c.b16 %v7030, %v7029
        %v7043 = vpack.c.b16 %v7032, %v7031
        %v7044 = vpack.c.b16 %v7034, %v7033
        %v7045 = vpack.c.b16 %v7036, %v7035
        %v7046 = vpack.c.b16 %v7038, %v7037
        %7055 = vmatpush.bf16.msra.mxu0 %v7046
        %7056 = vmatpush.bf16.msra.mxu0 %v7045
        %7057 = vmatpush.bf16.msra.mxu0 %v7044
        %7058 = vmatpush.bf16.msra.mxu0 %v7043
        %7059 = vmatpush.bf16.msra.mxu0 %v7042
        %7060 = vmatpush.bf16.msra.mxu0 %v7041
        %7061 = vmatpush.bf16.msra.mxu0 %v7040
        %7062 = vmatpush.bf16.msra.mxu0 %v7039
        %7063 = vmatmul.bf16.gmra.mxu0 %v6927
        %v7064 = vpop.f32.mrf.mxu0
        %v7065 = vadd.f32 0.0, %v7064
        %v7066 = vpop.f32.mrf.mxu0
        %v7067 = vadd.f32 0.0, %v7066
        %7068 = vmatmul.bf16.gmra.mxu0 %v6928
        %v7069 = vpop.f32.mrf.mxu0
        %v7070 = vadd.f32 0.0, %v7069
        %v7071 = vpop.f32.mrf.mxu0
        %v7072 = vadd.f32 0.0, %v7071
        %7073 = vmatmul.bf16.gmra.mxu0 %v6929
        %v7074 = vpop.f32.mrf.mxu0
        %v7075 = vadd.f32 0.0, %v7074
        %v7076 = vpop.f32.mrf.mxu0
        %v7077 = vadd.f32 0.0, %v7076
        %7078 = vmatmul.bf16.gmra.mxu0 %v6930
        %v7079 = vpop.f32.mrf.mxu0
        %v7080 = vadd.f32 0.0, %v7079
        %v7081 = vpop.f32.mrf.mxu0
        %v7082 = vadd.f32 0.0, %v7081
        %7083 = vmatmul.bf16.gmra.mxu0 %v6931
        %v7084 = vpop.f32.mrf.mxu0
        %v7085 = vadd.f32 0.0, %v7084
        %v7086 = vpop.f32.mrf.mxu0
        %v7087 = vadd.f32 0.0, %v7086
        %7088 = vmatmul.bf16.gmra.mxu0 %v6932
        %v7089 = vpop.f32.mrf.mxu0
        %v7090 = vadd.f32 0.0, %v7089
        %v7091 = vpop.f32.mrf.mxu0
        %v7092 = vadd.f32 0.0, %v7091
        %7093 = vmatmul.bf16.gmra.mxu0 %v6933
        %v7094 = vpop.f32.mrf.mxu0
        %v7095 = vadd.f32 0.0, %v7094
        %v7096 = vpop.f32.mrf.mxu0
        %v7097 = vadd.f32 0.0, %v7096
        %7098 = vmatmul.bf16.gmra.mxu0 %v6934
        %v7099 = vpop.f32.mrf.mxu0
        %v7100 = vadd.f32 0.0, %v7099
        %v7101 = vpop.f32.mrf.mxu0
        %v7102 = vadd.f32 0.0, %v7101
        %7103 = vmatmul.bf16.gmra.mxu0 %v6935
        %v7104 = vpop.f32.mrf.mxu0
        %v7105 = vadd.f32 0.0, %v7104
        %v7106 = vpop.f32.mrf.mxu0
        %v7107 = vadd.f32 0.0, %v7106
        %7108 = vmatmul.bf16.gmra.mxu0 %v6936
        %v7109 = vpop.f32.mrf.mxu0
        %v7110 = vadd.f32 0.0, %v7109
        %v7111 = vpop.f32.mrf.mxu0
        %v7112 = vadd.f32 0.0, %v7111
        %7113 = vmatmul.bf16.gmra.mxu0 %v6937
        %v7114 = vpop.f32.mrf.mxu0
        %v7115 = vadd.f32 0.0, %v7114
        %v7116 = vpop.f32.mrf.mxu0
        %v7117 = vadd.f32 0.0, %v7116
        %7118 = vmatmul.bf16.gmra.mxu0 %v6938
        %v7119 = vpop.f32.mrf.mxu0
        %v7120 = vadd.f32 0.0, %v7119
        %v7121 = vpop.f32.mrf.mxu0
        %v7122 = vadd.f32 0.0, %v7121
        %7123 = vmatmul.bf16.gmra.mxu0 %v6939
        %v7124 = vpop.f32.mrf.mxu0
        %v7125 = vadd.f32 0.0, %v7124
        %v7126 = vpop.f32.mrf.mxu0
        %v7127 = vadd.f32 0.0, %v7126
        %7128 = vmatmul.bf16.gmra.mxu0 %v6940
        %v7129 = vpop.f32.mrf.mxu0
        %v7130 = vadd.f32 0.0, %v7129
        %v7131 = vpop.f32.mrf.mxu0
        %v7132 = vadd.f32 0.0, %v7131
        %7133 = vmatmul.bf16.gmra.mxu0 %v6941
        %v7134 = vpop.f32.mrf.mxu0
        %v7135 = vadd.f32 0.0, %v7134
        %v7136 = vpop.f32.mrf.mxu0
        %v7137 = vadd.f32 0.0, %v7136
        %7138 = vmatmul.bf16.gmra.mxu0 %v6942
        %v7139 = vpop.f32.mrf.mxu0
        %v7140 = vadd.f32 0.0, %v7139
        %v7141 = vpop.f32.mrf.mxu0
        %v7142 = vadd.f32 0.0, %v7141
        %7143 = vmatmul.bf16.gmra.mxu0 %v6943
        %v7144 = vpop.f32.mrf.mxu0
        %v7145 = vadd.f32 0.0, %v7144
        %v7146 = vpop.f32.mrf.mxu0
        %v7147 = vadd.f32 0.0, %v7146
        %7148 = vmatmul.bf16.gmra.mxu0 %v6944
        %v7149 = vpop.f32.mrf.mxu0
        %v7150 = vadd.f32 0.0, %v7149
        %v7151 = vpop.f32.mrf.mxu0
        %v7152 = vadd.f32 0.0, %v7151
        %7153 = vmatmul.bf16.gmra.mxu0 %v6945
        %v7154 = vpop.f32.mrf.mxu0
        %v7155 = vadd.f32 0.0, %v7154
        %v7156 = vpop.f32.mrf.mxu0
        %v7157 = vadd.f32 0.0, %v7156
        %7158 = vmatmul.bf16.gmra.mxu0 %v6946
        %v7159 = vpop.f32.mrf.mxu0
        %v7160 = vadd.f32 0.0, %v7159
        %v7161 = vpop.f32.mrf.mxu0
        %v7162 = vadd.f32 0.0, %v7161
        %7163 = vmatmul.bf16.gmra.mxu0 %v6947
        %v7164 = vpop.f32.mrf.mxu0
        %v7165 = vadd.f32 0.0, %v7164
        %v7166 = vpop.f32.mrf.mxu0
        %v7167 = vadd.f32 0.0, %v7166
        %7168 = vmatmul.bf16.gmra.mxu0 %v6948
        %v7169 = vpop.f32.mrf.mxu0
        %v7170 = vadd.f32 0.0, %v7169
        %v7171 = vpop.f32.mrf.mxu0
        %v7172 = vadd.f32 0.0, %v7171
        %7173 = vmatmul.bf16.gmra.mxu0 %v6949
        %v7174 = vpop.f32.mrf.mxu0
        %v7175 = vadd.f32 0.0, %v7174
        %v7176 = vpop.f32.mrf.mxu0
        %v7177 = vadd.f32 0.0, %v7176
        %7178 = vmatmul.bf16.gmra.mxu0 %v6950
        %v7179 = vpop.f32.mrf.mxu0
        %v7180 = vadd.f32 0.0, %v7179
        %v7181 = vpop.f32.mrf.mxu0
        %v7182 = vadd.f32 0.0, %v7181
        %7183 = vmatmul.bf16.gmra.mxu0 %v6951
        %v7184 = vpop.f32.mrf.mxu0
        %v7185 = vadd.f32 0.0, %v7184
        %v7186 = vpop.f32.mrf.mxu0
        %v7187 = vadd.f32 0.0, %v7186
        %7188 = vmatmul.bf16.gmra.mxu0 %v6952
        %v7189 = vpop.f32.mrf.mxu0
        %v7190 = vadd.f32 0.0, %v7189
        %v7191 = vpop.f32.mrf.mxu0
        %v7192 = vadd.f32 0.0, %v7191
        %7193 = vmatmul.bf16.gmra.mxu0 %v6953
        %v7194 = vpop.f32.mrf.mxu0
        %v7195 = vadd.f32 0.0, %v7194
        %v7196 = vpop.f32.mrf.mxu0
        %v7197 = vadd.f32 0.0, %v7196
        %7198 = vmatmul.bf16.gmra.mxu0 %v6954
        %v7199 = vpop.f32.mrf.mxu0
        %v7200 = vadd.f32 0.0, %v7199
        %v7201 = vpop.f32.mrf.mxu0
        %v7202 = vadd.f32 0.0, %v7201
        %7203 = vmatmul.bf16.gmra.mxu0 %v6955
        %v7204 = vpop.f32.mrf.mxu0
        %v7205 = vadd.f32 0.0, %v7204
        %v7206 = vpop.f32.mrf.mxu0
        %v7207 = vadd.f32 0.0, %v7206
        %7208 = vmatmul.bf16.gmra.mxu0 %v6956
        %v7209 = vpop.f32.mrf.mxu0
        %v7210 = vadd.f32 0.0, %v7209
        %v7211 = vpop.f32.mrf.mxu0
        %v7212 = vadd.f32 0.0, %v7211
        %7213 = vmatmul.bf16.gmra.mxu0 %v6957
        %v7214 = vpop.f32.mrf.mxu0
        %v7215 = vadd.f32 0.0, %v7214
        %v7216 = vpop.f32.mrf.mxu0
        %v7217 = vadd.f32 0.0, %v7216
        %7218 = vmatmul.bf16.gmra.mxu0 %v6958
        %v7219 = vpop.f32.mrf.mxu0
        %v7220 = vadd.f32 0.0, %v7219
        %v7221 = vpop.f32.mrf.mxu0
        %v7222 = vadd.f32 0.0, %v7221
        %7223 = vmatmul.bf16.gmra.mxu0 %v6959
        %v7224 = vpop.f32.mrf.mxu0
        %v7225 = vadd.f32 0.0, %v7224
        %v7226 = vpop.f32.mrf.mxu0
        %v7227 = vadd.f32 0.0, %v7226
        %7228 = vmatmul.bf16.gmra.mxu0 %v6960
        %v7229 = vpop.f32.mrf.mxu0
        %v7230 = vadd.f32 0.0, %v7229
        %v7231 = vpop.f32.mrf.mxu0
        %v7232 = vadd.f32 0.0, %v7231
        %7233 = vmatmul.bf16.gmra.mxu0 %v6961
        %v7234 = vpop.f32.mrf.mxu0
        %v7235 = vadd.f32 0.0, %v7234
        %v7236 = vpop.f32.mrf.mxu0
        %v7237 = vadd.f32 0.0, %v7236
        %7238 = vmatmul.bf16.gmra.mxu0 %v6962
        %v7239 = vpop.f32.mrf.mxu0
        %v7240 = vadd.f32 0.0, %v7239
        %v7241 = vpop.f32.mrf.mxu0
        %v7242 = vadd.f32 0.0, %v7241
        %7243 = vmatmul.bf16.gmra.mxu0 %v6963
        %v7244 = vpop.f32.mrf.mxu0
        %v7245 = vadd.f32 0.0, %v7244
        %v7246 = vpop.f32.mrf.mxu0
        %v7247 = vadd.f32 0.0, %v7246
        %7248 = vmatmul.bf16.gmra.mxu0 %v6964
        %v7249 = vpop.f32.mrf.mxu0
        %v7250 = vadd.f32 0.0, %v7249
        %v7251 = vpop.f32.mrf.mxu0
        %v7252 = vadd.f32 0.0, %v7251
        %7253 = vmatmul.bf16.gmra.mxu0 %v6965
        %v7254 = vpop.f32.mrf.mxu0
        %v7255 = vadd.f32 0.0, %v7254
        %v7256 = vpop.f32.mrf.mxu0
        %v7257 = vadd.f32 0.0, %v7256
        %7258 = vmatmul.bf16.gmra.mxu0 %v6966
        %v7259 = vpop.f32.mrf.mxu0
        %v7260 = vadd.f32 0.0, %v7259
        %v7261 = vpop.f32.mrf.mxu0
        %v7262 = vadd.f32 0.0, %v7261
        %7263 = vmatmul.bf16.gmra.mxu0 %v6967
        %v7264 = vpop.f32.mrf.mxu0
        %v7265 = vadd.f32 0.0, %v7264
        %v7266 = vpop.f32.mrf.mxu0
        %v7267 = vadd.f32 0.0, %v7266
        %7268 = vmatmul.bf16.gmra.mxu0 %v6968
        %v7269 = vpop.f32.mrf.mxu0
        %v7270 = vadd.f32 0.0, %v7269
        %v7271 = vpop.f32.mrf.mxu0
        %v7272 = vadd.f32 0.0, %v7271
        %7273 = vmatmul.bf16.gmra.mxu0 %v6969
        %v7274 = vpop.f32.mrf.mxu0
        %v7275 = vadd.f32 0.0, %v7274
        %v7276 = vpop.f32.mrf.mxu0
        %v7277 = vadd.f32 0.0, %v7276
        %7278 = vmatmul.bf16.gmra.mxu0 %v6970
        %v7279 = vpop.f32.mrf.mxu0
        %v7280 = vadd.f32 0.0, %v7279
        %v7281 = vpop.f32.mrf.mxu0
        %v7282 = vadd.f32 0.0, %v7281
        %7283 = vmatmul.bf16.gmra.mxu0 %v6971
        %v7284 = vpop.f32.mrf.mxu0
        %v7285 = vadd.f32 0.0, %v7284
        %v7286 = vpop.f32.mrf.mxu0
        %v7287 = vadd.f32 0.0, %v7286
        %7288 = vmatmul.bf16.gmra.mxu0 %v6972
        %v7289 = vpop.f32.mrf.mxu0
        %v7290 = vadd.f32 0.0, %v7289
        %v7291 = vpop.f32.mrf.mxu0
        %v7292 = vadd.f32 0.0, %v7291
        %7293 = vmatmul.bf16.gmra.mxu0 %v6973
        %v7294 = vpop.f32.mrf.mxu0
        %v7295 = vadd.f32 0.0, %v7294
        %v7296 = vpop.f32.mrf.mxu0
        %v7297 = vadd.f32 0.0, %v7296
        %7298 = vmatmul.bf16.gmra.mxu0 %v6974
        %v7299 = vpop.f32.mrf.mxu0
        %v7300 = vadd.f32 0.0, %v7299
        %v7301 = vpop.f32.mrf.mxu0
        %v7302 = vadd.f32 0.0, %v7301
        %7303 = vmatmul.bf16.gmra.mxu0 %v6975
        %v7304 = vpop.f32.mrf.mxu0
        %v7305 = vadd.f32 0.0, %v7304
        %v7306 = vpop.f32.mrf.mxu0
        %v7307 = vadd.f32 0.0, %v7306
        %7308 = vmatmul.bf16.gmra.mxu0 %v6976
        %v7309 = vpop.f32.mrf.mxu0
        %v7310 = vadd.f32 0.0, %v7309
        %v7311 = vpop.f32.mrf.mxu0
        %v7312 = vadd.f32 0.0, %v7311
        %7313 = vmatmul.bf16.gmra.mxu0 %v6977
        %v7314 = vpop.f32.mrf.mxu0
        %v7315 = vadd.f32 0.0, %v7314
        %v7316 = vpop.f32.mrf.mxu0
        %v7317 = vadd.f32 0.0, %v7316
        %7318 = vmatmul.bf16.gmra.mxu0 %v6978
        %v7319 = vpop.f32.mrf.mxu0
        %v7320 = vadd.f32 0.0, %v7319
        %v7321 = vpop.f32.mrf.mxu0
        %v7322 = vadd.f32 0.0, %v7321
        %7323 = vmatmul.bf16.gmra.mxu0 %v6979
        %v7324 = vpop.f32.mrf.mxu0
        %v7325 = vadd.f32 0.0, %v7324
        %v7326 = vpop.f32.mrf.mxu0
        %v7327 = vadd.f32 0.0, %v7326
        %7328 = vmatmul.bf16.gmra.mxu0 %v6980
        %v7329 = vpop.f32.mrf.mxu0
        %v7330 = vadd.f32 0.0, %v7329
        %v7331 = vpop.f32.mrf.mxu0
        %v7332 = vadd.f32 0.0, %v7331
        %7333 = vmatmul.bf16.gmra.mxu0 %v6981
        %v7334 = vpop.f32.mrf.mxu0
        %v7335 = vadd.f32 0.0, %v7334
        %v7336 = vpop.f32.mrf.mxu0
        %v7337 = vadd.f32 0.0, %v7336
        %7338 = vmatmul.bf16.gmra.mxu0 %v6982
        %v7339 = vpop.f32.mrf.mxu0
        %v7340 = vadd.f32 0.0, %v7339
        %v7341 = vpop.f32.mrf.mxu0
        %v7342 = vadd.f32 0.0, %v7341
        %7343 = vmatmul.bf16.gmra.mxu0 %v6983
        %v7344 = vpop.f32.mrf.mxu0
        %v7345 = vadd.f32 0.0, %v7344
        %v7346 = vpop.f32.mrf.mxu0
        %v7347 = vadd.f32 0.0, %v7346
        %7348 = vmatmul.bf16.gmra.mxu0 %v6984
        %v7349 = vpop.f32.mrf.mxu0
        %v7350 = vadd.f32 0.0, %v7349
        %v7351 = vpop.f32.mrf.mxu0
        %v7352 = vadd.f32 0.0, %v7351
        %7353 = vmatmul.bf16.gmra.mxu0 %v6985
        %v7354 = vpop.f32.mrf.mxu0
        %v7355 = vadd.f32 0.0, %v7354
        %v7356 = vpop.f32.mrf.mxu0
        %v7357 = vadd.f32 0.0, %v7356
        %7358 = vmatmul.bf16.gmra.mxu0 %v6986
        %v7359 = vpop.f32.mrf.mxu0
        %v7360 = vadd.f32 0.0, %v7359
        %v7361 = vpop.f32.mrf.mxu0
        %v7362 = vadd.f32 0.0, %v7361
        %7363 = vmatmul.bf16.gmra.mxu0 %v6987
        %v7364 = vpop.f32.mrf.mxu0
        %v7365 = vadd.f32 0.0, %v7364
        %v7366 = vpop.f32.mrf.mxu0
        %v7367 = vadd.f32 0.0, %v7366
        %7368 = vmatmul.bf16.gmra.mxu0 %v6988
        %v7369 = vpop.f32.mrf.mxu0
        %v7370 = vadd.f32 0.0, %v7369
        %v7371 = vpop.f32.mrf.mxu0
        %v7372 = vadd.f32 0.0, %v7371
        %7373 = vmatmul.bf16.gmra.mxu0 %v6989
        %v7374 = vpop.f32.mrf.mxu0
        %v7375 = vadd.f32 0.0, %v7374
        %v7376 = vpop.f32.mrf.mxu0
        %v7377 = vadd.f32 0.0, %v7376
        %7378 = vmatmul.bf16.gmra.mxu0 %v6990
        %v7379 = vpop.f32.mrf.mxu0
        %v7380 = vadd.f32 0.0, %v7379
        %v7381 = vpop.f32.mrf.mxu0
        %v7382 = vadd.f32 0.0, %v7381
        %7383 = vdwg.mxu0
        %v7384 = vpack.c.bf16 %v7065, %v7065
        %v7385 = vpack.c.bf16 %v7067, %v7067
        %v7386 = vpack.c.bf16 %v7070, %v7070
        %v7387 = vpack.c.bf16 %v7072, %v7072
        %v7388 = vpack.c.bf16 %v7075, %v7075
        %v7389 = vpack.c.bf16 %v7077, %v7077
        %v7390 = vpack.c.bf16 %v7080, %v7080
        %v7391 = vpack.c.bf16 %v7082, %v7082
        %v7392 = vpack.c.bf16 %v7085, %v7085
        %v7393 = vpack.c.bf16 %v7087, %v7087
        %v7394 = vpack.c.bf16 %v7090, %v7090
        %v7395 = vpack.c.bf16 %v7092, %v7092
        %v7396 = vpack.c.bf16 %v7095, %v7095
        %v7397 = vpack.c.bf16 %v7097, %v7097
        %v7398 = vpack.c.bf16 %v7100, %v7100
        %v7399 = vpack.c.bf16 %v7102, %v7102
        %v7400 = vpack.c.bf16 %v7105, %v7105
        %v7401 = vpack.c.bf16 %v7107, %v7107
        %v7402 = vpack.c.bf16 %v7110, %v7110
        %v7403 = vpack.c.bf16 %v7112, %v7112
        %v7404 = vpack.c.bf16 %v7115, %v7115
        %v7405 = vpack.c.bf16 %v7117, %v7117
        %v7406 = vpack.c.bf16 %v7120, %v7120
        %v7407 = vpack.c.bf16 %v7122, %v7122
        %v7408 = vpack.c.bf16 %v7125, %v7125
        %v7409 = vpack.c.bf16 %v7127, %v7127
        %v7410 = vpack.c.bf16 %v7130, %v7130
        %v7411 = vpack.c.bf16 %v7132, %v7132
        %v7412 = vpack.c.bf16 %v7135, %v7135
        %v7413 = vpack.c.bf16 %v7137, %v7137
        %v7414 = vpack.c.bf16 %v7140, %v7140
        %v7415 = vpack.c.bf16 %v7142, %v7142
        %v7416 = vpack.c.bf16 %v7145, %v7145
        %v7417 = vpack.c.bf16 %v7147, %v7147
        %v7418 = vpack.c.bf16 %v7150, %v7150
        %v7419 = vpack.c.bf16 %v7152, %v7152
        %v7420 = vpack.c.bf16 %v7155, %v7155
        %v7421 = vpack.c.bf16 %v7157, %v7157
        %v7422 = vpack.c.bf16 %v7160, %v7160
        %v7423 = vpack.c.bf16 %v7162, %v7162
        %v7424 = vpack.c.bf16 %v7165, %v7165
        %v7425 = vpack.c.bf16 %v7167, %v7167
        %v7426 = vpack.c.bf16 %v7170, %v7170
        %v7427 = vpack.c.bf16 %v7172, %v7172
        %v7428 = vpack.c.bf16 %v7175, %v7175
        %v7429 = vpack.c.bf16 %v7177, %v7177
        %v7430 = vpack.c.bf16 %v7180, %v7180
        %v7431 = vpack.c.bf16 %v7182, %v7182
        %v7432 = vpack.c.bf16 %v7185, %v7185
        %v7433 = vpack.c.bf16 %v7187, %v7187
        %v7434 = vpack.c.bf16 %v7190, %v7190
        %v7435 = vpack.c.bf16 %v7192, %v7192
        %v7436 = vpack.c.bf16 %v7195, %v7195
        %v7437 = vpack.c.bf16 %v7197, %v7197
        %v7438 = vpack.c.bf16 %v7200, %v7200
        %v7439 = vpack.c.bf16 %v7202, %v7202
        %v7440 = vpack.c.bf16 %v7205, %v7205
        %v7441 = vpack.c.bf16 %v7207, %v7207
        %v7442 = vpack.c.bf16 %v7210, %v7210
        %v7443 = vpack.c.bf16 %v7212, %v7212
        %v7444 = vpack.c.bf16 %v7215, %v7215
        %v7445 = vpack.c.bf16 %v7217, %v7217
        %v7446 = vpack.c.bf16 %v7220, %v7220
        %v7447 = vpack.c.bf16 %v7222, %v7222
        %v7448 = vpack.c.bf16 %v7225, %v7225
        %v7449 = vpack.c.bf16 %v7227, %v7227
        %v7450 = vpack.c.bf16 %v7230, %v7230
        %v7451 = vpack.c.bf16 %v7232, %v7232
        %v7452 = vpack.c.bf16 %v7235, %v7235
        %v7453 = vpack.c.bf16 %v7237, %v7237
        %v7454 = vpack.c.bf16 %v7240, %v7240
        %v7455 = vpack.c.bf16 %v7242, %v7242
        %v7456 = vpack.c.bf16 %v7245, %v7245
        %v7457 = vpack.c.bf16 %v7247, %v7247
        %v7458 = vpack.c.bf16 %v7250, %v7250
        %v7459 = vpack.c.bf16 %v7252, %v7252
        %v7460 = vpack.c.bf16 %v7255, %v7255
        %v7461 = vpack.c.bf16 %v7257, %v7257
        %v7462 = vpack.c.bf16 %v7260, %v7260
        %v7463 = vpack.c.bf16 %v7262, %v7262
        %v7464 = vpack.c.bf16 %v7265, %v7265
        %v7465 = vpack.c.bf16 %v7267, %v7267
        %v7466 = vpack.c.bf16 %v7270, %v7270
        %v7467 = vpack.c.bf16 %v7272, %v7272
        %v7468 = vpack.c.bf16 %v7275, %v7275
        %v7469 = vpack.c.bf16 %v7277, %v7277
        %v7470 = vpack.c.bf16 %v7280, %v7280
        %v7471 = vpack.c.bf16 %v7282, %v7282
        %v7472 = vpack.c.bf16 %v7285, %v7285
        %v7473 = vpack.c.bf16 %v7287, %v7287
        %v7474 = vpack.c.bf16 %v7290, %v7290
        %v7475 = vpack.c.bf16 %v7292, %v7292
        %v7476 = vpack.c.bf16 %v7295, %v7295
        %v7477 = vpack.c.bf16 %v7297, %v7297
        %v7478 = vpack.c.bf16 %v7300, %v7300
        %v7479 = vpack.c.bf16 %v7302, %v7302
        %v7480 = vpack.c.bf16 %v7305, %v7305
        %v7481 = vpack.c.bf16 %v7307, %v7307
        %v7482 = vpack.c.bf16 %v7310, %v7310
        %v7483 = vpack.c.bf16 %v7312, %v7312
        %v7484 = vpack.c.bf16 %v7315, %v7315
        %v7485 = vpack.c.bf16 %v7317, %v7317
        %v7486 = vpack.c.bf16 %v7320, %v7320
        %v7487 = vpack.c.bf16 %v7322, %v7322
        %v7488 = vpack.c.bf16 %v7325, %v7325
        %v7489 = vpack.c.bf16 %v7327, %v7327
        %v7490 = vpack.c.bf16 %v7330, %v7330
        %v7491 = vpack.c.bf16 %v7332, %v7332
        %v7492 = vpack.c.bf16 %v7335, %v7335
        %v7493 = vpack.c.bf16 %v7337, %v7337
        %v7494 = vpack.c.bf16 %v7340, %v7340
        %v7495 = vpack.c.bf16 %v7342, %v7342
        %v7496 = vpack.c.bf16 %v7345, %v7345
        %v7497 = vpack.c.bf16 %v7347, %v7347
        %v7498 = vpack.c.bf16 %v7350, %v7350
        %v7499 = vpack.c.bf16 %v7352, %v7352
        %v7500 = vpack.c.bf16 %v7355, %v7355
        %v7501 = vpack.c.bf16 %v7357, %v7357
        %v7502 = vpack.c.bf16 %v7360, %v7360
        %v7503 = vpack.c.bf16 %v7362, %v7362
        %v7504 = vpack.c.bf16 %v7365, %v7365
        %v7505 = vpack.c.bf16 %v7367, %v7367
        %v7506 = vpack.c.bf16 %v7370, %v7370
        %v7507 = vpack.c.bf16 %v7372, %v7372
        %v7508 = vpack.c.bf16 %v7375, %v7375
        %v7509 = vpack.c.bf16 %v7377, %v7377
        %v7510 = vpack.c.bf16 %v7380, %v7380
        %v7511 = vpack.c.bf16 %v7382, %v7382
        %v7528 = vunpack.c.l.b16 %v7384
        %v7529 = vunpack.c.l.b16 %v7385
        %v7530 = vunpack.c.l.b16 %v7386
        %v7531 = vunpack.c.l.b16 %v7387
        %v7532 = vunpack.c.l.b16 %v7388
        %v7533 = vunpack.c.l.b16 %v7389
        %v7534 = vunpack.c.l.b16 %v7390
        %v7535 = vunpack.c.l.b16 %v7391
        %v7536 = vunpack.c.l.b16 %v7392
        %v7537 = vunpack.c.l.b16 %v7393
        %v7538 = vunpack.c.l.b16 %v7394
        %v7539 = vunpack.c.l.b16 %v7395
        %v7540 = vunpack.c.l.b16 %v7396
        %v7541 = vunpack.c.l.b16 %v7397
        %v7542 = vunpack.c.l.b16 %v7398
        %v7543 = vunpack.c.l.b16 %v7399
        %v7544 = vpack.c.b16 %v7529, %v7528
        %v7545 = vpack.c.b16 %v7531, %v7530
        %v7546 = vpack.c.b16 %v7533, %v7532
        %v7547 = vpack.c.b16 %v7535, %v7534
        %v7548 = vpack.c.b16 %v7537, %v7536
        %v7549 = vpack.c.b16 %v7539, %v7538
        %v7550 = vpack.c.b16 %v7541, %v7540
        %v7551 = vpack.c.b16 %v7543, %v7542
        %7560 = vmatpush.bf16.msra.mxu0 %v7551
        %7561 = vmatpush.bf16.msra.mxu0 %v7550
        %7562 = vmatpush.bf16.msra.mxu0 %v7549
        %7563 = vmatpush.bf16.msra.mxu0 %v7548
        %7564 = vmatpush.bf16.msra.mxu0 %v7547
        %7565 = vmatpush.bf16.msra.mxu0 %v7546
        %7566 = vmatpush.bf16.msra.mxu0 %v7545
        %7567 = vmatpush.bf16.msra.mxu0 %v7544
        %7568 = vmatmul.bf16.gmra.mxu0 %v3918
        %v7569 = vpop.f32.mrf.mxu0
        %v7570 = vadd.f32 0.0, %v7569
        %v7571 = vpop.f32.mrf.mxu0
        %v7572 = vadd.f32 0.0, %v7571
        %7573 = vmatmul.bf16.gmra.mxu0 %v3919
        %v7574 = vpop.f32.mrf.mxu0
        %v7575 = vadd.f32 0.0, %v7574
        %v7576 = vpop.f32.mrf.mxu0
        %v7577 = vadd.f32 0.0, %v7576
        %7578 = vmatmul.bf16.gmra.mxu0 %v3920
        %v7579 = vpop.f32.mrf.mxu0
        %v7580 = vadd.f32 0.0, %v7579
        %v7581 = vpop.f32.mrf.mxu0
        %v7582 = vadd.f32 0.0, %v7581
        %7583 = vmatmul.bf16.gmra.mxu0 %v3921
        %v7584 = vpop.f32.mrf.mxu0
        %v7585 = vadd.f32 0.0, %v7584
        %v7586 = vpop.f32.mrf.mxu0
        %v7587 = vadd.f32 0.0, %v7586
        %7588 = vmatmul.bf16.gmra.mxu0 %v3922
        %v7589 = vpop.f32.mrf.mxu0
        %v7590 = vadd.f32 0.0, %v7589
        %v7591 = vpop.f32.mrf.mxu0
        %v7592 = vadd.f32 0.0, %v7591
        %7593 = vmatmul.bf16.gmra.mxu0 %v3923
        %v7594 = vpop.f32.mrf.mxu0
        %v7595 = vadd.f32 0.0, %v7594
        %v7596 = vpop.f32.mrf.mxu0
        %v7597 = vadd.f32 0.0, %v7596
        %7598 = vmatmul.bf16.gmra.mxu0 %v3924
        %v7599 = vpop.f32.mrf.mxu0
        %v7600 = vadd.f32 0.0, %v7599
        %v7601 = vpop.f32.mrf.mxu0
        %v7602 = vadd.f32 0.0, %v7601
        %7603 = vmatmul.bf16.gmra.mxu0 %v3925
        %v7604 = vpop.f32.mrf.mxu0
        %v7605 = vadd.f32 0.0, %v7604
        %v7606 = vpop.f32.mrf.mxu0
        %v7607 = vadd.f32 0.0, %v7606
        %7608 = vdwg.mxu0
        %v7625 = vunpack.c.l.b16 %v7400
        %v7626 = vunpack.c.l.b16 %v7401
        %v7627 = vunpack.c.l.b16 %v7402
        %v7628 = vunpack.c.l.b16 %v7403
        %v7629 = vunpack.c.l.b16 %v7404
        %v7630 = vunpack.c.l.b16 %v7405
        %v7631 = vunpack.c.l.b16 %v7406
        %v7632 = vunpack.c.l.b16 %v7407
        %v7633 = vunpack.c.l.b16 %v7408
        %v7634 = vunpack.c.l.b16 %v7409
        %v7635 = vunpack.c.l.b16 %v7410
        %v7636 = vunpack.c.l.b16 %v7411
        %v7637 = vunpack.c.l.b16 %v7412
        %v7638 = vunpack.c.l.b16 %v7413
        %v7639 = vunpack.c.l.b16 %v7414
        %v7640 = vunpack.c.l.b16 %v7415
        %v7641 = vpack.c.b16 %v7626, %v7625
        %v7642 = vpack.c.b16 %v7628, %v7627
        %v7643 = vpack.c.b16 %v7630, %v7629
        %v7644 = vpack.c.b16 %v7632, %v7631
        %v7645 = vpack.c.b16 %v7634, %v7633
        %v7646 = vpack.c.b16 %v7636, %v7635
        %v7647 = vpack.c.b16 %v7638, %v7637
        %v7648 = vpack.c.b16 %v7640, %v7639
        %7657 = vmatpush.bf16.msra.mxu0 %v7648
        %7658 = vmatpush.bf16.msra.mxu0 %v7647
        %7659 = vmatpush.bf16.msra.mxu0 %v7646
        %7660 = vmatpush.bf16.msra.mxu0 %v7645
        %7661 = vmatpush.bf16.msra.mxu0 %v7644
        %7662 = vmatpush.bf16.msra.mxu0 %v7643
        %7663 = vmatpush.bf16.msra.mxu0 %v7642
        %7664 = vmatpush.bf16.msra.mxu0 %v7641
        %7665 = vmatmul.bf16.gmra.mxu0 %v4063
        %v7666 = vpop.f32.mrf.mxu0
        %v7667 = vadd.f32 0.0, %v7666
        %v7668 = vpop.f32.mrf.mxu0
        %v7669 = vadd.f32 0.0, %v7668
        %7670 = vmatmul.bf16.gmra.mxu0 %v4064
        %v7671 = vpop.f32.mrf.mxu0
        %v7672 = vadd.f32 0.0, %v7671
        %v7673 = vpop.f32.mrf.mxu0
        %v7674 = vadd.f32 0.0, %v7673
        %7675 = vmatmul.bf16.gmra.mxu0 %v4065
        %v7676 = vpop.f32.mrf.mxu0
        %v7677 = vadd.f32 0.0, %v7676
        %v7678 = vpop.f32.mrf.mxu0
        %v7679 = vadd.f32 0.0, %v7678
        %7680 = vmatmul.bf16.gmra.mxu0 %v4066
        %v7681 = vpop.f32.mrf.mxu0
        %v7682 = vadd.f32 0.0, %v7681
        %v7683 = vpop.f32.mrf.mxu0
        %v7684 = vadd.f32 0.0, %v7683
        %7685 = vmatmul.bf16.gmra.mxu0 %v4067
        %v7686 = vpop.f32.mrf.mxu0
        %v7687 = vadd.f32 0.0, %v7686
        %v7688 = vpop.f32.mrf.mxu0
        %v7689 = vadd.f32 0.0, %v7688
        %7690 = vmatmul.bf16.gmra.mxu0 %v4068
        %v7691 = vpop.f32.mrf.mxu0
        %v7692 = vadd.f32 0.0, %v7691
        %v7693 = vpop.f32.mrf.mxu0
        %v7694 = vadd.f32 0.0, %v7693
        %7695 = vmatmul.bf16.gmra.mxu0 %v4069
        %v7696 = vpop.f32.mrf.mxu0
        %v7697 = vadd.f32 0.0, %v7696
        %v7698 = vpop.f32.mrf.mxu0
        %v7699 = vadd.f32 0.0, %v7698
        %7700 = vmatmul.bf16.gmra.mxu0 %v4070
        %v7701 = vpop.f32.mrf.mxu0
        %v7702 = vadd.f32 0.0, %v7701
        %v7703 = vpop.f32.mrf.mxu0
        %v7704 = vadd.f32 0.0, %v7703
        %7705 = vdwg.mxu0
        %v7722 = vunpack.c.l.b16 %v7416
        %v7723 = vunpack.c.l.b16 %v7417
        %v7724 = vunpack.c.l.b16 %v7418
        %v7725 = vunpack.c.l.b16 %v7419
        %v7726 = vunpack.c.l.b16 %v7420
        %v7727 = vunpack.c.l.b16 %v7421
        %v7728 = vunpack.c.l.b16 %v7422
        %v7729 = vunpack.c.l.b16 %v7423
        %v7730 = vunpack.c.l.b16 %v7424
        %v7731 = vunpack.c.l.b16 %v7425
        %v7732 = vunpack.c.l.b16 %v7426
        %v7733 = vunpack.c.l.b16 %v7427
        %v7734 = vunpack.c.l.b16 %v7428
        %v7735 = vunpack.c.l.b16 %v7429
        %v7736 = vunpack.c.l.b16 %v7430
        %v7737 = vunpack.c.l.b16 %v7431
        %v7738 = vpack.c.b16 %v7723, %v7722
        %v7739 = vpack.c.b16 %v7725, %v7724
        %v7740 = vpack.c.b16 %v7727, %v7726
        %v7741 = vpack.c.b16 %v7729, %v7728
        %v7742 = vpack.c.b16 %v7731, %v7730
        %v7743 = vpack.c.b16 %v7733, %v7732
        %v7744 = vpack.c.b16 %v7735, %v7734
        %v7745 = vpack.c.b16 %v7737, %v7736
        %7754 = vmatpush.bf16.msra.mxu0 %v7745
        %7755 = vmatpush.bf16.msra.mxu0 %v7744
        %7756 = vmatpush.bf16.msra.mxu0 %v7743
        %7757 = vmatpush.bf16.msra.mxu0 %v7742
        %7758 = vmatpush.bf16.msra.mxu0 %v7741
        %7759 = vmatpush.bf16.msra.mxu0 %v7740
        %7760 = vmatpush.bf16.msra.mxu0 %v7739
        %7761 = vmatpush.bf16.msra.mxu0 %v7738
        %7762 = vmatmul.bf16.gmra.mxu0 %v4208
        %v7763 = vpop.f32.mrf.mxu0
        %v7764 = vadd.f32 0.0, %v7763
        %v7765 = vpop.f32.mrf.mxu0
        %v7766 = vadd.f32 0.0, %v7765
        %7767 = vmatmul.bf16.gmra.mxu0 %v4209
        %v7768 = vpop.f32.mrf.mxu0
        %v7769 = vadd.f32 0.0, %v7768
        %v7770 = vpop.f32.mrf.mxu0
        %v7771 = vadd.f32 0.0, %v7770
        %7772 = vmatmul.bf16.gmra.mxu0 %v4210
        %v7773 = vpop.f32.mrf.mxu0
        %v7774 = vadd.f32 0.0, %v7773
        %v7775 = vpop.f32.mrf.mxu0
        %v7776 = vadd.f32 0.0, %v7775
        %7777 = vmatmul.bf16.gmra.mxu0 %v4211
        %v7778 = vpop.f32.mrf.mxu0
        %v7779 = vadd.f32 0.0, %v7778
        %v7780 = vpop.f32.mrf.mxu0
        %v7781 = vadd.f32 0.0, %v7780
        %7782 = vmatmul.bf16.gmra.mxu0 %v4212
        %v7783 = vpop.f32.mrf.mxu0
        %v7784 = vadd.f32 0.0, %v7783
        %v7785 = vpop.f32.mrf.mxu0
        %v7786 = vadd.f32 0.0, %v7785
        %7787 = vmatmul.bf16.gmra.mxu0 %v4213
        %v7788 = vpop.f32.mrf.mxu0
        %v7789 = vadd.f32 0.0, %v7788
        %v7790 = vpop.f32.mrf.mxu0
        %v7791 = vadd.f32 0.0, %v7790
        %7792 = vmatmul.bf16.gmra.mxu0 %v4214
        %v7793 = vpop.f32.mrf.mxu0
        %v7794 = vadd.f32 0.0, %v7793
        %v7795 = vpop.f32.mrf.mxu0
        %v7796 = vadd.f32 0.0, %v7795
        %7797 = vmatmul.bf16.gmra.mxu0 %v4215
        %v7798 = vpop.f32.mrf.mxu0
        %v7799 = vadd.f32 0.0, %v7798
        %v7800 = vpop.f32.mrf.mxu0
        %v7801 = vadd.f32 0.0, %v7800
        %7802 = vdwg.mxu0
        %v7819 = vunpack.c.l.b16 %v7432
        %v7820 = vunpack.c.l.b16 %v7433
        %v7821 = vunpack.c.l.b16 %v7434
        %v7822 = vunpack.c.l.b16 %v7435
        %v7823 = vunpack.c.l.b16 %v7436
        %v7824 = vunpack.c.l.b16 %v7437
        %v7825 = vunpack.c.l.b16 %v7438
        %v7826 = vunpack.c.l.b16 %v7439
        %v7827 = vunpack.c.l.b16 %v7440
        %v7828 = vunpack.c.l.b16 %v7441
        %v7829 = vunpack.c.l.b16 %v7442
        %v7830 = vunpack.c.l.b16 %v7443
        %v7831 = vunpack.c.l.b16 %v7444
        %v7832 = vunpack.c.l.b16 %v7445
        %v7833 = vunpack.c.l.b16 %v7446
        %v7834 = vunpack.c.l.b16 %v7447
        %v7835 = vpack.c.b16 %v7820, %v7819
        %v7836 = vpack.c.b16 %v7822, %v7821
        %v7837 = vpack.c.b16 %v7824, %v7823
        %v7838 = vpack.c.b16 %v7826, %v7825
        %v7839 = vpack.c.b16 %v7828, %v7827
        %v7840 = vpack.c.b16 %v7830, %v7829
        %v7841 = vpack.c.b16 %v7832, %v7831
        %v7842 = vpack.c.b16 %v7834, %v7833
        %7851 = vmatpush.bf16.msra.mxu0 %v7842
        %7852 = vmatpush.bf16.msra.mxu0 %v7841
        %7853 = vmatpush.bf16.msra.mxu0 %v7840
        %7854 = vmatpush.bf16.msra.mxu0 %v7839
        %7855 = vmatpush.bf16.msra.mxu0 %v7838
        %7856 = vmatpush.bf16.msra.mxu0 %v7837
        %7857 = vmatpush.bf16.msra.mxu0 %v7836
        %7858 = vmatpush.bf16.msra.mxu0 %v7835
        %7859 = vmatmul.bf16.gmra.mxu0 %v4353
        %v7860 = vpop.f32.mrf.mxu0
        %v7861 = vadd.f32 0.0, %v7860
        %v7862 = vpop.f32.mrf.mxu0
        %v7863 = vadd.f32 0.0, %v7862
        %7864 = vmatmul.bf16.gmra.mxu0 %v4354
        %v7865 = vpop.f32.mrf.mxu0
        %v7866 = vadd.f32 0.0, %v7865
        %v7867 = vpop.f32.mrf.mxu0
        %v7868 = vadd.f32 0.0, %v7867
        %7869 = vmatmul.bf16.gmra.mxu0 %v4355
        %v7870 = vpop.f32.mrf.mxu0
        %v7871 = vadd.f32 0.0, %v7870
        %v7872 = vpop.f32.mrf.mxu0
        %v7873 = vadd.f32 0.0, %v7872
        %7874 = vmatmul.bf16.gmra.mxu0 %v4356
        %v7875 = vpop.f32.mrf.mxu0
        %v7876 = vadd.f32 0.0, %v7875
        %v7877 = vpop.f32.mrf.mxu0
        %v7878 = vadd.f32 0.0, %v7877
        %7879 = vmatmul.bf16.gmra.mxu0 %v4357
        %v7880 = vpop.f32.mrf.mxu0
        %v7881 = vadd.f32 0.0, %v7880
        %v7882 = vpop.f32.mrf.mxu0
        %v7883 = vadd.f32 0.0, %v7882
        %7884 = vmatmul.bf16.gmra.mxu0 %v4358
        %v7885 = vpop.f32.mrf.mxu0
        %v7886 = vadd.f32 0.0, %v7885
        %v7887 = vpop.f32.mrf.mxu0
        %v7888 = vadd.f32 0.0, %v7887
        %7889 = vmatmul.bf16.gmra.mxu0 %v4359
        %v7890 = vpop.f32.mrf.mxu0
        %v7891 = vadd.f32 0.0, %v7890
        %v7892 = vpop.f32.mrf.mxu0
        %v7893 = vadd.f32 0.0, %v7892
        %7894 = vmatmul.bf16.gmra.mxu0 %v4360
        %v7895 = vpop.f32.mrf.mxu0
        %v7896 = vadd.f32 0.0, %v7895
        %v7897 = vpop.f32.mrf.mxu0
        %v7898 = vadd.f32 0.0, %v7897
        %7899 = vdwg.mxu0
        %v7916 = vunpack.c.l.b16 %v7448
        %v7917 = vunpack.c.l.b16 %v7449
        %v7918 = vunpack.c.l.b16 %v7450
        %v7919 = vunpack.c.l.b16 %v7451
        %v7920 = vunpack.c.l.b16 %v7452
        %v7921 = vunpack.c.l.b16 %v7453
        %v7922 = vunpack.c.l.b16 %v7454
        %v7923 = vunpack.c.l.b16 %v7455
        %v7924 = vunpack.c.l.b16 %v7456
        %v7925 = vunpack.c.l.b16 %v7457
        %v7926 = vunpack.c.l.b16 %v7458
        %v7927 = vunpack.c.l.b16 %v7459
        %v7928 = vunpack.c.l.b16 %v7460
        %v7929 = vunpack.c.l.b16 %v7461
        %v7930 = vunpack.c.l.b16 %v7462
        %v7931 = vunpack.c.l.b16 %v7463
        %v7932 = vpack.c.b16 %v7917, %v7916
        %v7933 = vpack.c.b16 %v7919, %v7918
        %v7934 = vpack.c.b16 %v7921, %v7920
        %v7935 = vpack.c.b16 %v7923, %v7922
        %v7936 = vpack.c.b16 %v7925, %v7924
        %v7937 = vpack.c.b16 %v7927, %v7926
        %v7938 = vpack.c.b16 %v7929, %v7928
        %v7939 = vpack.c.b16 %v7931, %v7930
        %7948 = vmatpush.bf16.msra.mxu0 %v7939
        %7949 = vmatpush.bf16.msra.mxu0 %v7938
        %7950 = vmatpush.bf16.msra.mxu0 %v7937
        %7951 = vmatpush.bf16.msra.mxu0 %v7936
        %7952 = vmatpush.bf16.msra.mxu0 %v7935
        %7953 = vmatpush.bf16.msra.mxu0 %v7934
        %7954 = vmatpush.bf16.msra.mxu0 %v7933
        %7955 = vmatpush.bf16.msra.mxu0 %v7932
        %7956 = vmatmul.bf16.gmra.mxu0 %v4498
        %v7957 = vpop.f32.mrf.mxu0
        %v7958 = vadd.f32 0.0, %v7957
        %v7959 = vpop.f32.mrf.mxu0
        %v7960 = vadd.f32 0.0, %v7959
        %7961 = vmatmul.bf16.gmra.mxu0 %v4499
        %v7962 = vpop.f32.mrf.mxu0
        %v7963 = vadd.f32 0.0, %v7962
        %v7964 = vpop.f32.mrf.mxu0
        %v7965 = vadd.f32 0.0, %v7964
        %7966 = vmatmul.bf16.gmra.mxu0 %v4500
        %v7967 = vpop.f32.mrf.mxu0
        %v7968 = vadd.f32 0.0, %v7967
        %v7969 = vpop.f32.mrf.mxu0
        %v7970 = vadd.f32 0.0, %v7969
        %7971 = vmatmul.bf16.gmra.mxu0 %v4501
        %v7972 = vpop.f32.mrf.mxu0
        %v7973 = vadd.f32 0.0, %v7972
        %v7974 = vpop.f32.mrf.mxu0
        %v7975 = vadd.f32 0.0, %v7974
        %7976 = vmatmul.bf16.gmra.mxu0 %v4502
        %v7977 = vpop.f32.mrf.mxu0
        %v7978 = vadd.f32 0.0, %v7977
        %v7979 = vpop.f32.mrf.mxu0
        %v7980 = vadd.f32 0.0, %v7979
        %7981 = vmatmul.bf16.gmra.mxu0 %v4503
        %v7982 = vpop.f32.mrf.mxu0
        %v7983 = vadd.f32 0.0, %v7982
        %v7984 = vpop.f32.mrf.mxu0
        %v7985 = vadd.f32 0.0, %v7984
        %7986 = vmatmul.bf16.gmra.mxu0 %v4504
        %v7987 = vpop.f32.mrf.mxu0
        %v7988 = vadd.f32 0.0, %v7987
        %v7989 = vpop.f32.mrf.mxu0
        %v7990 = vadd.f32 0.0, %v7989
        %7991 = vmatmul.bf16.gmra.mxu0 %v4505
        %v7992 = vpop.f32.mrf.mxu0
        %v7993 = vadd.f32 0.0, %v7992
        %v7994 = vpop.f32.mrf.mxu0
        %v7995 = vadd.f32 0.0, %v7994
        %7996 = vdwg.mxu0
        %v8013 = vunpack.c.l.b16 %v7464
        %v8014 = vunpack.c.l.b16 %v7465
        %v8015 = vunpack.c.l.b16 %v7466
        %v8016 = vunpack.c.l.b16 %v7467
        %v8017 = vunpack.c.l.b16 %v7468
        %v8018 = vunpack.c.l.b16 %v7469
        %v8019 = vunpack.c.l.b16 %v7470
        %v8020 = vunpack.c.l.b16 %v7471
        %v8021 = vunpack.c.l.b16 %v7472
        %v8022 = vunpack.c.l.b16 %v7473
        %v8023 = vunpack.c.l.b16 %v7474
        %v8024 = vunpack.c.l.b16 %v7475
        %v8025 = vunpack.c.l.b16 %v7476
        %v8026 = vunpack.c.l.b16 %v7477
        %v8027 = vunpack.c.l.b16 %v7478
        %v8028 = vunpack.c.l.b16 %v7479
        %v8029 = vpack.c.b16 %v8014, %v8013
        %v8030 = vpack.c.b16 %v8016, %v8015
        %v8031 = vpack.c.b16 %v8018, %v8017
        %v8032 = vpack.c.b16 %v8020, %v8019
        %v8033 = vpack.c.b16 %v8022, %v8021
        %v8034 = vpack.c.b16 %v8024, %v8023
        %v8035 = vpack.c.b16 %v8026, %v8025
        %v8036 = vpack.c.b16 %v8028, %v8027
        %8045 = vmatpush.bf16.msra.mxu0 %v8036
        %8046 = vmatpush.bf16.msra.mxu0 %v8035
        %8047 = vmatpush.bf16.msra.mxu0 %v8034
        %8048 = vmatpush.bf16.msra.mxu0 %v8033
        %8049 = vmatpush.bf16.msra.mxu0 %v8032
        %8050 = vmatpush.bf16.msra.mxu0 %v8031
        %8051 = vmatpush.bf16.msra.mxu0 %v8030
        %8052 = vmatpush.bf16.msra.mxu0 %v8029
        %8053 = vmatmul.bf16.gmra.mxu0 %v4643
        %v8054 = vpop.f32.mrf.mxu0
        %v8055 = vadd.f32 0.0, %v8054
        %v8056 = vpop.f32.mrf.mxu0
        %v8057 = vadd.f32 0.0, %v8056
        %8058 = vmatmul.bf16.gmra.mxu0 %v4644
        %v8059 = vpop.f32.mrf.mxu0
        %v8060 = vadd.f32 0.0, %v8059
        %v8061 = vpop.f32.mrf.mxu0
        %v8062 = vadd.f32 0.0, %v8061
        %8063 = vmatmul.bf16.gmra.mxu0 %v4645
        %v8064 = vpop.f32.mrf.mxu0
        %v8065 = vadd.f32 0.0, %v8064
        %v8066 = vpop.f32.mrf.mxu0
        %v8067 = vadd.f32 0.0, %v8066
        %8068 = vmatmul.bf16.gmra.mxu0 %v4646
        %v8069 = vpop.f32.mrf.mxu0
        %v8070 = vadd.f32 0.0, %v8069
        %v8071 = vpop.f32.mrf.mxu0
        %v8072 = vadd.f32 0.0, %v8071
        %8073 = vmatmul.bf16.gmra.mxu0 %v4647
        %v8074 = vpop.f32.mrf.mxu0
        %v8075 = vadd.f32 0.0, %v8074
        %v8076 = vpop.f32.mrf.mxu0
        %v8077 = vadd.f32 0.0, %v8076
        %8078 = vmatmul.bf16.gmra.mxu0 %v4648
        %v8079 = vpop.f32.mrf.mxu0
        %v8080 = vadd.f32 0.0, %v8079
        %v8081 = vpop.f32.mrf.mxu0
        %v8082 = vadd.f32 0.0, %v8081
        %8083 = vmatmul.bf16.gmra.mxu0 %v4649
        %v8084 = vpop.f32.mrf.mxu0
        %v8085 = vadd.f32 0.0, %v8084
        %v8086 = vpop.f32.mrf.mxu0
        %v8087 = vadd.f32 0.0, %v8086
        %8088 = vmatmul.bf16.gmra.mxu0 %v4650
        %v8089 = vpop.f32.mrf.mxu0
        %v8090 = vadd.f32 0.0, %v8089
        %v8091 = vpop.f32.mrf.mxu0
        %v8092 = vadd.f32 0.0, %v8091
        %8093 = vdwg.mxu0
        %v8110 = vunpack.c.l.b16 %v7480
        %v8111 = vunpack.c.l.b16 %v7481
        %v8112 = vunpack.c.l.b16 %v7482
        %v8113 = vunpack.c.l.b16 %v7483
        %v8114 = vunpack.c.l.b16 %v7484
        %v8115 = vunpack.c.l.b16 %v7485
        %v8116 = vunpack.c.l.b16 %v7486
        %v8117 = vunpack.c.l.b16 %v7487
        %v8118 = vunpack.c.l.b16 %v7488
        %v8119 = vunpack.c.l.b16 %v7489
        %v8120 = vunpack.c.l.b16 %v7490
        %v8121 = vunpack.c.l.b16 %v7491
        %v8122 = vunpack.c.l.b16 %v7492
        %v8123 = vunpack.c.l.b16 %v7493
        %v8124 = vunpack.c.l.b16 %v7494
        %v8125 = vunpack.c.l.b16 %v7495
        %v8126 = vpack.c.b16 %v8111, %v8110
        %v8127 = vpack.c.b16 %v8113, %v8112
        %v8128 = vpack.c.b16 %v8115, %v8114
        %v8129 = vpack.c.b16 %v8117, %v8116
        %v8130 = vpack.c.b16 %v8119, %v8118
        %v8131 = vpack.c.b16 %v8121, %v8120
        %v8132 = vpack.c.b16 %v8123, %v8122
        %v8133 = vpack.c.b16 %v8125, %v8124
        %8142 = vmatpush.bf16.msra.mxu0 %v8133
        %8143 = vmatpush.bf16.msra.mxu0 %v8132
        %8144 = vmatpush.bf16.msra.mxu0 %v8131
        %8145 = vmatpush.bf16.msra.mxu0 %v8130
        %8146 = vmatpush.bf16.msra.mxu0 %v8129
        %8147 = vmatpush.bf16.msra.mxu0 %v8128
        %8148 = vmatpush.bf16.msra.mxu0 %v8127
        %8149 = vmatpush.bf16.msra.mxu0 %v8126
        %8150 = vmatmul.bf16.gmra.mxu0 %v4788
        %v8151 = vpop.f32.mrf.mxu0
        %v8152 = vadd.f32 0.0, %v8151
        %v8153 = vpop.f32.mrf.mxu0
        %v8154 = vadd.f32 0.0, %v8153
        %8155 = vmatmul.bf16.gmra.mxu0 %v4789
        %v8156 = vpop.f32.mrf.mxu0
        %v8157 = vadd.f32 0.0, %v8156
        %v8158 = vpop.f32.mrf.mxu0
        %v8159 = vadd.f32 0.0, %v8158
        %8160 = vmatmul.bf16.gmra.mxu0 %v4790
        %v8161 = vpop.f32.mrf.mxu0
        %v8162 = vadd.f32 0.0, %v8161
        %v8163 = vpop.f32.mrf.mxu0
        %v8164 = vadd.f32 0.0, %v8163
        %8165 = vmatmul.bf16.gmra.mxu0 %v4791
        %v8166 = vpop.f32.mrf.mxu0
        %v8167 = vadd.f32 0.0, %v8166
        %v8168 = vpop.f32.mrf.mxu0
        %v8169 = vadd.f32 0.0, %v8168
        %8170 = vmatmul.bf16.gmra.mxu0 %v4792
        %v8171 = vpop.f32.mrf.mxu0
        %v8172 = vadd.f32 0.0, %v8171
        %v8173 = vpop.f32.mrf.mxu0
        %v8174 = vadd.f32 0.0, %v8173
        %8175 = vmatmul.bf16.gmra.mxu0 %v4793
        %v8176 = vpop.f32.mrf.mxu0
        %v8177 = vadd.f32 0.0, %v8176
        %v8178 = vpop.f32.mrf.mxu0
        %v8179 = vadd.f32 0.0, %v8178
        %8180 = vmatmul.bf16.gmra.mxu0 %v4794
        %v8181 = vpop.f32.mrf.mxu0
        %v8182 = vadd.f32 0.0, %v8181
        %v8183 = vpop.f32.mrf.mxu0
        %v8184 = vadd.f32 0.0, %v8183
        %8185 = vmatmul.bf16.gmra.mxu0 %v4795
        %v8186 = vpop.f32.mrf.mxu0
        %v8187 = vadd.f32 0.0, %v8186
        %v8188 = vpop.f32.mrf.mxu0
        %v8189 = vadd.f32 0.0, %v8188
        %8190 = vdwg.mxu0
        %v8207 = vunpack.c.l.b16 %v7496
        %v8208 = vunpack.c.l.b16 %v7497
        %v8209 = vunpack.c.l.b16 %v7498
        %v8210 = vunpack.c.l.b16 %v7499
        %v8211 = vunpack.c.l.b16 %v7500
        %v8212 = vunpack.c.l.b16 %v7501
        %v8213 = vunpack.c.l.b16 %v7502
        %v8214 = vunpack.c.l.b16 %v7503
        %v8215 = vunpack.c.l.b16 %v7504
        %v8216 = vunpack.c.l.b16 %v7505
        %v8217 = vunpack.c.l.b16 %v7506
        %v8218 = vunpack.c.l.b16 %v7507
        %v8219 = vunpack.c.l.b16 %v7508
        %v8220 = vunpack.c.l.b16 %v7509
        %v8221 = vunpack.c.l.b16 %v7510
        %v8222 = vunpack.c.l.b16 %v7511
        %v8223 = vpack.c.b16 %v8208, %v8207
        %v8224 = vpack.c.b16 %v8210, %v8209
        %v8225 = vpack.c.b16 %v8212, %v8211
        %v8226 = vpack.c.b16 %v8214, %v8213
        %v8227 = vpack.c.b16 %v8216, %v8215
        %v8228 = vpack.c.b16 %v8218, %v8217
        %v8229 = vpack.c.b16 %v8220, %v8219
        %v8230 = vpack.c.b16 %v8222, %v8221
        %8239 = vmatpush.bf16.msra.mxu0 %v8230
        %8240 = vmatpush.bf16.msra.mxu0 %v8229
        %8241 = vmatpush.bf16.msra.mxu0 %v8228
        %8242 = vmatpush.bf16.msra.mxu0 %v8227
        %8243 = vmatpush.bf16.msra.mxu0 %v8226
        %8244 = vmatpush.bf16.msra.mxu0 %v8225
        %8245 = vmatpush.bf16.msra.mxu0 %v8224
        %8246 = vmatpush.bf16.msra.mxu0 %v8223
        %8247 = vmatmul.bf16.gmra.mxu0 %v4933
        %v8248 = vpop.f32.mrf.mxu0
        %v8249 = vadd.f32 0.0, %v8248
        %v8250 = vpop.f32.mrf.mxu0
        %v8251 = vadd.f32 0.0, %v8250
        %8252 = vmatmul.bf16.gmra.mxu0 %v4934
        %v8253 = vpop.f32.mrf.mxu0
        %v8254 = vadd.f32 0.0, %v8253
        %v8255 = vpop.f32.mrf.mxu0
        %v8256 = vadd.f32 0.0, %v8255
        %8257 = vmatmul.bf16.gmra.mxu0 %v4935
        %v8258 = vpop.f32.mrf.mxu0
        %v8259 = vadd.f32 0.0, %v8258
        %v8260 = vpop.f32.mrf.mxu0
        %v8261 = vadd.f32 0.0, %v8260
        %8262 = vmatmul.bf16.gmra.mxu0 %v4936
        %v8263 = vpop.f32.mrf.mxu0
        %v8264 = vadd.f32 0.0, %v8263
        %v8265 = vpop.f32.mrf.mxu0
        %v8266 = vadd.f32 0.0, %v8265
        %8267 = vmatmul.bf16.gmra.mxu0 %v4937
        %v8268 = vpop.f32.mrf.mxu0
        %v8269 = vadd.f32 0.0, %v8268
        %v8270 = vpop.f32.mrf.mxu0
        %v8271 = vadd.f32 0.0, %v8270
        %8272 = vmatmul.bf16.gmra.mxu0 %v4938
        %v8273 = vpop.f32.mrf.mxu0
        %v8274 = vadd.f32 0.0, %v8273
        %v8275 = vpop.f32.mrf.mxu0
        %v8276 = vadd.f32 0.0, %v8275
        %8277 = vmatmul.bf16.gmra.mxu0 %v4939
        %v8278 = vpop.f32.mrf.mxu0
        %v8279 = vadd.f32 0.0, %v8278
        %v8280 = vpop.f32.mrf.mxu0
        %v8281 = vadd.f32 0.0, %v8280
        %8282 = vmatmul.bf16.gmra.mxu0 %v4940
        %v8283 = vpop.f32.mrf.mxu0
        %v8284 = vadd.f32 0.0, %v8283
        %v8285 = vpop.f32.mrf.mxu0
        %v8286 = vadd.f32 0.0, %v8285
        %8287 = vdwg.mxu0
        %v8288 = vld [vmem:[%s8] sm:$0x1]
        %v8290 = vperm.slane %v8288, 0
        %v8292 = vadd.f32 %v7570, %v8290
        %v8293 = vadd.f32 %v7572, %v8290
        %v8294 = vadd.f32 %v7575, %v8290
        %v8295 = vadd.f32 %v7577, %v8290
        %v8296 = vadd.f32 %v7580, %v8290
        %v8297 = vadd.f32 %v7582, %v8290
        %v8298 = vadd.f32 %v7585, %v8290
        %v8299 = vadd.f32 %v7587, %v8290
        %v8300 = vadd.f32 %v7590, %v8290
        %v8301 = vadd.f32 %v7592, %v8290
        %v8302 = vadd.f32 %v7595, %v8290
        %v8303 = vadd.f32 %v7597, %v8290
        %v8304 = vadd.f32 %v7600, %v8290
        %v8305 = vadd.f32 %v7602, %v8290
        %v8306 = vadd.f32 %v7605, %v8290
        %v8307 = vadd.f32 %v7607, %v8290
        %v8308 = vadd.f32 %v7667, %v8290
        %v8309 = vadd.f32 %v7669, %v8290
        %v8310 = vadd.f32 %v7672, %v8290
        %v8311 = vadd.f32 %v7674, %v8290
        %v8312 = vadd.f32 %v7677, %v8290
        %v8313 = vadd.f32 %v7679, %v8290
        %v8314 = vadd.f32 %v7682, %v8290
        %v8315 = vadd.f32 %v7684, %v8290
        %v8316 = vadd.f32 %v7687, %v8290
        %v8317 = vadd.f32 %v7689, %v8290
        %v8318 = vadd.f32 %v7692, %v8290
        %v8319 = vadd.f32 %v7694, %v8290
        %v8320 = vadd.f32 %v7697, %v8290
        %v8321 = vadd.f32 %v7699, %v8290
        %v8322 = vadd.f32 %v7702, %v8290
        %v8323 = vadd.f32 %v7704, %v8290
        %v8324 = vadd.f32 %v7764, %v8290
        %v8325 = vadd.f32 %v7766, %v8290
        %v8326 = vadd.f32 %v7769, %v8290
        %v8327 = vadd.f32 %v7771, %v8290
        %v8328 = vadd.f32 %v7774, %v8290
        %v8329 = vadd.f32 %v7776, %v8290
        %v8330 = vadd.f32 %v7779, %v8290
        %v8331 = vadd.f32 %v7781, %v8290
        %v8332 = vadd.f32 %v7784, %v8290
        %v8333 = vadd.f32 %v7786, %v8290
        %v8334 = vadd.f32 %v7789, %v8290
        %v8335 = vadd.f32 %v7791, %v8290
        %v8336 = vadd.f32 %v7794, %v8290
        %v8337 = vadd.f32 %v7796, %v8290
        %v8338 = vadd.f32 %v7799, %v8290
        %v8339 = vadd.f32 %v7801, %v8290
        %v8340 = vadd.f32 %v7861, %v8290
        %v8341 = vadd.f32 %v7863, %v8290
        %v8342 = vadd.f32 %v7866, %v8290
        %v8343 = vadd.f32 %v7868, %v8290
        %v8344 = vadd.f32 %v7871, %v8290
        %v8345 = vadd.f32 %v7873, %v8290
        %v8346 = vadd.f32 %v7876, %v8290
        %v8347 = vadd.f32 %v7878, %v8290
        %v8348 = vadd.f32 %v7881, %v8290
        %v8349 = vadd.f32 %v7883, %v8290
        %v8350 = vadd.f32 %v7886, %v8290
        %v8351 = vadd.f32 %v7888, %v8290
        %v8352 = vadd.f32 %v7891, %v8290
        %v8353 = vadd.f32 %v7893, %v8290
        %v8354 = vadd.f32 %v7896, %v8290
        %v8355 = vadd.f32 %v7898, %v8290
        %v8356 = vadd.f32 %v7958, %v8290
        %v8357 = vadd.f32 %v7960, %v8290
        %v8358 = vadd.f32 %v7963, %v8290
        %v8359 = vadd.f32 %v7965, %v8290
        %v8360 = vadd.f32 %v7968, %v8290
        %v8361 = vadd.f32 %v7970, %v8290
        %v8362 = vadd.f32 %v7973, %v8290
        %v8363 = vadd.f32 %v7975, %v8290
        %v8364 = vadd.f32 %v7978, %v8290
        %v8365 = vadd.f32 %v7980, %v8290
        %v8366 = vadd.f32 %v7983, %v8290
        %v8367 = vadd.f32 %v7985, %v8290
        %v8368 = vadd.f32 %v7988, %v8290
        %v8369 = vadd.f32 %v7990, %v8290
        %v8370 = vadd.f32 %v7993, %v8290
        %v8371 = vadd.f32 %v7995, %v8290
        %v8372 = vadd.f32 %v8055, %v8290
        %v8373 = vadd.f32 %v8057, %v8290
        %v8374 = vadd.f32 %v8060, %v8290
        %v8375 = vadd.f32 %v8062, %v8290
        %v8376 = vadd.f32 %v8065, %v8290
        %v8377 = vadd.f32 %v8067, %v8290
        %v8378 = vadd.f32 %v8070, %v8290
        %v8379 = vadd.f32 %v8072, %v8290
        %v8380 = vadd.f32 %v8075, %v8290
        %v8381 = vadd.f32 %v8077, %v8290
        %v8382 = vadd.f32 %v8080, %v8290
        %v8383 = vadd.f32 %v8082, %v8290
        %v8384 = vadd.f32 %v8085, %v8290
        %v8385 = vadd.f32 %v8087, %v8290
        %v8386 = vadd.f32 %v8090, %v8290
        %v8387 = vadd.f32 %v8092, %v8290
        %v8388 = vadd.f32 %v8152, %v8290
        %v8389 = vadd.f32 %v8154, %v8290
        %v8390 = vadd.f32 %v8157, %v8290
        %v8391 = vadd.f32 %v8159, %v8290
        %v8392 = vadd.f32 %v8162, %v8290
        %v8393 = vadd.f32 %v8164, %v8290
        %v8394 = vadd.f32 %v8167, %v8290
        %v8395 = vadd.f32 %v8169, %v8290
        %v8396 = vadd.f32 %v8172, %v8290
        %v8397 = vadd.f32 %v8174, %v8290
        %v8398 = vadd.f32 %v8177, %v8290
        %v8399 = vadd.f32 %v8179, %v8290
        %v8400 = vadd.f32 %v8182, %v8290
        %v8401 = vadd.f32 %v8184, %v8290
        %v8402 = vadd.f32 %v8187, %v8290
        %v8403 = vadd.f32 %v8189, %v8290
        %v8404 = vadd.f32 %v8249, %v8290
        %v8405 = vadd.f32 %v8251, %v8290
        %v8406 = vadd.f32 %v8254, %v8290
        %v8407 = vadd.f32 %v8256, %v8290
        %v8408 = vadd.f32 %v8259, %v8290
        %v8409 = vadd.f32 %v8261, %v8290
        %v8410 = vadd.f32 %v8264, %v8290
        %v8411 = vadd.f32 %v8266, %v8290
        %v8412 = vadd.f32 %v8269, %v8290
        %v8413 = vadd.f32 %v8271, %v8290
        %v8414 = vadd.f32 %v8274, %v8290
        %v8415 = vadd.f32 %v8276, %v8290
        %v8416 = vadd.f32 %v8279, %v8290
        %v8417 = vadd.f32 %v8281, %v8290
        %v8418 = vadd.f32 %v8284, %v8290
        %v8419 = vadd.f32 %v8286, %v8290
        %v8420 = vld [vmem:[%s424] sm:$0xff]
        %v8421 = vld [vmem:[%s424 + $0x8] sm:$0xff]
        %v8422 = vld [vmem:[%s424 + $0x10] sm:$0xff]
        %v8423 = vld [vmem:[%s424 + $0x18] sm:$0xff]
        %v8424 = vld [vmem:[%s424 + $0x20] sm:$0xff]
        %v8425 = vld [vmem:[%s424 + $0x28] sm:$0xff]
        %v8426 = vld [vmem:[%s424 + $0x30] sm:$0xff]
        %v8427 = vld [vmem:[%s424 + $0x38] sm:$0xff]
        %v8428 = vld [vmem:[%s424 + $0x40] sm:$0xff]
        %v8429 = vld [vmem:[%s424 + $0x48] sm:$0xff]
        %v8430 = vld [vmem:[%s424 + $0x50] sm:$0xff]
        %v8431 = vld [vmem:[%s424 + $0x58] sm:$0xff]
        %v8432 = vld [vmem:[%s424 + $0x60] sm:$0xff]
        %v8433 = vld [vmem:[%s424 + $0x68] sm:$0xff]
        %v8434 = vld [vmem:[%s424 + $0x70] sm:$0xff]
        %v8435 = vld [vmem:[%s424 + $0x78] sm:$0xff]
        %v8436 = vpack.c.bf16 %v8293, %v8292
        %v8437 = vpack.c.bf16 %v8295, %v8294
        %v8438 = vpack.c.bf16 %v8297, %v8296
        %v8439 = vpack.c.bf16 %v8299, %v8298
        %v8440 = vpack.c.bf16 %v8301, %v8300
        %v8441 = vpack.c.bf16 %v8303, %v8302
        %v8442 = vpack.c.bf16 %v8305, %v8304
        %v8443 = vpack.c.bf16 %v8307, %v8306
        %v8444 = vpack.c.bf16 %v8309, %v8308
        %v8445 = vpack.c.bf16 %v8311, %v8310
        %v8446 = vpack.c.bf16 %v8313, %v8312
        %v8447 = vpack.c.bf16 %v8315, %v8314
        %v8448 = vpack.c.bf16 %v8317, %v8316
        %v8449 = vpack.c.bf16 %v8319, %v8318
        %v8450 = vpack.c.bf16 %v8321, %v8320
        %v8451 = vpack.c.bf16 %v8323, %v8322
        %v8452 = vpack.c.bf16 %v8325, %v8324
        %v8453 = vpack.c.bf16 %v8327, %v8326
        %v8454 = vpack.c.bf16 %v8329, %v8328
        %v8455 = vpack.c.bf16 %v8331, %v8330
        %v8456 = vpack.c.bf16 %v8333, %v8332
        %v8457 = vpack.c.bf16 %v8335, %v8334
        %v8458 = vpack.c.bf16 %v8337, %v8336
        %v8459 = vpack.c.bf16 %v8339, %v8338
        %v8460 = vpack.c.bf16 %v8341, %v8340
        %v8461 = vpack.c.bf16 %v8343, %v8342
        %v8462 = vpack.c.bf16 %v8345, %v8344
        %v8463 = vpack.c.bf16 %v8347, %v8346
        %v8464 = vpack.c.bf16 %v8349, %v8348
        %v8465 = vpack.c.bf16 %v8351, %v8350
        %v8466 = vpack.c.bf16 %v8353, %v8352
        %v8467 = vpack.c.bf16 %v8355, %v8354
        %v8468 = vpack.c.bf16 %v8357, %v8356
        %v8469 = vpack.c.bf16 %v8359, %v8358
        %v8470 = vpack.c.bf16 %v8361, %v8360
        %v8471 = vpack.c.bf16 %v8363, %v8362
        %v8472 = vpack.c.bf16 %v8365, %v8364
        %v8473 = vpack.c.bf16 %v8367, %v8366
        %v8474 = vpack.c.bf16 %v8369, %v8368
        %v8475 = vpack.c.bf16 %v8371, %v8370
        %v8476 = vpack.c.bf16 %v8373, %v8372
        %v8477 = vpack.c.bf16 %v8375, %v8374
        %v8478 = vpack.c.bf16 %v8377, %v8376
        %v8479 = vpack.c.bf16 %v8379, %v8378
        %v8480 = vpack.c.bf16 %v8381, %v8380
        %v8481 = vpack.c.bf16 %v8383, %v8382
        %v8482 = vpack.c.bf16 %v8385, %v8384
        %v8483 = vpack.c.bf16 %v8387, %v8386
        %v8484 = vpack.c.bf16 %v8389, %v8388
        %v8485 = vpack.c.bf16 %v8391, %v8390
        %v8486 = vpack.c.bf16 %v8393, %v8392
        %v8487 = vpack.c.bf16 %v8395, %v8394
        %v8488 = vpack.c.bf16 %v8397, %v8396
        %v8489 = vpack.c.bf16 %v8399, %v8398
        %v8490 = vpack.c.bf16 %v8401, %v8400
        %v8491 = vpack.c.bf16 %v8403, %v8402
        %v8492 = vpack.c.bf16 %v8405, %v8404
        %v8493 = vpack.c.bf16 %v8407, %v8406
        %v8494 = vpack.c.bf16 %v8409, %v8408
        %v8495 = vpack.c.bf16 %v8411, %v8410
        %v8496 = vpack.c.bf16 %v8413, %v8412
        %v8497 = vpack.c.bf16 %v8415, %v8414
        %v8498 = vpack.c.bf16 %v8417, %v8416
        %v8499 = vpack.c.bf16 %v8419, %v8418
        %v8516 = vunpack.c.l.b16 %v8420
        %v8517 = vunpack.c.h.b16 %v8420
        %v8518 = vunpack.c.l.b16 %v8421
        %v8519 = vunpack.c.h.b16 %v8421
        %v8520 = vunpack.c.l.b16 %v8422
        %v8521 = vunpack.c.h.b16 %v8422
        %v8522 = vunpack.c.l.b16 %v8423
        %v8523 = vunpack.c.h.b16 %v8423
        %v8524 = vunpack.c.l.b16 %v8424
        %v8525 = vunpack.c.h.b16 %v8424
        %v8526 = vunpack.c.l.b16 %v8425
        %v8527 = vunpack.c.h.b16 %v8425
        %v8528 = vunpack.c.l.b16 %v8426
        %v8529 = vunpack.c.h.b16 %v8426
        %v8530 = vunpack.c.l.b16 %v8427
        %v8531 = vunpack.c.h.b16 %v8427
        %v8532 = vunpack.c.l.b16 %v8428
        %v8533 = vunpack.c.h.b16 %v8428
        %v8534 = vunpack.c.l.b16 %v8429
        %v8535 = vunpack.c.h.b16 %v8429
        %v8536 = vunpack.c.l.b16 %v8430
        %v8537 = vunpack.c.h.b16 %v8430
        %v8538 = vunpack.c.l.b16 %v8431
        %v8539 = vunpack.c.h.b16 %v8431
        %v8540 = vunpack.c.l.b16 %v8432
        %v8541 = vunpack.c.h.b16 %v8432
        %v8542 = vunpack.c.l.b16 %v8433
        %v8543 = vunpack.c.h.b16 %v8433
        %v8544 = vunpack.c.l.b16 %v8434
        %v8545 = vunpack.c.h.b16 %v8434
        %v8546 = vunpack.c.l.b16 %v8435
        %v8547 = vunpack.c.h.b16 %v8435
        %v8548 = vpack.c.b16 %v8524, %v8516
        %v8549 = vpack.c.b16 %v8525, %v8517
        %v8550 = vpack.c.b16 %v8526, %v8518
        %v8551 = vpack.c.b16 %v8527, %v8519
        %v8552 = vpack.c.b16 %v8528, %v8520
        %v8553 = vpack.c.b16 %v8529, %v8521
        %v8554 = vpack.c.b16 %v8530, %v8522
        %v8555 = vpack.c.b16 %v8531, %v8523
        %v8556 = vpack.c.b16 %v8540, %v8532
        %v8557 = vpack.c.b16 %v8541, %v8533
        %v8558 = vpack.c.b16 %v8542, %v8534
        %v8559 = vpack.c.b16 %v8543, %v8535
        %v8560 = vpack.c.b16 %v8544, %v8536
        %v8561 = vpack.c.b16 %v8545, %v8537
        %v8562 = vpack.c.b16 %v8546, %v8538
        %v8563 = vpack.c.b16 %v8547, %v8539
        %8580 = vmatpush.bf16.msra.mxu0 %v8443
        %8581 = vmatpush.bf16.msra.mxu0 %v8442
        %8582 = vmatpush.bf16.msra.mxu0 %v8441
        %8583 = vmatpush.bf16.msra.mxu0 %v8440
        %8584 = vmatpush.bf16.msra.mxu0 %v8439
        %8585 = vmatpush.bf16.msra.mxu0 %v8438
        %8586 = vmatpush.bf16.msra.mxu0 %v8437
        %8587 = vmatpush.bf16.msra.mxu0 %v8436
        %8588 = vmatmul.bf16.gmra.mxu0 %v8548
        %v8589 = vpop.f32.mrf.mxu0
        %v8590 = vadd.f32 0.0, %v8589
        %v8591 = vpop.f32.mrf.mxu0
        %v8592 = vadd.f32 0.0, %v8591
        %8593 = vmatmul.bf16.gmra.mxu0 %v8556
        %v8594 = vpop.f32.mrf.mxu0
        %v8595 = vadd.f32 0.0, %v8594
        %v8596 = vpop.f32.mrf.mxu0
        %v8597 = vadd.f32 0.0, %v8596
        %8598 = vdwg.mxu0
        %8599 = vmatpush.bf16.msra.mxu0 %v8451
        %8600 = vmatpush.bf16.msra.mxu0 %v8450
        %8601 = vmatpush.bf16.msra.mxu0 %v8449
        %8602 = vmatpush.bf16.msra.mxu0 %v8448
        %8603 = vmatpush.bf16.msra.mxu0 %v8447
        %8604 = vmatpush.bf16.msra.mxu0 %v8446
        %8605 = vmatpush.bf16.msra.mxu0 %v8445
        %8606 = vmatpush.bf16.msra.mxu0 %v8444
        %8607 = vmatmul.bf16.gmra.mxu0 %v8549
        %v8608 = vpop.f32.mrf.mxu0
        %v8609 = vadd.f32 %v8590, %v8608
        %v8610 = vpop.f32.mrf.mxu0
        %v8611 = vadd.f32 %v8592, %v8610
        %8612 = vmatmul.bf16.gmra.mxu0 %v8557
        %v8613 = vpop.f32.mrf.mxu0
        %v8614 = vadd.f32 %v8595, %v8613
        %v8615 = vpop.f32.mrf.mxu0
        %v8616 = vadd.f32 %v8597, %v8615
        %8617 = vdwg.mxu0
        %8618 = vmatpush.bf16.msra.mxu0 %v8459
        %8619 = vmatpush.bf16.msra.mxu0 %v8458
        %8620 = vmatpush.bf16.msra.mxu0 %v8457
        %8621 = vmatpush.bf16.msra.mxu0 %v8456
        %8622 = vmatpush.bf16.msra.mxu0 %v8455
        %8623 = vmatpush.bf16.msra.mxu0 %v8454
        %8624 = vmatpush.bf16.msra.mxu0 %v8453
        %8625 = vmatpush.bf16.msra.mxu0 %v8452
        %8626 = vmatmul.bf16.gmra.mxu0 %v8550
        %v8627 = vpop.f32.mrf.mxu0
        %v8628 = vadd.f32 %v8609, %v8627
        %v8629 = vpop.f32.mrf.mxu0
        %v8630 = vadd.f32 %v8611, %v8629
        %8631 = vmatmul.bf16.gmra.mxu0 %v8558
        %v8632 = vpop.f32.mrf.mxu0
        %v8633 = vadd.f32 %v8614, %v8632
        %v8634 = vpop.f32.mrf.mxu0
        %v8635 = vadd.f32 %v8616, %v8634
        %8636 = vdwg.mxu0
        %8637 = vmatpush.bf16.msra.mxu0 %v8467
        %8638 = vmatpush.bf16.msra.mxu0 %v8466
        %8639 = vmatpush.bf16.msra.mxu0 %v8465
        %8640 = vmatpush.bf16.msra.mxu0 %v8464
        %8641 = vmatpush.bf16.msra.mxu0 %v8463
        %8642 = vmatpush.bf16.msra.mxu0 %v8462
        %8643 = vmatpush.bf16.msra.mxu0 %v8461
        %8644 = vmatpush.bf16.msra.mxu0 %v8460
        %8645 = vmatmul.bf16.gmra.mxu0 %v8551
        %v8646 = vpop.f32.mrf.mxu0
        %v8647 = vadd.f32 %v8628, %v8646
        %v8648 = vpop.f32.mrf.mxu0
        %v8649 = vadd.f32 %v8630, %v8648
        %8650 = vmatmul.bf16.gmra.mxu0 %v8559
        %v8651 = vpop.f32.mrf.mxu0
        %v8652 = vadd.f32 %v8633, %v8651
        %v8653 = vpop.f32.mrf.mxu0
        %v8654 = vadd.f32 %v8635, %v8653
        %8655 = vdwg.mxu0
        %8656 = vmatpush.bf16.msra.mxu0 %v8475
        %8657 = vmatpush.bf16.msra.mxu0 %v8474
        %8658 = vmatpush.bf16.msra.mxu0 %v8473
        %8659 = vmatpush.bf16.msra.mxu0 %v8472
        %8660 = vmatpush.bf16.msra.mxu0 %v8471
        %8661 = vmatpush.bf16.msra.mxu0 %v8470
        %8662 = vmatpush.bf16.msra.mxu0 %v8469
        %8663 = vmatpush.bf16.msra.mxu0 %v8468
        %8664 = vmatmul.bf16.gmra.mxu0 %v8552
        %v8665 = vpop.f32.mrf.mxu0
        %v8666 = vadd.f32 %v8647, %v8665
        %v8667 = vpop.f32.mrf.mxu0
        %v8668 = vadd.f32 %v8649, %v8667
        %8669 = vmatmul.bf16.gmra.mxu0 %v8560
        %v8670 = vpop.f32.mrf.mxu0
        %v8671 = vadd.f32 %v8652, %v8670
        %v8672 = vpop.f32.mrf.mxu0
        %v8673 = vadd.f32 %v8654, %v8672
        %8674 = vdwg.mxu0
        %8675 = vmatpush.bf16.msra.mxu0 %v8483
        %8676 = vmatpush.bf16.msra.mxu0 %v8482
        %8677 = vmatpush.bf16.msra.mxu0 %v8481
        %8678 = vmatpush.bf16.msra.mxu0 %v8480
        %8679 = vmatpush.bf16.msra.mxu0 %v8479
        %8680 = vmatpush.bf16.msra.mxu0 %v8478
        %8681 = vmatpush.bf16.msra.mxu0 %v8477
        %8682 = vmatpush.bf16.msra.mxu0 %v8476
        %8683 = vmatmul.bf16.gmra.mxu0 %v8553
        %v8684 = vpop.f32.mrf.mxu0
        %v8685 = vadd.f32 %v8666, %v8684
        %v8686 = vpop.f32.mrf.mxu0
        %v8687 = vadd.f32 %v8668, %v8686
        %8688 = vmatmul.bf16.gmra.mxu0 %v8561
        %v8689 = vpop.f32.mrf.mxu0
        %v8690 = vadd.f32 %v8671, %v8689
        %v8691 = vpop.f32.mrf.mxu0
        %v8692 = vadd.f32 %v8673, %v8691
        %8693 = vdwg.mxu0
        %8694 = vmatpush.bf16.msra.mxu0 %v8491
        %8695 = vmatpush.bf16.msra.mxu0 %v8490
        %8696 = vmatpush.bf16.msra.mxu0 %v8489
        %8697 = vmatpush.bf16.msra.mxu0 %v8488
        %8698 = vmatpush.bf16.msra.mxu0 %v8487
        %8699 = vmatpush.bf16.msra.mxu0 %v8486
        %8700 = vmatpush.bf16.msra.mxu0 %v8485
        %8701 = vmatpush.bf16.msra.mxu0 %v8484
        %8702 = vmatmul.bf16.gmra.mxu0 %v8554
        %v8703 = vpop.f32.mrf.mxu0
        %v8704 = vadd.f32 %v8685, %v8703
        %v8705 = vpop.f32.mrf.mxu0
        %v8706 = vadd.f32 %v8687, %v8705
        %8707 = vmatmul.bf16.gmra.mxu0 %v8562
        %v8708 = vpop.f32.mrf.mxu0
        %v8709 = vadd.f32 %v8690, %v8708
        %v8710 = vpop.f32.mrf.mxu0
        %v8711 = vadd.f32 %v8692, %v8710
        %8712 = vdwg.mxu0
        %8713 = vmatpush.bf16.msra.mxu0 %v8499
        %8714 = vmatpush.bf16.msra.mxu0 %v8498
        %8715 = vmatpush.bf16.msra.mxu0 %v8497
        %8716 = vmatpush.bf16.msra.mxu0 %v8496
        %8717 = vmatpush.bf16.msra.mxu0 %v8495
        %8718 = vmatpush.bf16.msra.mxu0 %v8494
        %8719 = vmatpush.bf16.msra.mxu0 %v8493
        %8720 = vmatpush.bf16.msra.mxu0 %v8492
        %8721 = vmatmul.bf16.gmra.mxu0 %v8555
        %v8722 = vpop.f32.mrf.mxu0
        %v8723 = vadd.f32 %v8704, %v8722
        %v8724 = vpop.f32.mrf.mxu0
        %v8725 = vadd.f32 %v8706, %v8724
        %8726 = vmatmul.bf16.gmra.mxu0 %v8563
        %v8727 = vpop.f32.mrf.mxu0
        %v8728 = vadd.f32 %v8709, %v8727
        %v8729 = vpop.f32.mrf.mxu0
        %v8730 = vadd.f32 %v8711, %v8729
        %8731 = vdwg.mxu0
        %v8732 = vpack.c.bf16 %v8725, %v8723
        %v8733 = vpack.c.bf16 %v8730, %v8728
        %v8734 = vld [vmem:[%s9] sm:$0xf]
        %v8735 = vld [vmem:[%s9 + $0x4] sm:$0xf]
        %v8736 = vld [vmem:[%s9 + $0x8] sm:$0xf]
        %v8737 = vld [vmem:[%s9 + $0xc] sm:$0xf]
        %v8738 = vld [vmem:[%s9 + $0x10] sm:$0xf]
        %v8739 = vld [vmem:[%s9 + $0x14] sm:$0xf]
        %v8740 = vld [vmem:[%s9 + $0x18] sm:$0xf]
        %v8741 = vld [vmem:[%s9 + $0x1c] sm:$0xf]
        %v8742 = vld [vmem:[%s9 + $0x20] sm:$0xf]
        %v8743 = vld [vmem:[%s9 + $0x24] sm:$0xf]
        %v8744 = vld [vmem:[%s9 + $0x28] sm:$0xf]
        %v8745 = vld [vmem:[%s9 + $0x2c] sm:$0xf]
        %v8746 = vld [vmem:[%s9 + $0x30] sm:$0xf]
        %v8747 = vld [vmem:[%s9 + $0x34] sm:$0xf]
        %v8748 = vld [vmem:[%s9 + $0x38] sm:$0xf]
        %v8749 = vld [vmem:[%s9 + $0x3c] sm:$0xf]
        %v8750 = vld [vmem:[%s10] sm:$0x1]
        %v8752 = vperm.slane %v8750, 0
        %v8770 = vunpack.c.l.b16 %v8734
        %v8771 = vunpack.c.l.b16 %v8735
        %v8772 = vunpack.c.l.b16 %v8736
        %v8773 = vunpack.c.l.b16 %v8737
        %v8774 = vunpack.c.l.b16 %v8738
        %v8775 = vunpack.c.l.b16 %v8739
        %v8776 = vunpack.c.l.b16 %v8740
        %v8777 = vunpack.c.l.b16 %v8741
        %v8778 = vunpack.c.l.b16 %v8742
        %v8779 = vunpack.c.l.b16 %v8743
        %v8780 = vunpack.c.l.b16 %v8744
        %v8781 = vunpack.c.l.b16 %v8745
        %v8782 = vunpack.c.l.b16 %v8746
        %v8783 = vunpack.c.l.b16 %v8747
        %v8784 = vunpack.c.l.b16 %v8748
        %v8785 = vunpack.c.l.b16 %v8749
        %v8786 = vpack.c.b16 %v8771, %v8770
        %v8787 = vpack.c.b16 %v8773, %v8772
        %v8788 = vpack.c.b16 %v8775, %v8774
        %v8789 = vpack.c.b16 %v8777, %v8776
        %v8790 = vpack.c.b16 %v8779, %v8778
        %v8791 = vpack.c.b16 %v8781, %v8780
        %v8792 = vpack.c.b16 %v8783, %v8782
        %v8793 = vpack.c.b16 %v8785, %v8784
        %8802 = vmatpush.bf16.msra.mxu0 %v8793
        %8803 = vmatpush.bf16.msra.mxu0 %v8792
        %8804 = vmatpush.bf16.msra.mxu0 %v8791
        %8805 = vmatpush.bf16.msra.mxu0 %v8790
        %8806 = vmatpush.bf16.msra.mxu0 %v8789
        %8807 = vmatpush.bf16.msra.mxu0 %v8788
        %8808 = vmatpush.bf16.msra.mxu0 %v8787
        %8809 = vmatpush.bf16.msra.mxu0 %v8786
        %8810 = vmatmul.bf16.gmra.mxu0 %v8732
        %v8811 = vpop.f32.mrf.mxu0
        %v8812 = vadd.f32 %v8752, %v8811
        %v8813 = vpop.f32.mrf.mxu0
        %v8814 = vadd.f32 %v8752, %v8813
        %8815 = vmatmul.bf16.gmra.mxu0 %v8733
        %v8816 = vpop.f32.mrf.mxu0
        %v8817 = vadd.f32 %v8752, %v8816
        %v8818 = vpop.f32.mrf.mxu0
        %v8819 = vadd.f32 %v8752, %v8818
        %8820 = vdwg.mxu0
        %8821 = vst [vmem:[%s409] sm:$0xff] %v8812
        %8822 = vst [vmem:[%s409 + $0x8] sm:$0xff] %v8814
        %8823 = vst [vmem:[%s409 + $0x10] sm:$0xff] %v8817
        %8824 = vst [vmem:[%s409 + $0x18] sm:$0xff] %v8819
        %s8825 = sand.u32 %s279, 1
        %s8826 = scalar_lea.sflag [#allocation3], %s8825
        %s8827 = sand.u32 %s279, 1
        %s8828 = smul.addr %s8827, 32
        %s8829 = scalar_lea.vmem [#allocation2], %s8828
        // Predicated region
        $region65: #{tpu_custom_call.1} parent=63 // pred_check
          %p8830 = pneg %p289
        $region66: #{tpu_custom_call.1} parent=63 // pred_check_branch
          %8832 = sbr.rel (%p8830) target = $region68
        $region67: #{tpu_custom_call.1} parent=63 // pred_region
          %8834 = vsyncadd %s8826, 0
          %s8835 = smul.addr %s25, 4
          %s8836 = smul.addr %s8835, 8
          %s8837 = scalar_lea.hbm %s11, %s8836
          %s8838 = sshll.u32 %s8829, 4
          %s8839 = int_to_ptr.vmem [resolvable:$true] %s8838
          %s8840 = sshll.u32 %s8837, 4
          %s8841 = int_to_ptr.hbm [resolvable:$true] %s8840
          %8846 = dma.vmem_to_hbm [thread:$0]  %s8839, 512, %s8841, %s8826, 128, 128, 8
        $region68: #{tpu_custom_call.1} parent=63 // pred_fallthru
          _
      $region64: #{tpu_custom_call.1} parent=5 // pred_fallthru
        _
      %p8847 = scmp.le.s32.totalorder 2, %s20
      // Predicated region
      $region69: #{tpu_custom_call.1} parent=5 // pred_check
        %p8848 = pneg %p8847
      $region70: #{tpu_custom_call.1} parent=5 // pred_check_branch
        %8850 = sbr.rel (%p8848) target = $region72
      $region71: #{tpu_custom_call.1} parent=5 // pred_region
        %s8851 = ssub.s32 %s20, 2
        // Predicated region
        $region73: #{tpu_custom_call.1} parent=71 // pred_check
          %p8852 = pneg %p295
        $region74: #{tpu_custom_call.1} parent=71 // pred_check_branch
          %8854 = sbr.rel (%p8852) target = $region76
        $region75: #{tpu_custom_call.1} parent=71 // pred_region
          %s8855 = sand.u32 %s280, 1
          %s8856 = scalar_lea.sflag [#allocation3], %s8855
          %s8857 = sand.u32 %s280, 1
          %s8858 = smul.addr %s8857, 32
          %s8859 = scalar_lea.vmem [#allocation2], %s8858
          %8861 = dma.done %s8856, 512
        $region76: #{tpu_custom_call.1} parent=71 // pred_fallthru
          _
      $region72: #{tpu_custom_call.1} parent=5 // pred_fallthru
        _
    $region6: #{tpu_custom_call.1} parent=1 // loop_footer
      %s24 = sadd.s32 1, %s20
    $region7: #{tpu_custom_call.1} parent=1 // loop_footer_branch
      %19 = sbr.rel target = $region3
    $region8: #{tpu_custom_call.1} parent=1 // loop_exit
      _
    %8862 = vsyncpa [#allocation3], 1
    %s8863 = scalar_lea.sflag [#allocation3], 1
    %8864 = vsyncpa %s8863, 1

</llo_original>
